<compile_context>
chip_gen: v5e
topology: v5e:2x2
jax: 0.10.0
libtpu: 0.0.40
codegen_flags: <defaults>
</compile_context>

<pallas_src>
import functools

import jax
import jax.numpy as jnp
from jax import lax
from jax.experimental import pallas as pl
from jax.experimental.pallas import tpu as pltpu

EPS = 1e-5
NEG_SLOPE = 0.01                    # PyTorch LeakyReLU default
VMEM_LIMIT = 32 * 1024 * 1024       # scoped-VMEM budget safe on v5e / v6e / v7x


def _round_up(a, b):
    return ((a + b - 1) // b) * b


# -----------------------------------------------------------------------------
# Pass A: Conv1 (3x3, stride 2, bias) + per-image BN1 partial stats, grid over N.
# -----------------------------------------------------------------------------
def _conv1_stats_kernel(xph_ref, w_ref, b_ref, y_ref, st_ref,
                        *, kd, H_out, W_out, C_out):
    s = jnp.zeros((1, C_out), jnp.float32)
    ss = jnp.zeros((1, C_out), jnp.float32)
    # One output row at a time: every tap slice is a contiguous 2-D (W_out, C_in) window,
    # so no in-kernel reshapes / strided loads; the tap accumulation stays in vregs.
    for h in range(H_out):
        acc = jnp.zeros((W_out, C_out), jnp.float32)
        for kh in range(kd):
            for kw in range(kd):
                p = (kh % 2) * 2 + (kw % 2)            # stride-2 phase of this tap
                oh, ow = kh // 2, kw // 2
                patch = xph_ref[0, p, oh + h, ow:ow + W_out, :]      # (W_out, C_in)
                acc = acc + jnp.dot(patch, w_ref[kh * kd + kw],
                                    preferred_element_type=jnp.float32)
        acc = acc + b_ref[...]                         # conv bias (pre-BN value)
        y_ref[0, h] = acc
        s = s + jnp.sum(acc, axis=0, keepdims=True)
        ss = ss + jnp.sum(acc * acc, axis=0, keepdims=True)
    st_ref[0, 0:1, :] = s
    st_ref[0, 1:2, :] = ss


def _conv1_pass(xphase, w_taps, b, H_out, W_out):
    N, P, Hph, Wph, C_in = xphase.shape
    kd2, _, C_out = w_taps.shape
    kd = int(round(kd2 ** 0.5))
    kern = functools.partial(_conv1_stats_kernel, kd=kd, H_out=H_out,
                             W_out=W_out, C_out=C_out)
    flops = 2 * N * H_out * W_out * kd2 * C_in * C_out
    bytes_accessed = (xphase.size * xphase.dtype.itemsize
                      + w_taps.size * w_taps.dtype.itemsize
                      + (N * H_out * W_out * C_out + N * 2 * C_out + C_out) * 4)
    return pl.pallas_call(
        kern,
        out_shape=(jax.ShapeDtypeStruct((N, H_out, W_out, C_out), jnp.float32),
                   jax.ShapeDtypeStruct((N, 2, C_out), jnp.float32)),
        grid=(N,),
        in_specs=[pl.BlockSpec((1, P, Hph, Wph, C_in), lambda n: (n, 0, 0, 0, 0)),
                  pl.BlockSpec((kd2, C_in, C_out), lambda n: (0, 0, 0)),
                  pl.BlockSpec((1, C_out), lambda n: (0, 0))],
        out_specs=(pl.BlockSpec((1, H_out, W_out, C_out), lambda n: (n, 0, 0, 0)),
                   pl.BlockSpec((1, 2, C_out), lambda n: (n, 0, 0))),
        compiler_params=pltpu.CompilerParams(
            dimension_semantics=("parallel",), vmem_limit_bytes=VMEM_LIMIT),
        cost_estimate=pl.CostEstimate(flops=flops, transcendentals=0,
                                      bytes_accessed=bytes_accessed),
    )(xphase, w_taps, b)


# -----------------------------------------------------------------------------
# Pass B (fused): BN1 affine + LeakyReLU + Conv2 (3x3, stride 1, bias)
#                 + per-image BN2 partial stats, grid over N.
# -----------------------------------------------------------------------------
def _bn1_conv2_stats_kernel(y1_ref, sc_ref, sh_ref, w_ref, b_ref,
                            y2_ref, st_ref, a_scr, *, kd, H_out, W_out, C):
    # BN1 folded affine + LeakyReLU in f32, then cast once into the compute-dtype scratch.
    y1 = y1_ref[0]                                      # (H1, W1, C) f32
    a = y1 * sc_ref[...] + sh_ref[...]
    a = jnp.where(a > 0, a, NEG_SLOPE * a)
    a_scr[...] = a.astype(a_scr.dtype)

    s = jnp.zeros((1, C), jnp.float32)
    ss = jnp.zeros((1, C), jnp.float32)
    for h in range(H_out):
        acc = jnp.zeros((W_out, C), jnp.float32)
        for kh in range(kd):
            for kw in range(kd):
                patch = a_scr[h + kh, kw:kw + W_out, :]              # (W_out, C)
                acc = acc + jnp.dot(patch, w_ref[kh * kd + kw],
                                    preferred_element_type=jnp.float32)
        acc = acc + b_ref[...]
        y2_ref[0, h] = acc
        s = s + jnp.sum(acc, axis=0, keepdims=True)
        ss = ss + jnp.sum(acc * acc, axis=0, keepdims=True)
    st_ref[0, 0:1, :] = s
    st_ref[0, 1:2, :] = ss


def _conv2_pass(y1_raw, scale1, shift1, w_taps, b, H_out, W_out, compute_dtype):
    N, H1, W1, C = y1_raw.shape
    kd2 = w_taps.shape[0]
    kd = int(round(kd2 ** 0.5))
    kern = functools.partial(_bn1_conv2_stats_kernel, kd=kd, H_out=H_out,
                             W_out=W_out, C=C)
    flops = 2 * N * H_out * W_out * kd2 * C * C
    bytes_accessed = (y1_raw.size * 4 + w_taps.size * w_taps.dtype.itemsize
                      + (N * H_out * W_out * C + N * 2 * C + 3 * C) * 4)
    return pl.pallas_call(
        kern,
        out_shape=(jax.ShapeDtypeStruct((N, H_out, W_out, C), jnp.float32),
                   jax.ShapeDtypeStruct((N, 2, C), jnp.float32)),
        grid=(N,),
        in_specs=[pl.BlockSpec((1, H1, W1, C), lambda n: (n, 0, 0, 0)),
                  pl.BlockSpec((1, C), lambda n: (0, 0)),
                  pl.BlockSpec((1, C), lambda n: (0, 0)),
                  pl.BlockSpec((kd2, C, C), lambda n: (0, 0, 0)),
                  pl.BlockSpec((1, C), lambda n: (0, 0))],
        out_specs=(pl.BlockSpec((1, H_out, W_out, C), lambda n: (n, 0, 0, 0)),
                   pl.BlockSpec((1, 2, C), lambda n: (n, 0, 0))),
        scratch_shapes=[pltpu.VMEM((H1, W1, C), compute_dtype)],
        compiler_params=pltpu.CompilerParams(
            dimension_semantics=("parallel",), vmem_limit_bytes=VMEM_LIMIT),
        cost_estimate=pl.CostEstimate(flops=flops, transcendentals=0,
                                      bytes_accessed=bytes_accessed),
    )(y1_raw, scale1, shift1, w_taps, b)


# -----------------------------------------------------------------------------
# Pass C: BN2 folded affine + LeakyReLU on a lane-dense (rows, 128) folded layout.
# -----------------------------------------------------------------------------
def _affine_lrelu_kernel(x_ref, sc_ref, sh_ref, o_ref):
    y = x_ref[...] * sc_ref[...] + sh_ref[...]
    o_ref[...] = jnp.where(y > 0, y, NEG_SLOPE * y)


def _affine_lrelu_lane_dense(y, scale, shift):
    N, H, W, C = y.shape
    # Fold F channel groups per 128-lane row so the store path is unmasked / lane-dense.
    F = (128 // C) if (C <= 128 and 128 % C == 0) else 1
    lanes = F * C
    total = N * H * W * C
    rows = (total + lanes - 1) // lanes
    tile_r = min(512, _round_up(rows, 8))
    rows_pad = _round_up(rows, tile_r)
    flat = jnp.pad(y.reshape(-1), (0, rows_pad * lanes - total)).reshape(rows_pad, lanes)
    sc = jnp.tile(scale.reshape(1, C), (1, F))          # lane l -> channel l % C
    sh = jnp.tile(shift.reshape(1, C), (1, F))
    out = pl.pallas_call(
        _affine_lrelu_kernel,
        out_shape=jax.ShapeDtypeStruct((rows_pad, lanes), jnp.float32),
        grid=(rows_pad // tile_r,),
        in_specs=[pl.BlockSpec((tile_r, lanes), lambda i: (i, 0)),
                  pl.BlockSpec((1, lanes), lambda i: (0, 0)),
                  pl.BlockSpec((1, lanes), lambda i: (0, 0))],
        out_specs=pl.BlockSpec((tile_r, lanes), lambda i: (i, 0)),
        compiler_params=pltpu.CompilerParams(
            dimension_semantics=("parallel",), vmem_limit_bytes=VMEM_LIMIT),
    )(flat, sc, sh)
    return out.reshape(-1)[:total].reshape(N, H, W, C)


# -----------------------------------------------------------------------------
# Wrapper-side helpers (pure data rearrangement / tiny scalar math).
# -----------------------------------------------------------------------------
def _space_to_phases(xp):
    """(N, Hp, Wp, C) -> (N, 4, Hph, Wph, C); phase p*2+q holds xp[:, p::2, q::2, :].
    Lets the stride-2 conv taps be contiguous in-kernel slices (no strided loads)."""
    N, Hp, Wp, C = xp.shape
    Hph, Wph = (Hp + 1) // 2, (Wp + 1) // 2
    phases = []
    for p in range(2):
        for q in range(2):
            ph = xp[:, p::2, q::2, :]
            ph = jnp.pad(ph, ((0, 0), (0, Hph - ph.shape[1]),
                              (0, Wph - ph.shape[2]), (0, 0)))
            phases.append(ph)
    return jnp.stack(phases, axis=1)


def _bn_affine_from_stats(stats, gamma, beta, count):
    """Reduce per-image (sum, sumsq) partials into the folded BN affine (scale, shift).
    Kept in f32 (biased variance, matching BatchNorm2d training-mode normalization)."""
    s = jnp.sum(stats[:, 0, :], axis=0)
    ss = jnp.sum(stats[:, 1, :], axis=0)
    mean = s / count
    var = jnp.maximum(ss / count - mean * mean, 0.0)
    scale = gamma.reshape(-1) * lax.rsqrt(var + EPS)
    shift = beta.reshape(-1) - mean * scale
    return (scale.reshape(1, -1).astype(jnp.float32),
            shift.reshape(1, -1).astype(jnp.float32))


@functools.partial(jax.jit, static_argnames=("kd", "padding", "stride", "compute_dtype"))
def downsample_forward(x_nchw, params, kd=3, padding=1, stride=2,
                       compute_dtype=jnp.bfloat16):
    w1, b1, g1, be1, w2, b2, g2, be2 = params
    N, C_in, H, W = x_nchw.shape
    nd = w1.shape[-1]
    assert stride == 2, "phase-split path implemented for the module default stride=2"

    cdt = jnp.dtype(compute_dtype)
    x = jnp.transpose(x_nchw, (0, 2, 3, 1))                        # NCHW -> NHWC
    xp = jnp.pad(x, ((0, 0), (padding, padding), (padding, padding), (0, 0)),
                 mode="reflect")                                   # ReflectionPad2d(padding)
    Hp, Wp = xp.shape[1], xp.shape[2]
    H1, W1 = (Hp - kd) // stride + 1, (Wp - kd) // stride + 1
    H2, W2 = H1 - kd + 1, W1 - kd + 1

    xphase = _space_to_phases(xp).astype(cdt)                      # (N, 4, Hph, Wph, Cin)
    w1_t = w1.reshape(kd * kd, C_in, nd).astype(cdt)               # HWIO -> per-tap mats
    w2_t = w2.reshape(kd * kd, nd, nd).astype(cdt)

    # Pass A: conv1 + bias + BN1 partial stats.
    y1_raw, st1 = _conv1_pass(xphase, w1_t, b1, H1, W1)
    scale1, shift1 = _bn_affine_from_stats(st1, g1, be1, N * H1 * W1)

    # Pass B (fused): BN1 affine + LeakyReLU + conv2 + bias + BN2 partial stats.
    y2_raw, st2 = _conv2_pass(y1_raw, scale1, shift1, w2_t, b2, H2, W2, cdt)
    scale2, shift2 = _bn_affine_from_stats(st2, g2, be2, N * H2 * W2)

    # Pass C: BN2 affine + LeakyReLU, lane-dense folded layout.
    y2 = _affine_lrelu_lane_dense(y2_raw, scale2, shift2)
    return jnp.transpose(y2, (0, 3, 1, 2))                         # NHWC -> NCHW


# -----------------------------------------------------------------------------
# Pure-JAX reference (PyTorch semantics) + synthetic params + demo.
# -----------------------------------------------------------------------------
def ref_forward(x_nchw, params, kd=3, padding=1, stride=2):
    w1, b1, g1, be1, w2, b2, g2, be2 = params
    dn = ("NHWC", "HWIO", "NHWC")

    def bn_lrelu(y, g, b):
        m = y.mean(axis=(0, 1, 2), keepdims=True)
        v = ((y - m) ** 2).mean(axis=(0, 1, 2), keepdims=True)
        y = (y - m) / jnp.sqrt(v + EPS) * g.reshape(1, 1, 1, -1) + b.reshape(1, 1, 1, -1)
        return jnp.where(y > 0, y, NEG_SLOPE * y)

    x = jnp.transpose(x_nchw, (0, 2, 3, 1))
    xp = jnp.pad(x, ((0, 0), (padding, padding), (padding, padding), (0, 0)), mode="reflect")
    y = lax.conv_general_dilated(xp, w1, (stride, stride), "VALID",
                                 dimension_numbers=dn) + b1.reshape(1, 1, 1, -1)
    y = bn_lrelu(y, g1, be1)
    y = lax.conv_general_dilated(y, w2, (1, 1), "VALID",
                                 dimension_numbers=dn) + b2.reshape(1, 1, 1, -1)
    y = bn_lrelu(y, g2, be2)
    return jnp.transpose(y, (0, 3, 1, 2))


def init_params(key, in_planes, nd, kd=3):
    ks = jax.random.split(key, 6)
    w1 = jax.random.normal(ks[0], (kd, kd, in_planes, nd), jnp.float32) * 0.2   # HWIO
    b1 = jax.random.normal(ks[1], (1, nd), jnp.float32) * 0.1
    w2 = jax.random.normal(ks[2], (kd, kd, nd, nd), jnp.float32) * 0.2
    b2 = jax.random.normal(ks[3], (1, nd), jnp.float32) * 0.1
    g1 = 1.0 + 0.1 * jax.random.normal(ks[4], (1, nd), jnp.float32)             # BN weight
    g2 = 1.0 + 0.1 * jax.random.normal(ks[5], (1, nd), jnp.float32)
    be1 = jnp.zeros((1, nd), jnp.float32)                                       # BN bias
    be2 = jnp.zeros((1, nd), jnp.float32)
    return (w1, b1, g1, be1, w2, b2, g2, be2)


if __name__ == "__main__":
    key = jax.random.PRNGKey(0)
    k_x, k_p = jax.random.split(key)

    N, C_in, H, W = 2, 4, 16, 16
    nd = 8

    x = jax.random.normal(k_x, (N, C_in, H, W), jnp.float32)     # NCHW, PyTorch convention
    params = init_params(k_p, C_in, nd)

    ref = jax.block_until_ready(ref_forward(x, params))

    # f32 MXU operands: tight check against the pure-JAX / PyTorch-semantics reference.
    out_f32 = jax.block_until_ready(downsample_forward(x, params, compute_dtype=jnp.float32))
    assert out_f32.shape == (N, nd, 6, 6), out_f32.shape         # 16 -> 8 (stride 2) -> 6
    assert jnp.allclose(out_f32, ref, atol=2e-4, rtol=2e-4), \
        float(jnp.max(jnp.abs(out_f32 - ref)))

    # bf16 MXU operands (f32 accumulation + f32 BN stats): looser tolerance from rounding.
    out_bf16 = jax.block_until_ready(downsample_forward(x, params, compute_dtype=jnp.bfloat16))
    assert out_bf16.shape == (N, nd, 6, 6), out_bf16.shape
    assert jnp.allclose(out_bf16, ref, atol=8e-2, rtol=8e-2), \
        float(jnp.max(jnp.abs(out_bf16 - ref)))

    print("KERNEL_OK")
</pallas_src>

<mosaic_0001>
module attributes {stable_mosaic.version = 11 : i64} {
  func.func @_conv1_stats_kernel(%arg0: i32, %arg1: memref<1x4x9x9x4xf32, #tpu.memory_space<vmem>>, %arg2: memref<9x4x8xf32, #tpu.memory_space<vmem>>, %arg3: memref<1x8xf32, #tpu.memory_space<vmem>>, %arg4: memref<1x8x8x8xf32, #tpu.memory_space<vmem>>, %arg5: memref<1x2x8xf32, #tpu.memory_space<vmem>>) attributes {dimension_semantics = [#tpu.dimension_semantics<parallel>], iteration_bounds = array<i64: 2>, scalar_prefetch = 0 : i64, scratch_operands = 0 : i64, tpu.core_type = #tpu.core_type<tc>, window_params = [{transform_indices = @transform_0, window_bounds = array<i64: 1, 4, 9, 9, 4>}, {pipeline_mode = #tpu.pipeline_mode<synchronous>, transform_indices = @transform_1, window_bounds = array<i64: 9, 4, 8>}, {pipeline_mode = #tpu.pipeline_mode<synchronous>, transform_indices = @transform_2, window_bounds = array<i64: 1, 8>}, {transform_indices = @transform_3, window_bounds = array<i64: 1, 8, 8, 8>}, {transform_indices = @transform_4, window_bounds = array<i64: 1, 2, 8>}]} {
    %cst = arith.constant 0.000000e+00 : f32
    %0 = vector.broadcast %cst : f32 to vector<1x8xf32>
    %cst_0 = arith.constant 0.000000e+00 : f32
    %1 = vector.broadcast %cst_0 : f32 to vector<1x8xf32>
    %cst_1 = arith.constant 0.000000e+00 : f32
    %2 = vector.broadcast %cst_1 : f32 to vector<8x8xf32>
    %c0 = arith.constant 0 : index
    %c0_2 = arith.constant 0 : index
    %c0_3 = arith.constant 0 : index
    %c0_4 = arith.constant 0 : index
    %c0_5 = arith.constant 0 : index
    %3 = vector.load %arg1[%c0, %c0_2, %c0_3, %c0_4, %c0_5] : memref<1x4x9x9x4xf32, #tpu.memory_space<vmem>>, vector<1x1x1x8x4xf32>
    %4 = vector.shape_cast %3 : vector<1x1x1x8x4xf32> to vector<8x4xf32>
    %c0_6 = arith.constant 0 : index
    %c0_7 = arith.constant 0 : index
    %c0_8 = arith.constant 0 : index
    %5 = vector.load %arg2[%c0_6, %c0_7, %c0_8] : memref<9x4x8xf32, #tpu.memory_space<vmem>>, vector<1x4x8xf32>
    %6 = vector.shape_cast %5 : vector<1x4x8xf32> to vector<4x8xf32>
    %cst_9 = arith.constant dense<0.000000e+00> : vector<8x8xf32>
    %7 = tpu.matmul %4, %6, %cst_9 {dimension_numbers = #tpu.dot_dimension_numbers<[1], [0], [0], [1], [0, 0, 1, 1], [], []>} : vector<8x4xf32>, vector<4x8xf32>, vector<8x8xf32> -> vector<8x8xf32>
    %8 = arith.addf %2, %7 : vector<8x8xf32>
    %c0_10 = arith.constant 0 : index
    %c1 = arith.constant 1 : index
    %c0_11 = arith.constant 0 : index
    %c0_12 = arith.constant 0 : index
    %c0_13 = arith.constant 0 : index
    %9 = vector.load %arg1[%c0_10, %c1, %c0_11, %c0_12, %c0_13] : memref<1x4x9x9x4xf32, #tpu.memory_space<vmem>>, vector<1x1x1x8x4xf32>
    %10 = vector.shape_cast %9 : vector<1x1x1x8x4xf32> to vector<8x4xf32>
    %c1_14 = arith.constant 1 : index
    %c0_15 = arith.constant 0 : index
    %c0_16 = arith.constant 0 : index
    %11 = vector.load %arg2[%c1_14, %c0_15, %c0_16] : memref<9x4x8xf32, #tpu.memory_space<vmem>>, vector<1x4x8xf32>
    %12 = vector.shape_cast %11 : vector<1x4x8xf32> to vector<4x8xf32>
    %cst_17 = arith.constant dense<0.000000e+00> : vector<8x8xf32>
    %13 = tpu.matmul %10, %12, %cst_17 {dimension_numbers = #tpu.dot_dimension_numbers<[1], [0], [0], [1], [0, 0, 1, 1], [], []>} : vector<8x4xf32>, vector<4x8xf32>, vector<8x8xf32> -> vector<8x8xf32>
    %14 = arith.addf %8, %13 : vector<8x8xf32>
    %c0_18 = arith.constant 0 : index
    %c0_19 = arith.constant 0 : index
    %c0_20 = arith.constant 0 : index
    %c1_21 = arith.constant 1 : index
    %c0_22 = arith.constant 0 : index
    %15 = vector.load %arg1[%c0_18, %c0_19, %c0_20, %c1_21, %c0_22] : memref<1x4x9x9x4xf32, #tpu.memory_space<vmem>>, vector<1x1x1x8x4xf32>
    %16 = vector.shape_cast %15 : vector<1x1x1x8x4xf32> to vector<8x4xf32>
    %c2 = arith.constant 2 : index
    %c0_23 = arith.constant 0 : index
    %c0_24 = arith.constant 0 : index
    %17 = vector.load %arg2[%c2, %c0_23, %c0_24] : memref<9x4x8xf32, #tpu.memory_space<vmem>>, vector<1x4x8xf32>
    %18 = vector.shape_cast %17 : vector<1x4x8xf32> to vector<4x8xf32>
    %cst_25 = arith.constant dense<0.000000e+00> : vector<8x8xf32>
    %19 = tpu.matmul %16, %18, %cst_25 {dimension_numbers = #tpu.dot_dimension_numbers<[1], [0], [0], [1], [0, 0, 1, 1], [], []>} : vector<8x4xf32>, vector<4x8xf32>, vector<8x8xf32> -> vector<8x8xf32>
    %20 = arith.addf %14, %19 : vector<8x8xf32>
    %c0_26 = arith.constant 0 : index
    %c2_27 = arith.constant 2 : index
    %c0_28 = arith.constant 0 : index
    %c0_29 = arith.constant 0 : index
    %c0_30 = arith.constant 0 : index
    %21 = vector.load %arg1[%c0_26, %c2_27, %c0_28, %c0_29, %c0_30] : memref<1x4x9x9x4xf32, #tpu.memory_space<vmem>>, vector<1x1x1x8x4xf32>
    %22 = vector.shape_cast %21 : vector<1x1x1x8x4xf32> to vector<8x4xf32>
    %c3 = arith.constant 3 : index
    %c0_31 = arith.constant 0 : index
    %c0_32 = arith.constant 0 : index
    %23 = vector.load %arg2[%c3, %c0_31, %c0_32] : memref<9x4x8xf32, #tpu.memory_space<vmem>>, vector<1x4x8xf32>
    %24 = vector.shape_cast %23 : vector<1x4x8xf32> to vector<4x8xf32>
    %cst_33 = arith.constant dense<0.000000e+00> : vector<8x8xf32>
    %25 = tpu.matmul %22, %24, %cst_33 {dimension_numbers = #tpu.dot_dimension_numbers<[1], [0], [0], [1], [0, 0, 1, 1], [], []>} : vector<8x4xf32>, vector<4x8xf32>, vector<8x8xf32> -> vector<8x8xf32>
    %26 = arith.addf %20, %25 : vector<8x8xf32>
    %c0_34 = arith.constant 0 : index
    %c3_35 = arith.constant 3 : index
    %c0_36 = arith.constant 0 : index
    %c0_37 = arith.constant 0 : index
    %c0_38 = arith.constant 0 : index
    %27 = vector.load %arg1[%c0_34, %c3_35, %c0_36, %c0_37, %c0_38] : memref<1x4x9x9x4xf32, #tpu.memory_space<vmem>>, vector<1x1x1x8x4xf32>
    %28 = vector.shape_cast %27 : vector<1x1x1x8x4xf32> to vector<8x4xf32>
    %c4 = arith.constant 4 : index
    %c0_39 = arith.constant 0 : index
    %c0_40 = arith.constant 0 : index
    %29 = vector.load %arg2[%c4, %c0_39, %c0_40] : memref<9x4x8xf32, #tpu.memory_space<vmem>>, vector<1x4x8xf32>
    %30 = vector.shape_cast %29 : vector<1x4x8xf32> to vector<4x8xf32>
    %cst_41 = arith.constant dense<0.000000e+00> : vector<8x8xf32>
    %31 = tpu.matmul %28, %30, %cst_41 {dimension_numbers = #tpu.dot_dimension_numbers<[1], [0], [0], [1], [0, 0, 1, 1], [], []>} : vector<8x4xf32>, vector<4x8xf32>, vector<8x8xf32> -> vector<8x8xf32>
    %32 = arith.addf %26, %31 : vector<8x8xf32>
    %c0_42 = arith.constant 0 : index
    %c2_43 = arith.constant 2 : index
    %c0_44 = arith.constant 0 : index
    %c1_45 = arith.constant 1 : index
    %c0_46 = arith.constant 0 : index
    %33 = vector.load %arg1[%c0_42, %c2_43, %c0_44, %c1_45, %c0_46] : memref<1x4x9x9x4xf32, #tpu.memory_space<vmem>>, vector<1x1x1x8x4xf32>
    %34 = vector.shape_cast %33 : vector<1x1x1x8x4xf32> to vector<8x4xf32>
    %c5 = arith.constant 5 : index
    %c0_47 = arith.constant 0 : index
    %c0_48 = arith.constant 0 : index
    %35 = vector.load %arg2[%c5, %c0_47, %c0_48] : memref<9x4x8xf32, #tpu.memory_space<vmem>>, vector<1x4x8xf32>
    %36 = vector.shape_cast %35 : vector<1x4x8xf32> to vector<4x8xf32>
    %cst_49 = arith.constant dense<0.000000e+00> : vector<8x8xf32>
    %37 = tpu.matmul %34, %36, %cst_49 {dimension_numbers = #tpu.dot_dimension_numbers<[1], [0], [0], [1], [0, 0, 1, 1], [], []>} : vector<8x4xf32>, vector<4x8xf32>, vector<8x8xf32> -> vector<8x8xf32>
    %38 = arith.addf %32, %37 : vector<8x8xf32>
    %c0_50 = arith.constant 0 : index
    %c0_51 = arith.constant 0 : index
    %c1_52 = arith.constant 1 : index
    %c0_53 = arith.constant 0 : index
    %c0_54 = arith.constant 0 : index
    %39 = vector.load %arg1[%c0_50, %c0_51, %c1_52, %c0_53, %c0_54] : memref<1x4x9x9x4xf32, #tpu.memory_space<vmem>>, vector<1x1x1x8x4xf32>
    %40 = vector.shape_cast %39 : vector<1x1x1x8x4xf32> to vector<8x4xf32>
    %c6 = arith.constant 6 : index
    %c0_55 = arith.constant 0 : index
    %c0_56 = arith.constant 0 : index
    %41 = vector.load %arg2[%c6, %c0_55, %c0_56] : memref<9x4x8xf32, #tpu.memory_space<vmem>>, vector<1x4x8xf32>
    %42 = vector.shape_cast %41 : vector<1x4x8xf32> to vector<4x8xf32>
    %cst_57 = arith.constant dense<0.000000e+00> : vector<8x8xf32>
    %43 = tpu.matmul %40, %42, %cst_57 {dimension_numbers = #tpu.dot_dimension_numbers<[1], [0], [0], [1], [0, 0, 1, 1], [], []>} : vector<8x4xf32>, vector<4x8xf32>, vector<8x8xf32> -> vector<8x8xf32>
    %44 = arith.addf %38, %43 : vector<8x8xf32>
    %c0_58 = arith.constant 0 : index
    %c1_59 = arith.constant 1 : index
    %c1_60 = arith.constant 1 : index
    %c0_61 = arith.constant 0 : index
    %c0_62 = arith.constant 0 : index
    %45 = vector.load %arg1[%c0_58, %c1_59, %c1_60, %c0_61, %c0_62] : memref<1x4x9x9x4xf32, #tpu.memory_space<vmem>>, vector<1x1x1x8x4xf32>
    %46 = vector.shape_cast %45 : vector<1x1x1x8x4xf32> to vector<8x4xf32>
    %c7 = arith.constant 7 : index
    %c0_63 = arith.constant 0 : index
    %c0_64 = arith.constant 0 : index
    %47 = vector.load %arg2[%c7, %c0_63, %c0_64] : memref<9x4x8xf32, #tpu.memory_space<vmem>>, vector<1x4x8xf32>
    %48 = vector.shape_cast %47 : vector<1x4x8xf32> to vector<4x8xf32>
    %cst_65 = arith.constant dense<0.000000e+00> : vector<8x8xf32>
    %49 = tpu.matmul %46, %48, %cst_65 {dimension_numbers = #tpu.dot_dimension_numbers<[1], [0], [0], [1], [0, 0, 1, 1], [], []>} : vector<8x4xf32>, vector<4x8xf32>, vector<8x8xf32> -> vector<8x8xf32>
    %50 = arith.addf %44, %49 : vector<8x8xf32>
    %c0_66 = arith.constant 0 : index
    %c0_67 = arith.constant 0 : index
    %c1_68 = arith.constant 1 : index
    %c1_69 = arith.constant 1 : index
    %c0_70 = arith.constant 0 : index
    %51 = vector.load %arg1[%c0_66, %c0_67, %c1_68, %c1_69, %c0_70] : memref<1x4x9x9x4xf32, #tpu.memory_space<vmem>>, vector<1x1x1x8x4xf32>
    %52 = vector.shape_cast %51 : vector<1x1x1x8x4xf32> to vector<8x4xf32>
    %c8 = arith.constant 8 : index
    %c0_71 = arith.constant 0 : index
    %c0_72 = arith.constant 0 : index
    %53 = vector.load %arg2[%c8, %c0_71, %c0_72] : memref<9x4x8xf32, #tpu.memory_space<vmem>>, vector<1x4x8xf32>
    %54 = vector.shape_cast %53 : vector<1x4x8xf32> to vector<4x8xf32>
    %cst_73 = arith.constant dense<0.000000e+00> : vector<8x8xf32>
    %55 = tpu.matmul %52, %54, %cst_73 {dimension_numbers = #tpu.dot_dimension_numbers<[1], [0], [0], [1], [0, 0, 1, 1], [], []>} : vector<8x4xf32>, vector<4x8xf32>, vector<8x8xf32> -> vector<8x8xf32>
    %56 = arith.addf %50, %55 : vector<8x8xf32>
    %c0_74 = arith.constant 0 : index
    %c0_75 = arith.constant 0 : index
    %57 = vector.load %arg3[%c0_74, %c0_75] : memref<1x8xf32, #tpu.memory_space<vmem>>, vector<1x8xf32>
    %58 = vector.broadcast %57 : vector<1x8xf32> to vector<8x8xf32>
    %59 = arith.addf %56, %58 : vector<8x8xf32>
    %c0_76 = arith.constant 0 : index
    %c0_77 = arith.constant 0 : index
    %c0_78 = arith.constant 0 : index
    %c0_79 = arith.constant 0 : index
    %60 = vector.load %arg4[%c0_76, %c0_77, %c0_78, %c0_79] : memref<1x8x8x8xf32, #tpu.memory_space<vmem>>, vector<1x1x8x8xf32>
    %61 = vector.shape_cast %60 : vector<1x1x8x8xf32> to vector<8x8xf32>
    %62 = vector.shape_cast %59 : vector<8x8xf32> to vector<1x1x8x8xf32>
    tpu.vector_store %arg4[%c0_76, %c0_77, %c0_78, %c0_79], %62 {strides = array<i32>} : memref<1x8x8x8xf32, #tpu.memory_space<vmem>>, vector<1x1x8x8xf32>,
    %cst_80 = arith.constant dense<0.000000e+00> : vector<8xf32>
    %63 = vector.multi_reduction <add>, %59, %cst_80 [0] : vector<8x8xf32> to vector<8xf32>
    %64 = vector.shape_cast %63 : vector<8xf32> to vector<1x8xf32>
    %65 = arith.addf %0, %64 : vector<1x8xf32>
    %66 = arith.mulf %59, %59 : vector<8x8xf32>
    %cst_81 = arith.constant dense<0.000000e+00> : vector<8xf32>
    %67 = vector.multi_reduction <add>, %66, %cst_81 [0] : vector<8x8xf32> to vector<8xf32>
    %68 = vector.shape_cast %67 : vector<8xf32> to vector<1x8xf32>
    %69 = arith.addf %1, %68 : vector<1x8xf32>
    %cst_82 = arith.constant 0.000000e+00 : f32
    %70 = vector.broadcast %cst_82 : f32 to vector<8x8xf32>
    %c0_83 = arith.constant 0 : index
    %c0_84 = arith.constant 0 : index
    %c1_85 = arith.constant 1 : index
    %c0_86 = arith.constant 0 : index
    %c0_87 = arith.constant 0 : index
    %71 = vector.load %arg1[%c0_83, %c0_84, %c1_85, %c0_86, %c0_87] : memref<1x4x9x9x4xf32, #tpu.memory_space<vmem>>, vector<1x1x1x8x4xf32>
    %72 = vector.shape_cast %71 : vector<1x1x1x8x4xf32> to vector<8x4xf32>
    %c0_88 = arith.constant 0 : index
    %c0_89 = arith.constant 0 : index
    %c0_90 = arith.constant 0 : index
    %73 = vector.load %arg2[%c0_88, %c0_89, %c0_90] : memref<9x4x8xf32, #tpu.memory_space<vmem>>, vector<1x4x8xf32>
    %74 = vector.shape_cast %73 : vector<1x4x8xf32> to vector<4x8xf32>
    %cst_91 = arith.constant dense<0.000000e+00> : vector<8x8xf32>
    %75 = tpu.matmul %72, %74, %cst_91 {dimension_numbers = #tpu.dot_dimension_numbers<[1], [0], [0], [1], [0, 0, 1, 1], [], []>} : vector<8x4xf32>, vector<4x8xf32>, vector<8x8xf32> -> vector<8x8xf32>
    %76 = arith.addf %70, %75 : vector<8x8xf32>
    %c0_92 = arith.constant 0 : index
    %c1_93 = arith.constant 1 : index
    %c1_94 = arith.constant 1 : index
    %c0_95 = arith.constant 0 : index
    %c0_96 = arith.constant 0 : index
    %77 = vector.load %arg1[%c0_92, %c1_93, %c1_94, %c0_95, %c0_96] : memref<1x4x9x9x4xf32, #tpu.memory_space<vmem>>, vector<1x1x1x8x4xf32>
    %78 = vector.shape_cast %77 : vector<1x1x1x8x4xf32> to vector<8x4xf32>
    %c1_97 = arith.constant 1 : index
    %c0_98 = arith.constant 0 : index
    %c0_99 = arith.constant 0 : index
    %79 = vector.load %arg2[%c1_97, %c0_98, %c0_99] : memref<9x4x8xf32, #tpu.memory_space<vmem>>, vector<1x4x8xf32>
    %80 = vector.shape_cast %79 : vector<1x4x8xf32> to vector<4x8xf32>
    %cst_100 = arith.constant dense<0.000000e+00> : vector<8x8xf32>
    %81 = tpu.matmul %78, %80, %cst_100 {dimension_numbers = #tpu.dot_dimension_numbers<[1], [0], [0], [1], [0, 0, 1, 1], [], []>} : vector<8x4xf32>, vector<4x8xf32>, vector<8x8xf32> -> vector<8x8xf32>
    %82 = arith.addf %76, %81 : vector<8x8xf32>
    %c0_101 = arith.constant 0 : index
    %c0_102 = arith.constant 0 : index
    %c1_103 = arith.constant 1 : index
    %c1_104 = arith.constant 1 : index
    %c0_105 = arith.constant 0 : index
    %83 = vector.load %arg1[%c0_101, %c0_102, %c1_103, %c1_104, %c0_105] : memref<1x4x9x9x4xf32, #tpu.memory_space<vmem>>, vector<1x1x1x8x4xf32>
    %84 = vector.shape_cast %83 : vector<1x1x1x8x4xf32> to vector<8x4xf32>
    %c2_106 = arith.constant 2 : index
    %c0_107 = arith.constant 0 : index
    %c0_108 = arith.constant 0 : index
    %85 = vector.load %arg2[%c2_106, %c0_107, %c0_108] : memref<9x4x8xf32, #tpu.memory_space<vmem>>, vector<1x4x8xf32>
    %86 = vector.shape_cast %85 : vector<1x4x8xf32> to vector<4x8xf32>
    %cst_109 = arith.constant dense<0.000000e+00> : vector<8x8xf32>
    %87 = tpu.matmul %84, %86, %cst_109 {dimension_numbers = #tpu.dot_dimension_numbers<[1], [0], [0], [1], [0, 0, 1, 1], [], []>} : vector<8x4xf32>, vector<4x8xf32>, vector<8x8xf32> -> vector<8x8xf32>
    %88 = arith.addf %82, %87 : vector<8x8xf32>
    %c0_110 = arith.constant 0 : index
    %c2_111 = arith.constant 2 : index
    %c1_112 = arith.constant 1 : index
    %c0_113 = arith.constant 0 : index
    %c0_114 = arith.constant 0 : index
    %89 = vector.load %arg1[%c0_110, %c2_111, %c1_112, %c0_113, %c0_114] : memref<1x4x9x9x4xf32, #tpu.memory_space<vmem>>, vector<1x1x1x8x4xf32>
    %90 = vector.shape_cast %89 : vector<1x1x1x8x4xf32> to vector<8x4xf32>
    %c3_115 = arith.constant 3 : index
    %c0_116 = arith.constant 0 : index
    %c0_117 = arith.constant 0 : index
    %91 = vector.load %arg2[%c3_115, %c0_116, %c0_117] : memref<9x4x8xf32, #tpu.memory_space<vmem>>, vector<1x4x8xf32>
    %92 = vector.shape_cast %91 : vector<1x4x8xf32> to vector<4x8xf32>
    %cst_118 = arith.constant dense<0.000000e+00> : vector<8x8xf32>
    %93 = tpu.matmul %90, %92, %cst_118 {dimension_numbers = #tpu.dot_dimension_numbers<[1], [0], [0], [1], [0, 0, 1, 1], [], []>} : vector<8x4xf32>, vector<4x8xf32>, vector<8x8xf32> -> vector<8x8xf32>
    %94 = arith.addf %88, %93 : vector<8x8xf32>
    %c0_119 = arith.constant 0 : index
    %c3_120 = arith.constant 3 : index
    %c1_121 = arith.constant 1 : index
    %c0_122 = arith.constant 0 : index
    %c0_123 = arith.constant 0 : index
    %95 = vector.load %arg1[%c0_119, %c3_120, %c1_121, %c0_122, %c0_123] : memref<1x4x9x9x4xf32, #tpu.memory_space<vmem>>, vector<1x1x1x8x4xf32>
    %96 = vector.shape_cast %95 : vector<1x1x1x8x4xf32> to vector<8x4xf32>
    %c4_124 = arith.constant 4 : index
    %c0_125 = arith.constant 0 : index
    %c0_126 = arith.constant 0 : index
    %97 = vector.load %arg2[%c4_124, %c0_125, %c0_126] : memref<9x4x8xf32, #tpu.memory_space<vmem>>, vector<1x4x8xf32>
    %98 = vector.shape_cast %97 : vector<1x4x8xf32> to vector<4x8xf32>
    %cst_127 = arith.constant dense<0.000000e+00> : vector<8x8xf32>
    %99 = tpu.matmul %96, %98, %cst_127 {dimension_numbers = #tpu.dot_dimension_numbers<[1], [0], [0], [1], [0, 0, 1, 1], [], []>} : vector<8x4xf32>, vector<4x8xf32>, vector<8x8xf32> -> vector<8x8xf32>
    %100 = arith.addf %94, %99 : vector<8x8xf32>
    %c0_128 = arith.constant 0 : index
    %c2_129 = arith.constant 2 : index
    %c1_130 = arith.constant 1 : index
    %c1_131 = arith.constant 1 : index
    %c0_132 = arith.constant 0 : index
    %101 = vector.load %arg1[%c0_128, %c2_129, %c1_130, %c1_131, %c0_132] : memref<1x4x9x9x4xf32, #tpu.memory_space<vmem>>, vector<1x1x1x8x4xf32>
    %102 = vector.shape_cast %101 : vector<1x1x1x8x4xf32> to vector<8x4xf32>
    %c5_133 = arith.constant 5 : index
    %c0_134 = arith.constant 0 : index
    %c0_135 = arith.constant 0 : index
    %103 = vector.load %arg2[%c5_133, %c0_134, %c0_135] : memref<9x4x8xf32, #tpu.memory_space<vmem>>, vector<1x4x8xf32>
    %104 = vector.shape_cast %103 : vector<1x4x8xf32> to vector<4x8xf32>
    %cst_136 = arith.constant dense<0.000000e+00> : vector<8x8xf32>
    %105 = tpu.matmul %102, %104, %cst_136 {dimension_numbers = #tpu.dot_dimension_numbers<[1], [0], [0], [1], [0, 0, 1, 1], [], []>} : vector<8x4xf32>, vector<4x8xf32>, vector<8x8xf32> -> vector<8x8xf32>
    %106 = arith.addf %100, %105 : vector<8x8xf32>
    %c0_137 = arith.constant 0 : index
    %c0_138 = arith.constant 0 : index
    %c2_139 = arith.constant 2 : index
    %c0_140 = arith.constant 0 : index
    %c0_141 = arith.constant 0 : index
    %107 = vector.load %arg1[%c0_137, %c0_138, %c2_139, %c0_140, %c0_141] : memref<1x4x9x9x4xf32, #tpu.memory_space<vmem>>, vector<1x1x1x8x4xf32>
    %108 = vector.shape_cast %107 : vector<1x1x1x8x4xf32> to vector<8x4xf32>
    %c6_142 = arith.constant 6 : index
    %c0_143 = arith.constant 0 : index
    %c0_144 = arith.constant 0 : index
    %109 = vector.load %arg2[%c6_142, %c0_143, %c0_144] : memref<9x4x8xf32, #tpu.memory_space<vmem>>, vector<1x4x8xf32>
    %110 = vector.shape_cast %109 : vector<1x4x8xf32> to vector<4x8xf32>
    %cst_145 = arith.constant dense<0.000000e+00> : vector<8x8xf32>
    %111 = tpu.matmul %108, %110, %cst_145 {dimension_numbers = #tpu.dot_dimension_numbers<[1], [0], [0], [1], [0, 0, 1, 1], [], []>} : vector<8x4xf32>, vector<4x8xf32>, vector<8x8xf32> -> vector<8x8xf32>
    %112 = arith.addf %106, %111 : vector<8x8xf32>
    %c0_146 = arith.constant 0 : index
    %c1_147 = arith.constant 1 : index
    %c2_148 = arith.constant 2 : index
    %c0_149 = arith.constant 0 : index
    %c0_150 = arith.constant 0 : index
    %113 = vector.load %arg1[%c0_146, %c1_147, %c2_148, %c0_149, %c0_150] : memref<1x4x9x9x4xf32, #tpu.memory_space<vmem>>, vector<1x1x1x8x4xf32>
    %114 = vector.shape_cast %113 : vector<1x1x1x8x4xf32> to vector<8x4xf32>
    %c7_151 = arith.constant 7 : index
    %c0_152 = arith.constant 0 : index
    %c0_153 = arith.constant 0 : index
    %115 = vector.load %arg2[%c7_151, %c0_152, %c0_153] : memref<9x4x8xf32, #tpu.memory_space<vmem>>, vector<1x4x8xf32>
    %116 = vector.shape_cast %115 : vector<1x4x8xf32> to vector<4x8xf32>
    %cst_154 = arith.constant dense<0.000000e+00> : vector<8x8xf32>
    %117 = tpu.matmul %114, %116, %cst_154 {dimension_numbers = #tpu.dot_dimension_numbers<[1], [0], [0], [1], [0, 0, 1, 1], [], []>} : vector<8x4xf32>, vector<4x8xf32>, vector<8x8xf32> -> vector<8x8xf32>
    %118 = arith.addf %112, %117 : vector<8x8xf32>
    %c0_155 = arith.constant 0 : index
    %c0_156 = arith.constant 0 : index
    %c2_157 = arith.constant 2 : index
    %c1_158 = arith.constant 1 : index
    %c0_159 = arith.constant 0 : index
    %119 = vector.load %arg1[%c0_155, %c0_156, %c2_157, %c1_158, %c0_159] : memref<1x4x9x9x4xf32, #tpu.memory_space<vmem>>, vector<1x1x1x8x4xf32>
    %120 = vector.shape_cast %119 : vector<1x1x1x8x4xf32> to vector<8x4xf32>
    %c8_160 = arith.constant 8 : index
    %c0_161 = arith.constant 0 : index
    %c0_162 = arith.constant 0 : index
    %121 = vector.load %arg2[%c8_160, %c0_161, %c0_162] : memref<9x4x8xf32, #tpu.memory_space<vmem>>, vector<1x4x8xf32>
    %122 = vector.shape_cast %121 : vector<1x4x8xf32> to vector<4x8xf32>
    %cst_163 = arith.constant dense<0.000000e+00> : vector<8x8xf32>
    %123 = tpu.matmul %120, %122, %cst_163 {dimension_numbers = #tpu.dot_dimension_numbers<[1], [0], [0], [1], [0, 0, 1, 1], [], []>} : vector<8x4xf32>, vector<4x8xf32>, vector<8x8xf32> -> vector<8x8xf32>
    %124 = arith.addf %118, %123 : vector<8x8xf32>
    %c0_164 = arith.constant 0 : index
    %c0_165 = arith.constant 0 : index
    %125 = vector.load %arg3[%c0_164, %c0_165] : memref<1x8xf32, #tpu.memory_space<vmem>>, vector<1x8xf32>
    %126 = vector.broadcast %125 : vector<1x8xf32> to vector<8x8xf32>
    %127 = arith.addf %124, %126 : vector<8x8xf32>
    %c0_166 = arith.constant 0 : index
    %c1_167 = arith.constant 1 : index
    %c0_168 = arith.constant 0 : index
    %c0_169 = arith.constant 0 : index
    %128 = vector.load %arg4[%c0_166, %c1_167, %c0_168, %c0_169] : memref<1x8x8x8xf32, #tpu.memory_space<vmem>>, vector<1x1x8x8xf32>
    %129 = vector.shape_cast %128 : vector<1x1x8x8xf32> to vector<8x8xf32>
    %130 = vector.shape_cast %127 : vector<8x8xf32> to vector<1x1x8x8xf32>
    tpu.vector_store %arg4[%c0_166, %c1_167, %c0_168, %c0_169], %130 {strides = array<i32>} : memref<1x8x8x8xf32, #tpu.memory_space<vmem>>, vector<1x1x8x8xf32>,
    %cst_170 = arith.constant dense<0.000000e+00> : vector<8xf32>
    %131 = vector.multi_reduction <add>, %127, %cst_170 [0] : vector<8x8xf32> to vector<8xf32>
    %132 = vector.shape_cast %131 : vector<8xf32> to vector<1x8xf32>
    %133 = arith.addf %65, %132 : vector<1x8xf32>
    %134 = arith.mulf %127, %127 : vector<8x8xf32>
    %cst_171 = arith.constant dense<0.000000e+00> : vector<8xf32>
    %135 = vector.multi_reduction <add>, %134, %cst_171 [0] : vector<8x8xf32> to vector<8xf32>
    %136 = vector.shape_cast %135 : vector<8xf32> to vector<1x8xf32>
    %137 = arith.addf %69, %136 : vector<1x8xf32>
    %cst_172 = arith.constant 0.000000e+00 : f32
    %138 = vector.broadcast %cst_172 : f32 to vector<8x8xf32>
    %c0_173 = arith.constant 0 : index
    %c0_174 = arith.constant 0 : index
    %c2_175 = arith.constant 2 : index
    %c0_176 = arith.constant 0 : index
    %c0_177 = arith.constant 0 : index
    %139 = vector.load %arg1[%c0_173, %c0_174, %c2_175, %c0_176, %c0_177] : memref<1x4x9x9x4xf32, #tpu.memory_space<vmem>>, vector<1x1x1x8x4xf32>
    %140 = vector.shape_cast %139 : vector<1x1x1x8x4xf32> to vector<8x4xf32>
    %c0_178 = arith.constant 0 : index
    %c0_179 = arith.constant 0 : index
    %c0_180 = arith.constant 0 : index
    %141 = vector.load %arg2[%c0_178, %c0_179, %c0_180] : memref<9x4x8xf32, #tpu.memory_space<vmem>>, vector<1x4x8xf32>
    %142 = vector.shape_cast %141 : vector<1x4x8xf32> to vector<4x8xf32>
    %cst_181 = arith.constant dense<0.000000e+00> : vector<8x8xf32>
    %143 = tpu.matmul %140, %142, %cst_181 {dimension_numbers = #tpu.dot_dimension_numbers<[1], [0], [0], [1], [0, 0, 1, 1], [], []>} : vector<8x4xf32>, vector<4x8xf32>, vector<8x8xf32> -> vector<8x8xf32>
    %144 = arith.addf %138, %143 : vector<8x8xf32>
    %c0_182 = arith.constant 0 : index
    %c1_183 = arith.constant 1 : index
    %c2_184 = arith.constant 2 : index
    %c0_185 = arith.constant 0 : index
    %c0_186 = arith.constant 0 : index
    %145 = vector.load %arg1[%c0_182, %c1_183, %c2_184, %c0_185, %c0_186] : memref<1x4x9x9x4xf32, #tpu.memory_space<vmem>>, vector<1x1x1x8x4xf32>
    %146 = vector.shape_cast %145 : vector<1x1x1x8x4xf32> to vector<8x4xf32>
    %c1_187 = arith.constant 1 : index
    %c0_188 = arith.constant 0 : index
    %c0_189 = arith.constant 0 : index
    %147 = vector.load %arg2[%c1_187, %c0_188, %c0_189] : memref<9x4x8xf32, #tpu.memory_space<vmem>>, vector<1x4x8xf32>
    %148 = vector.shape_cast %147 : vector<1x4x8xf32> to vector<4x8xf32>
    %cst_190 = arith.constant dense<0.000000e+00> : vector<8x8xf32>
    %149 = tpu.matmul %146, %148, %cst_190 {dimension_numbers = #tpu.dot_dimension_numbers<[1], [0], [0], [1], [0, 0, 1, 1], [], []>} : vector<8x4xf32>, vector<4x8xf32>, vector<8x8xf32> -> vector<8x8xf32>
    %150 = arith.addf %144, %149 : vector<8x8xf32>
    %c0_191 = arith.constant 0 : index
    %c0_192 = arith.constant 0 : index
    %c2_193 = arith.constant 2 : index
    %c1_194 = arith.constant 1 : index
    %c0_195 = arith.constant 0 : index
    %151 = vector.load %arg1[%c0_191, %c0_192, %c2_193, %c1_194, %c0_195] : memref<1x4x9x9x4xf32, #tpu.memory_space<vmem>>, vector<1x1x1x8x4xf32>
    %152 = vector.shape_cast %151 : vector<1x1x1x8x4xf32> to vector<8x4xf32>
    %c2_196 = arith.constant 2 : index
    %c0_197 = arith.constant 0 : index
    %c0_198 = arith.constant 0 : index
    %153 = vector.load %arg2[%c2_196, %c0_197, %c0_198] : memref<9x4x8xf32, #tpu.memory_space<vmem>>, vector<1x4x8xf32>
    %154 = vector.shape_cast %153 : vector<1x4x8xf32> to vector<4x8xf32>
    %cst_199 = arith.constant dense<0.000000e+00> : vector<8x8xf32>
    %155 = tpu.matmul %152, %154, %cst_199 {dimension_numbers = #tpu.dot_dimension_numbers<[1], [0], [0], [1], [0, 0, 1, 1], [], []>} : vector<8x4xf32>, vector<4x8xf32>, vector<8x8xf32> -> vector<8x8xf32>
    %156 = arith.addf %150, %155 : vector<8x8xf32>
    %c0_200 = arith.constant 0 : index
    %c2_201 = arith.constant 2 : index
    %c2_202 = arith.constant 2 : index
    %c0_203 = arith.constant 0 : index
    %c0_204 = arith.constant 0 : index
    %157 = vector.load %arg1[%c0_200, %c2_201, %c2_202, %c0_203, %c0_204] : memref<1x4x9x9x4xf32, #tpu.memory_space<vmem>>, vector<1x1x1x8x4xf32>
    %158 = vector.shape_cast %157 : vector<1x1x1x8x4xf32> to vector<8x4xf32>
    %c3_205 = arith.constant 3 : index
    %c0_206 = arith.constant 0 : index
    %c0_207 = arith.constant 0 : index
    %159 = vector.load %arg2[%c3_205, %c0_206, %c0_207] : memref<9x4x8xf32, #tpu.memory_space<vmem>>, vector<1x4x8xf32>
    %160 = vector.shape_cast %159 : vector<1x4x8xf32> to vector<4x8xf32>
    %cst_208 = arith.constant dense<0.000000e+00> : vector<8x8xf32>
    %161 = tpu.matmul %158, %160, %cst_208 {dimension_numbers = #tpu.dot_dimension_numbers<[1], [0], [0], [1], [0, 0, 1, 1], [], []>} : vector<8x4xf32>, vector<4x8xf32>, vector<8x8xf32> -> vector<8x8xf32>
    %162 = arith.addf %156, %161 : vector<8x8xf32>
    %c0_209 = arith.constant 0 : index
    %c3_210 = arith.constant 3 : index
    %c2_211 = arith.constant 2 : index
    %c0_212 = arith.constant 0 : index
    %c0_213 = arith.constant 0 : index
    %163 = vector.load %arg1[%c0_209, %c3_210, %c2_211, %c0_212, %c0_213] : memref<1x4x9x9x4xf32, #tpu.memory_space<vmem>>, vector<1x1x1x8x4xf32>
    %164 = vector.shape_cast %163 : vector<1x1x1x8x4xf32> to vector<8x4xf32>
    %c4_214 = arith.constant 4 : index
    %c0_215 = arith.constant 0 : index
    %c0_216 = arith.constant 0 : index
    %165 = vector.load %arg2[%c4_214, %c0_215, %c0_216] : memref<9x4x8xf32, #tpu.memory_space<vmem>>, vector<1x4x8xf32>
    %166 = vector.shape_cast %165 : vector<1x4x8xf32> to vector<4x8xf32>
    %cst_217 = arith.constant dense<0.000000e+00> : vector<8x8xf32>
    %167 = tpu.matmul %164, %166, %cst_217 {dimension_numbers = #tpu.dot_dimension_numbers<[1], [0], [0], [1], [0, 0, 1, 1], [], []>} : vector<8x4xf32>, vector<4x8xf32>, vector<8x8xf32> -> vector<8x8xf32>
    %168 = arith.addf %162, %167 : vector<8x8xf32>
    %c0_218 = arith.constant 0 : index
    %c2_219 = arith.constant 2 : index
    %c2_220 = arith.constant 2 : index
    %c1_221 = arith.constant 1 : index
    %c0_222 = arith.constant 0 : index
    %169 = vector.load %arg1[%c0_218, %c2_219, %c2_220, %c1_221, %c0_222] : memref<1x4x9x9x4xf32, #tpu.memory_space<vmem>>, vector<1x1x1x8x4xf32>
    %170 = vector.shape_cast %169 : vector<1x1x1x8x4xf32> to vector<8x4xf32>
    %c5_223 = arith.constant 5 : index
    %c0_224 = arith.constant 0 : index
    %c0_225 = arith.constant 0 : index
    %171 = vector.load %arg2[%c5_223, %c0_224, %c0_225] : memref<9x4x8xf32, #tpu.memory_space<vmem>>, vector<1x4x8xf32>
    %172 = vector.shape_cast %171 : vector<1x4x8xf32> to vector<4x8xf32>
    %cst_226 = arith.constant dense<0.000000e+00> : vector<8x8xf32>
    %173 = tpu.matmul %170, %172, %cst_226 {dimension_numbers = #tpu.dot_dimension_numbers<[1], [0], [0], [1], [0, 0, 1, 1], [], []>} : vector<8x4xf32>, vector<4x8xf32>, vector<8x8xf32> -> vector<8x8xf32>
    %174 = arith.addf %168, %173 : vector<8x8xf32>
    %c0_227 = arith.constant 0 : index
    %c0_228 = arith.constant 0 : index
    %c3_229 = arith.constant 3 : index
    %c0_230 = arith.constant 0 : index
    %c0_231 = arith.constant 0 : index
    %175 = vector.load %arg1[%c0_227, %c0_228, %c3_229, %c0_230, %c0_231] : memref<1x4x9x9x4xf32, #tpu.memory_space<vmem>>, vector<1x1x1x8x4xf32>
    %176 = vector.shape_cast %175 : vector<1x1x1x8x4xf32> to vector<8x4xf32>
    %c6_232 = arith.constant 6 : index
    %c0_233 = arith.constant 0 : index
    %c0_234 = arith.constant 0 : index
    %177 = vector.load %arg2[%c6_232, %c0_233, %c0_234] : memref<9x4x8xf32, #tpu.memory_space<vmem>>, vector<1x4x8xf32>
    %178 = vector.shape_cast %177 : vector<1x4x8xf32> to vector<4x8xf32>
    %cst_235 = arith.constant dense<0.000000e+00> : vector<8x8xf32>
    %179 = tpu.matmul %176, %178, %cst_235 {dimension_numbers = #tpu.dot_dimension_numbers<[1], [0], [0], [1], [0, 0, 1, 1], [], []>} : vector<8x4xf32>, vector<4x8xf32>, vector<8x8xf32> -> vector<8x8xf32>
    %180 = arith.addf %174, %179 : vector<8x8xf32>
    %c0_236 = arith.constant 0 : index
    %c1_237 = arith.constant 1 : index
    %c3_238 = arith.constant 3 : index
    %c0_239 = arith.constant 0 : index
    %c0_240 = arith.constant 0 : index
    %181 = vector.load %arg1[%c0_236, %c1_237, %c3_238, %c0_239, %c0_240] : memref<1x4x9x9x4xf32, #tpu.memory_space<vmem>>, vector<1x1x1x8x4xf32>
    %182 = vector.shape_cast %181 : vector<1x1x1x8x4xf32> to vector<8x4xf32>
    %c7_241 = arith.constant 7 : index
    %c0_242 = arith.constant 0 : index
    %c0_243 = arith.constant 0 : index
    %183 = vector.load %arg2[%c7_241, %c0_242, %c0_243] : memref<9x4x8xf32, #tpu.memory_space<vmem>>, vector<1x4x8xf32>
    %184 = vector.shape_cast %183 : vector<1x4x8xf32> to vector<4x8xf32>
    %cst_244 = arith.constant dense<0.000000e+00> : vector<8x8xf32>
    %185 = tpu.matmul %182, %184, %cst_244 {dimension_numbers = #tpu.dot_dimension_numbers<[1], [0], [0], [1], [0, 0, 1, 1], [], []>} : vector<8x4xf32>, vector<4x8xf32>, vector<8x8xf32> -> vector<8x8xf32>
    %186 = arith.addf %180, %185 : vector<8x8xf32>
    %c0_245 = arith.constant 0 : index
    %c0_246 = arith.constant 0 : index
    %c3_247 = arith.constant 3 : index
    %c1_248 = arith.constant 1 : index
    %c0_249 = arith.constant 0 : index
    %187 = vector.load %arg1[%c0_245, %c0_246, %c3_247, %c1_248, %c0_249] : memref<1x4x9x9x4xf32, #tpu.memory_space<vmem>>, vector<1x1x1x8x4xf32>
    %188 = vector.shape_cast %187 : vector<1x1x1x8x4xf32> to vector<8x4xf32>
    %c8_250 = arith.constant 8 : index
    %c0_251 = arith.constant 0 : index
    %c0_252 = arith.constant 0 : index
    %189 = vector.load %arg2[%c8_250, %c0_251, %c0_252] : memref<9x4x8xf32, #tpu.memory_space<vmem>>, vector<1x4x8xf32>
    %190 = vector.shape_cast %189 : vector<1x4x8xf32> to vector<4x8xf32>
    %cst_253 = arith.constant dense<0.000000e+00> : vector<8x8xf32>
    %191 = tpu.matmul %188, %190, %cst_253 {dimension_numbers = #tpu.dot_dimension_numbers<[1], [0], [0], [1], [0, 0, 1, 1], [], []>} : vector<8x4xf32>, vector<4x8xf32>, vector<8x8xf32> -> vector<8x8xf32>
    %192 = arith.addf %186, %191 : vector<8x8xf32>
    %c0_254 = arith.constant 0 : index
    %c0_255 = arith.constant 0 : index
    %193 = vector.load %arg3[%c0_254, %c0_255] : memref<1x8xf32, #tpu.memory_space<vmem>>, vector<1x8xf32>
    %194 = vector.broadcast %193 : vector<1x8xf32> to vector<8x8xf32>
    %195 = arith.addf %192, %194 : vector<8x8xf32>
    %c0_256 = arith.constant 0 : index
    %c2_257 = arith.constant 2 : index
    %c0_258 = arith.constant 0 : index
    %c0_259 = arith.constant 0 : index
    %196 = vector.load %arg4[%c0_256, %c2_257, %c0_258, %c0_259] : memref<1x8x8x8xf32, #tpu.memory_space<vmem>>, vector<1x1x8x8xf32>
    %197 = vector.shape_cast %196 : vector<1x1x8x8xf32> to vector<8x8xf32>
    %198 = vector.shape_cast %195 : vector<8x8xf32> to vector<1x1x8x8xf32>
    tpu.vector_store %arg4[%c0_256, %c2_257, %c0_258, %c0_259], %198 {strides = array<i32>} : memref<1x8x8x8xf32, #tpu.memory_space<vmem>>, vector<1x1x8x8xf32>,
    %cst_260 = arith.constant dense<0.000000e+00> : vector<8xf32>
    %199 = vector.multi_reduction <add>, %195, %cst_260 [0] : vector<8x8xf32> to vector<8xf32>
    %200 = vector.shape_cast %199 : vector<8xf32> to vector<1x8xf32>
    %201 = arith.addf %133, %200 : vector<1x8xf32>
    %202 = arith.mulf %195, %195 : vector<8x8xf32>
    %cst_261 = arith.constant dense<0.000000e+00> : vector<8xf32>
    %203 = vector.multi_reduction <add>, %202, %cst_261 [0] : vector<8x8xf32> to vector<8xf32>
    %204 = vector.shape_cast %203 : vector<8xf32> to vector<1x8xf32>
    %205 = arith.addf %137, %204 : vector<1x8xf32>
    %cst_262 = arith.constant 0.000000e+00 : f32
    %206 = vector.broadcast %cst_262 : f32 to vector<8x8xf32>
    %c0_263 = arith.constant 0 : index
    %c0_264 = arith.constant 0 : index
    %c3_265 = arith.constant 3 : index
    %c0_266 = arith.constant 0 : index
    %c0_267 = arith.constant 0 : index
    %207 = vector.load %arg1[%c0_263, %c0_264, %c3_265, %c0_266, %c0_267] : memref<1x4x9x9x4xf32, #tpu.memory_space<vmem>>, vector<1x1x1x8x4xf32>
    %208 = vector.shape_cast %207 : vector<1x1x1x8x4xf32> to vector<8x4xf32>
    %c0_268 = arith.constant 0 : index
    %c0_269 = arith.constant 0 : index
    %c0_270 = arith.constant 0 : index
    %209 = vector.load %arg2[%c0_268, %c0_269, %c0_270] : memref<9x4x8xf32, #tpu.memory_space<vmem>>, vector<1x4x8xf32>
    %210 = vector.shape_cast %209 : vector<1x4x8xf32> to vector<4x8xf32>
    %cst_271 = arith.constant dense<0.000000e+00> : vector<8x8xf32>
    %211 = tpu.matmul %208, %210, %cst_271 {dimension_numbers = #tpu.dot_dimension_numbers<[1], [0], [0], [1], [0, 0, 1, 1], [], []>} : vector<8x4xf32>, vector<4x8xf32>, vector<8x8xf32> -> vector<8x8xf32>
    %212 = arith.addf %206, %211 : vector<8x8xf32>
    %c0_272 = arith.constant 0 : index
    %c1_273 = arith.constant 1 : index
    %c3_274 = arith.constant 3 : index
    %c0_275 = arith.constant 0 : index
    %c0_276 = arith.constant 0 : index
    %213 = vector.load %arg1[%c0_272, %c1_273, %c3_274, %c0_275, %c0_276] : memref<1x4x9x9x4xf32, #tpu.memory_space<vmem>>, vector<1x1x1x8x4xf32>
    %214 = vector.shape_cast %213 : vector<1x1x1x8x4xf32> to vector<8x4xf32>
    %c1_277 = arith.constant 1 : index
    %c0_278 = arith.constant 0 : index
    %c0_279 = arith.constant 0 : index
    %215 = vector.load %arg2[%c1_277, %c0_278, %c0_279] : memref<9x4x8xf32, #tpu.memory_space<vmem>>, vector<1x4x8xf32>
    %216 = vector.shape_cast %215 : vector<1x4x8xf32> to vector<4x8xf32>
    %cst_280 = arith.constant dense<0.000000e+00> : vector<8x8xf32>
    %217 = tpu.matmul %214, %216, %cst_280 {dimension_numbers = #tpu.dot_dimension_numbers<[1], [0], [0], [1], [0, 0, 1, 1], [], []>} : vector<8x4xf32>, vector<4x8xf32>, vector<8x8xf32> -> vector<8x8xf32>
    %218 = arith.addf %212, %217 : vector<8x8xf32>
    %c0_281 = arith.constant 0 : index
    %c0_282 = arith.constant 0 : index
    %c3_283 = arith.constant 3 : index
    %c1_284 = arith.constant 1 : index
    %c0_285 = arith.constant 0 : index
    %219 = vector.load %arg1[%c0_281, %c0_282, %c3_283, %c1_284, %c0_285] : memref<1x4x9x9x4xf32, #tpu.memory_space<vmem>>, vector<1x1x1x8x4xf32>
    %220 = vector.shape_cast %219 : vector<1x1x1x8x4xf32> to vector<8x4xf32>
    %c2_286 = arith.constant 2 : index
    %c0_287 = arith.constant 0 : index
    %c0_288 = arith.constant 0 : index
    %221 = vector.load %arg2[%c2_286, %c0_287, %c0_288] : memref<9x4x8xf32, #tpu.memory_space<vmem>>, vector<1x4x8xf32>
    %222 = vector.shape_cast %221 : vector<1x4x8xf32> to vector<4x8xf32>
    %cst_289 = arith.constant dense<0.000000e+00> : vector<8x8xf32>
    %223 = tpu.matmul %220, %222, %cst_289 {dimension_numbers = #tpu.dot_dimension_numbers<[1], [0], [0], [1], [0, 0, 1, 1], [], []>} : vector<8x4xf32>, vector<4x8xf32>, vector<8x8xf32> -> vector<8x8xf32>
    %224 = arith.addf %218, %223 : vector<8x8xf32>
    %c0_290 = arith.constant 0 : index
    %c2_291 = arith.constant 2 : index
    %c3_292 = arith.constant 3 : index
    %c0_293 = arith.constant 0 : index
    %c0_294 = arith.constant 0 : index
    %225 = vector.load %arg1[%c0_290, %c2_291, %c3_292, %c0_293, %c0_294] : memref<1x4x9x9x4xf32, #tpu.memory_space<vmem>>, vector<1x1x1x8x4xf32>
    %226 = vector.shape_cast %225 : vector<1x1x1x8x4xf32> to vector<8x4xf32>
    %c3_295 = arith.constant 3 : index
    %c0_296 = arith.constant 0 : index
    %c0_297 = arith.constant 0 : index
    %227 = vector.load %arg2[%c3_295, %c0_296, %c0_297] : memref<9x4x8xf32, #tpu.memory_space<vmem>>, vector<1x4x8xf32>
    %228 = vector.shape_cast %227 : vector<1x4x8xf32> to vector<4x8xf32>
    %cst_298 = arith.constant dense<0.000000e+00> : vector<8x8xf32>
    %229 = tpu.matmul %226, %228, %cst_298 {dimension_numbers = #tpu.dot_dimension_numbers<[1], [0], [0], [1], [0, 0, 1, 1], [], []>} : vector<8x4xf32>, vector<4x8xf32>, vector<8x8xf32> -> vector<8x8xf32>
    %230 = arith.addf %224, %229 : vector<8x8xf32>
    %c0_299 = arith.constant 0 : index
    %c3_300 = arith.constant 3 : index
    %c3_301 = arith.constant 3 : index
    %c0_302 = arith.constant 0 : index
    %c0_303 = arith.constant 0 : index
    %231 = vector.load %arg1[%c0_299, %c3_300, %c3_301, %c0_302, %c0_303] : memref<1x4x9x9x4xf32, #tpu.memory_space<vmem>>, vector<1x1x1x8x4xf32>
    %232 = vector.shape_cast %231 : vector<1x1x1x8x4xf32> to vector<8x4xf32>
    %c4_304 = arith.constant 4 : index
    %c0_305 = arith.constant 0 : index
    %c0_306 = arith.constant 0 : index
    %233 = vector.load %arg2[%c4_304, %c0_305, %c0_306] : memref<9x4x8xf32, #tpu.memory_space<vmem>>, vector<1x4x8xf32>
    %234 = vector.shape_cast %233 : vector<1x4x8xf32> to vector<4x8xf32>
    %cst_307 = arith.constant dense<0.000000e+00> : vector<8x8xf32>
    %235 = tpu.matmul %232, %234, %cst_307 {dimension_numbers = #tpu.dot_dimension_numbers<[1], [0], [0], [1], [0, 0, 1, 1], [], []>} : vector<8x4xf32>, vector<4x8xf32>, vector<8x8xf32> -> vector<8x8xf32>
    %236 = arith.addf %230, %235 : vector<8x8xf32>
    %c0_308 = arith.constant 0 : index
    %c2_309 = arith.constant 2 : index
    %c3_310 = arith.constant 3 : index
    %c1_311 = arith.constant 1 : index
    %c0_312 = arith.constant 0 : index
    %237 = vector.load %arg1[%c0_308, %c2_309, %c3_310, %c1_311, %c0_312] : memref<1x4x9x9x4xf32, #tpu.memory_space<vmem>>, vector<1x1x1x8x4xf32>
    %238 = vector.shape_cast %237 : vector<1x1x1x8x4xf32> to vector<8x4xf32>
    %c5_313 = arith.constant 5 : index
    %c0_314 = arith.constant 0 : index
    %c0_315 = arith.constant 0 : index
    %239 = vector.load %arg2[%c5_313, %c0_314, %c0_315] : memref<9x4x8xf32, #tpu.memory_space<vmem>>, vector<1x4x8xf32>
    %240 = vector.shape_cast %239 : vector<1x4x8xf32> to vector<4x8xf32>
    %cst_316 = arith.constant dense<0.000000e+00> : vector<8x8xf32>
    %241 = tpu.matmul %238, %240, %cst_316 {dimension_numbers = #tpu.dot_dimension_numbers<[1], [0], [0], [1], [0, 0, 1, 1], [], []>} : vector<8x4xf32>, vector<4x8xf32>, vector<8x8xf32> -> vector<8x8xf32>
    %242 = arith.addf %236, %241 : vector<8x8xf32>
    %c0_317 = arith.constant 0 : index
    %c0_318 = arith.constant 0 : index
    %c4_319 = arith.constant 4 : index
    %c0_320 = arith.constant 0 : index
    %c0_321 = arith.constant 0 : index
    %243 = vector.load %arg1[%c0_317, %c0_318, %c4_319, %c0_320, %c0_321] : memref<1x4x9x9x4xf32, #tpu.memory_space<vmem>>, vector<1x1x1x8x4xf32>
    %244 = vector.shape_cast %243 : vector<1x1x1x8x4xf32> to vector<8x4xf32>
    %c6_322 = arith.constant 6 : index
    %c0_323 = arith.constant 0 : index
    %c0_324 = arith.constant 0 : index
    %245 = vector.load %arg2[%c6_322, %c0_323, %c0_324] : memref<9x4x8xf32, #tpu.memory_space<vmem>>, vector<1x4x8xf32>
    %246 = vector.shape_cast %245 : vector<1x4x8xf32> to vector<4x8xf32>
    %cst_325 = arith.constant dense<0.000000e+00> : vector<8x8xf32>
    %247 = tpu.matmul %244, %246, %cst_325 {dimension_numbers = #tpu.dot_dimension_numbers<[1], [0], [0], [1], [0, 0, 1, 1], [], []>} : vector<8x4xf32>, vector<4x8xf32>, vector<8x8xf32> -> vector<8x8xf32>
    %248 = arith.addf %242, %247 : vector<8x8xf32>
    %c0_326 = arith.constant 0 : index
    %c1_327 = arith.constant 1 : index
    %c4_328 = arith.constant 4 : index
    %c0_329 = arith.constant 0 : index
    %c0_330 = arith.constant 0 : index
    %249 = vector.load %arg1[%c0_326, %c1_327, %c4_328, %c0_329, %c0_330] : memref<1x4x9x9x4xf32, #tpu.memory_space<vmem>>, vector<1x1x1x8x4xf32>
    %250 = vector.shape_cast %249 : vector<1x1x1x8x4xf32> to vector<8x4xf32>
    %c7_331 = arith.constant 7 : index
    %c0_332 = arith.constant 0 : index
    %c0_333 = arith.constant 0 : index
    %251 = vector.load %arg2[%c7_331, %c0_332, %c0_333] : memref<9x4x8xf32, #tpu.memory_space<vmem>>, vector<1x4x8xf32>
    %252 = vector.shape_cast %251 : vector<1x4x8xf32> to vector<4x8xf32>
    %cst_334 = arith.constant dense<0.000000e+00> : vector<8x8xf32>
    %253 = tpu.matmul %250, %252, %cst_334 {dimension_numbers = #tpu.dot_dimension_numbers<[1], [0], [0], [1], [0, 0, 1, 1], [], []>} : vector<8x4xf32>, vector<4x8xf32>, vector<8x8xf32> -> vector<8x8xf32>
    %254 = arith.addf %248, %253 : vector<8x8xf32>
    %c0_335 = arith.constant 0 : index
    %c0_336 = arith.constant 0 : index
    %c4_337 = arith.constant 4 : index
    %c1_338 = arith.constant 1 : index
    %c0_339 = arith.constant 0 : index
    %255 = vector.load %arg1[%c0_335, %c0_336, %c4_337, %c1_338, %c0_339] : memref<1x4x9x9x4xf32, #tpu.memory_space<vmem>>, vector<1x1x1x8x4xf32>
    %256 = vector.shape_cast %255 : vector<1x1x1x8x4xf32> to vector<8x4xf32>
    %c8_340 = arith.constant 8 : index
    %c0_341 = arith.constant 0 : index
    %c0_342 = arith.constant 0 : index
    %257 = vector.load %arg2[%c8_340, %c0_341, %c0_342] : memref<9x4x8xf32, #tpu.memory_space<vmem>>, vector<1x4x8xf32>
    %258 = vector.shape_cast %257 : vector<1x4x8xf32> to vector<4x8xf32>
    %cst_343 = arith.constant dense<0.000000e+00> : vector<8x8xf32>
    %259 = tpu.matmul %256, %258, %cst_343 {dimension_numbers = #tpu.dot_dimension_numbers<[1], [0], [0], [1], [0, 0, 1, 1], [], []>} : vector<8x4xf32>, vector<4x8xf32>, vector<8x8xf32> -> vector<8x8xf32>
    %260 = arith.addf %254, %259 : vector<8x8xf32>
    %c0_344 = arith.constant 0 : index
    %c0_345 = arith.constant 0 : index
    %261 = vector.load %arg3[%c0_344, %c0_345] : memref<1x8xf32, #tpu.memory_space<vmem>>, vector<1x8xf32>
    %262 = vector.broadcast %261 : vector<1x8xf32> to vector<8x8xf32>
    %263 = arith.addf %260, %262 : vector<8x8xf32>
    %c0_346 = arith.constant 0 : index
    %c3_347 = arith.constant 3 : index
    %c0_348 = arith.constant 0 : index
    %c0_349 = arith.constant 0 : index
    %264 = vector.load %arg4[%c0_346, %c3_347, %c0_348, %c0_349] : memref<1x8x8x8xf32, #tpu.memory_space<vmem>>, vector<1x1x8x8xf32>
    %265 = vector.shape_cast %264 : vector<1x1x8x8xf32> to vector<8x8xf32>
    %266 = vector.shape_cast %263 : vector<8x8xf32> to vector<1x1x8x8xf32>
    tpu.vector_store %arg4[%c0_346, %c3_347, %c0_348, %c0_349], %266 {strides = array<i32>} : memref<1x8x8x8xf32, #tpu.memory_space<vmem>>, vector<1x1x8x8xf32>,
    %cst_350 = arith.constant dense<0.000000e+00> : vector<8xf32>
    %267 = vector.multi_reduction <add>, %263, %cst_350 [0] : vector<8x8xf32> to vector<8xf32>
    %268 = vector.shape_cast %267 : vector<8xf32> to vector<1x8xf32>
    %269 = arith.addf %201, %268 : vector<1x8xf32>
    %270 = arith.mulf %263, %263 : vector<8x8xf32>
    %cst_351 = arith.constant dense<0.000000e+00> : vector<8xf32>
    %271 = vector.multi_reduction <add>, %270, %cst_351 [0] : vector<8x8xf32> to vector<8xf32>
    %272 = vector.shape_cast %271 : vector<8xf32> to vector<1x8xf32>
    %273 = arith.addf %205, %272 : vector<1x8xf32>
    %cst_352 = arith.constant 0.000000e+00 : f32
    %274 = vector.broadcast %cst_352 : f32 to vector<8x8xf32>
    %c0_353 = arith.constant 0 : index
    %c0_354 = arith.constant 0 : index
    %c4_355 = arith.constant 4 : index
    %c0_356 = arith.constant 0 : index
    %c0_357 = arith.constant 0 : index
    %275 = vector.load %arg1[%c0_353, %c0_354, %c4_355, %c0_356, %c0_357] : memref<1x4x9x9x4xf32, #tpu.memory_space<vmem>>, vector<1x1x1x8x4xf32>
    %276 = vector.shape_cast %275 : vector<1x1x1x8x4xf32> to vector<8x4xf32>
    %c0_358 = arith.constant 0 : index
    %c0_359 = arith.constant 0 : index
    %c0_360 = arith.constant 0 : index
    %277 = vector.load %arg2[%c0_358, %c0_359, %c0_360] : memref<9x4x8xf32, #tpu.memory_space<vmem>>, vector<1x4x8xf32>
    %278 = vector.shape_cast %277 : vector<1x4x8xf32> to vector<4x8xf32>
    %cst_361 = arith.constant dense<0.000000e+00> : vector<8x8xf32>
    %279 = tpu.matmul %276, %278, %cst_361 {dimension_numbers = #tpu.dot_dimension_numbers<[1], [0], [0], [1], [0, 0, 1, 1], [], []>} : vector<8x4xf32>, vector<4x8xf32>, vector<8x8xf32> -> vector<8x8xf32>
    %280 = arith.addf %274, %279 : vector<8x8xf32>
    %c0_362 = arith.constant 0 : index
    %c1_363 = arith.constant 1 : index
    %c4_364 = arith.constant 4 : index
    %c0_365 = arith.constant 0 : index
    %c0_366 = arith.constant 0 : index
    %281 = vector.load %arg1[%c0_362, %c1_363, %c4_364, %c0_365, %c0_366] : memref<1x4x9x9x4xf32, #tpu.memory_space<vmem>>, vector<1x1x1x8x4xf32>
    %282 = vector.shape_cast %281 : vector<1x1x1x8x4xf32> to vector<8x4xf32>
    %c1_367 = arith.constant 1 : index
    %c0_368 = arith.constant 0 : index
    %c0_369 = arith.constant 0 : index
    %283 = vector.load %arg2[%c1_367, %c0_368, %c0_369] : memref<9x4x8xf32, #tpu.memory_space<vmem>>, vector<1x4x8xf32>
    %284 = vector.shape_cast %283 : vector<1x4x8xf32> to vector<4x8xf32>
    %cst_370 = arith.constant dense<0.000000e+00> : vector<8x8xf32>
    %285 = tpu.matmul %282, %284, %cst_370 {dimension_numbers = #tpu.dot_dimension_numbers<[1], [0], [0], [1], [0, 0, 1, 1], [], []>} : vector<8x4xf32>, vector<4x8xf32>, vector<8x8xf32> -> vector<8x8xf32>
    %286 = arith.addf %280, %285 : vector<8x8xf32>
    %c0_371 = arith.constant 0 : index
    %c0_372 = arith.constant 0 : index
    %c4_373 = arith.constant 4 : index
    %c1_374 = arith.constant 1 : index
    %c0_375 = arith.constant 0 : index
    %287 = vector.load %arg1[%c0_371, %c0_372, %c4_373, %c1_374, %c0_375] : memref<1x4x9x9x4xf32, #tpu.memory_space<vmem>>, vector<1x1x1x8x4xf32>
    %288 = vector.shape_cast %287 : vector<1x1x1x8x4xf32> to vector<8x4xf32>
    %c2_376 = arith.constant 2 : index
    %c0_377 = arith.constant 0 : index
    %c0_378 = arith.constant 0 : index
    %289 = vector.load %arg2[%c2_376, %c0_377, %c0_378] : memref<9x4x8xf32, #tpu.memory_space<vmem>>, vector<1x4x8xf32>
    %290 = vector.shape_cast %289 : vector<1x4x8xf32> to vector<4x8xf32>
    %cst_379 = arith.constant dense<0.000000e+00> : vector<8x8xf32>
    %291 = tpu.matmul %288, %290, %cst_379 {dimension_numbers = #tpu.dot_dimension_numbers<[1], [0], [0], [1], [0, 0, 1, 1], [], []>} : vector<8x4xf32>, vector<4x8xf32>, vector<8x8xf32> -> vector<8x8xf32>
    %292 = arith.addf %286, %291 : vector<8x8xf32>
    %c0_380 = arith.constant 0 : index
    %c2_381 = arith.constant 2 : index
    %c4_382 = arith.constant 4 : index
    %c0_383 = arith.constant 0 : index
    %c0_384 = arith.constant 0 : index
    %293 = vector.load %arg1[%c0_380, %c2_381, %c4_382, %c0_383, %c0_384] : memref<1x4x9x9x4xf32, #tpu.memory_space<vmem>>, vector<1x1x1x8x4xf32>
    %294 = vector.shape_cast %293 : vector<1x1x1x8x4xf32> to vector<8x4xf32>
    %c3_385 = arith.constant 3 : index
    %c0_386 = arith.constant 0 : index
    %c0_387 = arith.constant 0 : index
    %295 = vector.load %arg2[%c3_385, %c0_386, %c0_387] : memref<9x4x8xf32, #tpu.memory_space<vmem>>, vector<1x4x8xf32>
    %296 = vector.shape_cast %295 : vector<1x4x8xf32> to vector<4x8xf32>
    %cst_388 = arith.constant dense<0.000000e+00> : vector<8x8xf32>
    %297 = tpu.matmul %294, %296, %cst_388 {dimension_numbers = #tpu.dot_dimension_numbers<[1], [0], [0], [1], [0, 0, 1, 1], [], []>} : vector<8x4xf32>, vector<4x8xf32>, vector<8x8xf32> -> vector<8x8xf32>
    %298 = arith.addf %292, %297 : vector<8x8xf32>
    %c0_389 = arith.constant 0 : index
    %c3_390 = arith.constant 3 : index
    %c4_391 = arith.constant 4 : index
    %c0_392 = arith.constant 0 : index
    %c0_393 = arith.constant 0 : index
    %299 = vector.load %arg1[%c0_389, %c3_390, %c4_391, %c0_392, %c0_393] : memref<1x4x9x9x4xf32, #tpu.memory_space<vmem>>, vector<1x1x1x8x4xf32>
    %300 = vector.shape_cast %299 : vector<1x1x1x8x4xf32> to vector<8x4xf32>
    %c4_394 = arith.constant 4 : index
    %c0_395 = arith.constant 0 : index
    %c0_396 = arith.constant 0 : index
    %301 = vector.load %arg2[%c4_394, %c0_395, %c0_396] : memref<9x4x8xf32, #tpu.memory_space<vmem>>, vector<1x4x8xf32>
    %302 = vector.shape_cast %301 : vector<1x4x8xf32> to vector<4x8xf32>
    %cst_397 = arith.constant dense<0.000000e+00> : vector<8x8xf32>
    %303 = tpu.matmul %300, %302, %cst_397 {dimension_numbers = #tpu.dot_dimension_numbers<[1], [0], [0], [1], [0, 0, 1, 1], [], []>} : vector<8x4xf32>, vector<4x8xf32>, vector<8x8xf32> -> vector<8x8xf32>
    %304 = arith.addf %298, %303 : vector<8x8xf32>
    %c0_398 = arith.constant 0 : index
    %c2_399 = arith.constant 2 : index
    %c4_400 = arith.constant 4 : index
    %c1_401 = arith.constant 1 : index
    %c0_402 = arith.constant 0 : index
    %305 = vector.load %arg1[%c0_398, %c2_399, %c4_400, %c1_401, %c0_402] : memref<1x4x9x9x4xf32, #tpu.memory_space<vmem>>, vector<1x1x1x8x4xf32>
    %306 = vector.shape_cast %305 : vector<1x1x1x8x4xf32> to vector<8x4xf32>
    %c5_403 = arith.constant 5 : index
    %c0_404 = arith.constant 0 : index
    %c0_405 = arith.constant 0 : index
    %307 = vector.load %arg2[%c5_403, %c0_404, %c0_405] : memref<9x4x8xf32, #tpu.memory_space<vmem>>, vector<1x4x8xf32>
    %308 = vector.shape_cast %307 : vector<1x4x8xf32> to vector<4x8xf32>
    %cst_406 = arith.constant dense<0.000000e+00> : vector<8x8xf32>
    %309 = tpu.matmul %306, %308, %cst_406 {dimension_numbers = #tpu.dot_dimension_numbers<[1], [0], [0], [1], [0, 0, 1, 1], [], []>} : vector<8x4xf32>, vector<4x8xf32>, vector<8x8xf32> -> vector<8x8xf32>
    %310 = arith.addf %304, %309 : vector<8x8xf32>
    %c0_407 = arith.constant 0 : index
    %c0_408 = arith.constant 0 : index
    %c5_409 = arith.constant 5 : index
    %c0_410 = arith.constant 0 : index
    %c0_411 = arith.constant 0 : index
    %311 = vector.load %arg1[%c0_407, %c0_408, %c5_409, %c0_410, %c0_411] : memref<1x4x9x9x4xf32, #tpu.memory_space<vmem>>, vector<1x1x1x8x4xf32>
    %312 = vector.shape_cast %311 : vector<1x1x1x8x4xf32> to vector<8x4xf32>
    %c6_412 = arith.constant 6 : index
    %c0_413 = arith.constant 0 : index
    %c0_414 = arith.constant 0 : index
    %313 = vector.load %arg2[%c6_412, %c0_413, %c0_414] : memref<9x4x8xf32, #tpu.memory_space<vmem>>, vector<1x4x8xf32>
    %314 = vector.shape_cast %313 : vector<1x4x8xf32> to vector<4x8xf32>
    %cst_415 = arith.constant dense<0.000000e+00> : vector<8x8xf32>
    %315 = tpu.matmul %312, %314, %cst_415 {dimension_numbers = #tpu.dot_dimension_numbers<[1], [0], [0], [1], [0, 0, 1, 1], [], []>} : vector<8x4xf32>, vector<4x8xf32>, vector<8x8xf32> -> vector<8x8xf32>
    %316 = arith.addf %310, %315 : vector<8x8xf32>
    %c0_416 = arith.constant 0 : index
    %c1_417 = arith.constant 1 : index
    %c5_418 = arith.constant 5 : index
    %c0_419 = arith.constant 0 : index
    %c0_420 = arith.constant 0 : index
    %317 = vector.load %arg1[%c0_416, %c1_417, %c5_418, %c0_419, %c0_420] : memref<1x4x9x9x4xf32, #tpu.memory_space<vmem>>, vector<1x1x1x8x4xf32>
    %318 = vector.shape_cast %317 : vector<1x1x1x8x4xf32> to vector<8x4xf32>
    %c7_421 = arith.constant 7 : index
    %c0_422 = arith.constant 0 : index
    %c0_423 = arith.constant 0 : index
    %319 = vector.load %arg2[%c7_421, %c0_422, %c0_423] : memref<9x4x8xf32, #tpu.memory_space<vmem>>, vector<1x4x8xf32>
    %320 = vector.shape_cast %319 : vector<1x4x8xf32> to vector<4x8xf32>
    %cst_424 = arith.constant dense<0.000000e+00> : vector<8x8xf32>
    %321 = tpu.matmul %318, %320, %cst_424 {dimension_numbers = #tpu.dot_dimension_numbers<[1], [0], [0], [1], [0, 0, 1, 1], [], []>} : vector<8x4xf32>, vector<4x8xf32>, vector<8x8xf32> -> vector<8x8xf32>
    %322 = arith.addf %316, %321 : vector<8x8xf32>
    %c0_425 = arith.constant 0 : index
    %c0_426 = arith.constant 0 : index
    %c5_427 = arith.constant 5 : index
    %c1_428 = arith.constant 1 : index
    %c0_429 = arith.constant 0 : index
    %323 = vector.load %arg1[%c0_425, %c0_426, %c5_427, %c1_428, %c0_429] : memref<1x4x9x9x4xf32, #tpu.memory_space<vmem>>, vector<1x1x1x8x4xf32>
    %324 = vector.shape_cast %323 : vector<1x1x1x8x4xf32> to vector<8x4xf32>
    %c8_430 = arith.constant 8 : index
    %c0_431 = arith.constant 0 : index
    %c0_432 = arith.constant 0 : index
    %325 = vector.load %arg2[%c8_430, %c0_431, %c0_432] : memref<9x4x8xf32, #tpu.memory_space<vmem>>, vector<1x4x8xf32>
    %326 = vector.shape_cast %325 : vector<1x4x8xf32> to vector<4x8xf32>
    %cst_433 = arith.constant dense<0.000000e+00> : vector<8x8xf32>
    %327 = tpu.matmul %324, %326, %cst_433 {dimension_numbers = #tpu.dot_dimension_numbers<[1], [0], [0], [1], [0, 0, 1, 1], [], []>} : vector<8x4xf32>, vector<4x8xf32>, vector<8x8xf32> -> vector<8x8xf32>
    %328 = arith.addf %322, %327 : vector<8x8xf32>
    %c0_434 = arith.constant 0 : index
    %c0_435 = arith.constant 0 : index
    %329 = vector.load %arg3[%c0_434, %c0_435] : memref<1x8xf32, #tpu.memory_space<vmem>>, vector<1x8xf32>
    %330 = vector.broadcast %329 : vector<1x8xf32> to vector<8x8xf32>
    %331 = arith.addf %328, %330 : vector<8x8xf32>
    %c0_436 = arith.constant 0 : index
    %c4_437 = arith.constant 4 : index
    %c0_438 = arith.constant 0 : index
    %c0_439 = arith.constant 0 : index
    %332 = vector.load %arg4[%c0_436, %c4_437, %c0_438, %c0_439] : memref<1x8x8x8xf32, #tpu.memory_space<vmem>>, vector<1x1x8x8xf32>
    %333 = vector.shape_cast %332 : vector<1x1x8x8xf32> to vector<8x8xf32>
    %334 = vector.shape_cast %331 : vector<8x8xf32> to vector<1x1x8x8xf32>
    tpu.vector_store %arg4[%c0_436, %c4_437, %c0_438, %c0_439], %334 {strides = array<i32>} : memref<1x8x8x8xf32, #tpu.memory_space<vmem>>, vector<1x1x8x8xf32>,
    %cst_440 = arith.constant dense<0.000000e+00> : vector<8xf32>
    %335 = vector.multi_reduction <add>, %331, %cst_440 [0] : vector<8x8xf32> to vector<8xf32>
    %336 = vector.shape_cast %335 : vector<8xf32> to vector<1x8xf32>
    %337 = arith.addf %269, %336 : vector<1x8xf32>
    %338 = arith.mulf %331, %331 : vector<8x8xf32>
    %cst_441 = arith.constant dense<0.000000e+00> : vector<8xf32>
    %339 = vector.multi_reduction <add>, %338, %cst_441 [0] : vector<8x8xf32> to vector<8xf32>
    %340 = vector.shape_cast %339 : vector<8xf32> to vector<1x8xf32>
    %341 = arith.addf %273, %340 : vector<1x8xf32>
    %cst_442 = arith.constant 0.000000e+00 : f32
    %342 = vector.broadcast %cst_442 : f32 to vector<8x8xf32>
    %c0_443 = arith.constant 0 : index
    %c0_444 = arith.constant 0 : index
    %c5_445 = arith.constant 5 : index
    %c0_446 = arith.constant 0 : index
    %c0_447 = arith.constant 0 : index
    %343 = vector.load %arg1[%c0_443, %c0_444, %c5_445, %c0_446, %c0_447] : memref<1x4x9x9x4xf32, #tpu.memory_space<vmem>>, vector<1x1x1x8x4xf32>
    %344 = vector.shape_cast %343 : vector<1x1x1x8x4xf32> to vector<8x4xf32>
    %c0_448 = arith.constant 0 : index
    %c0_449 = arith.constant 0 : index
    %c0_450 = arith.constant 0 : index
    %345 = vector.load %arg2[%c0_448, %c0_449, %c0_450] : memref<9x4x8xf32, #tpu.memory_space<vmem>>, vector<1x4x8xf32>
    %346 = vector.shape_cast %345 : vector<1x4x8xf32> to vector<4x8xf32>
    %cst_451 = arith.constant dense<0.000000e+00> : vector<8x8xf32>
    %347 = tpu.matmul %344, %346, %cst_451 {dimension_numbers = #tpu.dot_dimension_numbers<[1], [0], [0], [1], [0, 0, 1, 1], [], []>} : vector<8x4xf32>, vector<4x8xf32>, vector<8x8xf32> -> vector<8x8xf32>
    %348 = arith.addf %342, %347 : vector<8x8xf32>
    %c0_452 = arith.constant 0 : index
    %c1_453 = arith.constant 1 : index
    %c5_454 = arith.constant 5 : index
    %c0_455 = arith.constant 0 : index
    %c0_456 = arith.constant 0 : index
    %349 = vector.load %arg1[%c0_452, %c1_453, %c5_454, %c0_455, %c0_456] : memref<1x4x9x9x4xf32, #tpu.memory_space<vmem>>, vector<1x1x1x8x4xf32>
    %350 = vector.shape_cast %349 : vector<1x1x1x8x4xf32> to vector<8x4xf32>
    %c1_457 = arith.constant 1 : index
    %c0_458 = arith.constant 0 : index
    %c0_459 = arith.constant 0 : index
    %351 = vector.load %arg2[%c1_457, %c0_458, %c0_459] : memref<9x4x8xf32, #tpu.memory_space<vmem>>, vector<1x4x8xf32>
    %352 = vector.shape_cast %351 : vector<1x4x8xf32> to vector<4x8xf32>
    %cst_460 = arith.constant dense<0.000000e+00> : vector<8x8xf32>
    %353 = tpu.matmul %350, %352, %cst_460 {dimension_numbers = #tpu.dot_dimension_numbers<[1], [0], [0], [1], [0, 0, 1, 1], [], []>} : vector<8x4xf32>, vector<4x8xf32>, vector<8x8xf32> -> vector<8x8xf32>
    %354 = arith.addf %348, %353 : vector<8x8xf32>
    %c0_461 = arith.constant 0 : index
    %c0_462 = arith.constant 0 : index
    %c5_463 = arith.constant 5 : index
    %c1_464 = arith.constant 1 : index
    %c0_465 = arith.constant 0 : index
    %355 = vector.load %arg1[%c0_461, %c0_462, %c5_463, %c1_464, %c0_465] : memref<1x4x9x9x4xf32, #tpu.memory_space<vmem>>, vector<1x1x1x8x4xf32>
    %356 = vector.shape_cast %355 : vector<1x1x1x8x4xf32> to vector<8x4xf32>
    %c2_466 = arith.constant 2 : index
    %c0_467 = arith.constant 0 : index
    %c0_468 = arith.constant 0 : index
    %357 = vector.load %arg2[%c2_466, %c0_467, %c0_468] : memref<9x4x8xf32, #tpu.memory_space<vmem>>, vector<1x4x8xf32>
    %358 = vector.shape_cast %357 : vector<1x4x8xf32> to vector<4x8xf32>
    %cst_469 = arith.constant dense<0.000000e+00> : vector<8x8xf32>
    %359 = tpu.matmul %356, %358, %cst_469 {dimension_numbers = #tpu.dot_dimension_numbers<[1], [0], [0], [1], [0, 0, 1, 1], [], []>} : vector<8x4xf32>, vector<4x8xf32>, vector<8x8xf32> -> vector<8x8xf32>
    %360 = arith.addf %354, %359 : vector<8x8xf32>
    %c0_470 = arith.constant 0 : index
    %c2_471 = arith.constant 2 : index
    %c5_472 = arith.constant 5 : index
    %c0_473 = arith.constant 0 : index
    %c0_474 = arith.constant 0 : index
    %361 = vector.load %arg1[%c0_470, %c2_471, %c5_472, %c0_473, %c0_474] : memref<1x4x9x9x4xf32, #tpu.memory_space<vmem>>, vector<1x1x1x8x4xf32>
    %362 = vector.shape_cast %361 : vector<1x1x1x8x4xf32> to vector<8x4xf32>
    %c3_475 = arith.constant 3 : index
    %c0_476 = arith.constant 0 : index
    %c0_477 = arith.constant 0 : index
    %363 = vector.load %arg2[%c3_475, %c0_476, %c0_477] : memref<9x4x8xf32, #tpu.memory_space<vmem>>, vector<1x4x8xf32>
    %364 = vector.shape_cast %363 : vector<1x4x8xf32> to vector<4x8xf32>
    %cst_478 = arith.constant dense<0.000000e+00> : vector<8x8xf32>
    %365 = tpu.matmul %362, %364, %cst_478 {dimension_numbers = #tpu.dot_dimension_numbers<[1], [0], [0], [1], [0, 0, 1, 1], [], []>} : vector<8x4xf32>, vector<4x8xf32>, vector<8x8xf32> -> vector<8x8xf32>
    %366 = arith.addf %360, %365 : vector<8x8xf32>
    %c0_479 = arith.constant 0 : index
    %c3_480 = arith.constant 3 : index
    %c5_481 = arith.constant 5 : index
    %c0_482 = arith.constant 0 : index
    %c0_483 = arith.constant 0 : index
    %367 = vector.load %arg1[%c0_479, %c3_480, %c5_481, %c0_482, %c0_483] : memref<1x4x9x9x4xf32, #tpu.memory_space<vmem>>, vector<1x1x1x8x4xf32>
    %368 = vector.shape_cast %367 : vector<1x1x1x8x4xf32> to vector<8x4xf32>
    %c4_484 = arith.constant 4 : index
    %c0_485 = arith.constant 0 : index
    %c0_486 = arith.constant 0 : index
    %369 = vector.load %arg2[%c4_484, %c0_485, %c0_486] : memref<9x4x8xf32, #tpu.memory_space<vmem>>, vector<1x4x8xf32>
    %370 = vector.shape_cast %369 : vector<1x4x8xf32> to vector<4x8xf32>
    %cst_487 = arith.constant dense<0.000000e+00> : vector<8x8xf32>
    %371 = tpu.matmul %368, %370, %cst_487 {dimension_numbers = #tpu.dot_dimension_numbers<[1], [0], [0], [1], [0, 0, 1, 1], [], []>} : vector<8x4xf32>, vector<4x8xf32>, vector<8x8xf32> -> vector<8x8xf32>
    %372 = arith.addf %366, %371 : vector<8x8xf32>
    %c0_488 = arith.constant 0 : index
    %c2_489 = arith.constant 2 : index
    %c5_490 = arith.constant 5 : index
    %c1_491 = arith.constant 1 : index
    %c0_492 = arith.constant 0 : index
    %373 = vector.load %arg1[%c0_488, %c2_489, %c5_490, %c1_491, %c0_492] : memref<1x4x9x9x4xf32, #tpu.memory_space<vmem>>, vector<1x1x1x8x4xf32>
    %374 = vector.shape_cast %373 : vector<1x1x1x8x4xf32> to vector<8x4xf32>
    %c5_493 = arith.constant 5 : index
    %c0_494 = arith.constant 0 : index
    %c0_495 = arith.constant 0 : index
    %375 = vector.load %arg2[%c5_493, %c0_494, %c0_495] : memref<9x4x8xf32, #tpu.memory_space<vmem>>, vector<1x4x8xf32>
    %376 = vector.shape_cast %375 : vector<1x4x8xf32> to vector<4x8xf32>
    %cst_496 = arith.constant dense<0.000000e+00> : vector<8x8xf32>
    %377 = tpu.matmul %374, %376, %cst_496 {dimension_numbers = #tpu.dot_dimension_numbers<[1], [0], [0], [1], [0, 0, 1, 1], [], []>} : vector<8x4xf32>, vector<4x8xf32>, vector<8x8xf32> -> vector<8x8xf32>
    %378 = arith.addf %372, %377 : vector<8x8xf32>
    %c0_497 = arith.constant 0 : index
    %c0_498 = arith.constant 0 : index
    %c6_499 = arith.constant 6 : index
    %c0_500 = arith.constant 0 : index
    %c0_501 = arith.constant 0 : index
    %379 = vector.load %arg1[%c0_497, %c0_498, %c6_499, %c0_500, %c0_501] : memref<1x4x9x9x4xf32, #tpu.memory_space<vmem>>, vector<1x1x1x8x4xf32>
    %380 = vector.shape_cast %379 : vector<1x1x1x8x4xf32> to vector<8x4xf32>
    %c6_502 = arith.constant 6 : index
    %c0_503 = arith.constant 0 : index
    %c0_504 = arith.constant 0 : index
    %381 = vector.load %arg2[%c6_502, %c0_503, %c0_504] : memref<9x4x8xf32, #tpu.memory_space<vmem>>, vector<1x4x8xf32>
    %382 = vector.shape_cast %381 : vector<1x4x8xf32> to vector<4x8xf32>
    %cst_505 = arith.constant dense<0.000000e+00> : vector<8x8xf32>
    %383 = tpu.matmul %380, %382, %cst_505 {dimension_numbers = #tpu.dot_dimension_numbers<[1], [0], [0], [1], [0, 0, 1, 1], [], []>} : vector<8x4xf32>, vector<4x8xf32>, vector<8x8xf32> -> vector<8x8xf32>
    %384 = arith.addf %378, %383 : vector<8x8xf32>
    %c0_506 = arith.constant 0 : index
    %c1_507 = arith.constant 1 : index
    %c6_508 = arith.constant 6 : index
    %c0_509 = arith.constant 0 : index
    %c0_510 = arith.constant 0 : index
    %385 = vector.load %arg1[%c0_506, %c1_507, %c6_508, %c0_509, %c0_510] : memref<1x4x9x9x4xf32, #tpu.memory_space<vmem>>, vector<1x1x1x8x4xf32>
    %386 = vector.shape_cast %385 : vector<1x1x1x8x4xf32> to vector<8x4xf32>
    %c7_511 = arith.constant 7 : index
    %c0_512 = arith.constant 0 : index
    %c0_513 = arith.constant 0 : index
    %387 = vector.load %arg2[%c7_511, %c0_512, %c0_513] : memref<9x4x8xf32, #tpu.memory_space<vmem>>, vector<1x4x8xf32>
    %388 = vector.shape_cast %387 : vector<1x4x8xf32> to vector<4x8xf32>
    %cst_514 = arith.constant dense<0.000000e+00> : vector<8x8xf32>
    %389 = tpu.matmul %386, %388, %cst_514 {dimension_numbers = #tpu.dot_dimension_numbers<[1], [0], [0], [1], [0, 0, 1, 1], [], []>} : vector<8x4xf32>, vector<4x8xf32>, vector<8x8xf32> -> vector<8x8xf32>
    %390 = arith.addf %384, %389 : vector<8x8xf32>
    %c0_515 = arith.constant 0 : index
    %c0_516 = arith.constant 0 : index
    %c6_517 = arith.constant 6 : index
    %c1_518 = arith.constant 1 : index
    %c0_519 = arith.constant 0 : index
    %391 = vector.load %arg1[%c0_515, %c0_516, %c6_517, %c1_518, %c0_519] : memref<1x4x9x9x4xf32, #tpu.memory_space<vmem>>, vector<1x1x1x8x4xf32>
    %392 = vector.shape_cast %391 : vector<1x1x1x8x4xf32> to vector<8x4xf32>
    %c8_520 = arith.constant 8 : index
    %c0_521 = arith.constant 0 : index
    %c0_522 = arith.constant 0 : index
    %393 = vector.load %arg2[%c8_520, %c0_521, %c0_522] : memref<9x4x8xf32, #tpu.memory_space<vmem>>, vector<1x4x8xf32>
    %394 = vector.shape_cast %393 : vector<1x4x8xf32> to vector<4x8xf32>
    %cst_523 = arith.constant dense<0.000000e+00> : vector<8x8xf32>
    %395 = tpu.matmul %392, %394, %cst_523 {dimension_numbers = #tpu.dot_dimension_numbers<[1], [0], [0], [1], [0, 0, 1, 1], [], []>} : vector<8x4xf32>, vector<4x8xf32>, vector<8x8xf32> -> vector<8x8xf32>
    %396 = arith.addf %390, %395 : vector<8x8xf32>
    %c0_524 = arith.constant 0 : index
    %c0_525 = arith.constant 0 : index
    %397 = vector.load %arg3[%c0_524, %c0_525] : memref<1x8xf32, #tpu.memory_space<vmem>>, vector<1x8xf32>
    %398 = vector.broadcast %397 : vector<1x8xf32> to vector<8x8xf32>
    %399 = arith.addf %396, %398 : vector<8x8xf32>
    %c0_526 = arith.constant 0 : index
    %c5_527 = arith.constant 5 : index
    %c0_528 = arith.constant 0 : index
    %c0_529 = arith.constant 0 : index
    %400 = vector.load %arg4[%c0_526, %c5_527, %c0_528, %c0_529] : memref<1x8x8x8xf32, #tpu.memory_space<vmem>>, vector<1x1x8x8xf32>
    %401 = vector.shape_cast %400 : vector<1x1x8x8xf32> to vector<8x8xf32>
    %402 = vector.shape_cast %399 : vector<8x8xf32> to vector<1x1x8x8xf32>
    tpu.vector_store %arg4[%c0_526, %c5_527, %c0_528, %c0_529], %402 {strides = array<i32>} : memref<1x8x8x8xf32, #tpu.memory_space<vmem>>, vector<1x1x8x8xf32>,
    %cst_530 = arith.constant dense<0.000000e+00> : vector<8xf32>
    %403 = vector.multi_reduction <add>, %399, %cst_530 [0] : vector<8x8xf32> to vector<8xf32>
    %404 = vector.shape_cast %403 : vector<8xf32> to vector<1x8xf32>
    %405 = arith.addf %337, %404 : vector<1x8xf32>
    %406 = arith.mulf %399, %399 : vector<8x8xf32>
    %cst_531 = arith.constant dense<0.000000e+00> : vector<8xf32>
    %407 = vector.multi_reduction <add>, %406, %cst_531 [0] : vector<8x8xf32> to vector<8xf32>
    %408 = vector.shape_cast %407 : vector<8xf32> to vector<1x8xf32>
    %409 = arith.addf %341, %408 : vector<1x8xf32>
    %cst_532 = arith.constant 0.000000e+00 : f32
    %410 = vector.broadcast %cst_532 : f32 to vector<8x8xf32>
    %c0_533 = arith.constant 0 : index
    %c0_534 = arith.constant 0 : index
    %c6_535 = arith.constant 6 : index
    %c0_536 = arith.constant 0 : index
    %c0_537 = arith.constant 0 : index
    %411 = vector.load %arg1[%c0_533, %c0_534, %c6_535, %c0_536, %c0_537] : memref<1x4x9x9x4xf32, #tpu.memory_space<vmem>>, vector<1x1x1x8x4xf32>
    %412 = vector.shape_cast %411 : vector<1x1x1x8x4xf32> to vector<8x4xf32>
    %c0_538 = arith.constant 0 : index
    %c0_539 = arith.constant 0 : index
    %c0_540 = arith.constant 0 : index
    %413 = vector.load %arg2[%c0_538, %c0_539, %c0_540] : memref<9x4x8xf32, #tpu.memory_space<vmem>>, vector<1x4x8xf32>
    %414 = vector.shape_cast %413 : vector<1x4x8xf32> to vector<4x8xf32>
    %cst_541 = arith.constant dense<0.000000e+00> : vector<8x8xf32>
    %415 = tpu.matmul %412, %414, %cst_541 {dimension_numbers = #tpu.dot_dimension_numbers<[1], [0], [0], [1], [0, 0, 1, 1], [], []>} : vector<8x4xf32>, vector<4x8xf32>, vector<8x8xf32> -> vector<8x8xf32>
    %416 = arith.addf %410, %415 : vector<8x8xf32>
    %c0_542 = arith.constant 0 : index
    %c1_543 = arith.constant 1 : index
    %c6_544 = arith.constant 6 : index
    %c0_545 = arith.constant 0 : index
    %c0_546 = arith.constant 0 : index
    %417 = vector.load %arg1[%c0_542, %c1_543, %c6_544, %c0_545, %c0_546] : memref<1x4x9x9x4xf32, #tpu.memory_space<vmem>>, vector<1x1x1x8x4xf32>
    %418 = vector.shape_cast %417 : vector<1x1x1x8x4xf32> to vector<8x4xf32>
    %c1_547 = arith.constant 1 : index
    %c0_548 = arith.constant 0 : index
    %c0_549 = arith.constant 0 : index
    %419 = vector.load %arg2[%c1_547, %c0_548, %c0_549] : memref<9x4x8xf32, #tpu.memory_space<vmem>>, vector<1x4x8xf32>
    %420 = vector.shape_cast %419 : vector<1x4x8xf32> to vector<4x8xf32>
    %cst_550 = arith.constant dense<0.000000e+00> : vector<8x8xf32>
    %421 = tpu.matmul %418, %420, %cst_550 {dimension_numbers = #tpu.dot_dimension_numbers<[1], [0], [0], [1], [0, 0, 1, 1], [], []>} : vector<8x4xf32>, vector<4x8xf32>, vector<8x8xf32> -> vector<8x8xf32>
    %422 = arith.addf %416, %421 : vector<8x8xf32>
    %c0_551 = arith.constant 0 : index
    %c0_552 = arith.constant 0 : index
    %c6_553 = arith.constant 6 : index
    %c1_554 = arith.constant 1 : index
    %c0_555 = arith.constant 0 : index
    %423 = vector.load %arg1[%c0_551, %c0_552, %c6_553, %c1_554, %c0_555] : memref<1x4x9x9x4xf32, #tpu.memory_space<vmem>>, vector<1x1x1x8x4xf32>
    %424 = vector.shape_cast %423 : vector<1x1x1x8x4xf32> to vector<8x4xf32>
    %c2_556 = arith.constant 2 : index
    %c0_557 = arith.constant 0 : index
    %c0_558 = arith.constant 0 : index
    %425 = vector.load %arg2[%c2_556, %c0_557, %c0_558] : memref<9x4x8xf32, #tpu.memory_space<vmem>>, vector<1x4x8xf32>
    %426 = vector.shape_cast %425 : vector<1x4x8xf32> to vector<4x8xf32>
    %cst_559 = arith.constant dense<0.000000e+00> : vector<8x8xf32>
    %427 = tpu.matmul %424, %426, %cst_559 {dimension_numbers = #tpu.dot_dimension_numbers<[1], [0], [0], [1], [0, 0, 1, 1], [], []>} : vector<8x4xf32>, vector<4x8xf32>, vector<8x8xf32> -> vector<8x8xf32>
    %428 = arith.addf %422, %427 : vector<8x8xf32>
    %c0_560 = arith.constant 0 : index
    %c2_561 = arith.constant 2 : index
    %c6_562 = arith.constant 6 : index
    %c0_563 = arith.constant 0 : index
    %c0_564 = arith.constant 0 : index
    %429 = vector.load %arg1[%c0_560, %c2_561, %c6_562, %c0_563, %c0_564] : memref<1x4x9x9x4xf32, #tpu.memory_space<vmem>>, vector<1x1x1x8x4xf32>
    %430 = vector.shape_cast %429 : vector<1x1x1x8x4xf32> to vector<8x4xf32>
    %c3_565 = arith.constant 3 : index
    %c0_566 = arith.constant 0 : index
    %c0_567 = arith.constant 0 : index
    %431 = vector.load %arg2[%c3_565, %c0_566, %c0_567] : memref<9x4x8xf32, #tpu.memory_space<vmem>>, vector<1x4x8xf32>
    %432 = vector.shape_cast %431 : vector<1x4x8xf32> to vector<4x8xf32>
    %cst_568 = arith.constant dense<0.000000e+00> : vector<8x8xf32>
    %433 = tpu.matmul %430, %432, %cst_568 {dimension_numbers = #tpu.dot_dimension_numbers<[1], [0], [0], [1], [0, 0, 1, 1], [], []>} : vector<8x4xf32>, vector<4x8xf32>, vector<8x8xf32> -> vector<8x8xf32>
    %434 = arith.addf %428, %433 : vector<8x8xf32>
    %c0_569 = arith.constant 0 : index
    %c3_570 = arith.constant 3 : index
    %c6_571 = arith.constant 6 : index
    %c0_572 = arith.constant 0 : index
    %c0_573 = arith.constant 0 : index
    %435 = vector.load %arg1[%c0_569, %c3_570, %c6_571, %c0_572, %c0_573] : memref<1x4x9x9x4xf32, #tpu.memory_space<vmem>>, vector<1x1x1x8x4xf32>
    %436 = vector.shape_cast %435 : vector<1x1x1x8x4xf32> to vector<8x4xf32>
    %c4_574 = arith.constant 4 : index
    %c0_575 = arith.constant 0 : index
    %c0_576 = arith.constant 0 : index
    %437 = vector.load %arg2[%c4_574, %c0_575, %c0_576] : memref<9x4x8xf32, #tpu.memory_space<vmem>>, vector<1x4x8xf32>
    %438 = vector.shape_cast %437 : vector<1x4x8xf32> to vector<4x8xf32>
    %cst_577 = arith.constant dense<0.000000e+00> : vector<8x8xf32>
    %439 = tpu.matmul %436, %438, %cst_577 {dimension_numbers = #tpu.dot_dimension_numbers<[1], [0], [0], [1], [0, 0, 1, 1], [], []>} : vector<8x4xf32>, vector<4x8xf32>, vector<8x8xf32> -> vector<8x8xf32>
    %440 = arith.addf %434, %439 : vector<8x8xf32>
    %c0_578 = arith.constant 0 : index
    %c2_579 = arith.constant 2 : index
    %c6_580 = arith.constant 6 : index
    %c1_581 = arith.constant 1 : index
    %c0_582 = arith.constant 0 : index
    %441 = vector.load %arg1[%c0_578, %c2_579, %c6_580, %c1_581, %c0_582] : memref<1x4x9x9x4xf32, #tpu.memory_space<vmem>>, vector<1x1x1x8x4xf32>
    %442 = vector.shape_cast %441 : vector<1x1x1x8x4xf32> to vector<8x4xf32>
    %c5_583 = arith.constant 5 : index
    %c0_584 = arith.constant 0 : index
    %c0_585 = arith.constant 0 : index
    %443 = vector.load %arg2[%c5_583, %c0_584, %c0_585] : memref<9x4x8xf32, #tpu.memory_space<vmem>>, vector<1x4x8xf32>
    %444 = vector.shape_cast %443 : vector<1x4x8xf32> to vector<4x8xf32>
    %cst_586 = arith.constant dense<0.000000e+00> : vector<8x8xf32>
    %445 = tpu.matmul %442, %444, %cst_586 {dimension_numbers = #tpu.dot_dimension_numbers<[1], [0], [0], [1], [0, 0, 1, 1], [], []>} : vector<8x4xf32>, vector<4x8xf32>, vector<8x8xf32> -> vector<8x8xf32>
    %446 = arith.addf %440, %445 : vector<8x8xf32>
    %c0_587 = arith.constant 0 : index
    %c0_588 = arith.constant 0 : index
    %c7_589 = arith.constant 7 : index
    %c0_590 = arith.constant 0 : index
    %c0_591 = arith.constant 0 : index
    %447 = vector.load %arg1[%c0_587, %c0_588, %c7_589, %c0_590, %c0_591] : memref<1x4x9x9x4xf32, #tpu.memory_space<vmem>>, vector<1x1x1x8x4xf32>
    %448 = vector.shape_cast %447 : vector<1x1x1x8x4xf32> to vector<8x4xf32>
    %c6_592 = arith.constant 6 : index
    %c0_593 = arith.constant 0 : index
    %c0_594 = arith.constant 0 : index
    %449 = vector.load %arg2[%c6_592, %c0_593, %c0_594] : memref<9x4x8xf32, #tpu.memory_space<vmem>>, vector<1x4x8xf32>
    %450 = vector.shape_cast %449 : vector<1x4x8xf32> to vector<4x8xf32>
    %cst_595 = arith.constant dense<0.000000e+00> : vector<8x8xf32>
    %451 = tpu.matmul %448, %450, %cst_595 {dimension_numbers = #tpu.dot_dimension_numbers<[1], [0], [0], [1], [0, 0, 1, 1], [], []>} : vector<8x4xf32>, vector<4x8xf32>, vector<8x8xf32> -> vector<8x8xf32>
    %452 = arith.addf %446, %451 : vector<8x8xf32>
    %c0_596 = arith.constant 0 : index
    %c1_597 = arith.constant 1 : index
    %c7_598 = arith.constant 7 : index
    %c0_599 = arith.constant 0 : index
    %c0_600 = arith.constant 0 : index
    %453 = vector.load %arg1[%c0_596, %c1_597, %c7_598, %c0_599, %c0_600] : memref<1x4x9x9x4xf32, #tpu.memory_space<vmem>>, vector<1x1x1x8x4xf32>
    %454 = vector.shape_cast %453 : vector<1x1x1x8x4xf32> to vector<8x4xf32>
    %c7_601 = arith.constant 7 : index
    %c0_602 = arith.constant 0 : index
    %c0_603 = arith.constant 0 : index
    %455 = vector.load %arg2[%c7_601, %c0_602, %c0_603] : memref<9x4x8xf32, #tpu.memory_space<vmem>>, vector<1x4x8xf32>
    %456 = vector.shape_cast %455 : vector<1x4x8xf32> to vector<4x8xf32>
    %cst_604 = arith.constant dense<0.000000e+00> : vector<8x8xf32>
    %457 = tpu.matmul %454, %456, %cst_604 {dimension_numbers = #tpu.dot_dimension_numbers<[1], [0], [0], [1], [0, 0, 1, 1], [], []>} : vector<8x4xf32>, vector<4x8xf32>, vector<8x8xf32> -> vector<8x8xf32>
    %458 = arith.addf %452, %457 : vector<8x8xf32>
    %c0_605 = arith.constant 0 : index
    %c0_606 = arith.constant 0 : index
    %c7_607 = arith.constant 7 : index
    %c1_608 = arith.constant 1 : index
    %c0_609 = arith.constant 0 : index
    %459 = vector.load %arg1[%c0_605, %c0_606, %c7_607, %c1_608, %c0_609] : memref<1x4x9x9x4xf32, #tpu.memory_space<vmem>>, vector<1x1x1x8x4xf32>
    %460 = vector.shape_cast %459 : vector<1x1x1x8x4xf32> to vector<8x4xf32>
    %c8_610 = arith.constant 8 : index
    %c0_611 = arith.constant 0 : index
    %c0_612 = arith.constant 0 : index
    %461 = vector.load %arg2[%c8_610, %c0_611, %c0_612] : memref<9x4x8xf32, #tpu.memory_space<vmem>>, vector<1x4x8xf32>
    %462 = vector.shape_cast %461 : vector<1x4x8xf32> to vector<4x8xf32>
    %cst_613 = arith.constant dense<0.000000e+00> : vector<8x8xf32>
    %463 = tpu.matmul %460, %462, %cst_613 {dimension_numbers = #tpu.dot_dimension_numbers<[1], [0], [0], [1], [0, 0, 1, 1], [], []>} : vector<8x4xf32>, vector<4x8xf32>, vector<8x8xf32> -> vector<8x8xf32>
    %464 = arith.addf %458, %463 : vector<8x8xf32>
    %c0_614 = arith.constant 0 : index
    %c0_615 = arith.constant 0 : index
    %465 = vector.load %arg3[%c0_614, %c0_615] : memref<1x8xf32, #tpu.memory_space<vmem>>, vector<1x8xf32>
    %466 = vector.broadcast %465 : vector<1x8xf32> to vector<8x8xf32>
    %467 = arith.addf %464, %466 : vector<8x8xf32>
    %c0_616 = arith.constant 0 : index
    %c6_617 = arith.constant 6 : index
    %c0_618 = arith.constant 0 : index
    %c0_619 = arith.constant 0 : index
    %468 = vector.load %arg4[%c0_616, %c6_617, %c0_618, %c0_619] : memref<1x8x8x8xf32, #tpu.memory_space<vmem>>, vector<1x1x8x8xf32>
    %469 = vector.shape_cast %468 : vector<1x1x8x8xf32> to vector<8x8xf32>
    %470 = vector.shape_cast %467 : vector<8x8xf32> to vector<1x1x8x8xf32>
    tpu.vector_store %arg4[%c0_616, %c6_617, %c0_618, %c0_619], %470 {strides = array<i32>} : memref<1x8x8x8xf32, #tpu.memory_space<vmem>>, vector<1x1x8x8xf32>,
    %cst_620 = arith.constant dense<0.000000e+00> : vector<8xf32>
    %471 = vector.multi_reduction <add>, %467, %cst_620 [0] : vector<8x8xf32> to vector<8xf32>
    %472 = vector.shape_cast %471 : vector<8xf32> to vector<1x8xf32>
    %473 = arith.addf %405, %472 : vector<1x8xf32>
    %474 = arith.mulf %467, %467 : vector<8x8xf32>
    %cst_621 = arith.constant dense<0.000000e+00> : vector<8xf32>
    %475 = vector.multi_reduction <add>, %474, %cst_621 [0] : vector<8x8xf32> to vector<8xf32>
    %476 = vector.shape_cast %475 : vector<8xf32> to vector<1x8xf32>
    %477 = arith.addf %409, %476 : vector<1x8xf32>
    %cst_622 = arith.constant 0.000000e+00 : f32
    %478 = vector.broadcast %cst_622 : f32 to vector<8x8xf32>
    %c0_623 = arith.constant 0 : index
    %c0_624 = arith.constant 0 : index
    %c7_625 = arith.constant 7 : index
    %c0_626 = arith.constant 0 : index
    %c0_627 = arith.constant 0 : index
    %479 = vector.load %arg1[%c0_623, %c0_624, %c7_625, %c0_626, %c0_627] : memref<1x4x9x9x4xf32, #tpu.memory_space<vmem>>, vector<1x1x1x8x4xf32>
    %480 = vector.shape_cast %479 : vector<1x1x1x8x4xf32> to vector<8x4xf32>
    %c0_628 = arith.constant 0 : index
    %c0_629 = arith.constant 0 : index
    %c0_630 = arith.constant 0 : index
    %481 = vector.load %arg2[%c0_628, %c0_629, %c0_630] : memref<9x4x8xf32, #tpu.memory_space<vmem>>, vector<1x4x8xf32>
    %482 = vector.shape_cast %481 : vector<1x4x8xf32> to vector<4x8xf32>
    %cst_631 = arith.constant dense<0.000000e+00> : vector<8x8xf32>
    %483 = tpu.matmul %480, %482, %cst_631 {dimension_numbers = #tpu.dot_dimension_numbers<[1], [0], [0], [1], [0, 0, 1, 1], [], []>} : vector<8x4xf32>, vector<4x8xf32>, vector<8x8xf32> -> vector<8x8xf32>
    %484 = arith.addf %478, %483 : vector<8x8xf32>
    %c0_632 = arith.constant 0 : index
    %c1_633 = arith.constant 1 : index
    %c7_634 = arith.constant 7 : index
    %c0_635 = arith.constant 0 : index
    %c0_636 = arith.constant 0 : index
    %485 = vector.load %arg1[%c0_632, %c1_633, %c7_634, %c0_635, %c0_636] : memref<1x4x9x9x4xf32, #tpu.memory_space<vmem>>, vector<1x1x1x8x4xf32>
    %486 = vector.shape_cast %485 : vector<1x1x1x8x4xf32> to vector<8x4xf32>
    %c1_637 = arith.constant 1 : index
    %c0_638 = arith.constant 0 : index
    %c0_639 = arith.constant 0 : index
    %487 = vector.load %arg2[%c1_637, %c0_638, %c0_639] : memref<9x4x8xf32, #tpu.memory_space<vmem>>, vector<1x4x8xf32>
    %488 = vector.shape_cast %487 : vector<1x4x8xf32> to vector<4x8xf32>
    %cst_640 = arith.constant dense<0.000000e+00> : vector<8x8xf32>
    %489 = tpu.matmul %486, %488, %cst_640 {dimension_numbers = #tpu.dot_dimension_numbers<[1], [0], [0], [1], [0, 0, 1, 1], [], []>} : vector<8x4xf32>, vector<4x8xf32>, vector<8x8xf32> -> vector<8x8xf32>
    %490 = arith.addf %484, %489 : vector<8x8xf32>
    %c0_641 = arith.constant 0 : index
    %c0_642 = arith.constant 0 : index
    %c7_643 = arith.constant 7 : index
    %c1_644 = arith.constant 1 : index
    %c0_645 = arith.constant 0 : index
    %491 = vector.load %arg1[%c0_641, %c0_642, %c7_643, %c1_644, %c0_645] : memref<1x4x9x9x4xf32, #tpu.memory_space<vmem>>, vector<1x1x1x8x4xf32>
    %492 = vector.shape_cast %491 : vector<1x1x1x8x4xf32> to vector<8x4xf32>
    %c2_646 = arith.constant 2 : index
    %c0_647 = arith.constant 0 : index
    %c0_648 = arith.constant 0 : index
    %493 = vector.load %arg2[%c2_646, %c0_647, %c0_648] : memref<9x4x8xf32, #tpu.memory_space<vmem>>, vector<1x4x8xf32>
    %494 = vector.shape_cast %493 : vector<1x4x8xf32> to vector<4x8xf32>
    %cst_649 = arith.constant dense<0.000000e+00> : vector<8x8xf32>
    %495 = tpu.matmul %492, %494, %cst_649 {dimension_numbers = #tpu.dot_dimension_numbers<[1], [0], [0], [1], [0, 0, 1, 1], [], []>} : vector<8x4xf32>, vector<4x8xf32>, vector<8x8xf32> -> vector<8x8xf32>
    %496 = arith.addf %490, %495 : vector<8x8xf32>
    %c0_650 = arith.constant 0 : index
    %c2_651 = arith.constant 2 : index
    %c7_652 = arith.constant 7 : index
    %c0_653 = arith.constant 0 : index
    %c0_654 = arith.constant 0 : index
    %497 = vector.load %arg1[%c0_650, %c2_651, %c7_652, %c0_653, %c0_654] : memref<1x4x9x9x4xf32, #tpu.memory_space<vmem>>, vector<1x1x1x8x4xf32>
    %498 = vector.shape_cast %497 : vector<1x1x1x8x4xf32> to vector<8x4xf32>
    %c3_655 = arith.constant 3 : index
    %c0_656 = arith.constant 0 : index
    %c0_657 = arith.constant 0 : index
    %499 = vector.load %arg2[%c3_655, %c0_656, %c0_657] : memref<9x4x8xf32, #tpu.memory_space<vmem>>, vector<1x4x8xf32>
    %500 = vector.shape_cast %499 : vector<1x4x8xf32> to vector<4x8xf32>
    %cst_658 = arith.constant dense<0.000000e+00> : vector<8x8xf32>
    %501 = tpu.matmul %498, %500, %cst_658 {dimension_numbers = #tpu.dot_dimension_numbers<[1], [0], [0], [1], [0, 0, 1, 1], [], []>} : vector<8x4xf32>, vector<4x8xf32>, vector<8x8xf32> -> vector<8x8xf32>
    %502 = arith.addf %496, %501 : vector<8x8xf32>
    %c0_659 = arith.constant 0 : index
    %c3_660 = arith.constant 3 : index
    %c7_661 = arith.constant 7 : index
    %c0_662 = arith.constant 0 : index
    %c0_663 = arith.constant 0 : index
    %503 = vector.load %arg1[%c0_659, %c3_660, %c7_661, %c0_662, %c0_663] : memref<1x4x9x9x4xf32, #tpu.memory_space<vmem>>, vector<1x1x1x8x4xf32>
    %504 = vector.shape_cast %503 : vector<1x1x1x8x4xf32> to vector<8x4xf32>
    %c4_664 = arith.constant 4 : index
    %c0_665 = arith.constant 0 : index
    %c0_666 = arith.constant 0 : index
    %505 = vector.load %arg2[%c4_664, %c0_665, %c0_666] : memref<9x4x8xf32, #tpu.memory_space<vmem>>, vector<1x4x8xf32>
    %506 = vector.shape_cast %505 : vector<1x4x8xf32> to vector<4x8xf32>
    %cst_667 = arith.constant dense<0.000000e+00> : vector<8x8xf32>
    %507 = tpu.matmul %504, %506, %cst_667 {dimension_numbers = #tpu.dot_dimension_numbers<[1], [0], [0], [1], [0, 0, 1, 1], [], []>} : vector<8x4xf32>, vector<4x8xf32>, vector<8x8xf32> -> vector<8x8xf32>
    %508 = arith.addf %502, %507 : vector<8x8xf32>
    %c0_668 = arith.constant 0 : index
    %c2_669 = arith.constant 2 : index
    %c7_670 = arith.constant 7 : index
    %c1_671 = arith.constant 1 : index
    %c0_672 = arith.constant 0 : index
    %509 = vector.load %arg1[%c0_668, %c2_669, %c7_670, %c1_671, %c0_672] : memref<1x4x9x9x4xf32, #tpu.memory_space<vmem>>, vector<1x1x1x8x4xf32>
    %510 = vector.shape_cast %509 : vector<1x1x1x8x4xf32> to vector<8x4xf32>
    %c5_673 = arith.constant 5 : index
    %c0_674 = arith.constant 0 : index
    %c0_675 = arith.constant 0 : index
    %511 = vector.load %arg2[%c5_673, %c0_674, %c0_675] : memref<9x4x8xf32, #tpu.memory_space<vmem>>, vector<1x4x8xf32>
    %512 = vector.shape_cast %511 : vector<1x4x8xf32> to vector<4x8xf32>
    %cst_676 = arith.constant dense<0.000000e+00> : vector<8x8xf32>
    %513 = tpu.matmul %510, %512, %cst_676 {dimension_numbers = #tpu.dot_dimension_numbers<[1], [0], [0], [1], [0, 0, 1, 1], [], []>} : vector<8x4xf32>, vector<4x8xf32>, vector<8x8xf32> -> vector<8x8xf32>
    %514 = arith.addf %508, %513 : vector<8x8xf32>
    %c0_677 = arith.constant 0 : index
    %c0_678 = arith.constant 0 : index
    %c8_679 = arith.constant 8 : index
    %c0_680 = arith.constant 0 : index
    %c0_681 = arith.constant 0 : index
    %515 = vector.load %arg1[%c0_677, %c0_678, %c8_679, %c0_680, %c0_681] : memref<1x4x9x9x4xf32, #tpu.memory_space<vmem>>, vector<1x1x1x8x4xf32>
    %516 = vector.shape_cast %515 : vector<1x1x1x8x4xf32> to vector<8x4xf32>
    %c6_682 = arith.constant 6 : index
    %c0_683 = arith.constant 0 : index
    %c0_684 = arith.constant 0 : index
    %517 = vector.load %arg2[%c6_682, %c0_683, %c0_684] : memref<9x4x8xf32, #tpu.memory_space<vmem>>, vector<1x4x8xf32>
    %518 = vector.shape_cast %517 : vector<1x4x8xf32> to vector<4x8xf32>
    %cst_685 = arith.constant dense<0.000000e+00> : vector<8x8xf32>
    %519 = tpu.matmul %516, %518, %cst_685 {dimension_numbers = #tpu.dot_dimension_numbers<[1], [0], [0], [1], [0, 0, 1, 1], [], []>} : vector<8x4xf32>, vector<4x8xf32>, vector<8x8xf32> -> vector<8x8xf32>
    %520 = arith.addf %514, %519 : vector<8x8xf32>
    %c0_686 = arith.constant 0 : index
    %c1_687 = arith.constant 1 : index
    %c8_688 = arith.constant 8 : index
    %c0_689 = arith.constant 0 : index
    %c0_690 = arith.constant 0 : index
    %521 = vector.load %arg1[%c0_686, %c1_687, %c8_688, %c0_689, %c0_690] : memref<1x4x9x9x4xf32, #tpu.memory_space<vmem>>, vector<1x1x1x8x4xf32>
    %522 = vector.shape_cast %521 : vector<1x1x1x8x4xf32> to vector<8x4xf32>
    %c7_691 = arith.constant 7 : index
    %c0_692 = arith.constant 0 : index
    %c0_693 = arith.constant 0 : index
    %523 = vector.load %arg2[%c7_691, %c0_692, %c0_693] : memref<9x4x8xf32, #tpu.memory_space<vmem>>, vector<1x4x8xf32>
    %524 = vector.shape_cast %523 : vector<1x4x8xf32> to vector<4x8xf32>
    %cst_694 = arith.constant dense<0.000000e+00> : vector<8x8xf32>
    %525 = tpu.matmul %522, %524, %cst_694 {dimension_numbers = #tpu.dot_dimension_numbers<[1], [0], [0], [1], [0, 0, 1, 1], [], []>} : vector<8x4xf32>, vector<4x8xf32>, vector<8x8xf32> -> vector<8x8xf32>
    %526 = arith.addf %520, %525 : vector<8x8xf32>
    %c0_695 = arith.constant 0 : index
    %c0_696 = arith.constant 0 : index
    %c8_697 = arith.constant 8 : index
    %c1_698 = arith.constant 1 : index
    %c0_699 = arith.constant 0 : index
    %527 = vector.load %arg1[%c0_695, %c0_696, %c8_697, %c1_698, %c0_699] : memref<1x4x9x9x4xf32, #tpu.memory_space<vmem>>, vector<1x1x1x8x4xf32>
    %528 = vector.shape_cast %527 : vector<1x1x1x8x4xf32> to vector<8x4xf32>
    %c8_700 = arith.constant 8 : index
    %c0_701 = arith.constant 0 : index
    %c0_702 = arith.constant 0 : index
    %529 = vector.load %arg2[%c8_700, %c0_701, %c0_702] : memref<9x4x8xf32, #tpu.memory_space<vmem>>, vector<1x4x8xf32>
    %530 = vector.shape_cast %529 : vector<1x4x8xf32> to vector<4x8xf32>
    %cst_703 = arith.constant dense<0.000000e+00> : vector<8x8xf32>
    %531 = tpu.matmul %528, %530, %cst_703 {dimension_numbers = #tpu.dot_dimension_numbers<[1], [0], [0], [1], [0, 0, 1, 1], [], []>} : vector<8x4xf32>, vector<4x8xf32>, vector<8x8xf32> -> vector<8x8xf32>
    %532 = arith.addf %526, %531 : vector<8x8xf32>
    %c0_704 = arith.constant 0 : index
    %c0_705 = arith.constant 0 : index
    %533 = vector.load %arg3[%c0_704, %c0_705] : memref<1x8xf32, #tpu.memory_space<vmem>>, vector<1x8xf32>
    %534 = vector.broadcast %533 : vector<1x8xf32> to vector<8x8xf32>
    %535 = arith.addf %532, %534 : vector<8x8xf32>
    %c0_706 = arith.constant 0 : index
    %c7_707 = arith.constant 7 : index
    %c0_708 = arith.constant 0 : index
    %c0_709 = arith.constant 0 : index
    %536 = vector.load %arg4[%c0_706, %c7_707, %c0_708, %c0_709] : memref<1x8x8x8xf32, #tpu.memory_space<vmem>>, vector<1x1x8x8xf32>
    %537 = vector.shape_cast %536 : vector<1x1x8x8xf32> to vector<8x8xf32>
    %538 = vector.shape_cast %535 : vector<8x8xf32> to vector<1x1x8x8xf32>
    tpu.vector_store %arg4[%c0_706, %c7_707, %c0_708, %c0_709], %538 {strides = array<i32>} : memref<1x8x8x8xf32, #tpu.memory_space<vmem>>, vector<1x1x8x8xf32>,
    %cst_710 = arith.constant dense<0.000000e+00> : vector<8xf32>
    %539 = vector.multi_reduction <add>, %535, %cst_710 [0] : vector<8x8xf32> to vector<8xf32>
    %540 = vector.shape_cast %539 : vector<8xf32> to vector<1x8xf32>
    %541 = arith.addf %473, %540 : vector<1x8xf32>
    %542 = arith.mulf %535, %535 : vector<8x8xf32>
    %cst_711 = arith.constant dense<0.000000e+00> : vector<8xf32>
    %543 = vector.multi_reduction <add>, %542, %cst_711 [0] : vector<8x8xf32> to vector<8xf32>
    %544 = vector.shape_cast %543 : vector<8xf32> to vector<1x8xf32>
    %545 = arith.addf %477, %544 : vector<1x8xf32>
    %c0_712 = arith.constant 0 : index
    %c0_713 = arith.constant 0 : index
    %c0_714 = arith.constant 0 : index
    %546 = vector.load %arg5[%c0_712, %c0_713, %c0_714] : memref<1x2x8xf32, #tpu.memory_space<vmem>>, vector<1x1x8xf32>
    %547 = vector.shape_cast %546 : vector<1x1x8xf32> to vector<1x8xf32>
    %548 = vector.shape_cast %541 : vector<1x8xf32> to vector<1x1x8xf32>
    tpu.vector_store %arg5[%c0_712, %c0_713, %c0_714], %548 {strides = array<i32>} : memref<1x2x8xf32, #tpu.memory_space<vmem>>, vector<1x1x8xf32>,
    %c0_715 = arith.constant 0 : index
    %c1_716 = arith.constant 1 : index
    %c0_717 = arith.constant 0 : index
    %549 = vector.load %arg5[%c0_715, %c1_716, %c0_717] : memref<1x2x8xf32, #tpu.memory_space<vmem>>, vector<1x1x8xf32>
    %550 = vector.shape_cast %549 : vector<1x1x8xf32> to vector<1x8xf32>
    %551 = vector.shape_cast %545 : vector<1x8xf32> to vector<1x1x8xf32>
    tpu.vector_store %arg5[%c0_715, %c1_716, %c0_717], %551 {strides = array<i32>} : memref<1x2x8xf32, #tpu.memory_space<vmem>>, vector<1x1x8xf32>,
    return
  }
  func.func @transform_0(%arg0: i32) -> (i32, i32, i32, i32, i32) {
    %c0_i32 = arith.constant 0 : i32
    %c0_i32_0 = arith.constant 0 : i32
    %c0_i32_1 = arith.constant 0 : i32
    %c0_i32_2 = arith.constant 0 : i32
    %c0_i32_3 = arith.constant 0 : i32
    return %arg0, %c0_i32, %c0_i32_0, %c0_i32_1, %c0_i32_2 : i32, i32, i32, i32, i32
  }
  func.func @transform_1(%arg0: i32) -> (i32, i32, i32) {
    %c0_i32 = arith.constant 0 : i32
    %c0_i32_0 = arith.constant 0 : i32
    %c0_i32_1 = arith.constant 0 : i32
    %c0_i32_2 = arith.constant 0 : i32
    return %c0_i32, %c0_i32_0, %c0_i32_1 : i32, i32, i32
  }
  func.func @transform_2(%arg0: i32) -> (i32, i32) {
    %c0_i32 = arith.constant 0 : i32
    %c0_i32_0 = arith.constant 0 : i32
    %c0_i32_1 = arith.constant 0 : i32
    return %c0_i32, %c0_i32_0 : i32, i32
  }
  func.func @transform_3(%arg0: i32) -> (i32, i32, i32, i32) {
    %c0_i32 = arith.constant 0 : i32
    %c0_i32_0 = arith.constant 0 : i32
    %c0_i32_1 = arith.constant 0 : i32
    %c0_i32_2 = arith.constant 0 : i32
    return %arg0, %c0_i32, %c0_i32_0, %c0_i32_1 : i32, i32, i32, i32
  }
  func.func @transform_4(%arg0: i32) -> (i32, i32, i32) {
    %c0_i32 = arith.constant 0 : i32
    %c0_i32_0 = arith.constant 0 : i32
    %c0_i32_1 = arith.constant 0 : i32
    return %arg0, %c0_i32, %c0_i32_0 : i32, i32, i32
  }
}

module attributes {stable_mosaic.version = 11 : i64} {
  func.func @_bn1_conv2_stats_kernel(%arg0: i32, %arg1: memref<1x8x8x8xf32, #tpu.memory_space<vmem>>, %arg2: memref<1x8xf32, #tpu.memory_space<vmem>>, %arg3: memref<1x8xf32, #tpu.memory_space<vmem>>, %arg4: memref<9x8x8xf32, #tpu.memory_space<vmem>>, %arg5: memref<1x8xf32, #tpu.memory_space<vmem>>, %arg6: memref<1x6x6x8xf32, #tpu.memory_space<vmem>>, %arg7: memref<1x2x8xf32, #tpu.memory_space<vmem>>, %arg8: memref<8x8x8xf32, #tpu.memory_space<vmem>>) attributes {dimension_semantics = [#tpu.dimension_semantics<parallel>], iteration_bounds = array<i64: 2>, scalar_prefetch = 0 : i64, scratch_operands = 1 : i64, tpu.core_type = #tpu.core_type<tc>, window_params = [{transform_indices = @transform_0, window_bounds = array<i64: 1, 8, 8, 8>}, {pipeline_mode = #tpu.pipeline_mode<synchronous>, transform_indices = @transform_1, window_bounds = array<i64: 1, 8>}, {pipeline_mode = #tpu.pipeline_mode<synchronous>, transform_indices = @transform_2, window_bounds = array<i64: 1, 8>}, {pipeline_mode = #tpu.pipeline_mode<synchronous>, transform_indices = @transform_3, window_bounds = array<i64: 9, 8, 8>}, {pipeline_mode = #tpu.pipeline_mode<synchronous>, transform_indices = @transform_4, window_bounds = array<i64: 1, 8>}, {transform_indices = @transform_5, window_bounds = array<i64: 1, 6, 6, 8>}, {transform_indices = @transform_6, window_bounds = array<i64: 1, 2, 8>}]} {
    %c0 = arith.constant 0 : index
    %c0_0 = arith.constant 0 : index
    %c0_1 = arith.constant 0 : index
    %c0_2 = arith.constant 0 : index
    %0 = vector.load %arg1[%c0, %c0_0, %c0_1, %c0_2] : memref<1x8x8x8xf32, #tpu.memory_space<vmem>>, vector<1x8x8x8xf32>
    %1 = vector.shape_cast %0 : vector<1x8x8x8xf32> to vector<8x8x8xf32>
    %c0_3 = arith.constant 0 : index
    %c0_4 = arith.constant 0 : index
    %2 = vector.load %arg2[%c0_3, %c0_4] : memref<1x8xf32, #tpu.memory_space<vmem>>, vector<1x8xf32>
    %3 = vector.shape_cast %2 : vector<1x8xf32> to vector<1x1x8xf32>
    %4 = vector.broadcast %3 : vector<1x1x8xf32> to vector<8x8x8xf32>
    %5 = arith.mulf %1, %4 : vector<8x8x8xf32>
    %c0_5 = arith.constant 0 : index
    %c0_6 = arith.constant 0 : index
    %6 = vector.load %arg3[%c0_5, %c0_6] : memref<1x8xf32, #tpu.memory_space<vmem>>, vector<1x8xf32>
    %7 = vector.shape_cast %6 : vector<1x8xf32> to vector<1x1x8xf32>
    %8 = vector.broadcast %7 : vector<1x1x8xf32> to vector<8x8x8xf32>
    %9 = arith.addf %5, %8 : vector<8x8x8xf32>
    %cst = arith.constant 0.000000e+00 : f32
    %10 = vector.broadcast %cst : f32 to vector<8x8x8xf32>
    %11 = arith.cmpf ogt, %9, %10 : vector<8x8x8xf32>
    %cst_7 = arith.constant 0.00999999977 : f32
    %12 = vector.broadcast %cst_7 : f32 to vector<8x8x8xf32>
    %13 = arith.mulf %12, %9 : vector<8x8x8xf32>
    %14 = arith.select %11, %9, %13 : vector<8x8x8xi1>, vector<8x8x8xf32>
    %c0_8 = arith.constant 0 : index
    %c0_9 = arith.constant 0 : index
    %c0_10 = arith.constant 0 : index
    %15 = vector.load %arg8[%c0_8, %c0_9, %c0_10] : memref<8x8x8xf32, #tpu.memory_space<vmem>>, vector<8x8x8xf32>
    tpu.vector_store %arg8[%c0_8, %c0_9, %c0_10], %14 {strides = array<i32>} : memref<8x8x8xf32, #tpu.memory_space<vmem>>, vector<8x8x8xf32>,
    %cst_11 = arith.constant 0.000000e+00 : f32
    %16 = vector.broadcast %cst_11 : f32 to vector<1x8xf32>
    %cst_12 = arith.constant 0.000000e+00 : f32
    %17 = vector.broadcast %cst_12 : f32 to vector<1x8xf32>
    %cst_13 = arith.constant 0.000000e+00 : f32
    %18 = vector.broadcast %cst_13 : f32 to vector<6x8xf32>
    %c0_14 = arith.constant 0 : index
    %c0_15 = arith.constant 0 : index
    %c0_16 = arith.constant 0 : index
    %19 = vector.load %arg8[%c0_14, %c0_15, %c0_16] : memref<8x8x8xf32, #tpu.memory_space<vmem>>, vector<1x6x8xf32>
    %20 = vector.shape_cast %19 : vector<1x6x8xf32> to vector<6x8xf32>
    %c0_17 = arith.constant 0 : index
    %c0_18 = arith.constant 0 : index
    %c0_19 = arith.constant 0 : index
    %21 = vector.load %arg4[%c0_17, %c0_18, %c0_19] : memref<9x8x8xf32, #tpu.memory_space<vmem>>, vector<1x8x8xf32>
    %22 = vector.shape_cast %21 : vector<1x8x8xf32> to vector<8x8xf32>
    %cst_20 = arith.constant dense<0.000000e+00> : vector<6x8xf32>
    %23 = tpu.matmul %20, %22, %cst_20 {dimension_numbers = #tpu.dot_dimension_numbers<[1], [0], [0], [1], [0, 0, 1, 1], [], []>} : vector<6x8xf32>, vector<8x8xf32>, vector<6x8xf32> -> vector<6x8xf32>
    %24 = arith.addf %18, %23 : vector<6x8xf32>
    %c0_21 = arith.constant 0 : index
    %c1 = arith.constant 1 : index
    %c0_22 = arith.constant 0 : index
    %25 = vector.load %arg8[%c0_21, %c1, %c0_22] : memref<8x8x8xf32, #tpu.memory_space<vmem>>, vector<1x6x8xf32>
    %26 = vector.shape_cast %25 : vector<1x6x8xf32> to vector<6x8xf32>
    %c1_23 = arith.constant 1 : index
    %c0_24 = arith.constant 0 : index
    %c0_25 = arith.constant 0 : index
    %27 = vector.load %arg4[%c1_23, %c0_24, %c0_25] : memref<9x8x8xf32, #tpu.memory_space<vmem>>, vector<1x8x8xf32>
    %28 = vector.shape_cast %27 : vector<1x8x8xf32> to vector<8x8xf32>
    %cst_26 = arith.constant dense<0.000000e+00> : vector<6x8xf32>
    %29 = tpu.matmul %26, %28, %cst_26 {dimension_numbers = #tpu.dot_dimension_numbers<[1], [0], [0], [1], [0, 0, 1, 1], [], []>} : vector<6x8xf32>, vector<8x8xf32>, vector<6x8xf32> -> vector<6x8xf32>
    %30 = arith.addf %24, %29 : vector<6x8xf32>
    %c0_27 = arith.constant 0 : index
    %c2 = arith.constant 2 : index
    %c0_28 = arith.constant 0 : index
    %31 = vector.load %arg8[%c0_27, %c2, %c0_28] : memref<8x8x8xf32, #tpu.memory_space<vmem>>, vector<1x6x8xf32>
    %32 = vector.shape_cast %31 : vector<1x6x8xf32> to vector<6x8xf32>
    %c2_29 = arith.constant 2 : index
    %c0_30 = arith.constant 0 : index
    %c0_31 = arith.constant 0 : index
    %33 = vector.load %arg4[%c2_29, %c0_30, %c0_31] : memref<9x8x8xf32, #tpu.memory_space<vmem>>, vector<1x8x8xf32>
    %34 = vector.shape_cast %33 : vector<1x8x8xf32> to vector<8x8xf32>
    %cst_32 = arith.constant dense<0.000000e+00> : vector<6x8xf32>
    %35 = tpu.matmul %32, %34, %cst_32 {dimension_numbers = #tpu.dot_dimension_numbers<[1], [0], [0], [1], [0, 0, 1, 1], [], []>} : vector<6x8xf32>, vector<8x8xf32>, vector<6x8xf32> -> vector<6x8xf32>
    %36 = arith.addf %30, %35 : vector<6x8xf32>
    %c1_33 = arith.constant 1 : index
    %c0_34 = arith.constant 0 : index
    %c0_35 = arith.constant 0 : index
    %37 = vector.load %arg8[%c1_33, %c0_34, %c0_35] : memref<8x8x8xf32, #tpu.memory_space<vmem>>, vector<1x6x8xf32>
    %38 = vector.shape_cast %37 : vector<1x6x8xf32> to vector<6x8xf32>
    %c3 = arith.constant 3 : index
    %c0_36 = arith.constant 0 : index
    %c0_37 = arith.constant 0 : index
    %39 = vector.load %arg4[%c3, %c0_36, %c0_37] : memref<9x8x8xf32, #tpu.memory_space<vmem>>, vector<1x8x8xf32>
    %40 = vector.shape_cast %39 : vector<1x8x8xf32> to vector<8x8xf32>
    %cst_38 = arith.constant dense<0.000000e+00> : vector<6x8xf32>
    %41 = tpu.matmul %38, %40, %cst_38 {dimension_numbers = #tpu.dot_dimension_numbers<[1], [0], [0], [1], [0, 0, 1, 1], [], []>} : vector<6x8xf32>, vector<8x8xf32>, vector<6x8xf32> -> vector<6x8xf32>
    %42 = arith.addf %36, %41 : vector<6x8xf32>
    %c1_39 = arith.constant 1 : index
    %c1_40 = arith.constant 1 : index
    %c0_41 = arith.constant 0 : index
    %43 = vector.load %arg8[%c1_39, %c1_40, %c0_41] : memref<8x8x8xf32, #tpu.memory_space<vmem>>, vector<1x6x8xf32>
    %44 = vector.shape_cast %43 : vector<1x6x8xf32> to vector<6x8xf32>
    %c4 = arith.constant 4 : index
    %c0_42 = arith.constant 0 : index
    %c0_43 = arith.constant 0 : index
    %45 = vector.load %arg4[%c4, %c0_42, %c0_43] : memref<9x8x8xf32, #tpu.memory_space<vmem>>, vector<1x8x8xf32>
    %46 = vector.shape_cast %45 : vector<1x8x8xf32> to vector<8x8xf32>
    %cst_44 = arith.constant dense<0.000000e+00> : vector<6x8xf32>
    %47 = tpu.matmul %44, %46, %cst_44 {dimension_numbers = #tpu.dot_dimension_numbers<[1], [0], [0], [1], [0, 0, 1, 1], [], []>} : vector<6x8xf32>, vector<8x8xf32>, vector<6x8xf32> -> vector<6x8xf32>
    %48 = arith.addf %42, %47 : vector<6x8xf32>
    %c1_45 = arith.constant 1 : index
    %c2_46 = arith.constant 2 : index
    %c0_47 = arith.constant 0 : index
    %49 = vector.load %arg8[%c1_45, %c2_46, %c0_47] : memref<8x8x8xf32, #tpu.memory_space<vmem>>, vector<1x6x8xf32>
    %50 = vector.shape_cast %49 : vector<1x6x8xf32> to vector<6x8xf32>
    %c5 = arith.constant 5 : index
    %c0_48 = arith.constant 0 : index
    %c0_49 = arith.constant 0 : index
    %51 = vector.load %arg4[%c5, %c0_48, %c0_49] : memref<9x8x8xf32, #tpu.memory_space<vmem>>, vector<1x8x8xf32>
    %52 = vector.shape_cast %51 : vector<1x8x8xf32> to vector<8x8xf32>
    %cst_50 = arith.constant dense<0.000000e+00> : vector<6x8xf32>
    %53 = tpu.matmul %50, %52, %cst_50 {dimension_numbers = #tpu.dot_dimension_numbers<[1], [0], [0], [1], [0, 0, 1, 1], [], []>} : vector<6x8xf32>, vector<8x8xf32>, vector<6x8xf32> -> vector<6x8xf32>
    %54 = arith.addf %48, %53 : vector<6x8xf32>
    %c2_51 = arith.constant 2 : index
    %c0_52 = arith.constant 0 : index
    %c0_53 = arith.constant 0 : index
    %55 = vector.load %arg8[%c2_51, %c0_52, %c0_53] : memref<8x8x8xf32, #tpu.memory_space<vmem>>, vector<1x6x8xf32>
    %56 = vector.shape_cast %55 : vector<1x6x8xf32> to vector<6x8xf32>
    %c6 = arith.constant 6 : index
    %c0_54 = arith.constant 0 : index
    %c0_55 = arith.constant 0 : index
    %57 = vector.load %arg4[%c6, %c0_54, %c0_55] : memref<9x8x8xf32, #tpu.memory_space<vmem>>, vector<1x8x8xf32>
    %58 = vector.shape_cast %57 : vector<1x8x8xf32> to vector<8x8xf32>
    %cst_56 = arith.constant dense<0.000000e+00> : vector<6x8xf32>
    %59 = tpu.matmul %56, %58, %cst_56 {dimension_numbers = #tpu.dot_dimension_numbers<[1], [0], [0], [1], [0, 0, 1, 1], [], []>} : vector<6x8xf32>, vector<8x8xf32>, vector<6x8xf32> -> vector<6x8xf32>
    %60 = arith.addf %54, %59 : vector<6x8xf32>
    %c2_57 = arith.constant 2 : index
    %c1_58 = arith.constant 1 : index
    %c0_59 = arith.constant 0 : index
    %61 = vector.load %arg8[%c2_57, %c1_58, %c0_59] : memref<8x8x8xf32, #tpu.memory_space<vmem>>, vector<1x6x8xf32>
    %62 = vector.shape_cast %61 : vector<1x6x8xf32> to vector<6x8xf32>
    %c7 = arith.constant 7 : index
    %c0_60 = arith.constant 0 : index
    %c0_61 = arith.constant 0 : index
    %63 = vector.load %arg4[%c7, %c0_60, %c0_61] : memref<9x8x8xf32, #tpu.memory_space<vmem>>, vector<1x8x8xf32>
    %64 = vector.shape_cast %63 : vector<1x8x8xf32> to vector<8x8xf32>
    %cst_62 = arith.constant dense<0.000000e+00> : vector<6x8xf32>
    %65 = tpu.matmul %62, %64, %cst_62 {dimension_numbers = #tpu.dot_dimension_numbers<[1], [0], [0], [1], [0, 0, 1, 1], [], []>} : vector<6x8xf32>, vector<8x8xf32>, vector<6x8xf32> -> vector<6x8xf32>
    %66 = arith.addf %60, %65 : vector<6x8xf32>
    %c2_63 = arith.constant 2 : index
    %c2_64 = arith.constant 2 : index
    %c0_65 = arith.constant 0 : index
    %67 = vector.load %arg8[%c2_63, %c2_64, %c0_65] : memref<8x8x8xf32, #tpu.memory_space<vmem>>, vector<1x6x8xf32>
    %68 = vector.shape_cast %67 : vector<1x6x8xf32> to vector<6x8xf32>
    %c8 = arith.constant 8 : index
    %c0_66 = arith.constant 0 : index
    %c0_67 = arith.constant 0 : index
    %69 = vector.load %arg4[%c8, %c0_66, %c0_67] : memref<9x8x8xf32, #tpu.memory_space<vmem>>, vector<1x8x8xf32>
    %70 = vector.shape_cast %69 : vector<1x8x8xf32> to vector<8x8xf32>
    %cst_68 = arith.constant dense<0.000000e+00> : vector<6x8xf32>
    %71 = tpu.matmul %68, %70, %cst_68 {dimension_numbers = #tpu.dot_dimension_numbers<[1], [0], [0], [1], [0, 0, 1, 1], [], []>} : vector<6x8xf32>, vector<8x8xf32>, vector<6x8xf32> -> vector<6x8xf32>
    %72 = arith.addf %66, %71 : vector<6x8xf32>
    %c0_69 = arith.constant 0 : index
    %c0_70 = arith.constant 0 : index
    %73 = vector.load %arg5[%c0_69, %c0_70] : memref<1x8xf32, #tpu.memory_space<vmem>>, vector<1x8xf32>
    %74 = vector.broadcast %73 : vector<1x8xf32> to vector<6x8xf32>
    %75 = arith.addf %72, %74 : vector<6x8xf32>
    %c0_71 = arith.constant 0 : index
    %c0_72 = arith.constant 0 : index
    %c0_73 = arith.constant 0 : index
    %c0_74 = arith.constant 0 : index
    %76 = vector.load %arg6[%c0_71, %c0_72, %c0_73, %c0_74] : memref<1x6x6x8xf32, #tpu.memory_space<vmem>>, vector<1x1x6x8xf32>
    %77 = vector.shape_cast %76 : vector<1x1x6x8xf32> to vector<6x8xf32>
    %78 = vector.shape_cast %75 : vector<6x8xf32> to vector<1x1x6x8xf32>
    tpu.vector_store %arg6[%c0_71, %c0_72, %c0_73, %c0_74], %78 {strides = array<i32>} : memref<1x6x6x8xf32, #tpu.memory_space<vmem>>, vector<1x1x6x8xf32>,
    %cst_75 = arith.constant dense<0.000000e+00> : vector<8xf32>
    %79 = vector.multi_reduction <add>, %75, %cst_75 [0] : vector<6x8xf32> to vector<8xf32>
    %80 = vector.shape_cast %79 : vector<8xf32> to vector<1x8xf32>
    %81 = arith.addf %16, %80 : vector<1x8xf32>
    %82 = arith.mulf %75, %75 : vector<6x8xf32>
    %cst_76 = arith.constant dense<0.000000e+00> : vector<8xf32>
    %83 = vector.multi_reduction <add>, %82, %cst_76 [0] : vector<6x8xf32> to vector<8xf32>
    %84 = vector.shape_cast %83 : vector<8xf32> to vector<1x8xf32>
    %85 = arith.addf %17, %84 : vector<1x8xf32>
    %cst_77 = arith.constant 0.000000e+00 : f32
    %86 = vector.broadcast %cst_77 : f32 to vector<6x8xf32>
    %c1_78 = arith.constant 1 : index
    %c0_79 = arith.constant 0 : index
    %c0_80 = arith.constant 0 : index
    %87 = vector.load %arg8[%c1_78, %c0_79, %c0_80] : memref<8x8x8xf32, #tpu.memory_space<vmem>>, vector<1x6x8xf32>
    %88 = vector.shape_cast %87 : vector<1x6x8xf32> to vector<6x8xf32>
    %c0_81 = arith.constant 0 : index
    %c0_82 = arith.constant 0 : index
    %c0_83 = arith.constant 0 : index
    %89 = vector.load %arg4[%c0_81, %c0_82, %c0_83] : memref<9x8x8xf32, #tpu.memory_space<vmem>>, vector<1x8x8xf32>
    %90 = vector.shape_cast %89 : vector<1x8x8xf32> to vector<8x8xf32>
    %cst_84 = arith.constant dense<0.000000e+00> : vector<6x8xf32>
    %91 = tpu.matmul %88, %90, %cst_84 {dimension_numbers = #tpu.dot_dimension_numbers<[1], [0], [0], [1], [0, 0, 1, 1], [], []>} : vector<6x8xf32>, vector<8x8xf32>, vector<6x8xf32> -> vector<6x8xf32>
    %92 = arith.addf %86, %91 : vector<6x8xf32>
    %c1_85 = arith.constant 1 : index
    %c1_86 = arith.constant 1 : index
    %c0_87 = arith.constant 0 : index
    %93 = vector.load %arg8[%c1_85, %c1_86, %c0_87] : memref<8x8x8xf32, #tpu.memory_space<vmem>>, vector<1x6x8xf32>
    %94 = vector.shape_cast %93 : vector<1x6x8xf32> to vector<6x8xf32>
    %c1_88 = arith.constant 1 : index
    %c0_89 = arith.constant 0 : index
    %c0_90 = arith.constant 0 : index
    %95 = vector.load %arg4[%c1_88, %c0_89, %c0_90] : memref<9x8x8xf32, #tpu.memory_space<vmem>>, vector<1x8x8xf32>
    %96 = vector.shape_cast %95 : vector<1x8x8xf32> to vector<8x8xf32>
    %cst_91 = arith.constant dense<0.000000e+00> : vector<6x8xf32>
    %97 = tpu.matmul %94, %96, %cst_91 {dimension_numbers = #tpu.dot_dimension_numbers<[1], [0], [0], [1], [0, 0, 1, 1], [], []>} : vector<6x8xf32>, vector<8x8xf32>, vector<6x8xf32> -> vector<6x8xf32>
    %98 = arith.addf %92, %97 : vector<6x8xf32>
    %c1_92 = arith.constant 1 : index
    %c2_93 = arith.constant 2 : index
    %c0_94 = arith.constant 0 : index
    %99 = vector.load %arg8[%c1_92, %c2_93, %c0_94] : memref<8x8x8xf32, #tpu.memory_space<vmem>>, vector<1x6x8xf32>
    %100 = vector.shape_cast %99 : vector<1x6x8xf32> to vector<6x8xf32>
    %c2_95 = arith.constant 2 : index
    %c0_96 = arith.constant 0 : index
    %c0_97 = arith.constant 0 : index
    %101 = vector.load %arg4[%c2_95, %c0_96, %c0_97] : memref<9x8x8xf32, #tpu.memory_space<vmem>>, vector<1x8x8xf32>
    %102 = vector.shape_cast %101 : vector<1x8x8xf32> to vector<8x8xf32>
    %cst_98 = arith.constant dense<0.000000e+00> : vector<6x8xf32>
    %103 = tpu.matmul %100, %102, %cst_98 {dimension_numbers = #tpu.dot_dimension_numbers<[1], [0], [0], [1], [0, 0, 1, 1], [], []>} : vector<6x8xf32>, vector<8x8xf32>, vector<6x8xf32> -> vector<6x8xf32>
    %104 = arith.addf %98, %103 : vector<6x8xf32>
    %c2_99 = arith.constant 2 : index
    %c0_100 = arith.constant 0 : index
    %c0_101 = arith.constant 0 : index
    %105 = vector.load %arg8[%c2_99, %c0_100, %c0_101] : memref<8x8x8xf32, #tpu.memory_space<vmem>>, vector<1x6x8xf32>
    %106 = vector.shape_cast %105 : vector<1x6x8xf32> to vector<6x8xf32>
    %c3_102 = arith.constant 3 : index
    %c0_103 = arith.constant 0 : index
    %c0_104 = arith.constant 0 : index
    %107 = vector.load %arg4[%c3_102, %c0_103, %c0_104] : memref<9x8x8xf32, #tpu.memory_space<vmem>>, vector<1x8x8xf32>
    %108 = vector.shape_cast %107 : vector<1x8x8xf32> to vector<8x8xf32>
    %cst_105 = arith.constant dense<0.000000e+00> : vector<6x8xf32>
    %109 = tpu.matmul %106, %108, %cst_105 {dimension_numbers = #tpu.dot_dimension_numbers<[1], [0], [0], [1], [0, 0, 1, 1], [], []>} : vector<6x8xf32>, vector<8x8xf32>, vector<6x8xf32> -> vector<6x8xf32>
    %110 = arith.addf %104, %109 : vector<6x8xf32>
    %c2_106 = arith.constant 2 : index
    %c1_107 = arith.constant 1 : index
    %c0_108 = arith.constant 0 : index
    %111 = vector.load %arg8[%c2_106, %c1_107, %c0_108] : memref<8x8x8xf32, #tpu.memory_space<vmem>>, vector<1x6x8xf32>
    %112 = vector.shape_cast %111 : vector<1x6x8xf32> to vector<6x8xf32>
    %c4_109 = arith.constant 4 : index
    %c0_110 = arith.constant 0 : index
    %c0_111 = arith.constant 0 : index
    %113 = vector.load %arg4[%c4_109, %c0_110, %c0_111] : memref<9x8x8xf32, #tpu.memory_space<vmem>>, vector<1x8x8xf32>
    %114 = vector.shape_cast %113 : vector<1x8x8xf32> to vector<8x8xf32>
    %cst_112 = arith.constant dense<0.000000e+00> : vector<6x8xf32>
    %115 = tpu.matmul %112, %114, %cst_112 {dimension_numbers = #tpu.dot_dimension_numbers<[1], [0], [0], [1], [0, 0, 1, 1], [], []>} : vector<6x8xf32>, vector<8x8xf32>, vector<6x8xf32> -> vector<6x8xf32>
    %116 = arith.addf %110, %115 : vector<6x8xf32>
    %c2_113 = arith.constant 2 : index
    %c2_114 = arith.constant 2 : index
    %c0_115 = arith.constant 0 : index
    %117 = vector.load %arg8[%c2_113, %c2_114, %c0_115] : memref<8x8x8xf32, #tpu.memory_space<vmem>>, vector<1x6x8xf32>
    %118 = vector.shape_cast %117 : vector<1x6x8xf32> to vector<6x8xf32>
    %c5_116 = arith.constant 5 : index
    %c0_117 = arith.constant 0 : index
    %c0_118 = arith.constant 0 : index
    %119 = vector.load %arg4[%c5_116, %c0_117, %c0_118] : memref<9x8x8xf32, #tpu.memory_space<vmem>>, vector<1x8x8xf32>
    %120 = vector.shape_cast %119 : vector<1x8x8xf32> to vector<8x8xf32>
    %cst_119 = arith.constant dense<0.000000e+00> : vector<6x8xf32>
    %121 = tpu.matmul %118, %120, %cst_119 {dimension_numbers = #tpu.dot_dimension_numbers<[1], [0], [0], [1], [0, 0, 1, 1], [], []>} : vector<6x8xf32>, vector<8x8xf32>, vector<6x8xf32> -> vector<6x8xf32>
    %122 = arith.addf %116, %121 : vector<6x8xf32>
    %c3_120 = arith.constant 3 : index
    %c0_121 = arith.constant 0 : index
    %c0_122 = arith.constant 0 : index
    %123 = vector.load %arg8[%c3_120, %c0_121, %c0_122] : memref<8x8x8xf32, #tpu.memory_space<vmem>>, vector<1x6x8xf32>
    %124 = vector.shape_cast %123 : vector<1x6x8xf32> to vector<6x8xf32>
    %c6_123 = arith.constant 6 : index
    %c0_124 = arith.constant 0 : index
    %c0_125 = arith.constant 0 : index
    %125 = vector.load %arg4[%c6_123, %c0_124, %c0_125] : memref<9x8x8xf32, #tpu.memory_space<vmem>>, vector<1x8x8xf32>
    %126 = vector.shape_cast %125 : vector<1x8x8xf32> to vector<8x8xf32>
    %cst_126 = arith.constant dense<0.000000e+00> : vector<6x8xf32>
    %127 = tpu.matmul %124, %126, %cst_126 {dimension_numbers = #tpu.dot_dimension_numbers<[1], [0], [0], [1], [0, 0, 1, 1], [], []>} : vector<6x8xf32>, vector<8x8xf32>, vector<6x8xf32> -> vector<6x8xf32>
    %128 = arith.addf %122, %127 : vector<6x8xf32>
    %c3_127 = arith.constant 3 : index
    %c1_128 = arith.constant 1 : index
    %c0_129 = arith.constant 0 : index
    %129 = vector.load %arg8[%c3_127, %c1_128, %c0_129] : memref<8x8x8xf32, #tpu.memory_space<vmem>>, vector<1x6x8xf32>
    %130 = vector.shape_cast %129 : vector<1x6x8xf32> to vector<6x8xf32>
    %c7_130 = arith.constant 7 : index
    %c0_131 = arith.constant 0 : index
    %c0_132 = arith.constant 0 : index
    %131 = vector.load %arg4[%c7_130, %c0_131, %c0_132] : memref<9x8x8xf32, #tpu.memory_space<vmem>>, vector<1x8x8xf32>
    %132 = vector.shape_cast %131 : vector<1x8x8xf32> to vector<8x8xf32>
    %cst_133 = arith.constant dense<0.000000e+00> : vector<6x8xf32>
    %133 = tpu.matmul %130, %132, %cst_133 {dimension_numbers = #tpu.dot_dimension_numbers<[1], [0], [0], [1], [0, 0, 1, 1], [], []>} : vector<6x8xf32>, vector<8x8xf32>, vector<6x8xf32> -> vector<6x8xf32>
    %134 = arith.addf %128, %133 : vector<6x8xf32>
    %c3_134 = arith.constant 3 : index
    %c2_135 = arith.constant 2 : index
    %c0_136 = arith.constant 0 : index
    %135 = vector.load %arg8[%c3_134, %c2_135, %c0_136] : memref<8x8x8xf32, #tpu.memory_space<vmem>>, vector<1x6x8xf32>
    %136 = vector.shape_cast %135 : vector<1x6x8xf32> to vector<6x8xf32>
    %c8_137 = arith.constant 8 : index
    %c0_138 = arith.constant 0 : index
    %c0_139 = arith.constant 0 : index
    %137 = vector.load %arg4[%c8_137, %c0_138, %c0_139] : memref<9x8x8xf32, #tpu.memory_space<vmem>>, vector<1x8x8xf32>
    %138 = vector.shape_cast %137 : vector<1x8x8xf32> to vector<8x8xf32>
    %cst_140 = arith.constant dense<0.000000e+00> : vector<6x8xf32>
    %139 = tpu.matmul %136, %138, %cst_140 {dimension_numbers = #tpu.dot_dimension_numbers<[1], [0], [0], [1], [0, 0, 1, 1], [], []>} : vector<6x8xf32>, vector<8x8xf32>, vector<6x8xf32> -> vector<6x8xf32>
    %140 = arith.addf %134, %139 : vector<6x8xf32>
    %c0_141 = arith.constant 0 : index
    %c0_142 = arith.constant 0 : index
    %141 = vector.load %arg5[%c0_141, %c0_142] : memref<1x8xf32, #tpu.memory_space<vmem>>, vector<1x8xf32>
    %142 = vector.broadcast %141 : vector<1x8xf32> to vector<6x8xf32>
    %143 = arith.addf %140, %142 : vector<6x8xf32>
    %c0_143 = arith.constant 0 : index
    %c1_144 = arith.constant 1 : index
    %c0_145 = arith.constant 0 : index
    %c0_146 = arith.constant 0 : index
    %144 = vector.load %arg6[%c0_143, %c1_144, %c0_145, %c0_146] : memref<1x6x6x8xf32, #tpu.memory_space<vmem>>, vector<1x1x6x8xf32>
    %145 = vector.shape_cast %144 : vector<1x1x6x8xf32> to vector<6x8xf32>
    %146 = vector.shape_cast %143 : vector<6x8xf32> to vector<1x1x6x8xf32>
    tpu.vector_store %arg6[%c0_143, %c1_144, %c0_145, %c0_146], %146 {strides = array<i32>} : memref<1x6x6x8xf32, #tpu.memory_space<vmem>>, vector<1x1x6x8xf32>,
    %cst_147 = arith.constant dense<0.000000e+00> : vector<8xf32>
    %147 = vector.multi_reduction <add>, %143, %cst_147 [0] : vector<6x8xf32> to vector<8xf32>
    %148 = vector.shape_cast %147 : vector<8xf32> to vector<1x8xf32>
    %149 = arith.addf %81, %148 : vector<1x8xf32>
    %150 = arith.mulf %143, %143 : vector<6x8xf32>
    %cst_148 = arith.constant dense<0.000000e+00> : vector<8xf32>
    %151 = vector.multi_reduction <add>, %150, %cst_148 [0] : vector<6x8xf32> to vector<8xf32>
    %152 = vector.shape_cast %151 : vector<8xf32> to vector<1x8xf32>
    %153 = arith.addf %85, %152 : vector<1x8xf32>
    %cst_149 = arith.constant 0.000000e+00 : f32
    %154 = vector.broadcast %cst_149 : f32 to vector<6x8xf32>
    %c2_150 = arith.constant 2 : index
    %c0_151 = arith.constant 0 : index
    %c0_152 = arith.constant 0 : index
    %155 = vector.load %arg8[%c2_150, %c0_151, %c0_152] : memref<8x8x8xf32, #tpu.memory_space<vmem>>, vector<1x6x8xf32>
    %156 = vector.shape_cast %155 : vector<1x6x8xf32> to vector<6x8xf32>
    %c0_153 = arith.constant 0 : index
    %c0_154 = arith.constant 0 : index
    %c0_155 = arith.constant 0 : index
    %157 = vector.load %arg4[%c0_153, %c0_154, %c0_155] : memref<9x8x8xf32, #tpu.memory_space<vmem>>, vector<1x8x8xf32>
    %158 = vector.shape_cast %157 : vector<1x8x8xf32> to vector<8x8xf32>
    %cst_156 = arith.constant dense<0.000000e+00> : vector<6x8xf32>
    %159 = tpu.matmul %156, %158, %cst_156 {dimension_numbers = #tpu.dot_dimension_numbers<[1], [0], [0], [1], [0, 0, 1, 1], [], []>} : vector<6x8xf32>, vector<8x8xf32>, vector<6x8xf32> -> vector<6x8xf32>
    %160 = arith.addf %154, %159 : vector<6x8xf32>
    %c2_157 = arith.constant 2 : index
    %c1_158 = arith.constant 1 : index
    %c0_159 = arith.constant 0 : index
    %161 = vector.load %arg8[%c2_157, %c1_158, %c0_159] : memref<8x8x8xf32, #tpu.memory_space<vmem>>, vector<1x6x8xf32>
    %162 = vector.shape_cast %161 : vector<1x6x8xf32> to vector<6x8xf32>
    %c1_160 = arith.constant 1 : index
    %c0_161 = arith.constant 0 : index
    %c0_162 = arith.constant 0 : index
    %163 = vector.load %arg4[%c1_160, %c0_161, %c0_162] : memref<9x8x8xf32, #tpu.memory_space<vmem>>, vector<1x8x8xf32>
    %164 = vector.shape_cast %163 : vector<1x8x8xf32> to vector<8x8xf32>
    %cst_163 = arith.constant dense<0.000000e+00> : vector<6x8xf32>
    %165 = tpu.matmul %162, %164, %cst_163 {dimension_numbers = #tpu.dot_dimension_numbers<[1], [0], [0], [1], [0, 0, 1, 1], [], []>} : vector<6x8xf32>, vector<8x8xf32>, vector<6x8xf32> -> vector<6x8xf32>
    %166 = arith.addf %160, %165 : vector<6x8xf32>
    %c2_164 = arith.constant 2 : index
    %c2_165 = arith.constant 2 : index
    %c0_166 = arith.constant 0 : index
    %167 = vector.load %arg8[%c2_164, %c2_165, %c0_166] : memref<8x8x8xf32, #tpu.memory_space<vmem>>, vector<1x6x8xf32>
    %168 = vector.shape_cast %167 : vector<1x6x8xf32> to vector<6x8xf32>
    %c2_167 = arith.constant 2 : index
    %c0_168 = arith.constant 0 : index
    %c0_169 = arith.constant 0 : index
    %169 = vector.load %arg4[%c2_167, %c0_168, %c0_169] : memref<9x8x8xf32, #tpu.memory_space<vmem>>, vector<1x8x8xf32>
    %170 = vector.shape_cast %169 : vector<1x8x8xf32> to vector<8x8xf32>
    %cst_170 = arith.constant dense<0.000000e+00> : vector<6x8xf32>
    %171 = tpu.matmul %168, %170, %cst_170 {dimension_numbers = #tpu.dot_dimension_numbers<[1], [0], [0], [1], [0, 0, 1, 1], [], []>} : vector<6x8xf32>, vector<8x8xf32>, vector<6x8xf32> -> vector<6x8xf32>
    %172 = arith.addf %166, %171 : vector<6x8xf32>
    %c3_171 = arith.constant 3 : index
    %c0_172 = arith.constant 0 : index
    %c0_173 = arith.constant 0 : index
    %173 = vector.load %arg8[%c3_171, %c0_172, %c0_173] : memref<8x8x8xf32, #tpu.memory_space<vmem>>, vector<1x6x8xf32>
    %174 = vector.shape_cast %173 : vector<1x6x8xf32> to vector<6x8xf32>
    %c3_174 = arith.constant 3 : index
    %c0_175 = arith.constant 0 : index
    %c0_176 = arith.constant 0 : index
    %175 = vector.load %arg4[%c3_174, %c0_175, %c0_176] : memref<9x8x8xf32, #tpu.memory_space<vmem>>, vector<1x8x8xf32>
    %176 = vector.shape_cast %175 : vector<1x8x8xf32> to vector<8x8xf32>
    %cst_177 = arith.constant dense<0.000000e+00> : vector<6x8xf32>
    %177 = tpu.matmul %174, %176, %cst_177 {dimension_numbers = #tpu.dot_dimension_numbers<[1], [0], [0], [1], [0, 0, 1, 1], [], []>} : vector<6x8xf32>, vector<8x8xf32>, vector<6x8xf32> -> vector<6x8xf32>
    %178 = arith.addf %172, %177 : vector<6x8xf32>
    %c3_178 = arith.constant 3 : index
    %c1_179 = arith.constant 1 : index
    %c0_180 = arith.constant 0 : index
    %179 = vector.load %arg8[%c3_178, %c1_179, %c0_180] : memref<8x8x8xf32, #tpu.memory_space<vmem>>, vector<1x6x8xf32>
    %180 = vector.shape_cast %179 : vector<1x6x8xf32> to vector<6x8xf32>
    %c4_181 = arith.constant 4 : index
    %c0_182 = arith.constant 0 : index
    %c0_183 = arith.constant 0 : index
    %181 = vector.load %arg4[%c4_181, %c0_182, %c0_183] : memref<9x8x8xf32, #tpu.memory_space<vmem>>, vector<1x8x8xf32>
    %182 = vector.shape_cast %181 : vector<1x8x8xf32> to vector<8x8xf32>
    %cst_184 = arith.constant dense<0.000000e+00> : vector<6x8xf32>
    %183 = tpu.matmul %180, %182, %cst_184 {dimension_numbers = #tpu.dot_dimension_numbers<[1], [0], [0], [1], [0, 0, 1, 1], [], []>} : vector<6x8xf32>, vector<8x8xf32>, vector<6x8xf32> -> vector<6x8xf32>
    %184 = arith.addf %178, %183 : vector<6x8xf32>
    %c3_185 = arith.constant 3 : index
    %c2_186 = arith.constant 2 : index
    %c0_187 = arith.constant 0 : index
    %185 = vector.load %arg8[%c3_185, %c2_186, %c0_187] : memref<8x8x8xf32, #tpu.memory_space<vmem>>, vector<1x6x8xf32>
    %186 = vector.shape_cast %185 : vector<1x6x8xf32> to vector<6x8xf32>
    %c5_188 = arith.constant 5 : index
    %c0_189 = arith.constant 0 : index
    %c0_190 = arith.constant 0 : index
    %187 = vector.load %arg4[%c5_188, %c0_189, %c0_190] : memref<9x8x8xf32, #tpu.memory_space<vmem>>, vector<1x8x8xf32>
    %188 = vector.shape_cast %187 : vector<1x8x8xf32> to vector<8x8xf32>
    %cst_191 = arith.constant dense<0.000000e+00> : vector<6x8xf32>
    %189 = tpu.matmul %186, %188, %cst_191 {dimension_numbers = #tpu.dot_dimension_numbers<[1], [0], [0], [1], [0, 0, 1, 1], [], []>} : vector<6x8xf32>, vector<8x8xf32>, vector<6x8xf32> -> vector<6x8xf32>
    %190 = arith.addf %184, %189 : vector<6x8xf32>
    %c4_192 = arith.constant 4 : index
    %c0_193 = arith.constant 0 : index
    %c0_194 = arith.constant 0 : index
    %191 = vector.load %arg8[%c4_192, %c0_193, %c0_194] : memref<8x8x8xf32, #tpu.memory_space<vmem>>, vector<1x6x8xf32>
    %192 = vector.shape_cast %191 : vector<1x6x8xf32> to vector<6x8xf32>
    %c6_195 = arith.constant 6 : index
    %c0_196 = arith.constant 0 : index
    %c0_197 = arith.constant 0 : index
    %193 = vector.load %arg4[%c6_195, %c0_196, %c0_197] : memref<9x8x8xf32, #tpu.memory_space<vmem>>, vector<1x8x8xf32>
    %194 = vector.shape_cast %193 : vector<1x8x8xf32> to vector<8x8xf32>
    %cst_198 = arith.constant dense<0.000000e+00> : vector<6x8xf32>
    %195 = tpu.matmul %192, %194, %cst_198 {dimension_numbers = #tpu.dot_dimension_numbers<[1], [0], [0], [1], [0, 0, 1, 1], [], []>} : vector<6x8xf32>, vector<8x8xf32>, vector<6x8xf32> -> vector<6x8xf32>
    %196 = arith.addf %190, %195 : vector<6x8xf32>
    %c4_199 = arith.constant 4 : index
    %c1_200 = arith.constant 1 : index
    %c0_201 = arith.constant 0 : index
    %197 = vector.load %arg8[%c4_199, %c1_200, %c0_201] : memref<8x8x8xf32, #tpu.memory_space<vmem>>, vector<1x6x8xf32>
    %198 = vector.shape_cast %197 : vector<1x6x8xf32> to vector<6x8xf32>
    %c7_202 = arith.constant 7 : index
    %c0_203 = arith.constant 0 : index
    %c0_204 = arith.constant 0 : index
    %199 = vector.load %arg4[%c7_202, %c0_203, %c0_204] : memref<9x8x8xf32, #tpu.memory_space<vmem>>, vector<1x8x8xf32>
    %200 = vector.shape_cast %199 : vector<1x8x8xf32> to vector<8x8xf32>
    %cst_205 = arith.constant dense<0.000000e+00> : vector<6x8xf32>
    %201 = tpu.matmul %198, %200, %cst_205 {dimension_numbers = #tpu.dot_dimension_numbers<[1], [0], [0], [1], [0, 0, 1, 1], [], []>} : vector<6x8xf32>, vector<8x8xf32>, vector<6x8xf32> -> vector<6x8xf32>
    %202 = arith.addf %196, %201 : vector<6x8xf32>
    %c4_206 = arith.constant 4 : index
    %c2_207 = arith.constant 2 : index
    %c0_208 = arith.constant 0 : index
    %203 = vector.load %arg8[%c4_206, %c2_207, %c0_208] : memref<8x8x8xf32, #tpu.memory_space<vmem>>, vector<1x6x8xf32>
    %204 = vector.shape_cast %203 : vector<1x6x8xf32> to vector<6x8xf32>
    %c8_209 = arith.constant 8 : index
    %c0_210 = arith.constant 0 : index
    %c0_211 = arith.constant 0 : index
    %205 = vector.load %arg4[%c8_209, %c0_210, %c0_211] : memref<9x8x8xf32, #tpu.memory_space<vmem>>, vector<1x8x8xf32>
    %206 = vector.shape_cast %205 : vector<1x8x8xf32> to vector<8x8xf32>
    %cst_212 = arith.constant dense<0.000000e+00> : vector<6x8xf32>
    %207 = tpu.matmul %204, %206, %cst_212 {dimension_numbers = #tpu.dot_dimension_numbers<[1], [0], [0], [1], [0, 0, 1, 1], [], []>} : vector<6x8xf32>, vector<8x8xf32>, vector<6x8xf32> -> vector<6x8xf32>
    %208 = arith.addf %202, %207 : vector<6x8xf32>
    %c0_213 = arith.constant 0 : index
    %c0_214 = arith.constant 0 : index
    %209 = vector.load %arg5[%c0_213, %c0_214] : memref<1x8xf32, #tpu.memory_space<vmem>>, vector<1x8xf32>
    %210 = vector.broadcast %209 : vector<1x8xf32> to vector<6x8xf32>
    %211 = arith.addf %208, %210 : vector<6x8xf32>
    %c0_215 = arith.constant 0 : index
    %c2_216 = arith.constant 2 : index
    %c0_217 = arith.constant 0 : index
    %c0_218 = arith.constant 0 : index
    %212 = vector.load %arg6[%c0_215, %c2_216, %c0_217, %c0_218] : memref<1x6x6x8xf32, #tpu.memory_space<vmem>>, vector<1x1x6x8xf32>
    %213 = vector.shape_cast %212 : vector<1x1x6x8xf32> to vector<6x8xf32>
    %214 = vector.shape_cast %211 : vector<6x8xf32> to vector<1x1x6x8xf32>
    tpu.vector_store %arg6[%c0_215, %c2_216, %c0_217, %c0_218], %214 {strides = array<i32>} : memref<1x6x6x8xf32, #tpu.memory_space<vmem>>, vector<1x1x6x8xf32>,
    %cst_219 = arith.constant dense<0.000000e+00> : vector<8xf32>
    %215 = vector.multi_reduction <add>, %211, %cst_219 [0] : vector<6x8xf32> to vector<8xf32>
    %216 = vector.shape_cast %215 : vector<8xf32> to vector<1x8xf32>
    %217 = arith.addf %149, %216 : vector<1x8xf32>
    %218 = arith.mulf %211, %211 : vector<6x8xf32>
    %cst_220 = arith.constant dense<0.000000e+00> : vector<8xf32>
    %219 = vector.multi_reduction <add>, %218, %cst_220 [0] : vector<6x8xf32> to vector<8xf32>
    %220 = vector.shape_cast %219 : vector<8xf32> to vector<1x8xf32>
    %221 = arith.addf %153, %220 : vector<1x8xf32>
    %cst_221 = arith.constant 0.000000e+00 : f32
    %222 = vector.broadcast %cst_221 : f32 to vector<6x8xf32>
    %c3_222 = arith.constant 3 : index
    %c0_223 = arith.constant 0 : index
    %c0_224 = arith.constant 0 : index
    %223 = vector.load %arg8[%c3_222, %c0_223, %c0_224] : memref<8x8x8xf32, #tpu.memory_space<vmem>>, vector<1x6x8xf32>
    %224 = vector.shape_cast %223 : vector<1x6x8xf32> to vector<6x8xf32>
    %c0_225 = arith.constant 0 : index
    %c0_226 = arith.constant 0 : index
    %c0_227 = arith.constant 0 : index
    %225 = vector.load %arg4[%c0_225, %c0_226, %c0_227] : memref<9x8x8xf32, #tpu.memory_space<vmem>>, vector<1x8x8xf32>
    %226 = vector.shape_cast %225 : vector<1x8x8xf32> to vector<8x8xf32>
    %cst_228 = arith.constant dense<0.000000e+00> : vector<6x8xf32>
    %227 = tpu.matmul %224, %226, %cst_228 {dimension_numbers = #tpu.dot_dimension_numbers<[1], [0], [0], [1], [0, 0, 1, 1], [], []>} : vector<6x8xf32>, vector<8x8xf32>, vector<6x8xf32> -> vector<6x8xf32>
    %228 = arith.addf %222, %227 : vector<6x8xf32>
    %c3_229 = arith.constant 3 : index
    %c1_230 = arith.constant 1 : index
    %c0_231 = arith.constant 0 : index
    %229 = vector.load %arg8[%c3_229, %c1_230, %c0_231] : memref<8x8x8xf32, #tpu.memory_space<vmem>>, vector<1x6x8xf32>
    %230 = vector.shape_cast %229 : vector<1x6x8xf32> to vector<6x8xf32>
    %c1_232 = arith.constant 1 : index
    %c0_233 = arith.constant 0 : index
    %c0_234 = arith.constant 0 : index
    %231 = vector.load %arg4[%c1_232, %c0_233, %c0_234] : memref<9x8x8xf32, #tpu.memory_space<vmem>>, vector<1x8x8xf32>
    %232 = vector.shape_cast %231 : vector<1x8x8xf32> to vector<8x8xf32>
    %cst_235 = arith.constant dense<0.000000e+00> : vector<6x8xf32>
    %233 = tpu.matmul %230, %232, %cst_235 {dimension_numbers = #tpu.dot_dimension_numbers<[1], [0], [0], [1], [0, 0, 1, 1], [], []>} : vector<6x8xf32>, vector<8x8xf32>, vector<6x8xf32> -> vector<6x8xf32>
    %234 = arith.addf %228, %233 : vector<6x8xf32>
    %c3_236 = arith.constant 3 : index
    %c2_237 = arith.constant 2 : index
    %c0_238 = arith.constant 0 : index
    %235 = vector.load %arg8[%c3_236, %c2_237, %c0_238] : memref<8x8x8xf32, #tpu.memory_space<vmem>>, vector<1x6x8xf32>
    %236 = vector.shape_cast %235 : vector<1x6x8xf32> to vector<6x8xf32>
    %c2_239 = arith.constant 2 : index
    %c0_240 = arith.constant 0 : index
    %c0_241 = arith.constant 0 : index
    %237 = vector.load %arg4[%c2_239, %c0_240, %c0_241] : memref<9x8x8xf32, #tpu.memory_space<vmem>>, vector<1x8x8xf32>
    %238 = vector.shape_cast %237 : vector<1x8x8xf32> to vector<8x8xf32>
    %cst_242 = arith.constant dense<0.000000e+00> : vector<6x8xf32>
    %239 = tpu.matmul %236, %238, %cst_242 {dimension_numbers = #tpu.dot_dimension_numbers<[1], [0], [0], [1], [0, 0, 1, 1], [], []>} : vector<6x8xf32>, vector<8x8xf32>, vector<6x8xf32> -> vector<6x8xf32>
    %240 = arith.addf %234, %239 : vector<6x8xf32>
    %c4_243 = arith.constant 4 : index
    %c0_244 = arith.constant 0 : index
    %c0_245 = arith.constant 0 : index
    %241 = vector.load %arg8[%c4_243, %c0_244, %c0_245] : memref<8x8x8xf32, #tpu.memory_space<vmem>>, vector<1x6x8xf32>
    %242 = vector.shape_cast %241 : vector<1x6x8xf32> to vector<6x8xf32>
    %c3_246 = arith.constant 3 : index
    %c0_247 = arith.constant 0 : index
    %c0_248 = arith.constant 0 : index
    %243 = vector.load %arg4[%c3_246, %c0_247, %c0_248] : memref<9x8x8xf32, #tpu.memory_space<vmem>>, vector<1x8x8xf32>
    %244 = vector.shape_cast %243 : vector<1x8x8xf32> to vector<8x8xf32>
    %cst_249 = arith.constant dense<0.000000e+00> : vector<6x8xf32>
    %245 = tpu.matmul %242, %244, %cst_249 {dimension_numbers = #tpu.dot_dimension_numbers<[1], [0], [0], [1], [0, 0, 1, 1], [], []>} : vector<6x8xf32>, vector<8x8xf32>, vector<6x8xf32> -> vector<6x8xf32>
    %246 = arith.addf %240, %245 : vector<6x8xf32>
    %c4_250 = arith.constant 4 : index
    %c1_251 = arith.constant 1 : index
    %c0_252 = arith.constant 0 : index
    %247 = vector.load %arg8[%c4_250, %c1_251, %c0_252] : memref<8x8x8xf32, #tpu.memory_space<vmem>>, vector<1x6x8xf32>
    %248 = vector.shape_cast %247 : vector<1x6x8xf32> to vector<6x8xf32>
    %c4_253 = arith.constant 4 : index
    %c0_254 = arith.constant 0 : index
    %c0_255 = arith.constant 0 : index
    %249 = vector.load %arg4[%c4_253, %c0_254, %c0_255] : memref<9x8x8xf32, #tpu.memory_space<vmem>>, vector<1x8x8xf32>
    %250 = vector.shape_cast %249 : vector<1x8x8xf32> to vector<8x8xf32>
    %cst_256 = arith.constant dense<0.000000e+00> : vector<6x8xf32>
    %251 = tpu.matmul %248, %250, %cst_256 {dimension_numbers = #tpu.dot_dimension_numbers<[1], [0], [0], [1], [0, 0, 1, 1], [], []>} : vector<6x8xf32>, vector<8x8xf32>, vector<6x8xf32> -> vector<6x8xf32>
    %252 = arith.addf %246, %251 : vector<6x8xf32>
    %c4_257 = arith.constant 4 : index
    %c2_258 = arith.constant 2 : index
    %c0_259 = arith.constant 0 : index
    %253 = vector.load %arg8[%c4_257, %c2_258, %c0_259] : memref<8x8x8xf32, #tpu.memory_space<vmem>>, vector<1x6x8xf32>
    %254 = vector.shape_cast %253 : vector<1x6x8xf32> to vector<6x8xf32>
    %c5_260 = arith.constant 5 : index
    %c0_261 = arith.constant 0 : index
    %c0_262 = arith.constant 0 : index
    %255 = vector.load %arg4[%c5_260, %c0_261, %c0_262] : memref<9x8x8xf32, #tpu.memory_space<vmem>>, vector<1x8x8xf32>
    %256 = vector.shape_cast %255 : vector<1x8x8xf32> to vector<8x8xf32>
    %cst_263 = arith.constant dense<0.000000e+00> : vector<6x8xf32>
    %257 = tpu.matmul %254, %256, %cst_263 {dimension_numbers = #tpu.dot_dimension_numbers<[1], [0], [0], [1], [0, 0, 1, 1], [], []>} : vector<6x8xf32>, vector<8x8xf32>, vector<6x8xf32> -> vector<6x8xf32>
    %258 = arith.addf %252, %257 : vector<6x8xf32>
    %c5_264 = arith.constant 5 : index
    %c0_265 = arith.constant 0 : index
    %c0_266 = arith.constant 0 : index
    %259 = vector.load %arg8[%c5_264, %c0_265, %c0_266] : memref<8x8x8xf32, #tpu.memory_space<vmem>>, vector<1x6x8xf32>
    %260 = vector.shape_cast %259 : vector<1x6x8xf32> to vector<6x8xf32>
    %c6_267 = arith.constant 6 : index
    %c0_268 = arith.constant 0 : index
    %c0_269 = arith.constant 0 : index
    %261 = vector.load %arg4[%c6_267, %c0_268, %c0_269] : memref<9x8x8xf32, #tpu.memory_space<vmem>>, vector<1x8x8xf32>
    %262 = vector.shape_cast %261 : vector<1x8x8xf32> to vector<8x8xf32>
    %cst_270 = arith.constant dense<0.000000e+00> : vector<6x8xf32>
    %263 = tpu.matmul %260, %262, %cst_270 {dimension_numbers = #tpu.dot_dimension_numbers<[1], [0], [0], [1], [0, 0, 1, 1], [], []>} : vector<6x8xf32>, vector<8x8xf32>, vector<6x8xf32> -> vector<6x8xf32>
    %264 = arith.addf %258, %263 : vector<6x8xf32>
    %c5_271 = arith.constant 5 : index
    %c1_272 = arith.constant 1 : index
    %c0_273 = arith.constant 0 : index
    %265 = vector.load %arg8[%c5_271, %c1_272, %c0_273] : memref<8x8x8xf32, #tpu.memory_space<vmem>>, vector<1x6x8xf32>
    %266 = vector.shape_cast %265 : vector<1x6x8xf32> to vector<6x8xf32>
    %c7_274 = arith.constant 7 : index
    %c0_275 = arith.constant 0 : index
    %c0_276 = arith.constant 0 : index
    %267 = vector.load %arg4[%c7_274, %c0_275, %c0_276] : memref<9x8x8xf32, #tpu.memory_space<vmem>>, vector<1x8x8xf32>
    %268 = vector.shape_cast %267 : vector<1x8x8xf32> to vector<8x8xf32>
    %cst_277 = arith.constant dense<0.000000e+00> : vector<6x8xf32>
    %269 = tpu.matmul %266, %268, %cst_277 {dimension_numbers = #tpu.dot_dimension_numbers<[1], [0], [0], [1], [0, 0, 1, 1], [], []>} : vector<6x8xf32>, vector<8x8xf32>, vector<6x8xf32> -> vector<6x8xf32>
    %270 = arith.addf %264, %269 : vector<6x8xf32>
    %c5_278 = arith.constant 5 : index
    %c2_279 = arith.constant 2 : index
    %c0_280 = arith.constant 0 : index
    %271 = vector.load %arg8[%c5_278, %c2_279, %c0_280] : memref<8x8x8xf32, #tpu.memory_space<vmem>>, vector<1x6x8xf32>
    %272 = vector.shape_cast %271 : vector<1x6x8xf32> to vector<6x8xf32>
    %c8_281 = arith.constant 8 : index
    %c0_282 = arith.constant 0 : index
    %c0_283 = arith.constant 0 : index
    %273 = vector.load %arg4[%c8_281, %c0_282, %c0_283] : memref<9x8x8xf32, #tpu.memory_space<vmem>>, vector<1x8x8xf32>
    %274 = vector.shape_cast %273 : vector<1x8x8xf32> to vector<8x8xf32>
    %cst_284 = arith.constant dense<0.000000e+00> : vector<6x8xf32>
    %275 = tpu.matmul %272, %274, %cst_284 {dimension_numbers = #tpu.dot_dimension_numbers<[1], [0], [0], [1], [0, 0, 1, 1], [], []>} : vector<6x8xf32>, vector<8x8xf32>, vector<6x8xf32> -> vector<6x8xf32>
    %276 = arith.addf %270, %275 : vector<6x8xf32>
    %c0_285 = arith.constant 0 : index
    %c0_286 = arith.constant 0 : index
    %277 = vector.load %arg5[%c0_285, %c0_286] : memref<1x8xf32, #tpu.memory_space<vmem>>, vector<1x8xf32>
    %278 = vector.broadcast %277 : vector<1x8xf32> to vector<6x8xf32>
    %279 = arith.addf %276, %278 : vector<6x8xf32>
    %c0_287 = arith.constant 0 : index
    %c3_288 = arith.constant 3 : index
    %c0_289 = arith.constant 0 : index
    %c0_290 = arith.constant 0 : index
    %280 = vector.load %arg6[%c0_287, %c3_288, %c0_289, %c0_290] : memref<1x6x6x8xf32, #tpu.memory_space<vmem>>, vector<1x1x6x8xf32>
    %281 = vector.shape_cast %280 : vector<1x1x6x8xf32> to vector<6x8xf32>
    %282 = vector.shape_cast %279 : vector<6x8xf32> to vector<1x1x6x8xf32>
    tpu.vector_store %arg6[%c0_287, %c3_288, %c0_289, %c0_290], %282 {strides = array<i32>} : memref<1x6x6x8xf32, #tpu.memory_space<vmem>>, vector<1x1x6x8xf32>,
    %cst_291 = arith.constant dense<0.000000e+00> : vector<8xf32>
    %283 = vector.multi_reduction <add>, %279, %cst_291 [0] : vector<6x8xf32> to vector<8xf32>
    %284 = vector.shape_cast %283 : vector<8xf32> to vector<1x8xf32>
    %285 = arith.addf %217, %284 : vector<1x8xf32>
    %286 = arith.mulf %279, %279 : vector<6x8xf32>
    %cst_292 = arith.constant dense<0.000000e+00> : vector<8xf32>
    %287 = vector.multi_reduction <add>, %286, %cst_292 [0] : vector<6x8xf32> to vector<8xf32>
    %288 = vector.shape_cast %287 : vector<8xf32> to vector<1x8xf32>
    %289 = arith.addf %221, %288 : vector<1x8xf32>
    %cst_293 = arith.constant 0.000000e+00 : f32
    %290 = vector.broadcast %cst_293 : f32 to vector<6x8xf32>
    %c4_294 = arith.constant 4 : index
    %c0_295 = arith.constant 0 : index
    %c0_296 = arith.constant 0 : index
    %291 = vector.load %arg8[%c4_294, %c0_295, %c0_296] : memref<8x8x8xf32, #tpu.memory_space<vmem>>, vector<1x6x8xf32>
    %292 = vector.shape_cast %291 : vector<1x6x8xf32> to vector<6x8xf32>
    %c0_297 = arith.constant 0 : index
    %c0_298 = arith.constant 0 : index
    %c0_299 = arith.constant 0 : index
    %293 = vector.load %arg4[%c0_297, %c0_298, %c0_299] : memref<9x8x8xf32, #tpu.memory_space<vmem>>, vector<1x8x8xf32>
    %294 = vector.shape_cast %293 : vector<1x8x8xf32> to vector<8x8xf32>
    %cst_300 = arith.constant dense<0.000000e+00> : vector<6x8xf32>
    %295 = tpu.matmul %292, %294, %cst_300 {dimension_numbers = #tpu.dot_dimension_numbers<[1], [0], [0], [1], [0, 0, 1, 1], [], []>} : vector<6x8xf32>, vector<8x8xf32>, vector<6x8xf32> -> vector<6x8xf32>
    %296 = arith.addf %290, %295 : vector<6x8xf32>
    %c4_301 = arith.constant 4 : index
    %c1_302 = arith.constant 1 : index
    %c0_303 = arith.constant 0 : index
    %297 = vector.load %arg8[%c4_301, %c1_302, %c0_303] : memref<8x8x8xf32, #tpu.memory_space<vmem>>, vector<1x6x8xf32>
    %298 = vector.shape_cast %297 : vector<1x6x8xf32> to vector<6x8xf32>
    %c1_304 = arith.constant 1 : index
    %c0_305 = arith.constant 0 : index
    %c0_306 = arith.constant 0 : index
    %299 = vector.load %arg4[%c1_304, %c0_305, %c0_306] : memref<9x8x8xf32, #tpu.memory_space<vmem>>, vector<1x8x8xf32>
    %300 = vector.shape_cast %299 : vector<1x8x8xf32> to vector<8x8xf32>
    %cst_307 = arith.constant dense<0.000000e+00> : vector<6x8xf32>
    %301 = tpu.matmul %298, %300, %cst_307 {dimension_numbers = #tpu.dot_dimension_numbers<[1], [0], [0], [1], [0, 0, 1, 1], [], []>} : vector<6x8xf32>, vector<8x8xf32>, vector<6x8xf32> -> vector<6x8xf32>
    %302 = arith.addf %296, %301 : vector<6x8xf32>
    %c4_308 = arith.constant 4 : index
    %c2_309 = arith.constant 2 : index
    %c0_310 = arith.constant 0 : index
    %303 = vector.load %arg8[%c4_308, %c2_309, %c0_310] : memref<8x8x8xf32, #tpu.memory_space<vmem>>, vector<1x6x8xf32>
    %304 = vector.shape_cast %303 : vector<1x6x8xf32> to vector<6x8xf32>
    %c2_311 = arith.constant 2 : index
    %c0_312 = arith.constant 0 : index
    %c0_313 = arith.constant 0 : index
    %305 = vector.load %arg4[%c2_311, %c0_312, %c0_313] : memref<9x8x8xf32, #tpu.memory_space<vmem>>, vector<1x8x8xf32>
    %306 = vector.shape_cast %305 : vector<1x8x8xf32> to vector<8x8xf32>
    %cst_314 = arith.constant dense<0.000000e+00> : vector<6x8xf32>
    %307 = tpu.matmul %304, %306, %cst_314 {dimension_numbers = #tpu.dot_dimension_numbers<[1], [0], [0], [1], [0, 0, 1, 1], [], []>} : vector<6x8xf32>, vector<8x8xf32>, vector<6x8xf32> -> vector<6x8xf32>
    %308 = arith.addf %302, %307 : vector<6x8xf32>
    %c5_315 = arith.constant 5 : index
    %c0_316 = arith.constant 0 : index
    %c0_317 = arith.constant 0 : index
    %309 = vector.load %arg8[%c5_315, %c0_316, %c0_317] : memref<8x8x8xf32, #tpu.memory_space<vmem>>, vector<1x6x8xf32>
    %310 = vector.shape_cast %309 : vector<1x6x8xf32> to vector<6x8xf32>
    %c3_318 = arith.constant 3 : index
    %c0_319 = arith.constant 0 : index
    %c0_320 = arith.constant 0 : index
    %311 = vector.load %arg4[%c3_318, %c0_319, %c0_320] : memref<9x8x8xf32, #tpu.memory_space<vmem>>, vector<1x8x8xf32>
    %312 = vector.shape_cast %311 : vector<1x8x8xf32> to vector<8x8xf32>
    %cst_321 = arith.constant dense<0.000000e+00> : vector<6x8xf32>
    %313 = tpu.matmul %310, %312, %cst_321 {dimension_numbers = #tpu.dot_dimension_numbers<[1], [0], [0], [1], [0, 0, 1, 1], [], []>} : vector<6x8xf32>, vector<8x8xf32>, vector<6x8xf32> -> vector<6x8xf32>
    %314 = arith.addf %308, %313 : vector<6x8xf32>
    %c5_322 = arith.constant 5 : index
    %c1_323 = arith.constant 1 : index
    %c0_324 = arith.constant 0 : index
    %315 = vector.load %arg8[%c5_322, %c1_323, %c0_324] : memref<8x8x8xf32, #tpu.memory_space<vmem>>, vector<1x6x8xf32>
    %316 = vector.shape_cast %315 : vector<1x6x8xf32> to vector<6x8xf32>
    %c4_325 = arith.constant 4 : index
    %c0_326 = arith.constant 0 : index
    %c0_327 = arith.constant 0 : index
    %317 = vector.load %arg4[%c4_325, %c0_326, %c0_327] : memref<9x8x8xf32, #tpu.memory_space<vmem>>, vector<1x8x8xf32>
    %318 = vector.shape_cast %317 : vector<1x8x8xf32> to vector<8x8xf32>
    %cst_328 = arith.constant dense<0.000000e+00> : vector<6x8xf32>
    %319 = tpu.matmul %316, %318, %cst_328 {dimension_numbers = #tpu.dot_dimension_numbers<[1], [0], [0], [1], [0, 0, 1, 1], [], []>} : vector<6x8xf32>, vector<8x8xf32>, vector<6x8xf32> -> vector<6x8xf32>
    %320 = arith.addf %314, %319 : vector<6x8xf32>
    %c5_329 = arith.constant 5 : index
    %c2_330 = arith.constant 2 : index
    %c0_331 = arith.constant 0 : index
    %321 = vector.load %arg8[%c5_329, %c2_330, %c0_331] : memref<8x8x8xf32, #tpu.memory_space<vmem>>, vector<1x6x8xf32>
    %322 = vector.shape_cast %321 : vector<1x6x8xf32> to vector<6x8xf32>
    %c5_332 = arith.constant 5 : index
    %c0_333 = arith.constant 0 : index
    %c0_334 = arith.constant 0 : index
    %323 = vector.load %arg4[%c5_332, %c0_333, %c0_334] : memref<9x8x8xf32, #tpu.memory_space<vmem>>, vector<1x8x8xf32>
    %324 = vector.shape_cast %323 : vector<1x8x8xf32> to vector<8x8xf32>
    %cst_335 = arith.constant dense<0.000000e+00> : vector<6x8xf32>
    %325 = tpu.matmul %322, %324, %cst_335 {dimension_numbers = #tpu.dot_dimension_numbers<[1], [0], [0], [1], [0, 0, 1, 1], [], []>} : vector<6x8xf32>, vector<8x8xf32>, vector<6x8xf32> -> vector<6x8xf32>
    %326 = arith.addf %320, %325 : vector<6x8xf32>
    %c6_336 = arith.constant 6 : index
    %c0_337 = arith.constant 0 : index
    %c0_338 = arith.constant 0 : index
    %327 = vector.load %arg8[%c6_336, %c0_337, %c0_338] : memref<8x8x8xf32, #tpu.memory_space<vmem>>, vector<1x6x8xf32>
    %328 = vector.shape_cast %327 : vector<1x6x8xf32> to vector<6x8xf32>
    %c6_339 = arith.constant 6 : index
    %c0_340 = arith.constant 0 : index
    %c0_341 = arith.constant 0 : index
    %329 = vector.load %arg4[%c6_339, %c0_340, %c0_341] : memref<9x8x8xf32, #tpu.memory_space<vmem>>, vector<1x8x8xf32>
    %330 = vector.shape_cast %329 : vector<1x8x8xf32> to vector<8x8xf32>
    %cst_342 = arith.constant dense<0.000000e+00> : vector<6x8xf32>
    %331 = tpu.matmul %328, %330, %cst_342 {dimension_numbers = #tpu.dot_dimension_numbers<[1], [0], [0], [1], [0, 0, 1, 1], [], []>} : vector<6x8xf32>, vector<8x8xf32>, vector<6x8xf32> -> vector<6x8xf32>
    %332 = arith.addf %326, %331 : vector<6x8xf32>
    %c6_343 = arith.constant 6 : index
    %c1_344 = arith.constant 1 : index
    %c0_345 = arith.constant 0 : index
    %333 = vector.load %arg8[%c6_343, %c1_344, %c0_345] : memref<8x8x8xf32, #tpu.memory_space<vmem>>, vector<1x6x8xf32>
    %334 = vector.shape_cast %333 : vector<1x6x8xf32> to vector<6x8xf32>
    %c7_346 = arith.constant 7 : index
    %c0_347 = arith.constant 0 : index
    %c0_348 = arith.constant 0 : index
    %335 = vector.load %arg4[%c7_346, %c0_347, %c0_348] : memref<9x8x8xf32, #tpu.memory_space<vmem>>, vector<1x8x8xf32>
    %336 = vector.shape_cast %335 : vector<1x8x8xf32> to vector<8x8xf32>
    %cst_349 = arith.constant dense<0.000000e+00> : vector<6x8xf32>
    %337 = tpu.matmul %334, %336, %cst_349 {dimension_numbers = #tpu.dot_dimension_numbers<[1], [0], [0], [1], [0, 0, 1, 1], [], []>} : vector<6x8xf32>, vector<8x8xf32>, vector<6x8xf32> -> vector<6x8xf32>
    %338 = arith.addf %332, %337 : vector<6x8xf32>
    %c6_350 = arith.constant 6 : index
    %c2_351 = arith.constant 2 : index
    %c0_352 = arith.constant 0 : index
    %339 = vector.load %arg8[%c6_350, %c2_351, %c0_352] : memref<8x8x8xf32, #tpu.memory_space<vmem>>, vector<1x6x8xf32>
    %340 = vector.shape_cast %339 : vector<1x6x8xf32> to vector<6x8xf32>
    %c8_353 = arith.constant 8 : index
    %c0_354 = arith.constant 0 : index
    %c0_355 = arith.constant 0 : index
    %341 = vector.load %arg4[%c8_353, %c0_354, %c0_355] : memref<9x8x8xf32, #tpu.memory_space<vmem>>, vector<1x8x8xf32>
    %342 = vector.shape_cast %341 : vector<1x8x8xf32> to vector<8x8xf32>
    %cst_356 = arith.constant dense<0.000000e+00> : vector<6x8xf32>
    %343 = tpu.matmul %340, %342, %cst_356 {dimension_numbers = #tpu.dot_dimension_numbers<[1], [0], [0], [1], [0, 0, 1, 1], [], []>} : vector<6x8xf32>, vector<8x8xf32>, vector<6x8xf32> -> vector<6x8xf32>
    %344 = arith.addf %338, %343 : vector<6x8xf32>
    %c0_357 = arith.constant 0 : index
    %c0_358 = arith.constant 0 : index
    %345 = vector.load %arg5[%c0_357, %c0_358] : memref<1x8xf32, #tpu.memory_space<vmem>>, vector<1x8xf32>
    %346 = vector.broadcast %345 : vector<1x8xf32> to vector<6x8xf32>
    %347 = arith.addf %344, %346 : vector<6x8xf32>
    %c0_359 = arith.constant 0 : index
    %c4_360 = arith.constant 4 : index
    %c0_361 = arith.constant 0 : index
    %c0_362 = arith.constant 0 : index
    %348 = vector.load %arg6[%c0_359, %c4_360, %c0_361, %c0_362] : memref<1x6x6x8xf32, #tpu.memory_space<vmem>>, vector<1x1x6x8xf32>
    %349 = vector.shape_cast %348 : vector<1x1x6x8xf32> to vector<6x8xf32>
    %350 = vector.shape_cast %347 : vector<6x8xf32> to vector<1x1x6x8xf32>
    tpu.vector_store %arg6[%c0_359, %c4_360, %c0_361, %c0_362], %350 {strides = array<i32>} : memref<1x6x6x8xf32, #tpu.memory_space<vmem>>, vector<1x1x6x8xf32>,
    %cst_363 = arith.constant dense<0.000000e+00> : vector<8xf32>
    %351 = vector.multi_reduction <add>, %347, %cst_363 [0] : vector<6x8xf32> to vector<8xf32>
    %352 = vector.shape_cast %351 : vector<8xf32> to vector<1x8xf32>
    %353 = arith.addf %285, %352 : vector<1x8xf32>
    %354 = arith.mulf %347, %347 : vector<6x8xf32>
    %cst_364 = arith.constant dense<0.000000e+00> : vector<8xf32>
    %355 = vector.multi_reduction <add>, %354, %cst_364 [0] : vector<6x8xf32> to vector<8xf32>
    %356 = vector.shape_cast %355 : vector<8xf32> to vector<1x8xf32>
    %357 = arith.addf %289, %356 : vector<1x8xf32>
    %cst_365 = arith.constant 0.000000e+00 : f32
    %358 = vector.broadcast %cst_365 : f32 to vector<6x8xf32>
    %c5_366 = arith.constant 5 : index
    %c0_367 = arith.constant 0 : index
    %c0_368 = arith.constant 0 : index
    %359 = vector.load %arg8[%c5_366, %c0_367, %c0_368] : memref<8x8x8xf32, #tpu.memory_space<vmem>>, vector<1x6x8xf32>
    %360 = vector.shape_cast %359 : vector<1x6x8xf32> to vector<6x8xf32>
    %c0_369 = arith.constant 0 : index
    %c0_370 = arith.constant 0 : index
    %c0_371 = arith.constant 0 : index
    %361 = vector.load %arg4[%c0_369, %c0_370, %c0_371] : memref<9x8x8xf32, #tpu.memory_space<vmem>>, vector<1x8x8xf32>
    %362 = vector.shape_cast %361 : vector<1x8x8xf32> to vector<8x8xf32>
    %cst_372 = arith.constant dense<0.000000e+00> : vector<6x8xf32>
    %363 = tpu.matmul %360, %362, %cst_372 {dimension_numbers = #tpu.dot_dimension_numbers<[1], [0], [0], [1], [0, 0, 1, 1], [], []>} : vector<6x8xf32>, vector<8x8xf32>, vector<6x8xf32> -> vector<6x8xf32>
    %364 = arith.addf %358, %363 : vector<6x8xf32>
    %c5_373 = arith.constant 5 : index
    %c1_374 = arith.constant 1 : index
    %c0_375 = arith.constant 0 : index
    %365 = vector.load %arg8[%c5_373, %c1_374, %c0_375] : memref<8x8x8xf32, #tpu.memory_space<vmem>>, vector<1x6x8xf32>
    %366 = vector.shape_cast %365 : vector<1x6x8xf32> to vector<6x8xf32>
    %c1_376 = arith.constant 1 : index
    %c0_377 = arith.constant 0 : index
    %c0_378 = arith.constant 0 : index
    %367 = vector.load %arg4[%c1_376, %c0_377, %c0_378] : memref<9x8x8xf32, #tpu.memory_space<vmem>>, vector<1x8x8xf32>
    %368 = vector.shape_cast %367 : vector<1x8x8xf32> to vector<8x8xf32>
    %cst_379 = arith.constant dense<0.000000e+00> : vector<6x8xf32>
    %369 = tpu.matmul %366, %368, %cst_379 {dimension_numbers = #tpu.dot_dimension_numbers<[1], [0], [0], [1], [0, 0, 1, 1], [], []>} : vector<6x8xf32>, vector<8x8xf32>, vector<6x8xf32> -> vector<6x8xf32>
    %370 = arith.addf %364, %369 : vector<6x8xf32>
    %c5_380 = arith.constant 5 : index
    %c2_381 = arith.constant 2 : index
    %c0_382 = arith.constant 0 : index
    %371 = vector.load %arg8[%c5_380, %c2_381, %c0_382] : memref<8x8x8xf32, #tpu.memory_space<vmem>>, vector<1x6x8xf32>
    %372 = vector.shape_cast %371 : vector<1x6x8xf32> to vector<6x8xf32>
    %c2_383 = arith.constant 2 : index
    %c0_384 = arith.constant 0 : index
    %c0_385 = arith.constant 0 : index
    %373 = vector.load %arg4[%c2_383, %c0_384, %c0_385] : memref<9x8x8xf32, #tpu.memory_space<vmem>>, vector<1x8x8xf32>
    %374 = vector.shape_cast %373 : vector<1x8x8xf32> to vector<8x8xf32>
    %cst_386 = arith.constant dense<0.000000e+00> : vector<6x8xf32>
    %375 = tpu.matmul %372, %374, %cst_386 {dimension_numbers = #tpu.dot_dimension_numbers<[1], [0], [0], [1], [0, 0, 1, 1], [], []>} : vector<6x8xf32>, vector<8x8xf32>, vector<6x8xf32> -> vector<6x8xf32>
    %376 = arith.addf %370, %375 : vector<6x8xf32>
    %c6_387 = arith.constant 6 : index
    %c0_388 = arith.constant 0 : index
    %c0_389 = arith.constant 0 : index
    %377 = vector.load %arg8[%c6_387, %c0_388, %c0_389] : memref<8x8x8xf32, #tpu.memory_space<vmem>>, vector<1x6x8xf32>
    %378 = vector.shape_cast %377 : vector<1x6x8xf32> to vector<6x8xf32>
    %c3_390 = arith.constant 3 : index
    %c0_391 = arith.constant 0 : index
    %c0_392 = arith.constant 0 : index
    %379 = vector.load %arg4[%c3_390, %c0_391, %c0_392] : memref<9x8x8xf32, #tpu.memory_space<vmem>>, vector<1x8x8xf32>
    %380 = vector.shape_cast %379 : vector<1x8x8xf32> to vector<8x8xf32>
    %cst_393 = arith.constant dense<0.000000e+00> : vector<6x8xf32>
    %381 = tpu.matmul %378, %380, %cst_393 {dimension_numbers = #tpu.dot_dimension_numbers<[1], [0], [0], [1], [0, 0, 1, 1], [], []>} : vector<6x8xf32>, vector<8x8xf32>, vector<6x8xf32> -> vector<6x8xf32>
    %382 = arith.addf %376, %381 : vector<6x8xf32>
    %c6_394 = arith.constant 6 : index
    %c1_395 = arith.constant 1 : index
    %c0_396 = arith.constant 0 : index
    %383 = vector.load %arg8[%c6_394, %c1_395, %c0_396] : memref<8x8x8xf32, #tpu.memory_space<vmem>>, vector<1x6x8xf32>
    %384 = vector.shape_cast %383 : vector<1x6x8xf32> to vector<6x8xf32>
    %c4_397 = arith.constant 4 : index
    %c0_398 = arith.constant 0 : index
    %c0_399 = arith.constant 0 : index
    %385 = vector.load %arg4[%c4_397, %c0_398, %c0_399] : memref<9x8x8xf32, #tpu.memory_space<vmem>>, vector<1x8x8xf32>
    %386 = vector.shape_cast %385 : vector<1x8x8xf32> to vector<8x8xf32>
    %cst_400 = arith.constant dense<0.000000e+00> : vector<6x8xf32>
    %387 = tpu.matmul %384, %386, %cst_400 {dimension_numbers = #tpu.dot_dimension_numbers<[1], [0], [0], [1], [0, 0, 1, 1], [], []>} : vector<6x8xf32>, vector<8x8xf32>, vector<6x8xf32> -> vector<6x8xf32>
    %388 = arith.addf %382, %387 : vector<6x8xf32>
    %c6_401 = arith.constant 6 : index
    %c2_402 = arith.constant 2 : index
    %c0_403 = arith.constant 0 : index
    %389 = vector.load %arg8[%c6_401, %c2_402, %c0_403] : memref<8x8x8xf32, #tpu.memory_space<vmem>>, vector<1x6x8xf32>
    %390 = vector.shape_cast %389 : vector<1x6x8xf32> to vector<6x8xf32>
    %c5_404 = arith.constant 5 : index
    %c0_405 = arith.constant 0 : index
    %c0_406 = arith.constant 0 : index
    %391 = vector.load %arg4[%c5_404, %c0_405, %c0_406] : memref<9x8x8xf32, #tpu.memory_space<vmem>>, vector<1x8x8xf32>
    %392 = vector.shape_cast %391 : vector<1x8x8xf32> to vector<8x8xf32>
    %cst_407 = arith.constant dense<0.000000e+00> : vector<6x8xf32>
    %393 = tpu.matmul %390, %392, %cst_407 {dimension_numbers = #tpu.dot_dimension_numbers<[1], [0], [0], [1], [0, 0, 1, 1], [], []>} : vector<6x8xf32>, vector<8x8xf32>, vector<6x8xf32> -> vector<6x8xf32>
    %394 = arith.addf %388, %393 : vector<6x8xf32>
    %c7_408 = arith.constant 7 : index
    %c0_409 = arith.constant 0 : index
    %c0_410 = arith.constant 0 : index
    %395 = vector.load %arg8[%c7_408, %c0_409, %c0_410] : memref<8x8x8xf32, #tpu.memory_space<vmem>>, vector<1x6x8xf32>
    %396 = vector.shape_cast %395 : vector<1x6x8xf32> to vector<6x8xf32>
    %c6_411 = arith.constant 6 : index
    %c0_412 = arith.constant 0 : index
    %c0_413 = arith.constant 0 : index
    %397 = vector.load %arg4[%c6_411, %c0_412, %c0_413] : memref<9x8x8xf32, #tpu.memory_space<vmem>>, vector<1x8x8xf32>
    %398 = vector.shape_cast %397 : vector<1x8x8xf32> to vector<8x8xf32>
    %cst_414 = arith.constant dense<0.000000e+00> : vector<6x8xf32>
    %399 = tpu.matmul %396, %398, %cst_414 {dimension_numbers = #tpu.dot_dimension_numbers<[1], [0], [0], [1], [0, 0, 1, 1], [], []>} : vector<6x8xf32>, vector<8x8xf32>, vector<6x8xf32> -> vector<6x8xf32>
    %400 = arith.addf %394, %399 : vector<6x8xf32>
    %c7_415 = arith.constant 7 : index
    %c1_416 = arith.constant 1 : index
    %c0_417 = arith.constant 0 : index
    %401 = vector.load %arg8[%c7_415, %c1_416, %c0_417] : memref<8x8x8xf32, #tpu.memory_space<vmem>>, vector<1x6x8xf32>
    %402 = vector.shape_cast %401 : vector<1x6x8xf32> to vector<6x8xf32>
    %c7_418 = arith.constant 7 : index
    %c0_419 = arith.constant 0 : index
    %c0_420 = arith.constant 0 : index
    %403 = vector.load %arg4[%c7_418, %c0_419, %c0_420] : memref<9x8x8xf32, #tpu.memory_space<vmem>>, vector<1x8x8xf32>
    %404 = vector.shape_cast %403 : vector<1x8x8xf32> to vector<8x8xf32>
    %cst_421 = arith.constant dense<0.000000e+00> : vector<6x8xf32>
    %405 = tpu.matmul %402, %404, %cst_421 {dimension_numbers = #tpu.dot_dimension_numbers<[1], [0], [0], [1], [0, 0, 1, 1], [], []>} : vector<6x8xf32>, vector<8x8xf32>, vector<6x8xf32> -> vector<6x8xf32>
    %406 = arith.addf %400, %405 : vector<6x8xf32>
    %c7_422 = arith.constant 7 : index
    %c2_423 = arith.constant 2 : index
    %c0_424 = arith.constant 0 : index
    %407 = vector.load %arg8[%c7_422, %c2_423, %c0_424] : memref<8x8x8xf32, #tpu.memory_space<vmem>>, vector<1x6x8xf32>
    %408 = vector.shape_cast %407 : vector<1x6x8xf32> to vector<6x8xf32>
    %c8_425 = arith.constant 8 : index
    %c0_426 = arith.constant 0 : index
    %c0_427 = arith.constant 0 : index
    %409 = vector.load %arg4[%c8_425, %c0_426, %c0_427] : memref<9x8x8xf32, #tpu.memory_space<vmem>>, vector<1x8x8xf32>
    %410 = vector.shape_cast %409 : vector<1x8x8xf32> to vector<8x8xf32>
    %cst_428 = arith.constant dense<0.000000e+00> : vector<6x8xf32>
    %411 = tpu.matmul %408, %410, %cst_428 {dimension_numbers = #tpu.dot_dimension_numbers<[1], [0], [0], [1], [0, 0, 1, 1], [], []>} : vector<6x8xf32>, vector<8x8xf32>, vector<6x8xf32> -> vector<6x8xf32>
    %412 = arith.addf %406, %411 : vector<6x8xf32>
    %c0_429 = arith.constant 0 : index
    %c0_430 = arith.constant 0 : index
    %413 = vector.load %arg5[%c0_429, %c0_430] : memref<1x8xf32, #tpu.memory_space<vmem>>, vector<1x8xf32>
    %414 = vector.broadcast %413 : vector<1x8xf32> to vector<6x8xf32>
    %415 = arith.addf %412, %414 : vector<6x8xf32>
    %c0_431 = arith.constant 0 : index
    %c5_432 = arith.constant 5 : index
    %c0_433 = arith.constant 0 : index
    %c0_434 = arith.constant 0 : index
    %416 = vector.load %arg6[%c0_431, %c5_432, %c0_433, %c0_434] : memref<1x6x6x8xf32, #tpu.memory_space<vmem>>, vector<1x1x6x8xf32>
    %417 = vector.shape_cast %416 : vector<1x1x6x8xf32> to vector<6x8xf32>
    %418 = vector.shape_cast %415 : vector<6x8xf32> to vector<1x1x6x8xf32>
    tpu.vector_store %arg6[%c0_431, %c5_432, %c0_433, %c0_434], %418 {strides = array<i32>} : memref<1x6x6x8xf32, #tpu.memory_space<vmem>>, vector<1x1x6x8xf32>,
    %cst_435 = arith.constant dense<0.000000e+00> : vector<8xf32>
    %419 = vector.multi_reduction <add>, %415, %cst_435 [0] : vector<6x8xf32> to vector<8xf32>
    %420 = vector.shape_cast %419 : vector<8xf32> to vector<1x8xf32>
    %421 = arith.addf %353, %420 : vector<1x8xf32>
    %422 = arith.mulf %415, %415 : vector<6x8xf32>
    %cst_436 = arith.constant dense<0.000000e+00> : vector<8xf32>
    %423 = vector.multi_reduction <add>, %422, %cst_436 [0] : vector<6x8xf32> to vector<8xf32>
    %424 = vector.shape_cast %423 : vector<8xf32> to vector<1x8xf32>
    %425 = arith.addf %357, %424 : vector<1x8xf32>
    %c0_437 = arith.constant 0 : index
    %c0_438 = arith.constant 0 : index
    %c0_439 = arith.constant 0 : index
    %426 = vector.load %arg7[%c0_437, %c0_438, %c0_439] : memref<1x2x8xf32, #tpu.memory_space<vmem>>, vector<1x1x8xf32>
    %427 = vector.shape_cast %426 : vector<1x1x8xf32> to vector<1x8xf32>
    %428 = vector.shape_cast %421 : vector<1x8xf32> to vector<1x1x8xf32>
    tpu.vector_store %arg7[%c0_437, %c0_438, %c0_439], %428 {strides = array<i32>} : memref<1x2x8xf32, #tpu.memory_space<vmem>>, vector<1x1x8xf32>,
    %c0_440 = arith.constant 0 : index
    %c1_441 = arith.constant 1 : index
    %c0_442 = arith.constant 0 : index
    %429 = vector.load %arg7[%c0_440, %c1_441, %c0_442] : memref<1x2x8xf32, #tpu.memory_space<vmem>>, vector<1x1x8xf32>
    %430 = vector.shape_cast %429 : vector<1x1x8xf32> to vector<1x8xf32>
    %431 = vector.shape_cast %425 : vector<1x8xf32> to vector<1x1x8xf32>
    tpu.vector_store %arg7[%c0_440, %c1_441, %c0_442], %431 {strides = array<i32>} : memref<1x2x8xf32, #tpu.memory_space<vmem>>, vector<1x1x8xf32>,
    return
  }
  func.func @transform_0(%arg0: i32) -> (i32, i32, i32, i32) {
    %c0_i32 = arith.constant 0 : i32
    %c0_i32_0 = arith.constant 0 : i32
    %c0_i32_1 = arith.constant 0 : i32
    %c0_i32_2 = arith.constant 0 : i32
    return %arg0, %c0_i32, %c0_i32_0, %c0_i32_1 : i32, i32, i32, i32
  }
  func.func @transform_1(%arg0: i32) -> (i32, i32) {
    %c0_i32 = arith.constant 0 : i32
    %c0_i32_0 = arith.constant 0 : i32
    %c0_i32_1 = arith.constant 0 : i32
    return %c0_i32, %c0_i32_0 : i32, i32
  }
  func.func @transform_2(%arg0: i32) -> (i32, i32) {
    %c0_i32 = arith.constant 0 : i32
    %c0_i32_0 = arith.constant 0 : i32
    %c0_i32_1 = arith.constant 0 : i32
    return %c0_i32, %c0_i32_0 : i32, i32
  }
  func.func @transform_3(%arg0: i32) -> (i32, i32, i32) {
    %c0_i32 = arith.constant 0 : i32
    %c0_i32_0 = arith.constant 0 : i32
    %c0_i32_1 = arith.constant 0 : i32
    %c0_i32_2 = arith.constant 0 : i32
    return %c0_i32, %c0_i32_0, %c0_i32_1 : i32, i32, i32
  }
  func.func @transform_4(%arg0: i32) -> (i32, i32) {
    %c0_i32 = arith.constant 0 : i32
    %c0_i32_0 = arith.constant 0 : i32
    %c0_i32_1 = arith.constant 0 : i32
    return %c0_i32, %c0_i32_0 : i32, i32
  }
  func.func @transform_5(%arg0: i32) -> (i32, i32, i32, i32) {
    %c0_i32 = arith.constant 0 : i32
    %c0_i32_0 = arith.constant 0 : i32
    %c0_i32_1 = arith.constant 0 : i32
    %c0_i32_2 = arith.constant 0 : i32
    return %arg0, %c0_i32, %c0_i32_0, %c0_i32_1 : i32, i32, i32, i32
  }
  func.func @transform_6(%arg0: i32) -> (i32, i32, i32) {
    %c0_i32 = arith.constant 0 : i32
    %c0_i32_0 = arith.constant 0 : i32
    %c0_i32_1 = arith.constant 0 : i32
    return %arg0, %c0_i32, %c0_i32_0 : i32, i32, i32
  }
}

module attributes {stable_mosaic.version = 11 : i64} {
  func.func @_affine_lrelu_kernel(%arg0: i32, %arg1: memref<8x128xf32, #tpu.memory_space<vmem>>, %arg2: memref<1x128xf32, #tpu.memory_space<vmem>>, %arg3: memref<1x128xf32, #tpu.memory_space<vmem>>, %arg4: memref<8x128xf32, #tpu.memory_space<vmem>>) attributes {dimension_semantics = [#tpu.dimension_semantics<parallel>], iteration_bounds = array<i64: 1>, scalar_prefetch = 0 : i64, scratch_operands = 0 : i64, tpu.core_type = #tpu.core_type<tc>, window_params = [{transform_indices = @transform_0, window_bounds = array<i64: 8, 128>}, {pipeline_mode = #tpu.pipeline_mode<synchronous>, transform_indices = @transform_1, window_bounds = array<i64: 1, 128>}, {pipeline_mode = #tpu.pipeline_mode<synchronous>, transform_indices = @transform_2, window_bounds = array<i64: 1, 128>}, {transform_indices = @transform_3, window_bounds = array<i64: 8, 128>}]} {
    %c0 = arith.constant 0 : index
    %c0_0 = arith.constant 0 : index
    %0 = vector.load %arg1[%c0, %c0_0] : memref<8x128xf32, #tpu.memory_space<vmem>>, vector<8x128xf32>
    %c0_1 = arith.constant 0 : index
    %c0_2 = arith.constant 0 : index
    %1 = vector.load %arg2[%c0_1, %c0_2] : memref<1x128xf32, #tpu.memory_space<vmem>>, vector<1x128xf32>
    %2 = vector.broadcast %1 : vector<1x128xf32> to vector<8x128xf32>
    %3 = arith.mulf %0, %2 : vector<8x128xf32>
    %c0_3 = arith.constant 0 : index
    %c0_4 = arith.constant 0 : index
    %4 = vector.load %arg3[%c0_3, %c0_4] : memref<1x128xf32, #tpu.memory_space<vmem>>, vector<1x128xf32>
    %5 = vector.broadcast %4 : vector<1x128xf32> to vector<8x128xf32>
    %6 = arith.addf %3, %5 : vector<8x128xf32>
    %cst = arith.constant 0.000000e+00 : f32
    %7 = vector.broadcast %cst : f32 to vector<8x128xf32>
    %8 = arith.cmpf ogt, %6, %7 : vector<8x128xf32>
    %cst_5 = arith.constant 0.00999999977 : f32
    %9 = vector.broadcast %cst_5 : f32 to vector<8x128xf32>
    %10 = arith.mulf %9, %6 : vector<8x128xf32>
    %11 = arith.select %8, %6, %10 : vector<8x128xi1>, vector<8x128xf32>
    %c0_6 = arith.constant 0 : index
    %c0_7 = arith.constant 0 : index
    %12 = vector.load %arg4[%c0_6, %c0_7] : memref<8x128xf32, #tpu.memory_space<vmem>>, vector<8x128xf32>
    tpu.vector_store %arg4[%c0_6, %c0_7], %11 {strides = array<i32>} : memref<8x128xf32, #tpu.memory_space<vmem>>, vector<8x128xf32>,
    return
  }
  func.func @transform_0(%arg0: i32) -> (i32, i32) {
    %c0_i32 = arith.constant 0 : i32
    %c0_i32_0 = arith.constant 0 : i32
    return %arg0, %c0_i32 : i32, i32
  }
  func.func @transform_1(%arg0: i32) -> (i32, i32) {
    %c0_i32 = arith.constant 0 : i32
    %c0_i32_0 = arith.constant 0 : i32
    %c0_i32_1 = arith.constant 0 : i32
    return %c0_i32, %c0_i32_0 : i32, i32
  }
  func.func @transform_2(%arg0: i32) -> (i32, i32) {
    %c0_i32 = arith.constant 0 : i32
    %c0_i32_0 = arith.constant 0 : i32
    %c0_i32_1 = arith.constant 0 : i32
    return %c0_i32, %c0_i32_0 : i32, i32
  }
  func.func @transform_3(%arg0: i32) -> (i32, i32) {
    %c0_i32 = arith.constant 0 : i32
    %c0_i32_0 = arith.constant 0 : i32
    return %arg0, %c0_i32 : i32, i32
  }
}

</mosaic_0001>

<llo_original>
// kernel: downsample_forward.5
$region0: #{downsample_forward.5}
  #allocation0 [shape = 'u32[]', space=smem, size = 0x4, offset = 0x4, fixed_abs, tag = 'smem constant byte address 0x4 - core index']
  #allocation1 [shape = 'u32[72,128]{1,0:T(1,128)}', space=vmem, size = 0x9000, scoped, tag = 'internal scratch']
  %s0 = inlined_call_operand.vmem [shape: f32[8,128], index: 0, kind: input, shape index: {}]
  %s1 = inlined_call_operand.vmem [shape: f32[1,128], index: 1, kind: input, shape index: {}]
  %s2 = inlined_call_operand.vmem [shape: f32[1,128], index: 2, kind: input, shape index: {}]
  %s3 = inlined_call_operand.vmem [shape: f32[8,128], index: 3, kind: output, shape index: {}]
  %s4 = sld [smem:[#allocation0]]
  $region22: #{downsample_forward.5} parent=0
    _
  %s6 = ssub.s32 1, %s4
  %s7 = scalar_select 0, %s6, %s4
  // Predicated region
  $region2: #{downsample_forward.5} parent=0 // pred_check
    _
  $region3: #{downsample_forward.5} parent=0 // pred_check_branch
    %9 = sbr.rel (0) target = $region5
  $region4: #{downsample_forward.5} parent=0 // pred_region
    _
  $region5: #{downsample_forward.5} parent=0 // pred_fallthru
    _
  // Predicated region
  $region6: #{downsample_forward.5} parent=0 // pred_check
    _
  $region7: #{downsample_forward.5} parent=0 // pred_check_branch
    %11 = sbr.rel (0) target = $region9
  $region8: #{downsample_forward.5} parent=0 // pred_region
    _
  $region9: #{downsample_forward.5} parent=0 // pred_fallthru
    _
  // Predicated region
  $region10: #{downsample_forward.5} parent=0 // pred_check
    _
  $region11: #{downsample_forward.5} parent=0 // pred_check_branch
    %13 = sbr.rel (0) target = $region13
  $region12: #{downsample_forward.5} parent=0 // pred_region
    _
  $region13: #{downsample_forward.5} parent=0 // pred_fallthru
    _
  %v14 = vld [vmem:[%s0] sm:$0xff]
  %v15 = vld [vmem:[%s1] sm:$0x1]
  %v17 = vperm.slane %v15, 0
  %v19 = vmul.f32 %v14, %v17
  %v20 = vld [vmem:[%s2] sm:$0x1]
  %v22 = vperm.slane %v20, 0
  %v24 = vadd.f32 %v19, %v22
  %vm25 = vcmp.gt.f32.partialorder %v24, 0.0
  %v26 = vmul.f32 %v24, 0.01
  %v27 = vsel %vm25, %v24, %v26
  %28 = vst [vmem:[%s3] sm:$0xff] %v27
  // Predicated region
  $region14: #{downsample_forward.5} parent=0 // pred_check
    _
  $region15: #{downsample_forward.5} parent=0 // pred_check_branch
    %30 = sbr.rel (0) target = $region17
  $region16: #{downsample_forward.5} parent=0 // pred_region
    _
  $region17: #{downsample_forward.5} parent=0 // pred_fallthru
    _
  // Predicated region
  $region18: #{downsample_forward.5} parent=0 // pred_check
    _
  $region19: #{downsample_forward.5} parent=0 // pred_check_branch
    %32 = sbr.rel (0) target = $region21
  $region20: #{downsample_forward.5} parent=0 // pred_region
    _
  $region21: #{downsample_forward.5} parent=0 // pred_fallthru
    _

// kernel: downsample_forward.4
$region0: #{downsample_forward.4}
  #allocation0 [shape = 'u32[]', space=smem, size = 0x4, offset = 0x4, fixed_abs, tag = 'smem constant byte address 0x4 - core index']
  #allocation1 [shape = 'u32[72,128]{1,0:T(1,128)}', space=vmem, size = 0x9000, scoped, tag = 'internal scratch']
  #allocation2 [shape = 'f32[8,8,8]{2,1,0:T(8,128)}', space=vmem, size = 0x8000, scoped, tag = 'scratch operand']
  %s0 = inlined_call_operand.vmem [shape: f32[2,8,8,8], index: 0, kind: input, shape index: {}]
  %s1 = inlined_call_operand.vmem [shape: f32[1,8], index: 1, kind: input, shape index: {}]
  %s2 = inlined_call_operand.vmem [shape: f32[1,8], index: 2, kind: input, shape index: {}]
  %s3 = inlined_call_operand.vmem [shape: f32[9,8,8], index: 3, kind: input, shape index: {}]
  %s4 = inlined_call_operand.vmem [shape: f32[1,8], index: 4, kind: input, shape index: {}]
  %s5 = inlined_call_operand.vmem [shape: f32[2,6,6,8], index: 5, kind: output, shape index: {0}]
  %s6 = inlined_call_operand.vmem [shape: f32[2,2,8], index: 6, kind: output, shape index: {1}]
  %7 = xla_tuple %s5, %s6
  %s8 = sld [smem:[#allocation0]]
  $region61: #{downsample_forward.4} parent=0
    _
  %s10 = ssub.s32 1, %s8
  %s11 = scalar_select 0, %s10, %s8
  loop: start=0, step=1, limit=4
  $region2: #{downsample_forward.4} parent=0 // loop_pre_header
    _
  $region3: #{downsample_forward.4} parent=0 // loop_header
    %s13 = sphi 0, %s17
    %p14 = scmp.ge.s32.totalorder %s13, 4
    %s23 = sphi 0, %s25
    %s26 = sphi 0, %s23
    %s27 = sphi 0, %s26
    %s43 = sphi 0, %s27
    %s47 = sphi 0, %s47
    %s49 = sphi 0, %s47
    %s50 = sphi 0, %s49
    %s64 = sphi 0, %s50
    %s68 = sphi 0, %s68
    %s70 = sphi 0, %s68
    %s71 = sphi 0, %s70
    %s85 = sphi 0, %s71
    %s89 = sphi 0, %s89
    %s91 = sphi 0, %s89
    %s92 = sphi 0, %s91
    %s106 = sphi 0, %s92
    %s110 = sphi 0, %s110
    %s112 = sphi 0, %s110
    %s113 = sphi 0, %s112
    %s127 = sphi 0, %s113
    %s133 = sphi 0, %s135
    %s136 = sphi 0, %s133
    %s137 = sphi 0, %s136
    %s153 = sphi 0, %s137
    %s159 = sphi 0, %s161
    %s162 = sphi 0, %s159
    %s163 = sphi 0, %s162
    %s179 = sphi 0, %s163
  $region4: #{downsample_forward.4} parent=0 // loop_header_branch
    %16 = sbr.rel (%p14) target = $region8
  $region5: #{downsample_forward.4} parent=0 // loop_body
    %s18 = ssub.s32 %s13, 1
    %s19 = ssub.s32 %s13, 2
    %s20 = sadd.s32 %s13, 1
    %s21 = ssub.s32 %s13, %s20
    %p22 = scmp.eq.s32.totalorder %s21, 0
    %s24 = sadd.s32 %s23, 1
    %s25 = scalar_select %p22, %s23, %s24
    %p28 = pneg %p22
    %p29 = scmp.eq.s32.totalorder %s13, 1
    %p30 = por %p28, %p29
    %p31 = scmp.ne.s32.totalorder %s23, %s26
    %p32 = scmp.eq.s32.totalorder %s13, 0
    %p33 = por %p31, %p32
    %p34 = scmp.ne.s32.totalorder %s23, %s26
    %p35 = scmp.eq.s32.totalorder %s18, 1
    %p36 = por %p34, %p35
    %p37 = scmp.ne.s32.totalorder %s26, %s27
    %p38 = scmp.eq.s32.totalorder %s18, 0
    %p39 = por %p37, %p38
    %p40 = scmp.ne.s32.totalorder %s26, %s27
    %p41 = scmp.eq.s32.totalorder %s19, 1
    %p42 = por %p40, %p41
    %p44 = scmp.ne.s32.totalorder %s27, %s43
    %p45 = scmp.eq.s32.totalorder %s19, 0
    %p46 = por %p44, %p45
    %s48 = sadd.s32 %s47, 1
    %p51 = scmp.eq.s32.totalorder %s13, 1
    %p52 = scmp.ne.s32.totalorder %s47, %s49
    %p53 = scmp.eq.s32.totalorder %s13, 0
    %p54 = por %p52, %p53
    %p55 = scmp.ne.s32.totalorder %s47, %s49
    %p56 = scmp.eq.s32.totalorder %s18, 1
    %p57 = por %p55, %p56
    %p58 = scmp.ne.s32.totalorder %s49, %s50
    %p59 = scmp.eq.s32.totalorder %s18, 0
    %p60 = por %p58, %p59
    %p61 = scmp.ne.s32.totalorder %s49, %s50
    %p62 = scmp.eq.s32.totalorder %s19, 1
    %p63 = por %p61, %p62
    %p65 = scmp.ne.s32.totalorder %s50, %s64
    %p66 = scmp.eq.s32.totalorder %s19, 0
    %p67 = por %p65, %p66
    %s69 = sadd.s32 %s68, 1
    %p72 = scmp.eq.s32.totalorder %s13, 1
    %p73 = scmp.ne.s32.totalorder %s68, %s70
    %p74 = scmp.eq.s32.totalorder %s13, 0
    %p75 = por %p73, %p74
    %p76 = scmp.ne.s32.totalorder %s68, %s70
    %p77 = scmp.eq.s32.totalorder %s18, 1
    %p78 = por %p76, %p77
    %p79 = scmp.ne.s32.totalorder %s70, %s71
    %p80 = scmp.eq.s32.totalorder %s18, 0
    %p81 = por %p79, %p80
    %p82 = scmp.ne.s32.totalorder %s70, %s71
    %p83 = scmp.eq.s32.totalorder %s19, 1
    %p84 = por %p82, %p83
    %p86 = scmp.ne.s32.totalorder %s71, %s85
    %p87 = scmp.eq.s32.totalorder %s19, 0
    %p88 = por %p86, %p87
    %s90 = sadd.s32 %s89, 1
    %p93 = scmp.eq.s32.totalorder %s13, 1
    %p94 = scmp.ne.s32.totalorder %s89, %s91
    %p95 = scmp.eq.s32.totalorder %s13, 0
    %p96 = por %p94, %p95
    %p97 = scmp.ne.s32.totalorder %s89, %s91
    %p98 = scmp.eq.s32.totalorder %s18, 1
    %p99 = por %p97, %p98
    %p100 = scmp.ne.s32.totalorder %s91, %s92
    %p101 = scmp.eq.s32.totalorder %s18, 0
    %p102 = por %p100, %p101
    %p103 = scmp.ne.s32.totalorder %s91, %s92
    %p104 = scmp.eq.s32.totalorder %s19, 1
    %p105 = por %p103, %p104
    %p107 = scmp.ne.s32.totalorder %s92, %s106
    %p108 = scmp.eq.s32.totalorder %s19, 0
    %p109 = por %p107, %p108
    %s111 = sadd.s32 %s110, 1
    %p114 = scmp.eq.s32.totalorder %s13, 1
    %p115 = scmp.ne.s32.totalorder %s110, %s112
    %p116 = scmp.eq.s32.totalorder %s13, 0
    %p117 = por %p115, %p116
    %p118 = scmp.ne.s32.totalorder %s110, %s112
    %p119 = scmp.eq.s32.totalorder %s18, 1
    %p120 = por %p118, %p119
    %p121 = scmp.ne.s32.totalorder %s112, %s113
    %p122 = scmp.eq.s32.totalorder %s18, 0
    %p123 = por %p121, %p122
    %p124 = scmp.ne.s32.totalorder %s112, %s113
    %p125 = scmp.eq.s32.totalorder %s19, 1
    %p126 = por %p124, %p125
    %p128 = scmp.ne.s32.totalorder %s113, %s127
    %p129 = scmp.eq.s32.totalorder %s19, 0
    %p130 = por %p128, %p129
    %s131 = ssub.s32 %s13, %s20
    %p132 = scmp.eq.s32.totalorder %s131, 0
    %s134 = sadd.s32 %s133, 1
    %s135 = scalar_select %p132, %s133, %s134
    %p138 = pneg %p132
    %p139 = scmp.eq.s32.totalorder %s13, 1
    %p140 = por %p138, %p139
    %p141 = scmp.ne.s32.totalorder %s133, %s136
    %p142 = scmp.eq.s32.totalorder %s13, 0
    %p143 = por %p141, %p142
    %p144 = scmp.ne.s32.totalorder %s133, %s136
    %p145 = scmp.eq.s32.totalorder %s18, 1
    %p146 = por %p144, %p145
    %p147 = scmp.ne.s32.totalorder %s136, %s137
    %p148 = scmp.eq.s32.totalorder %s18, 0
    %p149 = por %p147, %p148
    %p150 = scmp.ne.s32.totalorder %s136, %s137
    %p151 = scmp.eq.s32.totalorder %s19, 1
    %p152 = por %p150, %p151
    %p154 = scmp.ne.s32.totalorder %s137, %s153
    %p155 = scmp.eq.s32.totalorder %s19, 0
    %p156 = por %p154, %p155
    %s157 = ssub.s32 %s13, %s20
    %p158 = scmp.eq.s32.totalorder %s157, 0
    %s160 = sadd.s32 %s159, 1
    %s161 = scalar_select %p158, %s159, %s160
    %p164 = pneg %p158
    %p165 = scmp.eq.s32.totalorder %s13, 1
    %p166 = por %p164, %p165
    %p167 = scmp.ne.s32.totalorder %s159, %s162
    %p168 = scmp.eq.s32.totalorder %s13, 0
    %p169 = por %p167, %p168
    %p170 = scmp.ne.s32.totalorder %s159, %s162
    %p171 = scmp.eq.s32.totalorder %s18, 1
    %p172 = por %p170, %p171
    %p173 = scmp.ne.s32.totalorder %s162, %s163
    %p174 = scmp.eq.s32.totalorder %s18, 0
    %p175 = por %p173, %p174
    %p176 = scmp.ne.s32.totalorder %s162, %s163
    %p177 = scmp.eq.s32.totalorder %s19, 1
    %p178 = por %p176, %p177
    %p180 = scmp.ne.s32.totalorder %s163, %s179
    %p181 = scmp.eq.s32.totalorder %s19, 0
    %p182 = por %p180, %p181
    %p183 = scmp.le.s32.totalorder 1, %s13
    %p184 = scmp.lt.s32.totalorder %s13, 3
    %p185 = pnand %p183, %p184
    %p186 = pneg %p185
    // Predicated region
    $region9: #{downsample_forward.4} parent=5 // pred_check
      _
    $region10: #{downsample_forward.4} parent=5 // pred_check_branch
      %188 = sbr.rel (%p185) target = $region12
    $region11: #{downsample_forward.4} parent=5 // pred_region
      %s189 = ssub.s32 %s13, 1
      // Predicated region
      $region13: #{downsample_forward.4} parent=11 // pred_check
        %p190 = pneg %p60
      $region14: #{downsample_forward.4} parent=11 // pred_check_branch
        %192 = sbr.rel (%p190) target = $region16
      $region15: #{downsample_forward.4} parent=11 // pred_region
        _
      $region16: #{downsample_forward.4} parent=11 // pred_fallthru
        _
      // Predicated region
      $region17: #{downsample_forward.4} parent=11 // pred_check
        %p193 = pneg %p81
      $region18: #{downsample_forward.4} parent=11 // pred_check_branch
        %195 = sbr.rel (%p193) target = $region20
      $region19: #{downsample_forward.4} parent=11 // pred_region
        _
      $region20: #{downsample_forward.4} parent=11 // pred_fallthru
        _
      // Predicated region
      $region21: #{downsample_forward.4} parent=11 // pred_check
        %p196 = pneg %p102
      $region22: #{downsample_forward.4} parent=11 // pred_check_branch
        %198 = sbr.rel (%p196) target = $region24
      $region23: #{downsample_forward.4} parent=11 // pred_region
        _
      $region24: #{downsample_forward.4} parent=11 // pred_fallthru
        _
      // Predicated region
      $region25: #{downsample_forward.4} parent=11 // pred_check
        %p199 = pneg %p123
      $region26: #{downsample_forward.4} parent=11 // pred_check_branch
        %201 = sbr.rel (%p199) target = $region28
      $region27: #{downsample_forward.4} parent=11 // pred_region
        _
      $region28: #{downsample_forward.4} parent=11 // pred_fallthru
        _
    $region12: #{downsample_forward.4} parent=5 // pred_fallthru
      _
    %p202 = scmp.lt.s32.totalorder %s13, 2
    // Predicated region
    $region29: #{downsample_forward.4} parent=5 // pred_check
      %p203 = pneg %p202
    $region30: #{downsample_forward.4} parent=5 // pred_check_branch
      %205 = sbr.rel (%p203) target = $region32
    $region31: #{downsample_forward.4} parent=5 // pred_region
      // Predicated region
      $region33: #{downsample_forward.4} parent=31 // pred_check
        %p206 = pneg %p33
      $region34: #{downsample_forward.4} parent=31 // pred_check_branch
        %208 = sbr.rel (%p206) target = $region36
      $region35: #{downsample_forward.4} parent=31 // pred_region
        %p209 = scmp.lt.s32.totalorder %s13, 1
        %s210 = scalar_select %p209, %s13, 1
        %s211 = smul.addr %s210, 8
        %s212 = smul.addr %s211, 8
        %s213 = scalar_lea.vmem %s0, %s212
      $region36: #{downsample_forward.4} parent=31 // pred_fallthru
        _
    $region32: #{downsample_forward.4} parent=5 // pred_fallthru
      _
    %p214 = scmp.le.s32.totalorder 1, %s13
    %p215 = scmp.lt.s32.totalorder %s13, 3
    %p216 = pnand %p214, %p215
    %p217 = pneg %p216
    // Predicated region
    $region37: #{downsample_forward.4} parent=5 // pred_check
      _
    $region38: #{downsample_forward.4} parent=5 // pred_check_branch
      %219 = sbr.rel (%p216) target = $region40
    $region39: #{downsample_forward.4} parent=5 // pred_region
      %s220 = ssub.s32 %s13, 1
      %p221 = scmp.lt.s32.totalorder %s18, 1
      %s222 = scalar_select %p221, %s18, 1
      %s223 = smul.addr %s222, 8
      %s224 = smul.addr %s223, 8
      %s225 = scalar_lea.vmem %s0, %s224
      %p226 = pneg %p39
      %p227 = pneg %p36
      %p228 = pneg %p60
      %p229 = pneg %p57
      %p230 = pneg %p81
      %p231 = pneg %p78
      %p232 = pneg %p102
      %p233 = pneg %p99
      %p234 = pneg %p123
      %p235 = pneg %p120
      %p236 = pneg %p149
      %p237 = pneg %p146
      %p238 = scmp.lt.s32.totalorder %s18, 1
      %s239 = scalar_select %p238, %s18, 1
      %s240 = smul.addr %s239, 6
      %s241 = smul.addr %s240, 8
      %s242 = scalar_lea.vmem %s5, %s241
      %p243 = pneg %p175
      %p244 = pneg %p172
      %p245 = scmp.lt.s32.totalorder %s18, 1
      %s246 = scalar_select %p245, %s18, 1
      %s247 = smul.addr %s246, 2
      %s248 = scalar_lea.vmem %s6, %s247
      %p249 = scmp.lt.s32.totalorder %s18, 1
      %s250 = scalar_select %p249, %s18, 1
      %s251 = smul.addr %s250, 8
      %s252 = smul.addr %s251, 8
      %s253 = scalar_lea.vmem %s0, %s252
      %p254 = scmp.lt.s32.totalorder %s18, 1
      %s255 = scalar_select %p254, %s18, 1
      %s256 = smul.addr %s255, 6
      %s257 = smul.addr %s256, 8
      %s258 = scalar_lea.vmem %s5, %s257
      %p259 = scmp.lt.s32.totalorder %s18, 1
      %s260 = scalar_select %p259, %s18, 1
      %s261 = smul.addr %s260, 2
      %s262 = scalar_lea.vmem %s6, %s261
      %v263 = vld [vmem:[%s253] sm:$0xff]
      %v264 = vld [vmem:[%s253 + $0x8] sm:$0xff]
      %v265 = vld [vmem:[%s253 + $0x10] sm:$0xff]
      %v266 = vld [vmem:[%s253 + $0x18] sm:$0xff]
      %v267 = vld [vmem:[%s253 + $0x20] sm:$0xff]
      %v268 = vld [vmem:[%s253 + $0x28] sm:$0xff]
      %v269 = vld [vmem:[%s253 + $0x30] sm:$0xff]
      %v270 = vld [vmem:[%s253 + $0x38] sm:$0xff]
      %v271 = vld [vmem:[%s1] sm:$0x1]
      %v273 = vperm.slane %v271, 0
      %v275 = vmul.f32 %v263, %v273
      %v276 = vmul.f32 %v264, %v273
      %v277 = vmul.f32 %v265, %v273
      %v278 = vmul.f32 %v266, %v273
      %v279 = vmul.f32 %v267, %v273
      %v280 = vmul.f32 %v268, %v273
      %v281 = vmul.f32 %v269, %v273
      %v282 = vmul.f32 %v270, %v273
      %v283 = vld [vmem:[%s2] sm:$0x1]
      %v285 = vperm.slane %v283, 0
      %v287 = vadd.f32 %v275, %v285
      %v288 = vadd.f32 %v276, %v285
      %v289 = vadd.f32 %v277, %v285
      %v290 = vadd.f32 %v278, %v285
      %v291 = vadd.f32 %v279, %v285
      %v292 = vadd.f32 %v280, %v285
      %v293 = vadd.f32 %v281, %v285
      %v294 = vadd.f32 %v282, %v285
      %vm295 = vcmp.gt.f32.partialorder %v287, 0.0
      %vm296 = vcmp.gt.f32.partialorder %v288, 0.0
      %vm297 = vcmp.gt.f32.partialorder %v289, 0.0
      %vm298 = vcmp.gt.f32.partialorder %v290, 0.0
      %vm299 = vcmp.gt.f32.partialorder %v291, 0.0
      %vm300 = vcmp.gt.f32.partialorder %v292, 0.0
      %vm301 = vcmp.gt.f32.partialorder %v293, 0.0
      %vm302 = vcmp.gt.f32.partialorder %v294, 0.0
      %v303 = vmul.f32 %v287, 0.01
      %v304 = vmul.f32 %v288, 0.01
      %v305 = vmul.f32 %v289, 0.01
      %v306 = vmul.f32 %v290, 0.01
      %v307 = vmul.f32 %v291, 0.01
      %v308 = vmul.f32 %v292, 0.01
      %v309 = vmul.f32 %v293, 0.01
      %v310 = vmul.f32 %v294, 0.01
      %v311 = vsel %vm295, %v287, %v303
      %v312 = vsel %vm296, %v288, %v304
      %v313 = vsel %vm297, %v289, %v305
      %v314 = vsel %vm298, %v290, %v306
      %v315 = vsel %vm299, %v291, %v307
      %v316 = vsel %vm300, %v292, %v308
      %v317 = vsel %vm301, %v293, %v309
      %v318 = vsel %vm302, %v294, %v310
      %vm319 = vcmask 64512
      %320 = vst.msk [vmem:[#allocation2] sm:$0xff] %vm319, %v311
      %321 = vst.msk [vmem:[#allocation2 + $0x8] sm:$0xff] %vm319, %v312
      %322 = vst.msk [vmem:[#allocation2 + $0x10] sm:$0xff] %vm319, %v313
      %323 = vst.msk [vmem:[#allocation2 + $0x18] sm:$0xff] %vm319, %v314
      %324 = vst.msk [vmem:[#allocation2 + $0x20] sm:$0xff] %vm319, %v315
      %325 = vst.msk [vmem:[#allocation2 + $0x28] sm:$0xff] %vm319, %v316
      %326 = vst.msk [vmem:[#allocation2 + $0x30] sm:$0xff] %vm319, %v317
      %327 = vst.msk [vmem:[#allocation2 + $0x38] sm:$0xff] %vm319, %v318
      %v328 = vld [vmem:[#allocation2] sm:$0x3f]
      %v329 = vld [vmem:[%s3] sm:$0xff]
      %v330 = vld [vmem:[#allocation2 + $0x1] sm:$0x3f]
      %s331 = scalar_lea.vmem %s3, 8
      %v332 = vld [vmem:[%s331] sm:$0xff]
      %v334 = vsel %vm319, %v330, 0
      %336 = vmatpush.msra.mxu0 0.0
      %337 = vmatpush.msra.mxu0 0.0
      %338 = vmatpush.msra.mxu0 0.0
      %339 = vmatpush.msra.mxu0 0.0
      %340 = vmatpush.msra.mxu0 0.0
      %341 = vmatpush.msra.mxu0 0.0
      %342 = vmatpush.msra.mxu0 0.0
      %343 = vmatpush.msra.mxu0 0.0
      %344 = vmatpush.msra.mxu0 0.0
      %345 = vmatpush.msra.mxu0 0.0
      %346 = vmatpush.msra.mxu0 0.0
      %347 = vmatpush.msra.mxu0 0.0
      %348 = vmatpush.msra.mxu0 0.0
      %349 = vmatpush.msra.mxu0 0.0
      %350 = vmatpush.msra.mxu0 0.0
      %351 = vmatpush.msra.mxu0 %v332
      %352 = vmatmul.f32.gmra.mxu0 %v334
      %v353 = vpop.f32.mrf.mxu0
      %v354 = vadd.f32 0.0, %v353
      %355 = vdwg.mxu0
      %v357 = vsel %vm319, %v328, 0
      %359 = vmatpush.msra.mxu0 0.0
      %360 = vmatpush.msra.mxu0 0.0
      %361 = vmatpush.msra.mxu0 0.0
      %362 = vmatpush.msra.mxu0 0.0
      %363 = vmatpush.msra.mxu0 0.0
      %364 = vmatpush.msra.mxu0 0.0
      %365 = vmatpush.msra.mxu0 0.0
      %366 = vmatpush.msra.mxu0 0.0
      %367 = vmatpush.msra.mxu0 0.0
      %368 = vmatpush.msra.mxu0 0.0
      %369 = vmatpush.msra.mxu0 0.0
      %370 = vmatpush.msra.mxu0 0.0
      %371 = vmatpush.msra.mxu0 0.0
      %372 = vmatpush.msra.mxu0 0.0
      %373 = vmatpush.msra.mxu0 0.0
      %374 = vmatpush.msra.mxu0 %v329
      %375 = vmatmul.f32.gmra.mxu0 %v357
      %v376 = vpop.f32.mrf.mxu0
      %v377 = vadd.f32 %v354, %v376
      %378 = vdwg.mxu0
      %v379 = vld [vmem:[#allocation2 + $0x2] sm:$0x3f]
      %s380 = scalar_lea.vmem %s3, 16
      %v381 = vld [vmem:[%s380] sm:$0xff]
      %v383 = vsel %vm319, %v379, 0
      %385 = vmatpush.msra.mxu0 0.0
      %386 = vmatpush.msra.mxu0 0.0
      %387 = vmatpush.msra.mxu0 0.0
      %388 = vmatpush.msra.mxu0 0.0
      %389 = vmatpush.msra.mxu0 0.0
      %390 = vmatpush.msra.mxu0 0.0
      %391 = vmatpush.msra.mxu0 0.0
      %392 = vmatpush.msra.mxu0 0.0
      %393 = vmatpush.msra.mxu0 0.0
      %394 = vmatpush.msra.mxu0 0.0
      %395 = vmatpush.msra.mxu0 0.0
      %396 = vmatpush.msra.mxu0 0.0
      %397 = vmatpush.msra.mxu0 0.0
      %398 = vmatpush.msra.mxu0 0.0
      %399 = vmatpush.msra.mxu0 0.0
      %400 = vmatpush.msra.mxu0 %v381
      %401 = vmatmul.f32.gmra.mxu0 %v383
      %v402 = vpop.f32.mrf.mxu0
      %v403 = vadd.f32 0.0, %v402
      %404 = vdwg.mxu0
      %v405 = vadd.f32 %v377, %v403
      %s406 = scalar_lea.vmem [#allocation2], 8
      %v407 = vld [vmem:[%s406] sm:$0x3f]
      %s408 = scalar_lea.vmem %s3, 24
      %v409 = vld [vmem:[%s408] sm:$0xff]
      %v411 = vsel %vm319, %v407, 0
      %413 = vmatpush.msra.mxu0 0.0
      %414 = vmatpush.msra.mxu0 0.0
      %415 = vmatpush.msra.mxu0 0.0
      %416 = vmatpush.msra.mxu0 0.0
      %417 = vmatpush.msra.mxu0 0.0
      %418 = vmatpush.msra.mxu0 0.0
      %419 = vmatpush.msra.mxu0 0.0
      %420 = vmatpush.msra.mxu0 0.0
      %421 = vmatpush.msra.mxu0 0.0
      %422 = vmatpush.msra.mxu0 0.0
      %423 = vmatpush.msra.mxu0 0.0
      %424 = vmatpush.msra.mxu0 0.0
      %425 = vmatpush.msra.mxu0 0.0
      %426 = vmatpush.msra.mxu0 0.0
      %427 = vmatpush.msra.mxu0 0.0
      %428 = vmatpush.msra.mxu0 %v409
      %429 = vmatmul.f32.gmra.mxu0 %v411
      %v430 = vpop.f32.mrf.mxu0
      %v431 = vadd.f32 0.0, %v430
      %432 = vdwg.mxu0
      %v433 = vadd.f32 %v405, %v431
      %v434 = vld [vmem:[%s406 + $0x1] sm:$0x3f]
      %s435 = scalar_lea.vmem %s3, 32
      %v436 = vld [vmem:[%s435] sm:$0xff]
      %v438 = vsel %vm319, %v434, 0
      %440 = vmatpush.msra.mxu0 0.0
      %441 = vmatpush.msra.mxu0 0.0
      %442 = vmatpush.msra.mxu0 0.0
      %443 = vmatpush.msra.mxu0 0.0
      %444 = vmatpush.msra.mxu0 0.0
      %445 = vmatpush.msra.mxu0 0.0
      %446 = vmatpush.msra.mxu0 0.0
      %447 = vmatpush.msra.mxu0 0.0
      %448 = vmatpush.msra.mxu0 0.0
      %449 = vmatpush.msra.mxu0 0.0
      %450 = vmatpush.msra.mxu0 0.0
      %451 = vmatpush.msra.mxu0 0.0
      %452 = vmatpush.msra.mxu0 0.0
      %453 = vmatpush.msra.mxu0 0.0
      %454 = vmatpush.msra.mxu0 0.0
      %455 = vmatpush.msra.mxu0 %v436
      %456 = vmatmul.f32.gmra.mxu0 %v438
      %v457 = vpop.f32.mrf.mxu0
      %v458 = vadd.f32 0.0, %v457
      %459 = vdwg.mxu0
      %v460 = vadd.f32 %v433, %v458
      %v461 = vld [vmem:[%s406 + $0x2] sm:$0x3f]
      %s462 = scalar_lea.vmem %s3, 40
      %v463 = vld [vmem:[%s462] sm:$0xff]
      %v465 = vsel %vm319, %v461, 0
      %467 = vmatpush.msra.mxu0 0.0
      %468 = vmatpush.msra.mxu0 0.0
      %469 = vmatpush.msra.mxu0 0.0
      %470 = vmatpush.msra.mxu0 0.0
      %471 = vmatpush.msra.mxu0 0.0
      %472 = vmatpush.msra.mxu0 0.0
      %473 = vmatpush.msra.mxu0 0.0
      %474 = vmatpush.msra.mxu0 0.0
      %475 = vmatpush.msra.mxu0 0.0
      %476 = vmatpush.msra.mxu0 0.0
      %477 = vmatpush.msra.mxu0 0.0
      %478 = vmatpush.msra.mxu0 0.0
      %479 = vmatpush.msra.mxu0 0.0
      %480 = vmatpush.msra.mxu0 0.0
      %481 = vmatpush.msra.mxu0 0.0
      %482 = vmatpush.msra.mxu0 %v463
      %483 = vmatmul.f32.gmra.mxu0 %v465
      %v484 = vpop.f32.mrf.mxu0
      %v485 = vadd.f32 0.0, %v484
      %486 = vdwg.mxu0
      %v487 = vadd.f32 %v460, %v485
      %s488 = scalar_lea.vmem [#allocation2], 16
      %v489 = vld [vmem:[%s488] sm:$0x3f]
      %s490 = scalar_lea.vmem %s3, 48
      %v491 = vld [vmem:[%s490] sm:$0xff]
      %v493 = vsel %vm319, %v489, 0
      %495 = vmatpush.msra.mxu0 0.0
      %496 = vmatpush.msra.mxu0 0.0
      %497 = vmatpush.msra.mxu0 0.0
      %498 = vmatpush.msra.mxu0 0.0
      %499 = vmatpush.msra.mxu0 0.0
      %500 = vmatpush.msra.mxu0 0.0
      %501 = vmatpush.msra.mxu0 0.0
      %502 = vmatpush.msra.mxu0 0.0
      %503 = vmatpush.msra.mxu0 0.0
      %504 = vmatpush.msra.mxu0 0.0
      %505 = vmatpush.msra.mxu0 0.0
      %506 = vmatpush.msra.mxu0 0.0
      %507 = vmatpush.msra.mxu0 0.0
      %508 = vmatpush.msra.mxu0 0.0
      %509 = vmatpush.msra.mxu0 0.0
      %510 = vmatpush.msra.mxu0 %v491
      %511 = vmatmul.f32.gmra.mxu0 %v493
      %v512 = vpop.f32.mrf.mxu0
      %v513 = vadd.f32 0.0, %v512
      %514 = vdwg.mxu0
      %v515 = vadd.f32 %v487, %v513
      %v516 = vld [vmem:[%s488 + $0x1] sm:$0x3f]
      %s517 = scalar_lea.vmem %s3, 56
      %v518 = vld [vmem:[%s517] sm:$0xff]
      %v520 = vsel %vm319, %v516, 0
      %522 = vmatpush.msra.mxu0 0.0
      %523 = vmatpush.msra.mxu0 0.0
      %524 = vmatpush.msra.mxu0 0.0
      %525 = vmatpush.msra.mxu0 0.0
      %526 = vmatpush.msra.mxu0 0.0
      %527 = vmatpush.msra.mxu0 0.0
      %528 = vmatpush.msra.mxu0 0.0
      %529 = vmatpush.msra.mxu0 0.0
      %530 = vmatpush.msra.mxu0 0.0
      %531 = vmatpush.msra.mxu0 0.0
      %532 = vmatpush.msra.mxu0 0.0
      %533 = vmatpush.msra.mxu0 0.0
      %534 = vmatpush.msra.mxu0 0.0
      %535 = vmatpush.msra.mxu0 0.0
      %536 = vmatpush.msra.mxu0 0.0
      %537 = vmatpush.msra.mxu0 %v518
      %538 = vmatmul.f32.gmra.mxu0 %v520
      %v539 = vpop.f32.mrf.mxu0
      %v540 = vadd.f32 0.0, %v539
      %541 = vdwg.mxu0
      %v542 = vadd.f32 %v515, %v540
      %v543 = vld [vmem:[%s488 + $0x2] sm:$0x3f]
      %s544 = scalar_lea.vmem %s3, 64
      %v545 = vld [vmem:[%s544] sm:$0xff]
      %v547 = vsel %vm319, %v543, 0
      %549 = vmatpush.msra.mxu0 0.0
      %550 = vmatpush.msra.mxu0 0.0
      %551 = vmatpush.msra.mxu0 0.0
      %552 = vmatpush.msra.mxu0 0.0
      %553 = vmatpush.msra.mxu0 0.0
      %554 = vmatpush.msra.mxu0 0.0
      %555 = vmatpush.msra.mxu0 0.0
      %556 = vmatpush.msra.mxu0 0.0
      %557 = vmatpush.msra.mxu0 0.0
      %558 = vmatpush.msra.mxu0 0.0
      %559 = vmatpush.msra.mxu0 0.0
      %560 = vmatpush.msra.mxu0 0.0
      %561 = vmatpush.msra.mxu0 0.0
      %562 = vmatpush.msra.mxu0 0.0
      %563 = vmatpush.msra.mxu0 0.0
      %564 = vmatpush.msra.mxu0 %v545
      %565 = vmatmul.f32.gmra.mxu0 %v547
      %v566 = vpop.f32.mrf.mxu0
      %v567 = vadd.f32 0.0, %v566
      %568 = vdwg.mxu0
      %v569 = vadd.f32 %v542, %v567
      %v570 = vld [vmem:[%s4] sm:$0x1]
      %v572 = vperm.slane %v570, 0
      %v574 = vadd.f32 %v569, %v572
      %vm575 = vcmask 62464
      %576 = vst.msk [vmem:[%s258] sm:$0x3f] %vm575, %v574
      %v577 = vsel %vm575, %v574, 0.0
      %v578 = vrot.slane %v577, 4
      %v579 = vadd.f32 %v577, %v578
      %v580 = vrot.slane %v579, 2
      %v581 = vadd.f32 %v579, %v580
      %v582 = vrot.slane %v581, 1
      %v583 = vadd.f32 %v581, %v582
      %v584 = vadd.f32 %v583, 0.0
      %v585 = vmul.f32 %v574, %v574
      %v586 = vsel %vm575, %v585, 0.0
      %v587 = vrot.slane %v586, 4
      %v588 = vadd.f32 %v586, %v587
      %v589 = vrot.slane %v588, 2
      %v590 = vadd.f32 %v588, %v589
      %v591 = vrot.slane %v590, 1
      %v592 = vadd.f32 %v590, %v591
      %v593 = vadd.f32 %v592, 0.0
      %v594 = vld [vmem:[%s406] sm:$0x3f]
      %v595 = vld [vmem:[%s3] sm:$0xff]
      %v596 = vld [vmem:[%s406 + $0x1] sm:$0x3f]
      %v597 = vld [vmem:[%s331] sm:$0xff]
      %v599 = vsel %vm319, %v596, 0
      %601 = vmatpush.msra.mxu0 0.0
      %602 = vmatpush.msra.mxu0 0.0
      %603 = vmatpush.msra.mxu0 0.0
      %604 = vmatpush.msra.mxu0 0.0
      %605 = vmatpush.msra.mxu0 0.0
      %606 = vmatpush.msra.mxu0 0.0
      %607 = vmatpush.msra.mxu0 0.0
      %608 = vmatpush.msra.mxu0 0.0
      %609 = vmatpush.msra.mxu0 0.0
      %610 = vmatpush.msra.mxu0 0.0
      %611 = vmatpush.msra.mxu0 0.0
      %612 = vmatpush.msra.mxu0 0.0
      %613 = vmatpush.msra.mxu0 0.0
      %614 = vmatpush.msra.mxu0 0.0
      %615 = vmatpush.msra.mxu0 0.0
      %616 = vmatpush.msra.mxu0 %v597
      %617 = vmatmul.f32.gmra.mxu0 %v599
      %v618 = vpop.f32.mrf.mxu0
      %v619 = vadd.f32 0.0, %v618
      %620 = vdwg.mxu0
      %v622 = vsel %vm319, %v594, 0
      %624 = vmatpush.msra.mxu0 0.0
      %625 = vmatpush.msra.mxu0 0.0
      %626 = vmatpush.msra.mxu0 0.0
      %627 = vmatpush.msra.mxu0 0.0
      %628 = vmatpush.msra.mxu0 0.0
      %629 = vmatpush.msra.mxu0 0.0
      %630 = vmatpush.msra.mxu0 0.0
      %631 = vmatpush.msra.mxu0 0.0
      %632 = vmatpush.msra.mxu0 0.0
      %633 = vmatpush.msra.mxu0 0.0
      %634 = vmatpush.msra.mxu0 0.0
      %635 = vmatpush.msra.mxu0 0.0
      %636 = vmatpush.msra.mxu0 0.0
      %637 = vmatpush.msra.mxu0 0.0
      %638 = vmatpush.msra.mxu0 0.0
      %639 = vmatpush.msra.mxu0 %v595
      %640 = vmatmul.f32.gmra.mxu0 %v622
      %v641 = vpop.f32.mrf.mxu0
      %v642 = vadd.f32 %v619, %v641
      %643 = vdwg.mxu0
      %v644 = vld [vmem:[%s406 + $0x2] sm:$0x3f]
      %v645 = vld [vmem:[%s380] sm:$0xff]
      %v647 = vsel %vm319, %v644, 0
      %649 = vmatpush.msra.mxu0 0.0
      %650 = vmatpush.msra.mxu0 0.0
      %651 = vmatpush.msra.mxu0 0.0
      %652 = vmatpush.msra.mxu0 0.0
      %653 = vmatpush.msra.mxu0 0.0
      %654 = vmatpush.msra.mxu0 0.0
      %655 = vmatpush.msra.mxu0 0.0
      %656 = vmatpush.msra.mxu0 0.0
      %657 = vmatpush.msra.mxu0 0.0
      %658 = vmatpush.msra.mxu0 0.0
      %659 = vmatpush.msra.mxu0 0.0
      %660 = vmatpush.msra.mxu0 0.0
      %661 = vmatpush.msra.mxu0 0.0
      %662 = vmatpush.msra.mxu0 0.0
      %663 = vmatpush.msra.mxu0 0.0
      %664 = vmatpush.msra.mxu0 %v645
      %665 = vmatmul.f32.gmra.mxu0 %v647
      %v666 = vpop.f32.mrf.mxu0
      %v667 = vadd.f32 0.0, %v666
      %668 = vdwg.mxu0
      %v669 = vadd.f32 %v642, %v667
      %v670 = vld [vmem:[%s488] sm:$0x3f]
      %v671 = vld [vmem:[%s408] sm:$0xff]
      %v673 = vsel %vm319, %v670, 0
      %675 = vmatpush.msra.mxu0 0.0
      %676 = vmatpush.msra.mxu0 0.0
      %677 = vmatpush.msra.mxu0 0.0
      %678 = vmatpush.msra.mxu0 0.0
      %679 = vmatpush.msra.mxu0 0.0
      %680 = vmatpush.msra.mxu0 0.0
      %681 = vmatpush.msra.mxu0 0.0
      %682 = vmatpush.msra.mxu0 0.0
      %683 = vmatpush.msra.mxu0 0.0
      %684 = vmatpush.msra.mxu0 0.0
      %685 = vmatpush.msra.mxu0 0.0
      %686 = vmatpush.msra.mxu0 0.0
      %687 = vmatpush.msra.mxu0 0.0
      %688 = vmatpush.msra.mxu0 0.0
      %689 = vmatpush.msra.mxu0 0.0
      %690 = vmatpush.msra.mxu0 %v671
      %691 = vmatmul.f32.gmra.mxu0 %v673
      %v692 = vpop.f32.mrf.mxu0
      %v693 = vadd.f32 0.0, %v692
      %694 = vdwg.mxu0
      %v695 = vadd.f32 %v669, %v693
      %v696 = vld [vmem:[%s488 + $0x1] sm:$0x3f]
      %v697 = vld [vmem:[%s435] sm:$0xff]
      %v699 = vsel %vm319, %v696, 0
      %701 = vmatpush.msra.mxu0 0.0
      %702 = vmatpush.msra.mxu0 0.0
      %703 = vmatpush.msra.mxu0 0.0
      %704 = vmatpush.msra.mxu0 0.0
      %705 = vmatpush.msra.mxu0 0.0
      %706 = vmatpush.msra.mxu0 0.0
      %707 = vmatpush.msra.mxu0 0.0
      %708 = vmatpush.msra.mxu0 0.0
      %709 = vmatpush.msra.mxu0 0.0
      %710 = vmatpush.msra.mxu0 0.0
      %711 = vmatpush.msra.mxu0 0.0
      %712 = vmatpush.msra.mxu0 0.0
      %713 = vmatpush.msra.mxu0 0.0
      %714 = vmatpush.msra.mxu0 0.0
      %715 = vmatpush.msra.mxu0 0.0
      %716 = vmatpush.msra.mxu0 %v697
      %717 = vmatmul.f32.gmra.mxu0 %v699
      %v718 = vpop.f32.mrf.mxu0
      %v719 = vadd.f32 0.0, %v718
      %720 = vdwg.mxu0
      %v721 = vadd.f32 %v695, %v719
      %v722 = vld [vmem:[%s488 + $0x2] sm:$0x3f]
      %v723 = vld [vmem:[%s462] sm:$0xff]
      %v725 = vsel %vm319, %v722, 0
      %727 = vmatpush.msra.mxu0 0.0
      %728 = vmatpush.msra.mxu0 0.0
      %729 = vmatpush.msra.mxu0 0.0
      %730 = vmatpush.msra.mxu0 0.0
      %731 = vmatpush.msra.mxu0 0.0
      %732 = vmatpush.msra.mxu0 0.0
      %733 = vmatpush.msra.mxu0 0.0
      %734 = vmatpush.msra.mxu0 0.0
      %735 = vmatpush.msra.mxu0 0.0
      %736 = vmatpush.msra.mxu0 0.0
      %737 = vmatpush.msra.mxu0 0.0
      %738 = vmatpush.msra.mxu0 0.0
      %739 = vmatpush.msra.mxu0 0.0
      %740 = vmatpush.msra.mxu0 0.0
      %741 = vmatpush.msra.mxu0 0.0
      %742 = vmatpush.msra.mxu0 %v723
      %743 = vmatmul.f32.gmra.mxu0 %v725
      %v744 = vpop.f32.mrf.mxu0
      %v745 = vadd.f32 0.0, %v744
      %746 = vdwg.mxu0
      %v747 = vadd.f32 %v721, %v745
      %s748 = scalar_lea.vmem [#allocation2], 24
      %v749 = vld [vmem:[%s748] sm:$0x3f]
      %v750 = vld [vmem:[%s490] sm:$0xff]
      %v752 = vsel %vm319, %v749, 0
      %754 = vmatpush.msra.mxu0 0.0
      %755 = vmatpush.msra.mxu0 0.0
      %756 = vmatpush.msra.mxu0 0.0
      %757 = vmatpush.msra.mxu0 0.0
      %758 = vmatpush.msra.mxu0 0.0
      %759 = vmatpush.msra.mxu0 0.0
      %760 = vmatpush.msra.mxu0 0.0
      %761 = vmatpush.msra.mxu0 0.0
      %762 = vmatpush.msra.mxu0 0.0
      %763 = vmatpush.msra.mxu0 0.0
      %764 = vmatpush.msra.mxu0 0.0
      %765 = vmatpush.msra.mxu0 0.0
      %766 = vmatpush.msra.mxu0 0.0
      %767 = vmatpush.msra.mxu0 0.0
      %768 = vmatpush.msra.mxu0 0.0
      %769 = vmatpush.msra.mxu0 %v750
      %770 = vmatmul.f32.gmra.mxu0 %v752
      %v771 = vpop.f32.mrf.mxu0
      %v772 = vadd.f32 0.0, %v771
      %773 = vdwg.mxu0
      %v774 = vadd.f32 %v747, %v772
      %v775 = vld [vmem:[%s748 + $0x1] sm:$0x3f]
      %v776 = vld [vmem:[%s517] sm:$0xff]
      %v778 = vsel %vm319, %v775, 0
      %780 = vmatpush.msra.mxu0 0.0
      %781 = vmatpush.msra.mxu0 0.0
      %782 = vmatpush.msra.mxu0 0.0
      %783 = vmatpush.msra.mxu0 0.0
      %784 = vmatpush.msra.mxu0 0.0
      %785 = vmatpush.msra.mxu0 0.0
      %786 = vmatpush.msra.mxu0 0.0
      %787 = vmatpush.msra.mxu0 0.0
      %788 = vmatpush.msra.mxu0 0.0
      %789 = vmatpush.msra.mxu0 0.0
      %790 = vmatpush.msra.mxu0 0.0
      %791 = vmatpush.msra.mxu0 0.0
      %792 = vmatpush.msra.mxu0 0.0
      %793 = vmatpush.msra.mxu0 0.0
      %794 = vmatpush.msra.mxu0 0.0
      %795 = vmatpush.msra.mxu0 %v776
      %796 = vmatmul.f32.gmra.mxu0 %v778
      %v797 = vpop.f32.mrf.mxu0
      %v798 = vadd.f32 0.0, %v797
      %799 = vdwg.mxu0
      %v800 = vadd.f32 %v774, %v798
      %v801 = vld [vmem:[%s748 + $0x2] sm:$0x3f]
      %v802 = vld [vmem:[%s544] sm:$0xff]
      %v804 = vsel %vm319, %v801, 0
      %806 = vmatpush.msra.mxu0 0.0
      %807 = vmatpush.msra.mxu0 0.0
      %808 = vmatpush.msra.mxu0 0.0
      %809 = vmatpush.msra.mxu0 0.0
      %810 = vmatpush.msra.mxu0 0.0
      %811 = vmatpush.msra.mxu0 0.0
      %812 = vmatpush.msra.mxu0 0.0
      %813 = vmatpush.msra.mxu0 0.0
      %814 = vmatpush.msra.mxu0 0.0
      %815 = vmatpush.msra.mxu0 0.0
      %816 = vmatpush.msra.mxu0 0.0
      %817 = vmatpush.msra.mxu0 0.0
      %818 = vmatpush.msra.mxu0 0.0
      %819 = vmatpush.msra.mxu0 0.0
      %820 = vmatpush.msra.mxu0 0.0
      %821 = vmatpush.msra.mxu0 %v802
      %822 = vmatmul.f32.gmra.mxu0 %v804
      %v823 = vpop.f32.mrf.mxu0
      %v824 = vadd.f32 0.0, %v823
      %825 = vdwg.mxu0
      %v826 = vadd.f32 %v800, %v824
      %v827 = vld [vmem:[%s4] sm:$0x1]
      %v829 = vperm.slane %v827, 0
      %v831 = vadd.f32 %v826, %v829
      %s832 = scalar_lea.vmem %s258, 8
      %833 = vst.msk [vmem:[%s832] sm:$0x3f] %vm575, %v831
      %v834 = vsel %vm575, %v831, 0.0
      %v835 = vrot.slane %v834, 4
      %v836 = vadd.f32 %v834, %v835
      %v837 = vrot.slane %v836, 2
      %v838 = vadd.f32 %v836, %v837
      %v839 = vrot.slane %v838, 1
      %v840 = vadd.f32 %v838, %v839
      %v841 = vadd.f32 %v584, %v840
      %v842 = vmul.f32 %v831, %v831
      %v843 = vsel %vm575, %v842, 0.0
      %v844 = vrot.slane %v843, 4
      %v845 = vadd.f32 %v843, %v844
      %v846 = vrot.slane %v845, 2
      %v847 = vadd.f32 %v845, %v846
      %v848 = vrot.slane %v847, 1
      %v849 = vadd.f32 %v847, %v848
      %v850 = vadd.f32 %v593, %v849
      %v851 = vld [vmem:[%s488] sm:$0x3f]
      %v852 = vld [vmem:[%s3] sm:$0xff]
      %v853 = vld [vmem:[%s488 + $0x1] sm:$0x3f]
      %v854 = vld [vmem:[%s331] sm:$0xff]
      %v856 = vsel %vm319, %v853, 0
      %858 = vmatpush.msra.mxu0 0.0
      %859 = vmatpush.msra.mxu0 0.0
      %860 = vmatpush.msra.mxu0 0.0
      %861 = vmatpush.msra.mxu0 0.0
      %862 = vmatpush.msra.mxu0 0.0
      %863 = vmatpush.msra.mxu0 0.0
      %864 = vmatpush.msra.mxu0 0.0
      %865 = vmatpush.msra.mxu0 0.0
      %866 = vmatpush.msra.mxu0 0.0
      %867 = vmatpush.msra.mxu0 0.0
      %868 = vmatpush.msra.mxu0 0.0
      %869 = vmatpush.msra.mxu0 0.0
      %870 = vmatpush.msra.mxu0 0.0
      %871 = vmatpush.msra.mxu0 0.0
      %872 = vmatpush.msra.mxu0 0.0
      %873 = vmatpush.msra.mxu0 %v854
      %874 = vmatmul.f32.gmra.mxu0 %v856
      %v875 = vpop.f32.mrf.mxu0
      %v876 = vadd.f32 0.0, %v875
      %877 = vdwg.mxu0
      %v879 = vsel %vm319, %v851, 0
      %881 = vmatpush.msra.mxu0 0.0
      %882 = vmatpush.msra.mxu0 0.0
      %883 = vmatpush.msra.mxu0 0.0
      %884 = vmatpush.msra.mxu0 0.0
      %885 = vmatpush.msra.mxu0 0.0
      %886 = vmatpush.msra.mxu0 0.0
      %887 = vmatpush.msra.mxu0 0.0
      %888 = vmatpush.msra.mxu0 0.0
      %889 = vmatpush.msra.mxu0 0.0
      %890 = vmatpush.msra.mxu0 0.0
      %891 = vmatpush.msra.mxu0 0.0
      %892 = vmatpush.msra.mxu0 0.0
      %893 = vmatpush.msra.mxu0 0.0
      %894 = vmatpush.msra.mxu0 0.0
      %895 = vmatpush.msra.mxu0 0.0
      %896 = vmatpush.msra.mxu0 %v852
      %897 = vmatmul.f32.gmra.mxu0 %v879
      %v898 = vpop.f32.mrf.mxu0
      %v899 = vadd.f32 %v876, %v898
      %900 = vdwg.mxu0
      %v901 = vld [vmem:[%s488 + $0x2] sm:$0x3f]
      %v902 = vld [vmem:[%s380] sm:$0xff]
      %v904 = vsel %vm319, %v901, 0
      %906 = vmatpush.msra.mxu0 0.0
      %907 = vmatpush.msra.mxu0 0.0
      %908 = vmatpush.msra.mxu0 0.0
      %909 = vmatpush.msra.mxu0 0.0
      %910 = vmatpush.msra.mxu0 0.0
      %911 = vmatpush.msra.mxu0 0.0
      %912 = vmatpush.msra.mxu0 0.0
      %913 = vmatpush.msra.mxu0 0.0
      %914 = vmatpush.msra.mxu0 0.0
      %915 = vmatpush.msra.mxu0 0.0
      %916 = vmatpush.msra.mxu0 0.0
      %917 = vmatpush.msra.mxu0 0.0
      %918 = vmatpush.msra.mxu0 0.0
      %919 = vmatpush.msra.mxu0 0.0
      %920 = vmatpush.msra.mxu0 0.0
      %921 = vmatpush.msra.mxu0 %v902
      %922 = vmatmul.f32.gmra.mxu0 %v904
      %v923 = vpop.f32.mrf.mxu0
      %v924 = vadd.f32 0.0, %v923
      %925 = vdwg.mxu0
      %v926 = vadd.f32 %v899, %v924
      %v927 = vld [vmem:[%s748] sm:$0x3f]
      %v928 = vld [vmem:[%s408] sm:$0xff]
      %v930 = vsel %vm319, %v927, 0
      %932 = vmatpush.msra.mxu0 0.0
      %933 = vmatpush.msra.mxu0 0.0
      %934 = vmatpush.msra.mxu0 0.0
      %935 = vmatpush.msra.mxu0 0.0
      %936 = vmatpush.msra.mxu0 0.0
      %937 = vmatpush.msra.mxu0 0.0
      %938 = vmatpush.msra.mxu0 0.0
      %939 = vmatpush.msra.mxu0 0.0
      %940 = vmatpush.msra.mxu0 0.0
      %941 = vmatpush.msra.mxu0 0.0
      %942 = vmatpush.msra.mxu0 0.0
      %943 = vmatpush.msra.mxu0 0.0
      %944 = vmatpush.msra.mxu0 0.0
      %945 = vmatpush.msra.mxu0 0.0
      %946 = vmatpush.msra.mxu0 0.0
      %947 = vmatpush.msra.mxu0 %v928
      %948 = vmatmul.f32.gmra.mxu0 %v930
      %v949 = vpop.f32.mrf.mxu0
      %v950 = vadd.f32 0.0, %v949
      %951 = vdwg.mxu0
      %v952 = vadd.f32 %v926, %v950
      %v953 = vld [vmem:[%s748 + $0x1] sm:$0x3f]
      %v954 = vld [vmem:[%s435] sm:$0xff]
      %v956 = vsel %vm319, %v953, 0
      %958 = vmatpush.msra.mxu0 0.0
      %959 = vmatpush.msra.mxu0 0.0
      %960 = vmatpush.msra.mxu0 0.0
      %961 = vmatpush.msra.mxu0 0.0
      %962 = vmatpush.msra.mxu0 0.0
      %963 = vmatpush.msra.mxu0 0.0
      %964 = vmatpush.msra.mxu0 0.0
      %965 = vmatpush.msra.mxu0 0.0
      %966 = vmatpush.msra.mxu0 0.0
      %967 = vmatpush.msra.mxu0 0.0
      %968 = vmatpush.msra.mxu0 0.0
      %969 = vmatpush.msra.mxu0 0.0
      %970 = vmatpush.msra.mxu0 0.0
      %971 = vmatpush.msra.mxu0 0.0
      %972 = vmatpush.msra.mxu0 0.0
      %973 = vmatpush.msra.mxu0 %v954
      %974 = vmatmul.f32.gmra.mxu0 %v956
      %v975 = vpop.f32.mrf.mxu0
      %v976 = vadd.f32 0.0, %v975
      %977 = vdwg.mxu0
      %v978 = vadd.f32 %v952, %v976
      %v979 = vld [vmem:[%s748 + $0x2] sm:$0x3f]
      %v980 = vld [vmem:[%s462] sm:$0xff]
      %v982 = vsel %vm319, %v979, 0
      %984 = vmatpush.msra.mxu0 0.0
      %985 = vmatpush.msra.mxu0 0.0
      %986 = vmatpush.msra.mxu0 0.0
      %987 = vmatpush.msra.mxu0 0.0
      %988 = vmatpush.msra.mxu0 0.0
      %989 = vmatpush.msra.mxu0 0.0
      %990 = vmatpush.msra.mxu0 0.0
      %991 = vmatpush.msra.mxu0 0.0
      %992 = vmatpush.msra.mxu0 0.0
      %993 = vmatpush.msra.mxu0 0.0
      %994 = vmatpush.msra.mxu0 0.0
      %995 = vmatpush.msra.mxu0 0.0
      %996 = vmatpush.msra.mxu0 0.0
      %997 = vmatpush.msra.mxu0 0.0
      %998 = vmatpush.msra.mxu0 0.0
      %999 = vmatpush.msra.mxu0 %v980
      %1000 = vmatmul.f32.gmra.mxu0 %v982
      %v1001 = vpop.f32.mrf.mxu0
      %v1002 = vadd.f32 0.0, %v1001
      %1003 = vdwg.mxu0
      %v1004 = vadd.f32 %v978, %v1002
      %s1005 = scalar_lea.vmem [#allocation2], 32
      %v1006 = vld [vmem:[%s1005] sm:$0x3f]
      %v1007 = vld [vmem:[%s490] sm:$0xff]
      %v1009 = vsel %vm319, %v1006, 0
      %1011 = vmatpush.msra.mxu0 0.0
      %1012 = vmatpush.msra.mxu0 0.0
      %1013 = vmatpush.msra.mxu0 0.0
      %1014 = vmatpush.msra.mxu0 0.0
      %1015 = vmatpush.msra.mxu0 0.0
      %1016 = vmatpush.msra.mxu0 0.0
      %1017 = vmatpush.msra.mxu0 0.0
      %1018 = vmatpush.msra.mxu0 0.0
      %1019 = vmatpush.msra.mxu0 0.0
      %1020 = vmatpush.msra.mxu0 0.0
      %1021 = vmatpush.msra.mxu0 0.0
      %1022 = vmatpush.msra.mxu0 0.0
      %1023 = vmatpush.msra.mxu0 0.0
      %1024 = vmatpush.msra.mxu0 0.0
      %1025 = vmatpush.msra.mxu0 0.0
      %1026 = vmatpush.msra.mxu0 %v1007
      %1027 = vmatmul.f32.gmra.mxu0 %v1009
      %v1028 = vpop.f32.mrf.mxu0
      %v1029 = vadd.f32 0.0, %v1028
      %1030 = vdwg.mxu0
      %v1031 = vadd.f32 %v1004, %v1029
      %v1032 = vld [vmem:[%s1005 + $0x1] sm:$0x3f]
      %v1033 = vld [vmem:[%s517] sm:$0xff]
      %v1035 = vsel %vm319, %v1032, 0
      %1037 = vmatpush.msra.mxu0 0.0
      %1038 = vmatpush.msra.mxu0 0.0
      %1039 = vmatpush.msra.mxu0 0.0
      %1040 = vmatpush.msra.mxu0 0.0
      %1041 = vmatpush.msra.mxu0 0.0
      %1042 = vmatpush.msra.mxu0 0.0
      %1043 = vmatpush.msra.mxu0 0.0
      %1044 = vmatpush.msra.mxu0 0.0
      %1045 = vmatpush.msra.mxu0 0.0
      %1046 = vmatpush.msra.mxu0 0.0
      %1047 = vmatpush.msra.mxu0 0.0
      %1048 = vmatpush.msra.mxu0 0.0
      %1049 = vmatpush.msra.mxu0 0.0
      %1050 = vmatpush.msra.mxu0 0.0
      %1051 = vmatpush.msra.mxu0 0.0
      %1052 = vmatpush.msra.mxu0 %v1033
      %1053 = vmatmul.f32.gmra.mxu0 %v1035
      %v1054 = vpop.f32.mrf.mxu0
      %v1055 = vadd.f32 0.0, %v1054
      %1056 = vdwg.mxu0
      %v1057 = vadd.f32 %v1031, %v1055
      %v1058 = vld [vmem:[%s1005 + $0x2] sm:$0x3f]
      %v1059 = vld [vmem:[%s544] sm:$0xff]
      %v1061 = vsel %vm319, %v1058, 0
      %1063 = vmatpush.msra.mxu0 0.0
      %1064 = vmatpush.msra.mxu0 0.0
      %1065 = vmatpush.msra.mxu0 0.0
      %1066 = vmatpush.msra.mxu0 0.0
      %1067 = vmatpush.msra.mxu0 0.0
      %1068 = vmatpush.msra.mxu0 0.0
      %1069 = vmatpush.msra.mxu0 0.0
      %1070 = vmatpush.msra.mxu0 0.0
      %1071 = vmatpush.msra.mxu0 0.0
      %1072 = vmatpush.msra.mxu0 0.0
      %1073 = vmatpush.msra.mxu0 0.0
      %1074 = vmatpush.msra.mxu0 0.0
      %1075 = vmatpush.msra.mxu0 0.0
      %1076 = vmatpush.msra.mxu0 0.0
      %1077 = vmatpush.msra.mxu0 0.0
      %1078 = vmatpush.msra.mxu0 %v1059
      %1079 = vmatmul.f32.gmra.mxu0 %v1061
      %v1080 = vpop.f32.mrf.mxu0
      %v1081 = vadd.f32 0.0, %v1080
      %1082 = vdwg.mxu0
      %v1083 = vadd.f32 %v1057, %v1081
      %v1084 = vld [vmem:[%s4] sm:$0x1]
      %v1086 = vperm.slane %v1084, 0
      %v1088 = vadd.f32 %v1083, %v1086
      %s1089 = scalar_lea.vmem %s258, 16
      %1090 = vst.msk [vmem:[%s1089] sm:$0x3f] %vm575, %v1088
      %v1091 = vsel %vm575, %v1088, 0.0
      %v1092 = vrot.slane %v1091, 4
      %v1093 = vadd.f32 %v1091, %v1092
      %v1094 = vrot.slane %v1093, 2
      %v1095 = vadd.f32 %v1093, %v1094
      %v1096 = vrot.slane %v1095, 1
      %v1097 = vadd.f32 %v1095, %v1096
      %v1098 = vadd.f32 %v841, %v1097
      %v1099 = vmul.f32 %v1088, %v1088
      %v1100 = vsel %vm575, %v1099, 0.0
      %v1101 = vrot.slane %v1100, 4
      %v1102 = vadd.f32 %v1100, %v1101
      %v1103 = vrot.slane %v1102, 2
      %v1104 = vadd.f32 %v1102, %v1103
      %v1105 = vrot.slane %v1104, 1
      %v1106 = vadd.f32 %v1104, %v1105
      %v1107 = vadd.f32 %v850, %v1106
      %v1108 = vld [vmem:[%s748] sm:$0x3f]
      %v1109 = vld [vmem:[%s3] sm:$0xff]
      %v1110 = vld [vmem:[%s748 + $0x1] sm:$0x3f]
      %v1111 = vld [vmem:[%s331] sm:$0xff]
      %v1113 = vsel %vm319, %v1110, 0
      %1115 = vmatpush.msra.mxu0 0.0
      %1116 = vmatpush.msra.mxu0 0.0
      %1117 = vmatpush.msra.mxu0 0.0
      %1118 = vmatpush.msra.mxu0 0.0
      %1119 = vmatpush.msra.mxu0 0.0
      %1120 = vmatpush.msra.mxu0 0.0
      %1121 = vmatpush.msra.mxu0 0.0
      %1122 = vmatpush.msra.mxu0 0.0
      %1123 = vmatpush.msra.mxu0 0.0
      %1124 = vmatpush.msra.mxu0 0.0
      %1125 = vmatpush.msra.mxu0 0.0
      %1126 = vmatpush.msra.mxu0 0.0
      %1127 = vmatpush.msra.mxu0 0.0
      %1128 = vmatpush.msra.mxu0 0.0
      %1129 = vmatpush.msra.mxu0 0.0
      %1130 = vmatpush.msra.mxu0 %v1111
      %1131 = vmatmul.f32.gmra.mxu0 %v1113
      %v1132 = vpop.f32.mrf.mxu0
      %v1133 = vadd.f32 0.0, %v1132
      %1134 = vdwg.mxu0
      %v1136 = vsel %vm319, %v1108, 0
      %1138 = vmatpush.msra.mxu0 0.0
      %1139 = vmatpush.msra.mxu0 0.0
      %1140 = vmatpush.msra.mxu0 0.0
      %1141 = vmatpush.msra.mxu0 0.0
      %1142 = vmatpush.msra.mxu0 0.0
      %1143 = vmatpush.msra.mxu0 0.0
      %1144 = vmatpush.msra.mxu0 0.0
      %1145 = vmatpush.msra.mxu0 0.0
      %1146 = vmatpush.msra.mxu0 0.0
      %1147 = vmatpush.msra.mxu0 0.0
      %1148 = vmatpush.msra.mxu0 0.0
      %1149 = vmatpush.msra.mxu0 0.0
      %1150 = vmatpush.msra.mxu0 0.0
      %1151 = vmatpush.msra.mxu0 0.0
      %1152 = vmatpush.msra.mxu0 0.0
      %1153 = vmatpush.msra.mxu0 %v1109
      %1154 = vmatmul.f32.gmra.mxu0 %v1136
      %v1155 = vpop.f32.mrf.mxu0
      %v1156 = vadd.f32 %v1133, %v1155
      %1157 = vdwg.mxu0
      %v1158 = vld [vmem:[%s748 + $0x2] sm:$0x3f]
      %v1159 = vld [vmem:[%s380] sm:$0xff]
      %v1161 = vsel %vm319, %v1158, 0
      %1163 = vmatpush.msra.mxu0 0.0
      %1164 = vmatpush.msra.mxu0 0.0
      %1165 = vmatpush.msra.mxu0 0.0
      %1166 = vmatpush.msra.mxu0 0.0
      %1167 = vmatpush.msra.mxu0 0.0
      %1168 = vmatpush.msra.mxu0 0.0
      %1169 = vmatpush.msra.mxu0 0.0
      %1170 = vmatpush.msra.mxu0 0.0
      %1171 = vmatpush.msra.mxu0 0.0
      %1172 = vmatpush.msra.mxu0 0.0
      %1173 = vmatpush.msra.mxu0 0.0
      %1174 = vmatpush.msra.mxu0 0.0
      %1175 = vmatpush.msra.mxu0 0.0
      %1176 = vmatpush.msra.mxu0 0.0
      %1177 = vmatpush.msra.mxu0 0.0
      %1178 = vmatpush.msra.mxu0 %v1159
      %1179 = vmatmul.f32.gmra.mxu0 %v1161
      %v1180 = vpop.f32.mrf.mxu0
      %v1181 = vadd.f32 0.0, %v1180
      %1182 = vdwg.mxu0
      %v1183 = vadd.f32 %v1156, %v1181
      %v1184 = vld [vmem:[%s1005] sm:$0x3f]
      %v1185 = vld [vmem:[%s408] sm:$0xff]
      %v1187 = vsel %vm319, %v1184, 0
      %1189 = vmatpush.msra.mxu0 0.0
      %1190 = vmatpush.msra.mxu0 0.0
      %1191 = vmatpush.msra.mxu0 0.0
      %1192 = vmatpush.msra.mxu0 0.0
      %1193 = vmatpush.msra.mxu0 0.0
      %1194 = vmatpush.msra.mxu0 0.0
      %1195 = vmatpush.msra.mxu0 0.0
      %1196 = vmatpush.msra.mxu0 0.0
      %1197 = vmatpush.msra.mxu0 0.0
      %1198 = vmatpush.msra.mxu0 0.0
      %1199 = vmatpush.msra.mxu0 0.0
      %1200 = vmatpush.msra.mxu0 0.0
      %1201 = vmatpush.msra.mxu0 0.0
      %1202 = vmatpush.msra.mxu0 0.0
      %1203 = vmatpush.msra.mxu0 0.0
      %1204 = vmatpush.msra.mxu0 %v1185
      %1205 = vmatmul.f32.gmra.mxu0 %v1187
      %v1206 = vpop.f32.mrf.mxu0
      %v1207 = vadd.f32 0.0, %v1206
      %1208 = vdwg.mxu0
      %v1209 = vadd.f32 %v1183, %v1207
      %v1210 = vld [vmem:[%s1005 + $0x1] sm:$0x3f]
      %v1211 = vld [vmem:[%s435] sm:$0xff]
      %v1213 = vsel %vm319, %v1210, 0
      %1215 = vmatpush.msra.mxu0 0.0
      %1216 = vmatpush.msra.mxu0 0.0
      %1217 = vmatpush.msra.mxu0 0.0
      %1218 = vmatpush.msra.mxu0 0.0
      %1219 = vmatpush.msra.mxu0 0.0
      %1220 = vmatpush.msra.mxu0 0.0
      %1221 = vmatpush.msra.mxu0 0.0
      %1222 = vmatpush.msra.mxu0 0.0
      %1223 = vmatpush.msra.mxu0 0.0
      %1224 = vmatpush.msra.mxu0 0.0
      %1225 = vmatpush.msra.mxu0 0.0
      %1226 = vmatpush.msra.mxu0 0.0
      %1227 = vmatpush.msra.mxu0 0.0
      %1228 = vmatpush.msra.mxu0 0.0
      %1229 = vmatpush.msra.mxu0 0.0
      %1230 = vmatpush.msra.mxu0 %v1211
      %1231 = vmatmul.f32.gmra.mxu0 %v1213
      %v1232 = vpop.f32.mrf.mxu0
      %v1233 = vadd.f32 0.0, %v1232
      %1234 = vdwg.mxu0
      %v1235 = vadd.f32 %v1209, %v1233
      %v1236 = vld [vmem:[%s1005 + $0x2] sm:$0x3f]
      %v1237 = vld [vmem:[%s462] sm:$0xff]
      %v1239 = vsel %vm319, %v1236, 0
      %1241 = vmatpush.msra.mxu0 0.0
      %1242 = vmatpush.msra.mxu0 0.0
      %1243 = vmatpush.msra.mxu0 0.0
      %1244 = vmatpush.msra.mxu0 0.0
      %1245 = vmatpush.msra.mxu0 0.0
      %1246 = vmatpush.msra.mxu0 0.0
      %1247 = vmatpush.msra.mxu0 0.0
      %1248 = vmatpush.msra.mxu0 0.0
      %1249 = vmatpush.msra.mxu0 0.0
      %1250 = vmatpush.msra.mxu0 0.0
      %1251 = vmatpush.msra.mxu0 0.0
      %1252 = vmatpush.msra.mxu0 0.0
      %1253 = vmatpush.msra.mxu0 0.0
      %1254 = vmatpush.msra.mxu0 0.0
      %1255 = vmatpush.msra.mxu0 0.0
      %1256 = vmatpush.msra.mxu0 %v1237
      %1257 = vmatmul.f32.gmra.mxu0 %v1239
      %v1258 = vpop.f32.mrf.mxu0
      %v1259 = vadd.f32 0.0, %v1258
      %1260 = vdwg.mxu0
      %v1261 = vadd.f32 %v1235, %v1259
      %s1262 = scalar_lea.vmem [#allocation2], 40
      %v1263 = vld [vmem:[%s1262] sm:$0x3f]
      %v1264 = vld [vmem:[%s490] sm:$0xff]
      %v1266 = vsel %vm319, %v1263, 0
      %1268 = vmatpush.msra.mxu0 0.0
      %1269 = vmatpush.msra.mxu0 0.0
      %1270 = vmatpush.msra.mxu0 0.0
      %1271 = vmatpush.msra.mxu0 0.0
      %1272 = vmatpush.msra.mxu0 0.0
      %1273 = vmatpush.msra.mxu0 0.0
      %1274 = vmatpush.msra.mxu0 0.0
      %1275 = vmatpush.msra.mxu0 0.0
      %1276 = vmatpush.msra.mxu0 0.0
      %1277 = vmatpush.msra.mxu0 0.0
      %1278 = vmatpush.msra.mxu0 0.0
      %1279 = vmatpush.msra.mxu0 0.0
      %1280 = vmatpush.msra.mxu0 0.0
      %1281 = vmatpush.msra.mxu0 0.0
      %1282 = vmatpush.msra.mxu0 0.0
      %1283 = vmatpush.msra.mxu0 %v1264
      %1284 = vmatmul.f32.gmra.mxu0 %v1266
      %v1285 = vpop.f32.mrf.mxu0
      %v1286 = vadd.f32 0.0, %v1285
      %1287 = vdwg.mxu0
      %v1288 = vadd.f32 %v1261, %v1286
      %v1289 = vld [vmem:[%s1262 + $0x1] sm:$0x3f]
      %v1290 = vld [vmem:[%s517] sm:$0xff]
      %v1292 = vsel %vm319, %v1289, 0
      %1294 = vmatpush.msra.mxu0 0.0
      %1295 = vmatpush.msra.mxu0 0.0
      %1296 = vmatpush.msra.mxu0 0.0
      %1297 = vmatpush.msra.mxu0 0.0
      %1298 = vmatpush.msra.mxu0 0.0
      %1299 = vmatpush.msra.mxu0 0.0
      %1300 = vmatpush.msra.mxu0 0.0
      %1301 = vmatpush.msra.mxu0 0.0
      %1302 = vmatpush.msra.mxu0 0.0
      %1303 = vmatpush.msra.mxu0 0.0
      %1304 = vmatpush.msra.mxu0 0.0
      %1305 = vmatpush.msra.mxu0 0.0
      %1306 = vmatpush.msra.mxu0 0.0
      %1307 = vmatpush.msra.mxu0 0.0
      %1308 = vmatpush.msra.mxu0 0.0
      %1309 = vmatpush.msra.mxu0 %v1290
      %1310 = vmatmul.f32.gmra.mxu0 %v1292
      %v1311 = vpop.f32.mrf.mxu0
      %v1312 = vadd.f32 0.0, %v1311
      %1313 = vdwg.mxu0
      %v1314 = vadd.f32 %v1288, %v1312
      %v1315 = vld [vmem:[%s1262 + $0x2] sm:$0x3f]
      %v1316 = vld [vmem:[%s544] sm:$0xff]
      %v1318 = vsel %vm319, %v1315, 0
      %1320 = vmatpush.msra.mxu0 0.0
      %1321 = vmatpush.msra.mxu0 0.0
      %1322 = vmatpush.msra.mxu0 0.0
      %1323 = vmatpush.msra.mxu0 0.0
      %1324 = vmatpush.msra.mxu0 0.0
      %1325 = vmatpush.msra.mxu0 0.0
      %1326 = vmatpush.msra.mxu0 0.0
      %1327 = vmatpush.msra.mxu0 0.0
      %1328 = vmatpush.msra.mxu0 0.0
      %1329 = vmatpush.msra.mxu0 0.0
      %1330 = vmatpush.msra.mxu0 0.0
      %1331 = vmatpush.msra.mxu0 0.0
      %1332 = vmatpush.msra.mxu0 0.0
      %1333 = vmatpush.msra.mxu0 0.0
      %1334 = vmatpush.msra.mxu0 0.0
      %1335 = vmatpush.msra.mxu0 %v1316
      %1336 = vmatmul.f32.gmra.mxu0 %v1318
      %v1337 = vpop.f32.mrf.mxu0
      %v1338 = vadd.f32 0.0, %v1337
      %1339 = vdwg.mxu0
      %v1340 = vadd.f32 %v1314, %v1338
      %v1341 = vld [vmem:[%s4] sm:$0x1]
      %v1343 = vperm.slane %v1341, 0
      %v1345 = vadd.f32 %v1340, %v1343
      %s1346 = scalar_lea.vmem %s258, 24
      %1347 = vst.msk [vmem:[%s1346] sm:$0x3f] %vm575, %v1345
      %v1348 = vsel %vm575, %v1345, 0.0
      %v1349 = vrot.slane %v1348, 4
      %v1350 = vadd.f32 %v1348, %v1349
      %v1351 = vrot.slane %v1350, 2
      %v1352 = vadd.f32 %v1350, %v1351
      %v1353 = vrot.slane %v1352, 1
      %v1354 = vadd.f32 %v1352, %v1353
      %v1355 = vadd.f32 %v1098, %v1354
      %v1356 = vmul.f32 %v1345, %v1345
      %v1357 = vsel %vm575, %v1356, 0.0
      %v1358 = vrot.slane %v1357, 4
      %v1359 = vadd.f32 %v1357, %v1358
      %v1360 = vrot.slane %v1359, 2
      %v1361 = vadd.f32 %v1359, %v1360
      %v1362 = vrot.slane %v1361, 1
      %v1363 = vadd.f32 %v1361, %v1362
      %v1364 = vadd.f32 %v1107, %v1363
      %v1365 = vld [vmem:[%s1005] sm:$0x3f]
      %v1366 = vld [vmem:[%s3] sm:$0xff]
      %v1367 = vld [vmem:[%s1005 + $0x1] sm:$0x3f]
      %v1368 = vld [vmem:[%s331] sm:$0xff]
      %v1370 = vsel %vm319, %v1367, 0
      %1372 = vmatpush.msra.mxu0 0.0
      %1373 = vmatpush.msra.mxu0 0.0
      %1374 = vmatpush.msra.mxu0 0.0
      %1375 = vmatpush.msra.mxu0 0.0
      %1376 = vmatpush.msra.mxu0 0.0
      %1377 = vmatpush.msra.mxu0 0.0
      %1378 = vmatpush.msra.mxu0 0.0
      %1379 = vmatpush.msra.mxu0 0.0
      %1380 = vmatpush.msra.mxu0 0.0
      %1381 = vmatpush.msra.mxu0 0.0
      %1382 = vmatpush.msra.mxu0 0.0
      %1383 = vmatpush.msra.mxu0 0.0
      %1384 = vmatpush.msra.mxu0 0.0
      %1385 = vmatpush.msra.mxu0 0.0
      %1386 = vmatpush.msra.mxu0 0.0
      %1387 = vmatpush.msra.mxu0 %v1368
      %1388 = vmatmul.f32.gmra.mxu0 %v1370
      %v1389 = vpop.f32.mrf.mxu0
      %v1390 = vadd.f32 0.0, %v1389
      %1391 = vdwg.mxu0
      %v1393 = vsel %vm319, %v1365, 0
      %1395 = vmatpush.msra.mxu0 0.0
      %1396 = vmatpush.msra.mxu0 0.0
      %1397 = vmatpush.msra.mxu0 0.0
      %1398 = vmatpush.msra.mxu0 0.0
      %1399 = vmatpush.msra.mxu0 0.0
      %1400 = vmatpush.msra.mxu0 0.0
      %1401 = vmatpush.msra.mxu0 0.0
      %1402 = vmatpush.msra.mxu0 0.0
      %1403 = vmatpush.msra.mxu0 0.0
      %1404 = vmatpush.msra.mxu0 0.0
      %1405 = vmatpush.msra.mxu0 0.0
      %1406 = vmatpush.msra.mxu0 0.0
      %1407 = vmatpush.msra.mxu0 0.0
      %1408 = vmatpush.msra.mxu0 0.0
      %1409 = vmatpush.msra.mxu0 0.0
      %1410 = vmatpush.msra.mxu0 %v1366
      %1411 = vmatmul.f32.gmra.mxu0 %v1393
      %v1412 = vpop.f32.mrf.mxu0
      %v1413 = vadd.f32 %v1390, %v1412
      %1414 = vdwg.mxu0
      %v1415 = vld [vmem:[%s1005 + $0x2] sm:$0x3f]
      %v1416 = vld [vmem:[%s380] sm:$0xff]
      %v1418 = vsel %vm319, %v1415, 0
      %1420 = vmatpush.msra.mxu0 0.0
      %1421 = vmatpush.msra.mxu0 0.0
      %1422 = vmatpush.msra.mxu0 0.0
      %1423 = vmatpush.msra.mxu0 0.0
      %1424 = vmatpush.msra.mxu0 0.0
      %1425 = vmatpush.msra.mxu0 0.0
      %1426 = vmatpush.msra.mxu0 0.0
      %1427 = vmatpush.msra.mxu0 0.0
      %1428 = vmatpush.msra.mxu0 0.0
      %1429 = vmatpush.msra.mxu0 0.0
      %1430 = vmatpush.msra.mxu0 0.0
      %1431 = vmatpush.msra.mxu0 0.0
      %1432 = vmatpush.msra.mxu0 0.0
      %1433 = vmatpush.msra.mxu0 0.0
      %1434 = vmatpush.msra.mxu0 0.0
      %1435 = vmatpush.msra.mxu0 %v1416
      %1436 = vmatmul.f32.gmra.mxu0 %v1418
      %v1437 = vpop.f32.mrf.mxu0
      %v1438 = vadd.f32 0.0, %v1437
      %1439 = vdwg.mxu0
      %v1440 = vadd.f32 %v1413, %v1438
      %v1441 = vld [vmem:[%s1262] sm:$0x3f]
      %v1442 = vld [vmem:[%s408] sm:$0xff]
      %v1444 = vsel %vm319, %v1441, 0
      %1446 = vmatpush.msra.mxu0 0.0
      %1447 = vmatpush.msra.mxu0 0.0
      %1448 = vmatpush.msra.mxu0 0.0
      %1449 = vmatpush.msra.mxu0 0.0
      %1450 = vmatpush.msra.mxu0 0.0
      %1451 = vmatpush.msra.mxu0 0.0
      %1452 = vmatpush.msra.mxu0 0.0
      %1453 = vmatpush.msra.mxu0 0.0
      %1454 = vmatpush.msra.mxu0 0.0
      %1455 = vmatpush.msra.mxu0 0.0
      %1456 = vmatpush.msra.mxu0 0.0
      %1457 = vmatpush.msra.mxu0 0.0
      %1458 = vmatpush.msra.mxu0 0.0
      %1459 = vmatpush.msra.mxu0 0.0
      %1460 = vmatpush.msra.mxu0 0.0
      %1461 = vmatpush.msra.mxu0 %v1442
      %1462 = vmatmul.f32.gmra.mxu0 %v1444
      %v1463 = vpop.f32.mrf.mxu0
      %v1464 = vadd.f32 0.0, %v1463
      %1465 = vdwg.mxu0
      %v1466 = vadd.f32 %v1440, %v1464
      %v1467 = vld [vmem:[%s1262 + $0x1] sm:$0x3f]
      %v1468 = vld [vmem:[%s435] sm:$0xff]
      %v1470 = vsel %vm319, %v1467, 0
      %1472 = vmatpush.msra.mxu0 0.0
      %1473 = vmatpush.msra.mxu0 0.0
      %1474 = vmatpush.msra.mxu0 0.0
      %1475 = vmatpush.msra.mxu0 0.0
      %1476 = vmatpush.msra.mxu0 0.0
      %1477 = vmatpush.msra.mxu0 0.0
      %1478 = vmatpush.msra.mxu0 0.0
      %1479 = vmatpush.msra.mxu0 0.0
      %1480 = vmatpush.msra.mxu0 0.0
      %1481 = vmatpush.msra.mxu0 0.0
      %1482 = vmatpush.msra.mxu0 0.0
      %1483 = vmatpush.msra.mxu0 0.0
      %1484 = vmatpush.msra.mxu0 0.0
      %1485 = vmatpush.msra.mxu0 0.0
      %1486 = vmatpush.msra.mxu0 0.0
      %1487 = vmatpush.msra.mxu0 %v1468
      %1488 = vmatmul.f32.gmra.mxu0 %v1470
      %v1489 = vpop.f32.mrf.mxu0
      %v1490 = vadd.f32 0.0, %v1489
      %1491 = vdwg.mxu0
      %v1492 = vadd.f32 %v1466, %v1490
      %v1493 = vld [vmem:[%s1262 + $0x2] sm:$0x3f]
      %v1494 = vld [vmem:[%s462] sm:$0xff]
      %v1496 = vsel %vm319, %v1493, 0
      %1498 = vmatpush.msra.mxu0 0.0
      %1499 = vmatpush.msra.mxu0 0.0
      %1500 = vmatpush.msra.mxu0 0.0
      %1501 = vmatpush.msra.mxu0 0.0
      %1502 = vmatpush.msra.mxu0 0.0
      %1503 = vmatpush.msra.mxu0 0.0
      %1504 = vmatpush.msra.mxu0 0.0
      %1505 = vmatpush.msra.mxu0 0.0
      %1506 = vmatpush.msra.mxu0 0.0
      %1507 = vmatpush.msra.mxu0 0.0
      %1508 = vmatpush.msra.mxu0 0.0
      %1509 = vmatpush.msra.mxu0 0.0
      %1510 = vmatpush.msra.mxu0 0.0
      %1511 = vmatpush.msra.mxu0 0.0
      %1512 = vmatpush.msra.mxu0 0.0
      %1513 = vmatpush.msra.mxu0 %v1494
      %1514 = vmatmul.f32.gmra.mxu0 %v1496
      %v1515 = vpop.f32.mrf.mxu0
      %v1516 = vadd.f32 0.0, %v1515
      %1517 = vdwg.mxu0
      %v1518 = vadd.f32 %v1492, %v1516
      %s1519 = scalar_lea.vmem [#allocation2], 48
      %v1520 = vld [vmem:[%s1519] sm:$0x3f]
      %v1521 = vld [vmem:[%s490] sm:$0xff]
      %v1523 = vsel %vm319, %v1520, 0
      %1525 = vmatpush.msra.mxu0 0.0
      %1526 = vmatpush.msra.mxu0 0.0
      %1527 = vmatpush.msra.mxu0 0.0
      %1528 = vmatpush.msra.mxu0 0.0
      %1529 = vmatpush.msra.mxu0 0.0
      %1530 = vmatpush.msra.mxu0 0.0
      %1531 = vmatpush.msra.mxu0 0.0
      %1532 = vmatpush.msra.mxu0 0.0
      %1533 = vmatpush.msra.mxu0 0.0
      %1534 = vmatpush.msra.mxu0 0.0
      %1535 = vmatpush.msra.mxu0 0.0
      %1536 = vmatpush.msra.mxu0 0.0
      %1537 = vmatpush.msra.mxu0 0.0
      %1538 = vmatpush.msra.mxu0 0.0
      %1539 = vmatpush.msra.mxu0 0.0
      %1540 = vmatpush.msra.mxu0 %v1521
      %1541 = vmatmul.f32.gmra.mxu0 %v1523
      %v1542 = vpop.f32.mrf.mxu0
      %v1543 = vadd.f32 0.0, %v1542
      %1544 = vdwg.mxu0
      %v1545 = vadd.f32 %v1518, %v1543
      %v1546 = vld [vmem:[%s1519 + $0x1] sm:$0x3f]
      %v1547 = vld [vmem:[%s517] sm:$0xff]
      %v1549 = vsel %vm319, %v1546, 0
      %1551 = vmatpush.msra.mxu0 0.0
      %1552 = vmatpush.msra.mxu0 0.0
      %1553 = vmatpush.msra.mxu0 0.0
      %1554 = vmatpush.msra.mxu0 0.0
      %1555 = vmatpush.msra.mxu0 0.0
      %1556 = vmatpush.msra.mxu0 0.0
      %1557 = vmatpush.msra.mxu0 0.0
      %1558 = vmatpush.msra.mxu0 0.0
      %1559 = vmatpush.msra.mxu0 0.0
      %1560 = vmatpush.msra.mxu0 0.0
      %1561 = vmatpush.msra.mxu0 0.0
      %1562 = vmatpush.msra.mxu0 0.0
      %1563 = vmatpush.msra.mxu0 0.0
      %1564 = vmatpush.msra.mxu0 0.0
      %1565 = vmatpush.msra.mxu0 0.0
      %1566 = vmatpush.msra.mxu0 %v1547
      %1567 = vmatmul.f32.gmra.mxu0 %v1549
      %v1568 = vpop.f32.mrf.mxu0
      %v1569 = vadd.f32 0.0, %v1568
      %1570 = vdwg.mxu0
      %v1571 = vadd.f32 %v1545, %v1569
      %v1572 = vld [vmem:[%s1519 + $0x2] sm:$0x3f]
      %v1573 = vld [vmem:[%s544] sm:$0xff]
      %v1575 = vsel %vm319, %v1572, 0
      %1577 = vmatpush.msra.mxu0 0.0
      %1578 = vmatpush.msra.mxu0 0.0
      %1579 = vmatpush.msra.mxu0 0.0
      %1580 = vmatpush.msra.mxu0 0.0
      %1581 = vmatpush.msra.mxu0 0.0
      %1582 = vmatpush.msra.mxu0 0.0
      %1583 = vmatpush.msra.mxu0 0.0
      %1584 = vmatpush.msra.mxu0 0.0
      %1585 = vmatpush.msra.mxu0 0.0
      %1586 = vmatpush.msra.mxu0 0.0
      %1587 = vmatpush.msra.mxu0 0.0
      %1588 = vmatpush.msra.mxu0 0.0
      %1589 = vmatpush.msra.mxu0 0.0
      %1590 = vmatpush.msra.mxu0 0.0
      %1591 = vmatpush.msra.mxu0 0.0
      %1592 = vmatpush.msra.mxu0 %v1573
      %1593 = vmatmul.f32.gmra.mxu0 %v1575
      %v1594 = vpop.f32.mrf.mxu0
      %v1595 = vadd.f32 0.0, %v1594
      %1596 = vdwg.mxu0
      %v1597 = vadd.f32 %v1571, %v1595
      %v1598 = vld [vmem:[%s4] sm:$0x1]
      %v1600 = vperm.slane %v1598, 0
      %v1602 = vadd.f32 %v1597, %v1600
      %s1603 = scalar_lea.vmem %s258, 32
      %1604 = vst.msk [vmem:[%s1603] sm:$0x3f] %vm575, %v1602
      %v1605 = vsel %vm575, %v1602, 0.0
      %v1606 = vrot.slane %v1605, 4
      %v1607 = vadd.f32 %v1605, %v1606
      %v1608 = vrot.slane %v1607, 2
      %v1609 = vadd.f32 %v1607, %v1608
      %v1610 = vrot.slane %v1609, 1
      %v1611 = vadd.f32 %v1609, %v1610
      %v1612 = vadd.f32 %v1355, %v1611
      %v1613 = vmul.f32 %v1602, %v1602
      %v1614 = vsel %vm575, %v1613, 0.0
      %v1615 = vrot.slane %v1614, 4
      %v1616 = vadd.f32 %v1614, %v1615
      %v1617 = vrot.slane %v1616, 2
      %v1618 = vadd.f32 %v1616, %v1617
      %v1619 = vrot.slane %v1618, 1
      %v1620 = vadd.f32 %v1618, %v1619
      %v1621 = vadd.f32 %v1364, %v1620
      %v1622 = vld [vmem:[%s1262] sm:$0x3f]
      %v1623 = vld [vmem:[%s3] sm:$0xff]
      %v1624 = vld [vmem:[%s1262 + $0x1] sm:$0x3f]
      %v1625 = vld [vmem:[%s331] sm:$0xff]
      %v1627 = vsel %vm319, %v1624, 0
      %1629 = vmatpush.msra.mxu0 0.0
      %1630 = vmatpush.msra.mxu0 0.0
      %1631 = vmatpush.msra.mxu0 0.0
      %1632 = vmatpush.msra.mxu0 0.0
      %1633 = vmatpush.msra.mxu0 0.0
      %1634 = vmatpush.msra.mxu0 0.0
      %1635 = vmatpush.msra.mxu0 0.0
      %1636 = vmatpush.msra.mxu0 0.0
      %1637 = vmatpush.msra.mxu0 0.0
      %1638 = vmatpush.msra.mxu0 0.0
      %1639 = vmatpush.msra.mxu0 0.0
      %1640 = vmatpush.msra.mxu0 0.0
      %1641 = vmatpush.msra.mxu0 0.0
      %1642 = vmatpush.msra.mxu0 0.0
      %1643 = vmatpush.msra.mxu0 0.0
      %1644 = vmatpush.msra.mxu0 %v1625
      %1645 = vmatmul.f32.gmra.mxu0 %v1627
      %v1646 = vpop.f32.mrf.mxu0
      %v1647 = vadd.f32 0.0, %v1646
      %1648 = vdwg.mxu0
      %v1650 = vsel %vm319, %v1622, 0
      %1652 = vmatpush.msra.mxu0 0.0
      %1653 = vmatpush.msra.mxu0 0.0
      %1654 = vmatpush.msra.mxu0 0.0
      %1655 = vmatpush.msra.mxu0 0.0
      %1656 = vmatpush.msra.mxu0 0.0
      %1657 = vmatpush.msra.mxu0 0.0
      %1658 = vmatpush.msra.mxu0 0.0
      %1659 = vmatpush.msra.mxu0 0.0
      %1660 = vmatpush.msra.mxu0 0.0
      %1661 = vmatpush.msra.mxu0 0.0
      %1662 = vmatpush.msra.mxu0 0.0
      %1663 = vmatpush.msra.mxu0 0.0
      %1664 = vmatpush.msra.mxu0 0.0
      %1665 = vmatpush.msra.mxu0 0.0
      %1666 = vmatpush.msra.mxu0 0.0
      %1667 = vmatpush.msra.mxu0 %v1623
      %1668 = vmatmul.f32.gmra.mxu0 %v1650
      %v1669 = vpop.f32.mrf.mxu0
      %v1670 = vadd.f32 %v1647, %v1669
      %1671 = vdwg.mxu0
      %v1672 = vld [vmem:[%s1262 + $0x2] sm:$0x3f]
      %v1673 = vld [vmem:[%s380] sm:$0xff]
      %v1675 = vsel %vm319, %v1672, 0
      %1677 = vmatpush.msra.mxu0 0.0
      %1678 = vmatpush.msra.mxu0 0.0
      %1679 = vmatpush.msra.mxu0 0.0
      %1680 = vmatpush.msra.mxu0 0.0
      %1681 = vmatpush.msra.mxu0 0.0
      %1682 = vmatpush.msra.mxu0 0.0
      %1683 = vmatpush.msra.mxu0 0.0
      %1684 = vmatpush.msra.mxu0 0.0
      %1685 = vmatpush.msra.mxu0 0.0
      %1686 = vmatpush.msra.mxu0 0.0
      %1687 = vmatpush.msra.mxu0 0.0
      %1688 = vmatpush.msra.mxu0 0.0
      %1689 = vmatpush.msra.mxu0 0.0
      %1690 = vmatpush.msra.mxu0 0.0
      %1691 = vmatpush.msra.mxu0 0.0
      %1692 = vmatpush.msra.mxu0 %v1673
      %1693 = vmatmul.f32.gmra.mxu0 %v1675
      %v1694 = vpop.f32.mrf.mxu0
      %v1695 = vadd.f32 0.0, %v1694
      %1696 = vdwg.mxu0
      %v1697 = vadd.f32 %v1670, %v1695
      %v1698 = vld [vmem:[%s1519] sm:$0x3f]
      %v1699 = vld [vmem:[%s408] sm:$0xff]
      %v1701 = vsel %vm319, %v1698, 0
      %1703 = vmatpush.msra.mxu0 0.0
      %1704 = vmatpush.msra.mxu0 0.0
      %1705 = vmatpush.msra.mxu0 0.0
      %1706 = vmatpush.msra.mxu0 0.0
      %1707 = vmatpush.msra.mxu0 0.0
      %1708 = vmatpush.msra.mxu0 0.0
      %1709 = vmatpush.msra.mxu0 0.0
      %1710 = vmatpush.msra.mxu0 0.0
      %1711 = vmatpush.msra.mxu0 0.0
      %1712 = vmatpush.msra.mxu0 0.0
      %1713 = vmatpush.msra.mxu0 0.0
      %1714 = vmatpush.msra.mxu0 0.0
      %1715 = vmatpush.msra.mxu0 0.0
      %1716 = vmatpush.msra.mxu0 0.0
      %1717 = vmatpush.msra.mxu0 0.0
      %1718 = vmatpush.msra.mxu0 %v1699
      %1719 = vmatmul.f32.gmra.mxu0 %v1701
      %v1720 = vpop.f32.mrf.mxu0
      %v1721 = vadd.f32 0.0, %v1720
      %1722 = vdwg.mxu0
      %v1723 = vadd.f32 %v1697, %v1721
      %v1724 = vld [vmem:[%s1519 + $0x1] sm:$0x3f]
      %v1725 = vld [vmem:[%s435] sm:$0xff]
      %v1727 = vsel %vm319, %v1724, 0
      %1729 = vmatpush.msra.mxu0 0.0
      %1730 = vmatpush.msra.mxu0 0.0
      %1731 = vmatpush.msra.mxu0 0.0
      %1732 = vmatpush.msra.mxu0 0.0
      %1733 = vmatpush.msra.mxu0 0.0
      %1734 = vmatpush.msra.mxu0 0.0
      %1735 = vmatpush.msra.mxu0 0.0
      %1736 = vmatpush.msra.mxu0 0.0
      %1737 = vmatpush.msra.mxu0 0.0
      %1738 = vmatpush.msra.mxu0 0.0
      %1739 = vmatpush.msra.mxu0 0.0
      %1740 = vmatpush.msra.mxu0 0.0
      %1741 = vmatpush.msra.mxu0 0.0
      %1742 = vmatpush.msra.mxu0 0.0
      %1743 = vmatpush.msra.mxu0 0.0
      %1744 = vmatpush.msra.mxu0 %v1725
      %1745 = vmatmul.f32.gmra.mxu0 %v1727
      %v1746 = vpop.f32.mrf.mxu0
      %v1747 = vadd.f32 0.0, %v1746
      %1748 = vdwg.mxu0
      %v1749 = vadd.f32 %v1723, %v1747
      %v1750 = vld [vmem:[%s1519 + $0x2] sm:$0x3f]
      %v1751 = vld [vmem:[%s462] sm:$0xff]
      %v1753 = vsel %vm319, %v1750, 0
      %1755 = vmatpush.msra.mxu0 0.0
      %1756 = vmatpush.msra.mxu0 0.0
      %1757 = vmatpush.msra.mxu0 0.0
      %1758 = vmatpush.msra.mxu0 0.0
      %1759 = vmatpush.msra.mxu0 0.0
      %1760 = vmatpush.msra.mxu0 0.0
      %1761 = vmatpush.msra.mxu0 0.0
      %1762 = vmatpush.msra.mxu0 0.0
      %1763 = vmatpush.msra.mxu0 0.0
      %1764 = vmatpush.msra.mxu0 0.0
      %1765 = vmatpush.msra.mxu0 0.0
      %1766 = vmatpush.msra.mxu0 0.0
      %1767 = vmatpush.msra.mxu0 0.0
      %1768 = vmatpush.msra.mxu0 0.0
      %1769 = vmatpush.msra.mxu0 0.0
      %1770 = vmatpush.msra.mxu0 %v1751
      %1771 = vmatmul.f32.gmra.mxu0 %v1753
      %v1772 = vpop.f32.mrf.mxu0
      %v1773 = vadd.f32 0.0, %v1772
      %1774 = vdwg.mxu0
      %v1775 = vadd.f32 %v1749, %v1773
      %s1776 = scalar_lea.vmem [#allocation2], 56
      %v1777 = vld [vmem:[%s1776] sm:$0x3f]
      %v1778 = vld [vmem:[%s490] sm:$0xff]
      %v1780 = vsel %vm319, %v1777, 0
      %1782 = vmatpush.msra.mxu0 0.0
      %1783 = vmatpush.msra.mxu0 0.0
      %1784 = vmatpush.msra.mxu0 0.0
      %1785 = vmatpush.msra.mxu0 0.0
      %1786 = vmatpush.msra.mxu0 0.0
      %1787 = vmatpush.msra.mxu0 0.0
      %1788 = vmatpush.msra.mxu0 0.0
      %1789 = vmatpush.msra.mxu0 0.0
      %1790 = vmatpush.msra.mxu0 0.0
      %1791 = vmatpush.msra.mxu0 0.0
      %1792 = vmatpush.msra.mxu0 0.0
      %1793 = vmatpush.msra.mxu0 0.0
      %1794 = vmatpush.msra.mxu0 0.0
      %1795 = vmatpush.msra.mxu0 0.0
      %1796 = vmatpush.msra.mxu0 0.0
      %1797 = vmatpush.msra.mxu0 %v1778
      %1798 = vmatmul.f32.gmra.mxu0 %v1780
      %v1799 = vpop.f32.mrf.mxu0
      %v1800 = vadd.f32 0.0, %v1799
      %1801 = vdwg.mxu0
      %v1802 = vadd.f32 %v1775, %v1800
      %v1803 = vld [vmem:[%s1776 + $0x1] sm:$0x3f]
      %v1804 = vld [vmem:[%s517] sm:$0xff]
      %v1806 = vsel %vm319, %v1803, 0
      %1808 = vmatpush.msra.mxu0 0.0
      %1809 = vmatpush.msra.mxu0 0.0
      %1810 = vmatpush.msra.mxu0 0.0
      %1811 = vmatpush.msra.mxu0 0.0
      %1812 = vmatpush.msra.mxu0 0.0
      %1813 = vmatpush.msra.mxu0 0.0
      %1814 = vmatpush.msra.mxu0 0.0
      %1815 = vmatpush.msra.mxu0 0.0
      %1816 = vmatpush.msra.mxu0 0.0
      %1817 = vmatpush.msra.mxu0 0.0
      %1818 = vmatpush.msra.mxu0 0.0
      %1819 = vmatpush.msra.mxu0 0.0
      %1820 = vmatpush.msra.mxu0 0.0
      %1821 = vmatpush.msra.mxu0 0.0
      %1822 = vmatpush.msra.mxu0 0.0
      %1823 = vmatpush.msra.mxu0 %v1804
      %1824 = vmatmul.f32.gmra.mxu0 %v1806
      %v1825 = vpop.f32.mrf.mxu0
      %v1826 = vadd.f32 0.0, %v1825
      %1827 = vdwg.mxu0
      %v1828 = vadd.f32 %v1802, %v1826
      %v1829 = vld [vmem:[%s1776 + $0x2] sm:$0x3f]
      %v1830 = vld [vmem:[%s544] sm:$0xff]
      %v1832 = vsel %vm319, %v1829, 0
      %1834 = vmatpush.msra.mxu0 0.0
      %1835 = vmatpush.msra.mxu0 0.0
      %1836 = vmatpush.msra.mxu0 0.0
      %1837 = vmatpush.msra.mxu0 0.0
      %1838 = vmatpush.msra.mxu0 0.0
      %1839 = vmatpush.msra.mxu0 0.0
      %1840 = vmatpush.msra.mxu0 0.0
      %1841 = vmatpush.msra.mxu0 0.0
      %1842 = vmatpush.msra.mxu0 0.0
      %1843 = vmatpush.msra.mxu0 0.0
      %1844 = vmatpush.msra.mxu0 0.0
      %1845 = vmatpush.msra.mxu0 0.0
      %1846 = vmatpush.msra.mxu0 0.0
      %1847 = vmatpush.msra.mxu0 0.0
      %1848 = vmatpush.msra.mxu0 0.0
      %1849 = vmatpush.msra.mxu0 %v1830
      %1850 = vmatmul.f32.gmra.mxu0 %v1832
      %v1851 = vpop.f32.mrf.mxu0
      %v1852 = vadd.f32 0.0, %v1851
      %1853 = vdwg.mxu0
      %v1854 = vadd.f32 %v1828, %v1852
      %v1855 = vld [vmem:[%s4] sm:$0x1]
      %v1857 = vperm.slane %v1855, 0
      %v1859 = vadd.f32 %v1854, %v1857
      %s1860 = scalar_lea.vmem %s258, 40
      %1861 = vst.msk [vmem:[%s1860] sm:$0x3f] %vm575, %v1859
      %v1862 = vsel %vm575, %v1859, 0.0
      %v1863 = vrot.slane %v1862, 4
      %v1864 = vadd.f32 %v1862, %v1863
      %v1865 = vrot.slane %v1864, 2
      %v1866 = vadd.f32 %v1864, %v1865
      %v1867 = vrot.slane %v1866, 1
      %v1868 = vadd.f32 %v1866, %v1867
      %v1869 = vadd.f32 %v1612, %v1868
      %v1870 = vmul.f32 %v1859, %v1859
      %v1871 = vsel %vm575, %v1870, 0.0
      %v1872 = vrot.slane %v1871, 4
      %v1873 = vadd.f32 %v1871, %v1872
      %v1874 = vrot.slane %v1873, 2
      %v1875 = vadd.f32 %v1873, %v1874
      %v1876 = vrot.slane %v1875, 1
      %v1877 = vadd.f32 %v1875, %v1876
      %v1878 = vadd.f32 %v1621, %v1877
      %vm1879 = vcmask 57344
      %1880 = vst.msk [vmem:[%s262] sm:$0x1] %vm1879, %v1869
      %1881 = vst.msk [vmem:[%s262 + $0x1] sm:$0x1] %vm1879, %v1878
      %p1882 = scmp.lt.s32.totalorder %s18, 1
      %s1883 = scalar_select %p1882, %s18, 1
      %s1884 = smul.addr %s1883, 6
      %s1885 = smul.addr %s1884, 8
      %s1886 = scalar_lea.vmem %s5, %s1885
      %p1887 = scmp.lt.s32.totalorder %s18, 1
      %s1888 = scalar_select %p1887, %s18, 1
      %s1889 = smul.addr %s1888, 2
      %s1890 = scalar_lea.vmem %s6, %s1889
      // Predicated region
      $region41: #{downsample_forward.4} parent=39 // pred_check
        %p1891 = pneg %p146
      $region42: #{downsample_forward.4} parent=39 // pred_check_branch
        %1893 = sbr.rel (%p1891) target = $region44
      $region43: #{downsample_forward.4} parent=39 // pred_region
        _
      $region44: #{downsample_forward.4} parent=39 // pred_fallthru
        _
      // Predicated region
      $region45: #{downsample_forward.4} parent=39 // pred_check
        %p1894 = pneg %p172
      $region46: #{downsample_forward.4} parent=39 // pred_check_branch
        %1896 = sbr.rel (%p1894) target = $region48
      $region47: #{downsample_forward.4} parent=39 // pred_region
        _
      $region48: #{downsample_forward.4} parent=39 // pred_fallthru
        _
    $region40: #{downsample_forward.4} parent=5 // pred_fallthru
      _
    %p1897 = scmp.le.s32.totalorder 2, %s13
    // Predicated region
    $region49: #{downsample_forward.4} parent=5 // pred_check
      %p1898 = pneg %p1897
    $region50: #{downsample_forward.4} parent=5 // pred_check_branch
      %1900 = sbr.rel (%p1898) target = $region52
    $region51: #{downsample_forward.4} parent=5 // pred_region
      %s1901 = ssub.s32 %s13, 2
      // Predicated region
      $region53: #{downsample_forward.4} parent=51 // pred_check
        %p1902 = pneg %p152
      $region54: #{downsample_forward.4} parent=51 // pred_check_branch
        %1904 = sbr.rel (%p1902) target = $region56
      $region55: #{downsample_forward.4} parent=51 // pred_region
        %p1905 = scmp.lt.s32.totalorder %s19, 1
        %s1906 = scalar_select %p1905, %s19, 1
        %s1907 = smul.addr %s1906, 6
        %s1908 = smul.addr %s1907, 8
        %s1909 = scalar_lea.vmem %s5, %s1908
      $region56: #{downsample_forward.4} parent=51 // pred_fallthru
        _
      // Predicated region
      $region57: #{downsample_forward.4} parent=51 // pred_check
        %p1910 = pneg %p178
      $region58: #{downsample_forward.4} parent=51 // pred_check_branch
        %1912 = sbr.rel (%p1910) target = $region60
      $region59: #{downsample_forward.4} parent=51 // pred_region
        %p1913 = scmp.lt.s32.totalorder %s19, 1
        %s1914 = scalar_select %p1913, %s19, 1
        %s1915 = smul.addr %s1914, 2
        %s1916 = scalar_lea.vmem %s6, %s1915
      $region60: #{downsample_forward.4} parent=51 // pred_fallthru
        _
    $region52: #{downsample_forward.4} parent=5 // pred_fallthru
      _
  $region6: #{downsample_forward.4} parent=0 // loop_footer
    %s17 = sadd.s32 1, %s13
  $region7: #{downsample_forward.4} parent=0 // loop_footer_branch
    %12 = sbr.rel target = $region3
  $region8: #{downsample_forward.4} parent=0 // loop_exit
    _

// kernel: downsample_forward.3
$region0: #{downsample_forward.3}
  #allocation0 [shape = 'u32[]', space=smem, size = 0x4, offset = 0x4, fixed_abs, tag = 'smem constant byte address 0x4 - core index']
  #allocation1 [shape = 'u32[72,128]{1,0:T(1,128)}', space=vmem, size = 0x9000, scoped, tag = 'internal scratch']
  %s0 = inlined_call_operand.vmem [shape: f32[2,4,9,9,4], index: 0, kind: input, shape index: {}]
  %s1 = inlined_call_operand.vmem [shape: f32[9,4,8], index: 1, kind: input, shape index: {}]
  %s2 = inlined_call_operand.vmem [shape: f32[1,8], index: 2, kind: input, shape index: {}]
  %s3 = inlined_call_operand.vmem [shape: f32[2,8,8,8], index: 3, kind: output, shape index: {0}]
  %s4 = inlined_call_operand.vmem [shape: f32[2,2,8], index: 4, kind: output, shape index: {1}]
  %5 = xla_tuple %s3, %s4
  %s6 = sld [smem:[#allocation0]]
  $region53: #{downsample_forward.3} parent=0
    _
  %s8 = ssub.s32 1, %s6
  %s9 = scalar_select 0, %s8, %s6
  loop: start=0, step=1, limit=4
  $region2: #{downsample_forward.3} parent=0 // loop_pre_header
    _
  $region3: #{downsample_forward.3} parent=0 // loop_header
    %s11 = sphi 0, %s15
    %p12 = scmp.ge.s32.totalorder %s11, 4
    %s21 = sphi 0, %s23
    %s24 = sphi 0, %s21
    %s25 = sphi 0, %s24
    %s41 = sphi 0, %s25
    %s45 = sphi 0, %s45
    %s47 = sphi 0, %s45
    %s48 = sphi 0, %s47
    %s62 = sphi 0, %s48
    %s66 = sphi 0, %s66
    %s68 = sphi 0, %s66
    %s69 = sphi 0, %s68
    %s83 = sphi 0, %s69
    %s89 = sphi 0, %s91
    %s92 = sphi 0, %s89
    %s93 = sphi 0, %s92
    %s109 = sphi 0, %s93
    %s115 = sphi 0, %s117
    %s118 = sphi 0, %s115
    %s119 = sphi 0, %s118
    %s135 = sphi 0, %s119
  $region4: #{downsample_forward.3} parent=0 // loop_header_branch
    %14 = sbr.rel (%p12) target = $region8
  $region5: #{downsample_forward.3} parent=0 // loop_body
    %s16 = ssub.s32 %s11, 1
    %s17 = ssub.s32 %s11, 2
    %s18 = sadd.s32 %s11, 1
    %s19 = ssub.s32 %s11, %s18
    %p20 = scmp.eq.s32.totalorder %s19, 0
    %s22 = sadd.s32 %s21, 1
    %s23 = scalar_select %p20, %s21, %s22
    %p26 = pneg %p20
    %p27 = scmp.eq.s32.totalorder %s11, 1
    %p28 = por %p26, %p27
    %p29 = scmp.ne.s32.totalorder %s21, %s24
    %p30 = scmp.eq.s32.totalorder %s11, 0
    %p31 = por %p29, %p30
    %p32 = scmp.ne.s32.totalorder %s21, %s24
    %p33 = scmp.eq.s32.totalorder %s16, 1
    %p34 = por %p32, %p33
    %p35 = scmp.ne.s32.totalorder %s24, %s25
    %p36 = scmp.eq.s32.totalorder %s16, 0
    %p37 = por %p35, %p36
    %p38 = scmp.ne.s32.totalorder %s24, %s25
    %p39 = scmp.eq.s32.totalorder %s17, 1
    %p40 = por %p38, %p39
    %p42 = scmp.ne.s32.totalorder %s25, %s41
    %p43 = scmp.eq.s32.totalorder %s17, 0
    %p44 = por %p42, %p43
    %s46 = sadd.s32 %s45, 1
    %p49 = scmp.eq.s32.totalorder %s11, 1
    %p50 = scmp.ne.s32.totalorder %s45, %s47
    %p51 = scmp.eq.s32.totalorder %s11, 0
    %p52 = por %p50, %p51
    %p53 = scmp.ne.s32.totalorder %s45, %s47
    %p54 = scmp.eq.s32.totalorder %s16, 1
    %p55 = por %p53, %p54
    %p56 = scmp.ne.s32.totalorder %s47, %s48
    %p57 = scmp.eq.s32.totalorder %s16, 0
    %p58 = por %p56, %p57
    %p59 = scmp.ne.s32.totalorder %s47, %s48
    %p60 = scmp.eq.s32.totalorder %s17, 1
    %p61 = por %p59, %p60
    %p63 = scmp.ne.s32.totalorder %s48, %s62
    %p64 = scmp.eq.s32.totalorder %s17, 0
    %p65 = por %p63, %p64
    %s67 = sadd.s32 %s66, 1
    %p70 = scmp.eq.s32.totalorder %s11, 1
    %p71 = scmp.ne.s32.totalorder %s66, %s68
    %p72 = scmp.eq.s32.totalorder %s11, 0
    %p73 = por %p71, %p72
    %p74 = scmp.ne.s32.totalorder %s66, %s68
    %p75 = scmp.eq.s32.totalorder %s16, 1
    %p76 = por %p74, %p75
    %p77 = scmp.ne.s32.totalorder %s68, %s69
    %p78 = scmp.eq.s32.totalorder %s16, 0
    %p79 = por %p77, %p78
    %p80 = scmp.ne.s32.totalorder %s68, %s69
    %p81 = scmp.eq.s32.totalorder %s17, 1
    %p82 = por %p80, %p81
    %p84 = scmp.ne.s32.totalorder %s69, %s83
    %p85 = scmp.eq.s32.totalorder %s17, 0
    %p86 = por %p84, %p85
    %s87 = ssub.s32 %s11, %s18
    %p88 = scmp.eq.s32.totalorder %s87, 0
    %s90 = sadd.s32 %s89, 1
    %s91 = scalar_select %p88, %s89, %s90
    %p94 = pneg %p88
    %p95 = scmp.eq.s32.totalorder %s11, 1
    %p96 = por %p94, %p95
    %p97 = scmp.ne.s32.totalorder %s89, %s92
    %p98 = scmp.eq.s32.totalorder %s11, 0
    %p99 = por %p97, %p98
    %p100 = scmp.ne.s32.totalorder %s89, %s92
    %p101 = scmp.eq.s32.totalorder %s16, 1
    %p102 = por %p100, %p101
    %p103 = scmp.ne.s32.totalorder %s92, %s93
    %p104 = scmp.eq.s32.totalorder %s16, 0
    %p105 = por %p103, %p104
    %p106 = scmp.ne.s32.totalorder %s92, %s93
    %p107 = scmp.eq.s32.totalorder %s17, 1
    %p108 = por %p106, %p107
    %p110 = scmp.ne.s32.totalorder %s93, %s109
    %p111 = scmp.eq.s32.totalorder %s17, 0
    %p112 = por %p110, %p111
    %s113 = ssub.s32 %s11, %s18
    %p114 = scmp.eq.s32.totalorder %s113, 0
    %s116 = sadd.s32 %s115, 1
    %s117 = scalar_select %p114, %s115, %s116
    %p120 = pneg %p114
    %p121 = scmp.eq.s32.totalorder %s11, 1
    %p122 = por %p120, %p121
    %p123 = scmp.ne.s32.totalorder %s115, %s118
    %p124 = scmp.eq.s32.totalorder %s11, 0
    %p125 = por %p123, %p124
    %p126 = scmp.ne.s32.totalorder %s115, %s118
    %p127 = scmp.eq.s32.totalorder %s16, 1
    %p128 = por %p126, %p127
    %p129 = scmp.ne.s32.totalorder %s118, %s119
    %p130 = scmp.eq.s32.totalorder %s16, 0
    %p131 = por %p129, %p130
    %p132 = scmp.ne.s32.totalorder %s118, %s119
    %p133 = scmp.eq.s32.totalorder %s17, 1
    %p134 = por %p132, %p133
    %p136 = scmp.ne.s32.totalorder %s119, %s135
    %p137 = scmp.eq.s32.totalorder %s17, 0
    %p138 = por %p136, %p137
    %p139 = scmp.le.s32.totalorder 1, %s11
    %p140 = scmp.lt.s32.totalorder %s11, 3
    %p141 = pnand %p139, %p140
    %p142 = pneg %p141
    // Predicated region
    $region9: #{downsample_forward.3} parent=5 // pred_check
      _
    $region10: #{downsample_forward.3} parent=5 // pred_check_branch
      %144 = sbr.rel (%p141) target = $region12
    $region11: #{downsample_forward.3} parent=5 // pred_region
      %s145 = ssub.s32 %s11, 1
      // Predicated region
      $region13: #{downsample_forward.3} parent=11 // pred_check
        %p146 = pneg %p58
      $region14: #{downsample_forward.3} parent=11 // pred_check_branch
        %148 = sbr.rel (%p146) target = $region16
      $region15: #{downsample_forward.3} parent=11 // pred_region
        _
      $region16: #{downsample_forward.3} parent=11 // pred_fallthru
        _
      // Predicated region
      $region17: #{downsample_forward.3} parent=11 // pred_check
        %p149 = pneg %p79
      $region18: #{downsample_forward.3} parent=11 // pred_check_branch
        %151 = sbr.rel (%p149) target = $region20
      $region19: #{downsample_forward.3} parent=11 // pred_region
        _
      $region20: #{downsample_forward.3} parent=11 // pred_fallthru
        _
    $region12: #{downsample_forward.3} parent=5 // pred_fallthru
      _
    %p152 = scmp.lt.s32.totalorder %s11, 2
    // Predicated region
    $region21: #{downsample_forward.3} parent=5 // pred_check
      %p153 = pneg %p152
    $region22: #{downsample_forward.3} parent=5 // pred_check_branch
      %155 = sbr.rel (%p153) target = $region24
    $region23: #{downsample_forward.3} parent=5 // pred_region
      // Predicated region
      $region25: #{downsample_forward.3} parent=23 // pred_check
        %p156 = pneg %p31
      $region26: #{downsample_forward.3} parent=23 // pred_check_branch
        %158 = sbr.rel (%p156) target = $region28
      $region27: #{downsample_forward.3} parent=23 // pred_region
        %p159 = scmp.lt.s32.totalorder %s11, 1
        %s160 = scalar_select %p159, %s11, 1
        %s161 = smul.addr %s160, 72
        %s162 = smul.addr %s161, 8
        %s163 = scalar_lea.vmem %s0, %s162
      $region28: #{downsample_forward.3} parent=23 // pred_fallthru
        _
    $region24: #{downsample_forward.3} parent=5 // pred_fallthru
      _
    %p164 = scmp.le.s32.totalorder 1, %s11
    %p165 = scmp.lt.s32.totalorder %s11, 3
    %p166 = pnand %p164, %p165
    %p167 = pneg %p166
    // Predicated region
    $region29: #{downsample_forward.3} parent=5 // pred_check
      _
    $region30: #{downsample_forward.3} parent=5 // pred_check_branch
      %169 = sbr.rel (%p166) target = $region32
    $region31: #{downsample_forward.3} parent=5 // pred_region
      %s170 = ssub.s32 %s11, 1
      %p171 = scmp.lt.s32.totalorder %s16, 1
      %s172 = scalar_select %p171, %s16, 1
      %s173 = smul.addr %s172, 72
      %s174 = smul.addr %s173, 8
      %s175 = scalar_lea.vmem %s0, %s174
      %p176 = pneg %p37
      %p177 = pneg %p34
      %p178 = pneg %p58
      %p179 = pneg %p55
      %p180 = pneg %p79
      %p181 = pneg %p76
      %p182 = pneg %p105
      %p183 = pneg %p102
      %p184 = scmp.lt.s32.totalorder %s16, 1
      %s185 = scalar_select %p184, %s16, 1
      %s186 = smul.addr %s185, 8
      %s187 = smul.addr %s186, 8
      %s188 = scalar_lea.vmem %s3, %s187
      %p189 = pneg %p131
      %p190 = pneg %p128
      %p191 = scmp.lt.s32.totalorder %s16, 1
      %s192 = scalar_select %p191, %s16, 1
      %s193 = smul.addr %s192, 2
      %s194 = scalar_lea.vmem %s4, %s193
      %p195 = scmp.lt.s32.totalorder %s16, 1
      %s196 = scalar_select %p195, %s16, 1
      %s197 = smul.addr %s196, 72
      %s198 = smul.addr %s197, 8
      %s199 = scalar_lea.vmem %s0, %s198
      %p200 = scmp.lt.s32.totalorder %s16, 1
      %s201 = scalar_select %p200, %s16, 1
      %s202 = smul.addr %s201, 8
      %s203 = smul.addr %s202, 8
      %s204 = scalar_lea.vmem %s3, %s203
      %p205 = scmp.lt.s32.totalorder %s16, 1
      %s206 = scalar_select %p205, %s16, 1
      %s207 = smul.addr %s206, 2
      %s208 = scalar_lea.vmem %s4, %s207
      %v209 = vld [vmem:[%s199] sm:$0xff]
      %v210 = vld [vmem:[%s1] sm:$0xf]
      %s211 = scalar_lea.vmem %s199, 144
      %v212 = vld [vmem:[%s211] sm:$0xff]
      %s213 = scalar_lea.vmem %s1, 4
      %v214 = vld [vmem:[%s213] sm:$0xf]
      %vm215 = vcmask 31744
      %v217 = vsel %vm215, %v212, 0
      %vm219 = vcmask 1043456
      %v221 = vsel %vm219, %v214, 0
      %223 = vmatpush.msra.mxu0 0.0
      %224 = vmatpush.msra.mxu0 0.0
      %225 = vmatpush.msra.mxu0 0.0
      %226 = vmatpush.msra.mxu0 0.0
      %227 = vmatpush.msra.mxu0 0.0
      %228 = vmatpush.msra.mxu0 0.0
      %229 = vmatpush.msra.mxu0 0.0
      %230 = vmatpush.msra.mxu0 0.0
      %231 = vmatpush.msra.mxu0 0.0
      %232 = vmatpush.msra.mxu0 0.0
      %233 = vmatpush.msra.mxu0 0.0
      %234 = vmatpush.msra.mxu0 0.0
      %235 = vmatpush.msra.mxu0 0.0
      %236 = vmatpush.msra.mxu0 0.0
      %237 = vmatpush.msra.mxu0 0.0
      %238 = vmatpush.msra.mxu0 %v221
      %239 = vmatmul.f32.gmra.mxu0 %v217
      %v240 = vpop.f32.mrf.mxu0
      %v241 = vadd.f32 0.0, %v240
      %242 = vdwg.mxu0
      %v244 = vsel %vm215, %v209, 0
      %v247 = vsel %vm219, %v210, 0
      %249 = vmatpush.msra.mxu0 0.0
      %250 = vmatpush.msra.mxu0 0.0
      %251 = vmatpush.msra.mxu0 0.0
      %252 = vmatpush.msra.mxu0 0.0
      %253 = vmatpush.msra.mxu0 0.0
      %254 = vmatpush.msra.mxu0 0.0
      %255 = vmatpush.msra.mxu0 0.0
      %256 = vmatpush.msra.mxu0 0.0
      %257 = vmatpush.msra.mxu0 0.0
      %258 = vmatpush.msra.mxu0 0.0
      %259 = vmatpush.msra.mxu0 0.0
      %260 = vmatpush.msra.mxu0 0.0
      %261 = vmatpush.msra.mxu0 0.0
      %262 = vmatpush.msra.mxu0 0.0
      %263 = vmatpush.msra.mxu0 0.0
      %264 = vmatpush.msra.mxu0 %v247
      %265 = vmatmul.f32.gmra.mxu0 %v244
      %v266 = vpop.f32.mrf.mxu0
      %v267 = vadd.f32 %v241, %v266
      %268 = vdwg.mxu0
      %v269 = vld [vmem:[%s199 + $0x1] sm:$0xff]
      %s270 = scalar_lea.vmem %s1, 8
      %v271 = vld [vmem:[%s270] sm:$0xf]
      %v273 = vsel %vm215, %v269, 0
      %v276 = vsel %vm219, %v271, 0
      %278 = vmatpush.msra.mxu0 0.0
      %279 = vmatpush.msra.mxu0 0.0
      %280 = vmatpush.msra.mxu0 0.0
      %281 = vmatpush.msra.mxu0 0.0
      %282 = vmatpush.msra.mxu0 0.0
      %283 = vmatpush.msra.mxu0 0.0
      %284 = vmatpush.msra.mxu0 0.0
      %285 = vmatpush.msra.mxu0 0.0
      %286 = vmatpush.msra.mxu0 0.0
      %287 = vmatpush.msra.mxu0 0.0
      %288 = vmatpush.msra.mxu0 0.0
      %289 = vmatpush.msra.mxu0 0.0
      %290 = vmatpush.msra.mxu0 0.0
      %291 = vmatpush.msra.mxu0 0.0
      %292 = vmatpush.msra.mxu0 0.0
      %293 = vmatpush.msra.mxu0 %v276
      %294 = vmatmul.f32.gmra.mxu0 %v273
      %v295 = vpop.f32.mrf.mxu0
      %v296 = vadd.f32 0.0, %v295
      %297 = vdwg.mxu0
      %v298 = vadd.f32 %v267, %v296
      %s299 = scalar_lea.vmem %s199, 288
      %v300 = vld [vmem:[%s299] sm:$0xff]
      %s301 = scalar_lea.vmem %s1, 12
      %v302 = vld [vmem:[%s301] sm:$0xf]
      %v304 = vsel %vm215, %v300, 0
      %v307 = vsel %vm219, %v302, 0
      %309 = vmatpush.msra.mxu0 0.0
      %310 = vmatpush.msra.mxu0 0.0
      %311 = vmatpush.msra.mxu0 0.0
      %312 = vmatpush.msra.mxu0 0.0
      %313 = vmatpush.msra.mxu0 0.0
      %314 = vmatpush.msra.mxu0 0.0
      %315 = vmatpush.msra.mxu0 0.0
      %316 = vmatpush.msra.mxu0 0.0
      %317 = vmatpush.msra.mxu0 0.0
      %318 = vmatpush.msra.mxu0 0.0
      %319 = vmatpush.msra.mxu0 0.0
      %320 = vmatpush.msra.mxu0 0.0
      %321 = vmatpush.msra.mxu0 0.0
      %322 = vmatpush.msra.mxu0 0.0
      %323 = vmatpush.msra.mxu0 0.0
      %324 = vmatpush.msra.mxu0 %v307
      %325 = vmatmul.f32.gmra.mxu0 %v304
      %v326 = vpop.f32.mrf.mxu0
      %v327 = vadd.f32 0.0, %v326
      %328 = vdwg.mxu0
      %v329 = vadd.f32 %v298, %v327
      %s330 = scalar_lea.vmem %s199, 432
      %v331 = vld [vmem:[%s330] sm:$0xff]
      %s332 = scalar_lea.vmem %s1, 16
      %v333 = vld [vmem:[%s332] sm:$0xf]
      %v335 = vsel %vm215, %v331, 0
      %v338 = vsel %vm219, %v333, 0
      %340 = vmatpush.msra.mxu0 0.0
      %341 = vmatpush.msra.mxu0 0.0
      %342 = vmatpush.msra.mxu0 0.0
      %343 = vmatpush.msra.mxu0 0.0
      %344 = vmatpush.msra.mxu0 0.0
      %345 = vmatpush.msra.mxu0 0.0
      %346 = vmatpush.msra.mxu0 0.0
      %347 = vmatpush.msra.mxu0 0.0
      %348 = vmatpush.msra.mxu0 0.0
      %349 = vmatpush.msra.mxu0 0.0
      %350 = vmatpush.msra.mxu0 0.0
      %351 = vmatpush.msra.mxu0 0.0
      %352 = vmatpush.msra.mxu0 0.0
      %353 = vmatpush.msra.mxu0 0.0
      %354 = vmatpush.msra.mxu0 0.0
      %355 = vmatpush.msra.mxu0 %v338
      %356 = vmatmul.f32.gmra.mxu0 %v335
      %v357 = vpop.f32.mrf.mxu0
      %v358 = vadd.f32 0.0, %v357
      %359 = vdwg.mxu0
      %v360 = vadd.f32 %v329, %v358
      %v361 = vld [vmem:[%s299 + $0x1] sm:$0xff]
      %s362 = scalar_lea.vmem %s1, 20
      %v363 = vld [vmem:[%s362] sm:$0xf]
      %v365 = vsel %vm215, %v361, 0
      %v368 = vsel %vm219, %v363, 0
      %370 = vmatpush.msra.mxu0 0.0
      %371 = vmatpush.msra.mxu0 0.0
      %372 = vmatpush.msra.mxu0 0.0
      %373 = vmatpush.msra.mxu0 0.0
      %374 = vmatpush.msra.mxu0 0.0
      %375 = vmatpush.msra.mxu0 0.0
      %376 = vmatpush.msra.mxu0 0.0
      %377 = vmatpush.msra.mxu0 0.0
      %378 = vmatpush.msra.mxu0 0.0
      %379 = vmatpush.msra.mxu0 0.0
      %380 = vmatpush.msra.mxu0 0.0
      %381 = vmatpush.msra.mxu0 0.0
      %382 = vmatpush.msra.mxu0 0.0
      %383 = vmatpush.msra.mxu0 0.0
      %384 = vmatpush.msra.mxu0 0.0
      %385 = vmatpush.msra.mxu0 %v368
      %386 = vmatmul.f32.gmra.mxu0 %v365
      %v387 = vpop.f32.mrf.mxu0
      %v388 = vadd.f32 0.0, %v387
      %389 = vdwg.mxu0
      %v390 = vadd.f32 %v360, %v388
      %s391 = scalar_lea.vmem %s199, 16
      %v392 = vld [vmem:[%s391] sm:$0xff]
      %s393 = scalar_lea.vmem %s1, 24
      %v394 = vld [vmem:[%s393] sm:$0xf]
      %v396 = vsel %vm215, %v392, 0
      %v399 = vsel %vm219, %v394, 0
      %401 = vmatpush.msra.mxu0 0.0
      %402 = vmatpush.msra.mxu0 0.0
      %403 = vmatpush.msra.mxu0 0.0
      %404 = vmatpush.msra.mxu0 0.0
      %405 = vmatpush.msra.mxu0 0.0
      %406 = vmatpush.msra.mxu0 0.0
      %407 = vmatpush.msra.mxu0 0.0
      %408 = vmatpush.msra.mxu0 0.0
      %409 = vmatpush.msra.mxu0 0.0
      %410 = vmatpush.msra.mxu0 0.0
      %411 = vmatpush.msra.mxu0 0.0
      %412 = vmatpush.msra.mxu0 0.0
      %413 = vmatpush.msra.mxu0 0.0
      %414 = vmatpush.msra.mxu0 0.0
      %415 = vmatpush.msra.mxu0 0.0
      %416 = vmatpush.msra.mxu0 %v399
      %417 = vmatmul.f32.gmra.mxu0 %v396
      %v418 = vpop.f32.mrf.mxu0
      %v419 = vadd.f32 0.0, %v418
      %420 = vdwg.mxu0
      %v421 = vadd.f32 %v390, %v419
      %s422 = scalar_lea.vmem %s199, 160
      %v423 = vld [vmem:[%s422] sm:$0xff]
      %s424 = scalar_lea.vmem %s1, 28
      %v425 = vld [vmem:[%s424] sm:$0xf]
      %v427 = vsel %vm215, %v423, 0
      %v430 = vsel %vm219, %v425, 0
      %432 = vmatpush.msra.mxu0 0.0
      %433 = vmatpush.msra.mxu0 0.0
      %434 = vmatpush.msra.mxu0 0.0
      %435 = vmatpush.msra.mxu0 0.0
      %436 = vmatpush.msra.mxu0 0.0
      %437 = vmatpush.msra.mxu0 0.0
      %438 = vmatpush.msra.mxu0 0.0
      %439 = vmatpush.msra.mxu0 0.0
      %440 = vmatpush.msra.mxu0 0.0
      %441 = vmatpush.msra.mxu0 0.0
      %442 = vmatpush.msra.mxu0 0.0
      %443 = vmatpush.msra.mxu0 0.0
      %444 = vmatpush.msra.mxu0 0.0
      %445 = vmatpush.msra.mxu0 0.0
      %446 = vmatpush.msra.mxu0 0.0
      %447 = vmatpush.msra.mxu0 %v430
      %448 = vmatmul.f32.gmra.mxu0 %v427
      %v449 = vpop.f32.mrf.mxu0
      %v450 = vadd.f32 0.0, %v449
      %451 = vdwg.mxu0
      %v452 = vadd.f32 %v421, %v450
      %v453 = vld [vmem:[%s391 + $0x1] sm:$0xff]
      %s454 = scalar_lea.vmem %s1, 32
      %v455 = vld [vmem:[%s454] sm:$0xf]
      %v457 = vsel %vm215, %v453, 0
      %v460 = vsel %vm219, %v455, 0
      %462 = vmatpush.msra.mxu0 0.0
      %463 = vmatpush.msra.mxu0 0.0
      %464 = vmatpush.msra.mxu0 0.0
      %465 = vmatpush.msra.mxu0 0.0
      %466 = vmatpush.msra.mxu0 0.0
      %467 = vmatpush.msra.mxu0 0.0
      %468 = vmatpush.msra.mxu0 0.0
      %469 = vmatpush.msra.mxu0 0.0
      %470 = vmatpush.msra.mxu0 0.0
      %471 = vmatpush.msra.mxu0 0.0
      %472 = vmatpush.msra.mxu0 0.0
      %473 = vmatpush.msra.mxu0 0.0
      %474 = vmatpush.msra.mxu0 0.0
      %475 = vmatpush.msra.mxu0 0.0
      %476 = vmatpush.msra.mxu0 0.0
      %477 = vmatpush.msra.mxu0 %v460
      %478 = vmatmul.f32.gmra.mxu0 %v457
      %v479 = vpop.f32.mrf.mxu0
      %v480 = vadd.f32 0.0, %v479
      %481 = vdwg.mxu0
      %v482 = vadd.f32 %v452, %v480
      %v483 = vld [vmem:[%s2] sm:$0x1]
      %v485 = vperm.slane %v483, 0
      %v487 = vadd.f32 %v482, %v485
      %vm488 = vcmask 64512
      %489 = vst.msk [vmem:[%s204] sm:$0xff] %vm488, %v487
      %v490 = vsel %vm488, %v487, 0.0
      %v491 = vrot.slane %v490, 4
      %v492 = vadd.f32 %v490, %v491
      %v493 = vrot.slane %v492, 2
      %v494 = vadd.f32 %v492, %v493
      %v495 = vrot.slane %v494, 1
      %v496 = vadd.f32 %v494, %v495
      %v497 = vadd.f32 %v496, 0.0
      %v498 = vmul.f32 %v487, %v487
      %v499 = vsel %vm488, %v498, 0.0
      %v500 = vrot.slane %v499, 4
      %v501 = vadd.f32 %v499, %v500
      %v502 = vrot.slane %v501, 2
      %v503 = vadd.f32 %v501, %v502
      %v504 = vrot.slane %v503, 1
      %v505 = vadd.f32 %v503, %v504
      %v506 = vadd.f32 %v505, 0.0
      %v507 = vld [vmem:[%s391] sm:$0xff]
      %v508 = vld [vmem:[%s1] sm:$0xf]
      %v509 = vld [vmem:[%s422] sm:$0xff]
      %v510 = vld [vmem:[%s213] sm:$0xf]
      %v512 = vsel %vm215, %v509, 0
      %v515 = vsel %vm219, %v510, 0
      %517 = vmatpush.msra.mxu0 0.0
      %518 = vmatpush.msra.mxu0 0.0
      %519 = vmatpush.msra.mxu0 0.0
      %520 = vmatpush.msra.mxu0 0.0
      %521 = vmatpush.msra.mxu0 0.0
      %522 = vmatpush.msra.mxu0 0.0
      %523 = vmatpush.msra.mxu0 0.0
      %524 = vmatpush.msra.mxu0 0.0
      %525 = vmatpush.msra.mxu0 0.0
      %526 = vmatpush.msra.mxu0 0.0
      %527 = vmatpush.msra.mxu0 0.0
      %528 = vmatpush.msra.mxu0 0.0
      %529 = vmatpush.msra.mxu0 0.0
      %530 = vmatpush.msra.mxu0 0.0
      %531 = vmatpush.msra.mxu0 0.0
      %532 = vmatpush.msra.mxu0 %v515
      %533 = vmatmul.f32.gmra.mxu0 %v512
      %v534 = vpop.f32.mrf.mxu0
      %v535 = vadd.f32 0.0, %v534
      %536 = vdwg.mxu0
      %v538 = vsel %vm215, %v507, 0
      %v541 = vsel %vm219, %v508, 0
      %543 = vmatpush.msra.mxu0 0.0
      %544 = vmatpush.msra.mxu0 0.0
      %545 = vmatpush.msra.mxu0 0.0
      %546 = vmatpush.msra.mxu0 0.0
      %547 = vmatpush.msra.mxu0 0.0
      %548 = vmatpush.msra.mxu0 0.0
      %549 = vmatpush.msra.mxu0 0.0
      %550 = vmatpush.msra.mxu0 0.0
      %551 = vmatpush.msra.mxu0 0.0
      %552 = vmatpush.msra.mxu0 0.0
      %553 = vmatpush.msra.mxu0 0.0
      %554 = vmatpush.msra.mxu0 0.0
      %555 = vmatpush.msra.mxu0 0.0
      %556 = vmatpush.msra.mxu0 0.0
      %557 = vmatpush.msra.mxu0 0.0
      %558 = vmatpush.msra.mxu0 %v541
      %559 = vmatmul.f32.gmra.mxu0 %v538
      %v560 = vpop.f32.mrf.mxu0
      %v561 = vadd.f32 %v535, %v560
      %562 = vdwg.mxu0
      %v563 = vld [vmem:[%s391 + $0x1] sm:$0xff]
      %v564 = vld [vmem:[%s270] sm:$0xf]
      %v566 = vsel %vm215, %v563, 0
      %v569 = vsel %vm219, %v564, 0
      %571 = vmatpush.msra.mxu0 0.0
      %572 = vmatpush.msra.mxu0 0.0
      %573 = vmatpush.msra.mxu0 0.0
      %574 = vmatpush.msra.mxu0 0.0
      %575 = vmatpush.msra.mxu0 0.0
      %576 = vmatpush.msra.mxu0 0.0
      %577 = vmatpush.msra.mxu0 0.0
      %578 = vmatpush.msra.mxu0 0.0
      %579 = vmatpush.msra.mxu0 0.0
      %580 = vmatpush.msra.mxu0 0.0
      %581 = vmatpush.msra.mxu0 0.0
      %582 = vmatpush.msra.mxu0 0.0
      %583 = vmatpush.msra.mxu0 0.0
      %584 = vmatpush.msra.mxu0 0.0
      %585 = vmatpush.msra.mxu0 0.0
      %586 = vmatpush.msra.mxu0 %v569
      %587 = vmatmul.f32.gmra.mxu0 %v566
      %v588 = vpop.f32.mrf.mxu0
      %v589 = vadd.f32 0.0, %v588
      %590 = vdwg.mxu0
      %v591 = vadd.f32 %v561, %v589
      %s592 = scalar_lea.vmem %s199, 304
      %v593 = vld [vmem:[%s592] sm:$0xff]
      %v594 = vld [vmem:[%s301] sm:$0xf]
      %v596 = vsel %vm215, %v593, 0
      %v599 = vsel %vm219, %v594, 0
      %601 = vmatpush.msra.mxu0 0.0
      %602 = vmatpush.msra.mxu0 0.0
      %603 = vmatpush.msra.mxu0 0.0
      %604 = vmatpush.msra.mxu0 0.0
      %605 = vmatpush.msra.mxu0 0.0
      %606 = vmatpush.msra.mxu0 0.0
      %607 = vmatpush.msra.mxu0 0.0
      %608 = vmatpush.msra.mxu0 0.0
      %609 = vmatpush.msra.mxu0 0.0
      %610 = vmatpush.msra.mxu0 0.0
      %611 = vmatpush.msra.mxu0 0.0
      %612 = vmatpush.msra.mxu0 0.0
      %613 = vmatpush.msra.mxu0 0.0
      %614 = vmatpush.msra.mxu0 0.0
      %615 = vmatpush.msra.mxu0 0.0
      %616 = vmatpush.msra.mxu0 %v599
      %617 = vmatmul.f32.gmra.mxu0 %v596
      %v618 = vpop.f32.mrf.mxu0
      %v619 = vadd.f32 0.0, %v618
      %620 = vdwg.mxu0
      %v621 = vadd.f32 %v591, %v619
      %s622 = scalar_lea.vmem %s199, 448
      %v623 = vld [vmem:[%s622] sm:$0xff]
      %v624 = vld [vmem:[%s332] sm:$0xf]
      %v626 = vsel %vm215, %v623, 0
      %v629 = vsel %vm219, %v624, 0
      %631 = vmatpush.msra.mxu0 0.0
      %632 = vmatpush.msra.mxu0 0.0
      %633 = vmatpush.msra.mxu0 0.0
      %634 = vmatpush.msra.mxu0 0.0
      %635 = vmatpush.msra.mxu0 0.0
      %636 = vmatpush.msra.mxu0 0.0
      %637 = vmatpush.msra.mxu0 0.0
      %638 = vmatpush.msra.mxu0 0.0
      %639 = vmatpush.msra.mxu0 0.0
      %640 = vmatpush.msra.mxu0 0.0
      %641 = vmatpush.msra.mxu0 0.0
      %642 = vmatpush.msra.mxu0 0.0
      %643 = vmatpush.msra.mxu0 0.0
      %644 = vmatpush.msra.mxu0 0.0
      %645 = vmatpush.msra.mxu0 0.0
      %646 = vmatpush.msra.mxu0 %v629
      %647 = vmatmul.f32.gmra.mxu0 %v626
      %v648 = vpop.f32.mrf.mxu0
      %v649 = vadd.f32 0.0, %v648
      %650 = vdwg.mxu0
      %v651 = vadd.f32 %v621, %v649
      %v652 = vld [vmem:[%s592 + $0x1] sm:$0xff]
      %v653 = vld [vmem:[%s362] sm:$0xf]
      %v655 = vsel %vm215, %v652, 0
      %v658 = vsel %vm219, %v653, 0
      %660 = vmatpush.msra.mxu0 0.0
      %661 = vmatpush.msra.mxu0 0.0
      %662 = vmatpush.msra.mxu0 0.0
      %663 = vmatpush.msra.mxu0 0.0
      %664 = vmatpush.msra.mxu0 0.0
      %665 = vmatpush.msra.mxu0 0.0
      %666 = vmatpush.msra.mxu0 0.0
      %667 = vmatpush.msra.mxu0 0.0
      %668 = vmatpush.msra.mxu0 0.0
      %669 = vmatpush.msra.mxu0 0.0
      %670 = vmatpush.msra.mxu0 0.0
      %671 = vmatpush.msra.mxu0 0.0
      %672 = vmatpush.msra.mxu0 0.0
      %673 = vmatpush.msra.mxu0 0.0
      %674 = vmatpush.msra.mxu0 0.0
      %675 = vmatpush.msra.mxu0 %v658
      %676 = vmatmul.f32.gmra.mxu0 %v655
      %v677 = vpop.f32.mrf.mxu0
      %v678 = vadd.f32 0.0, %v677
      %679 = vdwg.mxu0
      %v680 = vadd.f32 %v651, %v678
      %s681 = scalar_lea.vmem %s199, 32
      %v682 = vld [vmem:[%s681] sm:$0xff]
      %v683 = vld [vmem:[%s393] sm:$0xf]
      %v685 = vsel %vm215, %v682, 0
      %v688 = vsel %vm219, %v683, 0
      %690 = vmatpush.msra.mxu0 0.0
      %691 = vmatpush.msra.mxu0 0.0
      %692 = vmatpush.msra.mxu0 0.0
      %693 = vmatpush.msra.mxu0 0.0
      %694 = vmatpush.msra.mxu0 0.0
      %695 = vmatpush.msra.mxu0 0.0
      %696 = vmatpush.msra.mxu0 0.0
      %697 = vmatpush.msra.mxu0 0.0
      %698 = vmatpush.msra.mxu0 0.0
      %699 = vmatpush.msra.mxu0 0.0
      %700 = vmatpush.msra.mxu0 0.0
      %701 = vmatpush.msra.mxu0 0.0
      %702 = vmatpush.msra.mxu0 0.0
      %703 = vmatpush.msra.mxu0 0.0
      %704 = vmatpush.msra.mxu0 0.0
      %705 = vmatpush.msra.mxu0 %v688
      %706 = vmatmul.f32.gmra.mxu0 %v685
      %v707 = vpop.f32.mrf.mxu0
      %v708 = vadd.f32 0.0, %v707
      %709 = vdwg.mxu0
      %v710 = vadd.f32 %v680, %v708
      %s711 = scalar_lea.vmem %s199, 176
      %v712 = vld [vmem:[%s711] sm:$0xff]
      %v713 = vld [vmem:[%s424] sm:$0xf]
      %v715 = vsel %vm215, %v712, 0
      %v718 = vsel %vm219, %v713, 0
      %720 = vmatpush.msra.mxu0 0.0
      %721 = vmatpush.msra.mxu0 0.0
      %722 = vmatpush.msra.mxu0 0.0
      %723 = vmatpush.msra.mxu0 0.0
      %724 = vmatpush.msra.mxu0 0.0
      %725 = vmatpush.msra.mxu0 0.0
      %726 = vmatpush.msra.mxu0 0.0
      %727 = vmatpush.msra.mxu0 0.0
      %728 = vmatpush.msra.mxu0 0.0
      %729 = vmatpush.msra.mxu0 0.0
      %730 = vmatpush.msra.mxu0 0.0
      %731 = vmatpush.msra.mxu0 0.0
      %732 = vmatpush.msra.mxu0 0.0
      %733 = vmatpush.msra.mxu0 0.0
      %734 = vmatpush.msra.mxu0 0.0
      %735 = vmatpush.msra.mxu0 %v718
      %736 = vmatmul.f32.gmra.mxu0 %v715
      %v737 = vpop.f32.mrf.mxu0
      %v738 = vadd.f32 0.0, %v737
      %739 = vdwg.mxu0
      %v740 = vadd.f32 %v710, %v738
      %v741 = vld [vmem:[%s681 + $0x1] sm:$0xff]
      %v742 = vld [vmem:[%s454] sm:$0xf]
      %v744 = vsel %vm215, %v741, 0
      %v747 = vsel %vm219, %v742, 0
      %749 = vmatpush.msra.mxu0 0.0
      %750 = vmatpush.msra.mxu0 0.0
      %751 = vmatpush.msra.mxu0 0.0
      %752 = vmatpush.msra.mxu0 0.0
      %753 = vmatpush.msra.mxu0 0.0
      %754 = vmatpush.msra.mxu0 0.0
      %755 = vmatpush.msra.mxu0 0.0
      %756 = vmatpush.msra.mxu0 0.0
      %757 = vmatpush.msra.mxu0 0.0
      %758 = vmatpush.msra.mxu0 0.0
      %759 = vmatpush.msra.mxu0 0.0
      %760 = vmatpush.msra.mxu0 0.0
      %761 = vmatpush.msra.mxu0 0.0
      %762 = vmatpush.msra.mxu0 0.0
      %763 = vmatpush.msra.mxu0 0.0
      %764 = vmatpush.msra.mxu0 %v747
      %765 = vmatmul.f32.gmra.mxu0 %v744
      %v766 = vpop.f32.mrf.mxu0
      %v767 = vadd.f32 0.0, %v766
      %768 = vdwg.mxu0
      %v769 = vadd.f32 %v740, %v767
      %v770 = vld [vmem:[%s2] sm:$0x1]
      %v772 = vperm.slane %v770, 0
      %v774 = vadd.f32 %v769, %v772
      %s775 = scalar_lea.vmem %s204, 8
      %776 = vst.msk [vmem:[%s775] sm:$0xff] %vm488, %v774
      %v777 = vsel %vm488, %v774, 0.0
      %v778 = vrot.slane %v777, 4
      %v779 = vadd.f32 %v777, %v778
      %v780 = vrot.slane %v779, 2
      %v781 = vadd.f32 %v779, %v780
      %v782 = vrot.slane %v781, 1
      %v783 = vadd.f32 %v781, %v782
      %v784 = vadd.f32 %v497, %v783
      %v785 = vmul.f32 %v774, %v774
      %v786 = vsel %vm488, %v785, 0.0
      %v787 = vrot.slane %v786, 4
      %v788 = vadd.f32 %v786, %v787
      %v789 = vrot.slane %v788, 2
      %v790 = vadd.f32 %v788, %v789
      %v791 = vrot.slane %v790, 1
      %v792 = vadd.f32 %v790, %v791
      %v793 = vadd.f32 %v506, %v792
      %v794 = vld [vmem:[%s681] sm:$0xff]
      %v795 = vld [vmem:[%s1] sm:$0xf]
      %v796 = vld [vmem:[%s711] sm:$0xff]
      %v797 = vld [vmem:[%s213] sm:$0xf]
      %v799 = vsel %vm215, %v796, 0
      %v802 = vsel %vm219, %v797, 0
      %804 = vmatpush.msra.mxu0 0.0
      %805 = vmatpush.msra.mxu0 0.0
      %806 = vmatpush.msra.mxu0 0.0
      %807 = vmatpush.msra.mxu0 0.0
      %808 = vmatpush.msra.mxu0 0.0
      %809 = vmatpush.msra.mxu0 0.0
      %810 = vmatpush.msra.mxu0 0.0
      %811 = vmatpush.msra.mxu0 0.0
      %812 = vmatpush.msra.mxu0 0.0
      %813 = vmatpush.msra.mxu0 0.0
      %814 = vmatpush.msra.mxu0 0.0
      %815 = vmatpush.msra.mxu0 0.0
      %816 = vmatpush.msra.mxu0 0.0
      %817 = vmatpush.msra.mxu0 0.0
      %818 = vmatpush.msra.mxu0 0.0
      %819 = vmatpush.msra.mxu0 %v802
      %820 = vmatmul.f32.gmra.mxu0 %v799
      %v821 = vpop.f32.mrf.mxu0
      %v822 = vadd.f32 0.0, %v821
      %823 = vdwg.mxu0
      %v825 = vsel %vm215, %v794, 0
      %v828 = vsel %vm219, %v795, 0
      %830 = vmatpush.msra.mxu0 0.0
      %831 = vmatpush.msra.mxu0 0.0
      %832 = vmatpush.msra.mxu0 0.0
      %833 = vmatpush.msra.mxu0 0.0
      %834 = vmatpush.msra.mxu0 0.0
      %835 = vmatpush.msra.mxu0 0.0
      %836 = vmatpush.msra.mxu0 0.0
      %837 = vmatpush.msra.mxu0 0.0
      %838 = vmatpush.msra.mxu0 0.0
      %839 = vmatpush.msra.mxu0 0.0
      %840 = vmatpush.msra.mxu0 0.0
      %841 = vmatpush.msra.mxu0 0.0
      %842 = vmatpush.msra.mxu0 0.0
      %843 = vmatpush.msra.mxu0 0.0
      %844 = vmatpush.msra.mxu0 0.0
      %845 = vmatpush.msra.mxu0 %v828
      %846 = vmatmul.f32.gmra.mxu0 %v825
      %v847 = vpop.f32.mrf.mxu0
      %v848 = vadd.f32 %v822, %v847
      %849 = vdwg.mxu0
      %v850 = vld [vmem:[%s681 + $0x1] sm:$0xff]
      %v851 = vld [vmem:[%s270] sm:$0xf]
      %v853 = vsel %vm215, %v850, 0
      %v856 = vsel %vm219, %v851, 0
      %858 = vmatpush.msra.mxu0 0.0
      %859 = vmatpush.msra.mxu0 0.0
      %860 = vmatpush.msra.mxu0 0.0
      %861 = vmatpush.msra.mxu0 0.0
      %862 = vmatpush.msra.mxu0 0.0
      %863 = vmatpush.msra.mxu0 0.0
      %864 = vmatpush.msra.mxu0 0.0
      %865 = vmatpush.msra.mxu0 0.0
      %866 = vmatpush.msra.mxu0 0.0
      %867 = vmatpush.msra.mxu0 0.0
      %868 = vmatpush.msra.mxu0 0.0
      %869 = vmatpush.msra.mxu0 0.0
      %870 = vmatpush.msra.mxu0 0.0
      %871 = vmatpush.msra.mxu0 0.0
      %872 = vmatpush.msra.mxu0 0.0
      %873 = vmatpush.msra.mxu0 %v856
      %874 = vmatmul.f32.gmra.mxu0 %v853
      %v875 = vpop.f32.mrf.mxu0
      %v876 = vadd.f32 0.0, %v875
      %877 = vdwg.mxu0
      %v878 = vadd.f32 %v848, %v876
      %s879 = scalar_lea.vmem %s199, 320
      %v880 = vld [vmem:[%s879] sm:$0xff]
      %v881 = vld [vmem:[%s301] sm:$0xf]
      %v883 = vsel %vm215, %v880, 0
      %v886 = vsel %vm219, %v881, 0
      %888 = vmatpush.msra.mxu0 0.0
      %889 = vmatpush.msra.mxu0 0.0
      %890 = vmatpush.msra.mxu0 0.0
      %891 = vmatpush.msra.mxu0 0.0
      %892 = vmatpush.msra.mxu0 0.0
      %893 = vmatpush.msra.mxu0 0.0
      %894 = vmatpush.msra.mxu0 0.0
      %895 = vmatpush.msra.mxu0 0.0
      %896 = vmatpush.msra.mxu0 0.0
      %897 = vmatpush.msra.mxu0 0.0
      %898 = vmatpush.msra.mxu0 0.0
      %899 = vmatpush.msra.mxu0 0.0
      %900 = vmatpush.msra.mxu0 0.0
      %901 = vmatpush.msra.mxu0 0.0
      %902 = vmatpush.msra.mxu0 0.0
      %903 = vmatpush.msra.mxu0 %v886
      %904 = vmatmul.f32.gmra.mxu0 %v883
      %v905 = vpop.f32.mrf.mxu0
      %v906 = vadd.f32 0.0, %v905
      %907 = vdwg.mxu0
      %v908 = vadd.f32 %v878, %v906
      %s909 = scalar_lea.vmem %s199, 464
      %v910 = vld [vmem:[%s909] sm:$0xff]
      %v911 = vld [vmem:[%s332] sm:$0xf]
      %v913 = vsel %vm215, %v910, 0
      %v916 = vsel %vm219, %v911, 0
      %918 = vmatpush.msra.mxu0 0.0
      %919 = vmatpush.msra.mxu0 0.0
      %920 = vmatpush.msra.mxu0 0.0
      %921 = vmatpush.msra.mxu0 0.0
      %922 = vmatpush.msra.mxu0 0.0
      %923 = vmatpush.msra.mxu0 0.0
      %924 = vmatpush.msra.mxu0 0.0
      %925 = vmatpush.msra.mxu0 0.0
      %926 = vmatpush.msra.mxu0 0.0
      %927 = vmatpush.msra.mxu0 0.0
      %928 = vmatpush.msra.mxu0 0.0
      %929 = vmatpush.msra.mxu0 0.0
      %930 = vmatpush.msra.mxu0 0.0
      %931 = vmatpush.msra.mxu0 0.0
      %932 = vmatpush.msra.mxu0 0.0
      %933 = vmatpush.msra.mxu0 %v916
      %934 = vmatmul.f32.gmra.mxu0 %v913
      %v935 = vpop.f32.mrf.mxu0
      %v936 = vadd.f32 0.0, %v935
      %937 = vdwg.mxu0
      %v938 = vadd.f32 %v908, %v936
      %v939 = vld [vmem:[%s879 + $0x1] sm:$0xff]
      %v940 = vld [vmem:[%s362] sm:$0xf]
      %v942 = vsel %vm215, %v939, 0
      %v945 = vsel %vm219, %v940, 0
      %947 = vmatpush.msra.mxu0 0.0
      %948 = vmatpush.msra.mxu0 0.0
      %949 = vmatpush.msra.mxu0 0.0
      %950 = vmatpush.msra.mxu0 0.0
      %951 = vmatpush.msra.mxu0 0.0
      %952 = vmatpush.msra.mxu0 0.0
      %953 = vmatpush.msra.mxu0 0.0
      %954 = vmatpush.msra.mxu0 0.0
      %955 = vmatpush.msra.mxu0 0.0
      %956 = vmatpush.msra.mxu0 0.0
      %957 = vmatpush.msra.mxu0 0.0
      %958 = vmatpush.msra.mxu0 0.0
      %959 = vmatpush.msra.mxu0 0.0
      %960 = vmatpush.msra.mxu0 0.0
      %961 = vmatpush.msra.mxu0 0.0
      %962 = vmatpush.msra.mxu0 %v945
      %963 = vmatmul.f32.gmra.mxu0 %v942
      %v964 = vpop.f32.mrf.mxu0
      %v965 = vadd.f32 0.0, %v964
      %966 = vdwg.mxu0
      %v967 = vadd.f32 %v938, %v965
      %s968 = scalar_lea.vmem %s199, 48
      %v969 = vld [vmem:[%s968] sm:$0xff]
      %v970 = vld [vmem:[%s393] sm:$0xf]
      %v972 = vsel %vm215, %v969, 0
      %v975 = vsel %vm219, %v970, 0
      %977 = vmatpush.msra.mxu0 0.0
      %978 = vmatpush.msra.mxu0 0.0
      %979 = vmatpush.msra.mxu0 0.0
      %980 = vmatpush.msra.mxu0 0.0
      %981 = vmatpush.msra.mxu0 0.0
      %982 = vmatpush.msra.mxu0 0.0
      %983 = vmatpush.msra.mxu0 0.0
      %984 = vmatpush.msra.mxu0 0.0
      %985 = vmatpush.msra.mxu0 0.0
      %986 = vmatpush.msra.mxu0 0.0
      %987 = vmatpush.msra.mxu0 0.0
      %988 = vmatpush.msra.mxu0 0.0
      %989 = vmatpush.msra.mxu0 0.0
      %990 = vmatpush.msra.mxu0 0.0
      %991 = vmatpush.msra.mxu0 0.0
      %992 = vmatpush.msra.mxu0 %v975
      %993 = vmatmul.f32.gmra.mxu0 %v972
      %v994 = vpop.f32.mrf.mxu0
      %v995 = vadd.f32 0.0, %v994
      %996 = vdwg.mxu0
      %v997 = vadd.f32 %v967, %v995
      %s998 = scalar_lea.vmem %s199, 192
      %v999 = vld [vmem:[%s998] sm:$0xff]
      %v1000 = vld [vmem:[%s424] sm:$0xf]
      %v1002 = vsel %vm215, %v999, 0
      %v1005 = vsel %vm219, %v1000, 0
      %1007 = vmatpush.msra.mxu0 0.0
      %1008 = vmatpush.msra.mxu0 0.0
      %1009 = vmatpush.msra.mxu0 0.0
      %1010 = vmatpush.msra.mxu0 0.0
      %1011 = vmatpush.msra.mxu0 0.0
      %1012 = vmatpush.msra.mxu0 0.0
      %1013 = vmatpush.msra.mxu0 0.0
      %1014 = vmatpush.msra.mxu0 0.0
      %1015 = vmatpush.msra.mxu0 0.0
      %1016 = vmatpush.msra.mxu0 0.0
      %1017 = vmatpush.msra.mxu0 0.0
      %1018 = vmatpush.msra.mxu0 0.0
      %1019 = vmatpush.msra.mxu0 0.0
      %1020 = vmatpush.msra.mxu0 0.0
      %1021 = vmatpush.msra.mxu0 0.0
      %1022 = vmatpush.msra.mxu0 %v1005
      %1023 = vmatmul.f32.gmra.mxu0 %v1002
      %v1024 = vpop.f32.mrf.mxu0
      %v1025 = vadd.f32 0.0, %v1024
      %1026 = vdwg.mxu0
      %v1027 = vadd.f32 %v997, %v1025
      %v1028 = vld [vmem:[%s968 + $0x1] sm:$0xff]
      %v1029 = vld [vmem:[%s454] sm:$0xf]
      %v1031 = vsel %vm215, %v1028, 0
      %v1034 = vsel %vm219, %v1029, 0
      %1036 = vmatpush.msra.mxu0 0.0
      %1037 = vmatpush.msra.mxu0 0.0
      %1038 = vmatpush.msra.mxu0 0.0
      %1039 = vmatpush.msra.mxu0 0.0
      %1040 = vmatpush.msra.mxu0 0.0
      %1041 = vmatpush.msra.mxu0 0.0
      %1042 = vmatpush.msra.mxu0 0.0
      %1043 = vmatpush.msra.mxu0 0.0
      %1044 = vmatpush.msra.mxu0 0.0
      %1045 = vmatpush.msra.mxu0 0.0
      %1046 = vmatpush.msra.mxu0 0.0
      %1047 = vmatpush.msra.mxu0 0.0
      %1048 = vmatpush.msra.mxu0 0.0
      %1049 = vmatpush.msra.mxu0 0.0
      %1050 = vmatpush.msra.mxu0 0.0
      %1051 = vmatpush.msra.mxu0 %v1034
      %1052 = vmatmul.f32.gmra.mxu0 %v1031
      %v1053 = vpop.f32.mrf.mxu0
      %v1054 = vadd.f32 0.0, %v1053
      %1055 = vdwg.mxu0
      %v1056 = vadd.f32 %v1027, %v1054
      %v1057 = vld [vmem:[%s2] sm:$0x1]
      %v1059 = vperm.slane %v1057, 0
      %v1061 = vadd.f32 %v1056, %v1059
      %s1062 = scalar_lea.vmem %s204, 16
      %1063 = vst.msk [vmem:[%s1062] sm:$0xff] %vm488, %v1061
      %v1064 = vsel %vm488, %v1061, 0.0
      %v1065 = vrot.slane %v1064, 4
      %v1066 = vadd.f32 %v1064, %v1065
      %v1067 = vrot.slane %v1066, 2
      %v1068 = vadd.f32 %v1066, %v1067
      %v1069 = vrot.slane %v1068, 1
      %v1070 = vadd.f32 %v1068, %v1069
      %v1071 = vadd.f32 %v784, %v1070
      %v1072 = vmul.f32 %v1061, %v1061
      %v1073 = vsel %vm488, %v1072, 0.0
      %v1074 = vrot.slane %v1073, 4
      %v1075 = vadd.f32 %v1073, %v1074
      %v1076 = vrot.slane %v1075, 2
      %v1077 = vadd.f32 %v1075, %v1076
      %v1078 = vrot.slane %v1077, 1
      %v1079 = vadd.f32 %v1077, %v1078
      %v1080 = vadd.f32 %v793, %v1079
      %v1081 = vld [vmem:[%s968] sm:$0xff]
      %v1082 = vld [vmem:[%s1] sm:$0xf]
      %v1083 = vld [vmem:[%s998] sm:$0xff]
      %v1084 = vld [vmem:[%s213] sm:$0xf]
      %v1086 = vsel %vm215, %v1083, 0
      %v1089 = vsel %vm219, %v1084, 0
      %1091 = vmatpush.msra.mxu0 0.0
      %1092 = vmatpush.msra.mxu0 0.0
      %1093 = vmatpush.msra.mxu0 0.0
      %1094 = vmatpush.msra.mxu0 0.0
      %1095 = vmatpush.msra.mxu0 0.0
      %1096 = vmatpush.msra.mxu0 0.0
      %1097 = vmatpush.msra.mxu0 0.0
      %1098 = vmatpush.msra.mxu0 0.0
      %1099 = vmatpush.msra.mxu0 0.0
      %1100 = vmatpush.msra.mxu0 0.0
      %1101 = vmatpush.msra.mxu0 0.0
      %1102 = vmatpush.msra.mxu0 0.0
      %1103 = vmatpush.msra.mxu0 0.0
      %1104 = vmatpush.msra.mxu0 0.0
      %1105 = vmatpush.msra.mxu0 0.0
      %1106 = vmatpush.msra.mxu0 %v1089
      %1107 = vmatmul.f32.gmra.mxu0 %v1086
      %v1108 = vpop.f32.mrf.mxu0
      %v1109 = vadd.f32 0.0, %v1108
      %1110 = vdwg.mxu0
      %v1112 = vsel %vm215, %v1081, 0
      %v1115 = vsel %vm219, %v1082, 0
      %1117 = vmatpush.msra.mxu0 0.0
      %1118 = vmatpush.msra.mxu0 0.0
      %1119 = vmatpush.msra.mxu0 0.0
      %1120 = vmatpush.msra.mxu0 0.0
      %1121 = vmatpush.msra.mxu0 0.0
      %1122 = vmatpush.msra.mxu0 0.0
      %1123 = vmatpush.msra.mxu0 0.0
      %1124 = vmatpush.msra.mxu0 0.0
      %1125 = vmatpush.msra.mxu0 0.0
      %1126 = vmatpush.msra.mxu0 0.0
      %1127 = vmatpush.msra.mxu0 0.0
      %1128 = vmatpush.msra.mxu0 0.0
      %1129 = vmatpush.msra.mxu0 0.0
      %1130 = vmatpush.msra.mxu0 0.0
      %1131 = vmatpush.msra.mxu0 0.0
      %1132 = vmatpush.msra.mxu0 %v1115
      %1133 = vmatmul.f32.gmra.mxu0 %v1112
      %v1134 = vpop.f32.mrf.mxu0
      %v1135 = vadd.f32 %v1109, %v1134
      %1136 = vdwg.mxu0
      %v1137 = vld [vmem:[%s968 + $0x1] sm:$0xff]
      %v1138 = vld [vmem:[%s270] sm:$0xf]
      %v1140 = vsel %vm215, %v1137, 0
      %v1143 = vsel %vm219, %v1138, 0
      %1145 = vmatpush.msra.mxu0 0.0
      %1146 = vmatpush.msra.mxu0 0.0
      %1147 = vmatpush.msra.mxu0 0.0
      %1148 = vmatpush.msra.mxu0 0.0
      %1149 = vmatpush.msra.mxu0 0.0
      %1150 = vmatpush.msra.mxu0 0.0
      %1151 = vmatpush.msra.mxu0 0.0
      %1152 = vmatpush.msra.mxu0 0.0
      %1153 = vmatpush.msra.mxu0 0.0
      %1154 = vmatpush.msra.mxu0 0.0
      %1155 = vmatpush.msra.mxu0 0.0
      %1156 = vmatpush.msra.mxu0 0.0
      %1157 = vmatpush.msra.mxu0 0.0
      %1158 = vmatpush.msra.mxu0 0.0
      %1159 = vmatpush.msra.mxu0 0.0
      %1160 = vmatpush.msra.mxu0 %v1143
      %1161 = vmatmul.f32.gmra.mxu0 %v1140
      %v1162 = vpop.f32.mrf.mxu0
      %v1163 = vadd.f32 0.0, %v1162
      %1164 = vdwg.mxu0
      %v1165 = vadd.f32 %v1135, %v1163
      %s1166 = scalar_lea.vmem %s199, 336
      %v1167 = vld [vmem:[%s1166] sm:$0xff]
      %v1168 = vld [vmem:[%s301] sm:$0xf]
      %v1170 = vsel %vm215, %v1167, 0
      %v1173 = vsel %vm219, %v1168, 0
      %1175 = vmatpush.msra.mxu0 0.0
      %1176 = vmatpush.msra.mxu0 0.0
      %1177 = vmatpush.msra.mxu0 0.0
      %1178 = vmatpush.msra.mxu0 0.0
      %1179 = vmatpush.msra.mxu0 0.0
      %1180 = vmatpush.msra.mxu0 0.0
      %1181 = vmatpush.msra.mxu0 0.0
      %1182 = vmatpush.msra.mxu0 0.0
      %1183 = vmatpush.msra.mxu0 0.0
      %1184 = vmatpush.msra.mxu0 0.0
      %1185 = vmatpush.msra.mxu0 0.0
      %1186 = vmatpush.msra.mxu0 0.0
      %1187 = vmatpush.msra.mxu0 0.0
      %1188 = vmatpush.msra.mxu0 0.0
      %1189 = vmatpush.msra.mxu0 0.0
      %1190 = vmatpush.msra.mxu0 %v1173
      %1191 = vmatmul.f32.gmra.mxu0 %v1170
      %v1192 = vpop.f32.mrf.mxu0
      %v1193 = vadd.f32 0.0, %v1192
      %1194 = vdwg.mxu0
      %v1195 = vadd.f32 %v1165, %v1193
      %s1196 = scalar_lea.vmem %s199, 480
      %v1197 = vld [vmem:[%s1196] sm:$0xff]
      %v1198 = vld [vmem:[%s332] sm:$0xf]
      %v1200 = vsel %vm215, %v1197, 0
      %v1203 = vsel %vm219, %v1198, 0
      %1205 = vmatpush.msra.mxu0 0.0
      %1206 = vmatpush.msra.mxu0 0.0
      %1207 = vmatpush.msra.mxu0 0.0
      %1208 = vmatpush.msra.mxu0 0.0
      %1209 = vmatpush.msra.mxu0 0.0
      %1210 = vmatpush.msra.mxu0 0.0
      %1211 = vmatpush.msra.mxu0 0.0
      %1212 = vmatpush.msra.mxu0 0.0
      %1213 = vmatpush.msra.mxu0 0.0
      %1214 = vmatpush.msra.mxu0 0.0
      %1215 = vmatpush.msra.mxu0 0.0
      %1216 = vmatpush.msra.mxu0 0.0
      %1217 = vmatpush.msra.mxu0 0.0
      %1218 = vmatpush.msra.mxu0 0.0
      %1219 = vmatpush.msra.mxu0 0.0
      %1220 = vmatpush.msra.mxu0 %v1203
      %1221 = vmatmul.f32.gmra.mxu0 %v1200
      %v1222 = vpop.f32.mrf.mxu0
      %v1223 = vadd.f32 0.0, %v1222
      %1224 = vdwg.mxu0
      %v1225 = vadd.f32 %v1195, %v1223
      %v1226 = vld [vmem:[%s1166 + $0x1] sm:$0xff]
      %v1227 = vld [vmem:[%s362] sm:$0xf]
      %v1229 = vsel %vm215, %v1226, 0
      %v1232 = vsel %vm219, %v1227, 0
      %1234 = vmatpush.msra.mxu0 0.0
      %1235 = vmatpush.msra.mxu0 0.0
      %1236 = vmatpush.msra.mxu0 0.0
      %1237 = vmatpush.msra.mxu0 0.0
      %1238 = vmatpush.msra.mxu0 0.0
      %1239 = vmatpush.msra.mxu0 0.0
      %1240 = vmatpush.msra.mxu0 0.0
      %1241 = vmatpush.msra.mxu0 0.0
      %1242 = vmatpush.msra.mxu0 0.0
      %1243 = vmatpush.msra.mxu0 0.0
      %1244 = vmatpush.msra.mxu0 0.0
      %1245 = vmatpush.msra.mxu0 0.0
      %1246 = vmatpush.msra.mxu0 0.0
      %1247 = vmatpush.msra.mxu0 0.0
      %1248 = vmatpush.msra.mxu0 0.0
      %1249 = vmatpush.msra.mxu0 %v1232
      %1250 = vmatmul.f32.gmra.mxu0 %v1229
      %v1251 = vpop.f32.mrf.mxu0
      %v1252 = vadd.f32 0.0, %v1251
      %1253 = vdwg.mxu0
      %v1254 = vadd.f32 %v1225, %v1252
      %s1255 = scalar_lea.vmem %s199, 64
      %v1256 = vld [vmem:[%s1255] sm:$0xff]
      %v1257 = vld [vmem:[%s393] sm:$0xf]
      %v1259 = vsel %vm215, %v1256, 0
      %v1262 = vsel %vm219, %v1257, 0
      %1264 = vmatpush.msra.mxu0 0.0
      %1265 = vmatpush.msra.mxu0 0.0
      %1266 = vmatpush.msra.mxu0 0.0
      %1267 = vmatpush.msra.mxu0 0.0
      %1268 = vmatpush.msra.mxu0 0.0
      %1269 = vmatpush.msra.mxu0 0.0
      %1270 = vmatpush.msra.mxu0 0.0
      %1271 = vmatpush.msra.mxu0 0.0
      %1272 = vmatpush.msra.mxu0 0.0
      %1273 = vmatpush.msra.mxu0 0.0
      %1274 = vmatpush.msra.mxu0 0.0
      %1275 = vmatpush.msra.mxu0 0.0
      %1276 = vmatpush.msra.mxu0 0.0
      %1277 = vmatpush.msra.mxu0 0.0
      %1278 = vmatpush.msra.mxu0 0.0
      %1279 = vmatpush.msra.mxu0 %v1262
      %1280 = vmatmul.f32.gmra.mxu0 %v1259
      %v1281 = vpop.f32.mrf.mxu0
      %v1282 = vadd.f32 0.0, %v1281
      %1283 = vdwg.mxu0
      %v1284 = vadd.f32 %v1254, %v1282
      %s1285 = scalar_lea.vmem %s199, 208
      %v1286 = vld [vmem:[%s1285] sm:$0xff]
      %v1287 = vld [vmem:[%s424] sm:$0xf]
      %v1289 = vsel %vm215, %v1286, 0
      %v1292 = vsel %vm219, %v1287, 0
      %1294 = vmatpush.msra.mxu0 0.0
      %1295 = vmatpush.msra.mxu0 0.0
      %1296 = vmatpush.msra.mxu0 0.0
      %1297 = vmatpush.msra.mxu0 0.0
      %1298 = vmatpush.msra.mxu0 0.0
      %1299 = vmatpush.msra.mxu0 0.0
      %1300 = vmatpush.msra.mxu0 0.0
      %1301 = vmatpush.msra.mxu0 0.0
      %1302 = vmatpush.msra.mxu0 0.0
      %1303 = vmatpush.msra.mxu0 0.0
      %1304 = vmatpush.msra.mxu0 0.0
      %1305 = vmatpush.msra.mxu0 0.0
      %1306 = vmatpush.msra.mxu0 0.0
      %1307 = vmatpush.msra.mxu0 0.0
      %1308 = vmatpush.msra.mxu0 0.0
      %1309 = vmatpush.msra.mxu0 %v1292
      %1310 = vmatmul.f32.gmra.mxu0 %v1289
      %v1311 = vpop.f32.mrf.mxu0
      %v1312 = vadd.f32 0.0, %v1311
      %1313 = vdwg.mxu0
      %v1314 = vadd.f32 %v1284, %v1312
      %v1315 = vld [vmem:[%s1255 + $0x1] sm:$0xff]
      %v1316 = vld [vmem:[%s454] sm:$0xf]
      %v1318 = vsel %vm215, %v1315, 0
      %v1321 = vsel %vm219, %v1316, 0
      %1323 = vmatpush.msra.mxu0 0.0
      %1324 = vmatpush.msra.mxu0 0.0
      %1325 = vmatpush.msra.mxu0 0.0
      %1326 = vmatpush.msra.mxu0 0.0
      %1327 = vmatpush.msra.mxu0 0.0
      %1328 = vmatpush.msra.mxu0 0.0
      %1329 = vmatpush.msra.mxu0 0.0
      %1330 = vmatpush.msra.mxu0 0.0
      %1331 = vmatpush.msra.mxu0 0.0
      %1332 = vmatpush.msra.mxu0 0.0
      %1333 = vmatpush.msra.mxu0 0.0
      %1334 = vmatpush.msra.mxu0 0.0
      %1335 = vmatpush.msra.mxu0 0.0
      %1336 = vmatpush.msra.mxu0 0.0
      %1337 = vmatpush.msra.mxu0 0.0
      %1338 = vmatpush.msra.mxu0 %v1321
      %1339 = vmatmul.f32.gmra.mxu0 %v1318
      %v1340 = vpop.f32.mrf.mxu0
      %v1341 = vadd.f32 0.0, %v1340
      %1342 = vdwg.mxu0
      %v1343 = vadd.f32 %v1314, %v1341
      %v1344 = vld [vmem:[%s2] sm:$0x1]
      %v1346 = vperm.slane %v1344, 0
      %v1348 = vadd.f32 %v1343, %v1346
      %s1349 = scalar_lea.vmem %s204, 24
      %1350 = vst.msk [vmem:[%s1349] sm:$0xff] %vm488, %v1348
      %v1351 = vsel %vm488, %v1348, 0.0
      %v1352 = vrot.slane %v1351, 4
      %v1353 = vadd.f32 %v1351, %v1352
      %v1354 = vrot.slane %v1353, 2
      %v1355 = vadd.f32 %v1353, %v1354
      %v1356 = vrot.slane %v1355, 1
      %v1357 = vadd.f32 %v1355, %v1356
      %v1358 = vadd.f32 %v1071, %v1357
      %v1359 = vmul.f32 %v1348, %v1348
      %v1360 = vsel %vm488, %v1359, 0.0
      %v1361 = vrot.slane %v1360, 4
      %v1362 = vadd.f32 %v1360, %v1361
      %v1363 = vrot.slane %v1362, 2
      %v1364 = vadd.f32 %v1362, %v1363
      %v1365 = vrot.slane %v1364, 1
      %v1366 = vadd.f32 %v1364, %v1365
      %v1367 = vadd.f32 %v1080, %v1366
      %v1368 = vld [vmem:[%s1255] sm:$0xff]
      %v1369 = vld [vmem:[%s1] sm:$0xf]
      %v1370 = vld [vmem:[%s1285] sm:$0xff]
      %v1371 = vld [vmem:[%s213] sm:$0xf]
      %v1373 = vsel %vm215, %v1370, 0
      %v1376 = vsel %vm219, %v1371, 0
      %1378 = vmatpush.msra.mxu0 0.0
      %1379 = vmatpush.msra.mxu0 0.0
      %1380 = vmatpush.msra.mxu0 0.0
      %1381 = vmatpush.msra.mxu0 0.0
      %1382 = vmatpush.msra.mxu0 0.0
      %1383 = vmatpush.msra.mxu0 0.0
      %1384 = vmatpush.msra.mxu0 0.0
      %1385 = vmatpush.msra.mxu0 0.0
      %1386 = vmatpush.msra.mxu0 0.0
      %1387 = vmatpush.msra.mxu0 0.0
      %1388 = vmatpush.msra.mxu0 0.0
      %1389 = vmatpush.msra.mxu0 0.0
      %1390 = vmatpush.msra.mxu0 0.0
      %1391 = vmatpush.msra.mxu0 0.0
      %1392 = vmatpush.msra.mxu0 0.0
      %1393 = vmatpush.msra.mxu0 %v1376
      %1394 = vmatmul.f32.gmra.mxu0 %v1373
      %v1395 = vpop.f32.mrf.mxu0
      %v1396 = vadd.f32 0.0, %v1395
      %1397 = vdwg.mxu0
      %v1399 = vsel %vm215, %v1368, 0
      %v1402 = vsel %vm219, %v1369, 0
      %1404 = vmatpush.msra.mxu0 0.0
      %1405 = vmatpush.msra.mxu0 0.0
      %1406 = vmatpush.msra.mxu0 0.0
      %1407 = vmatpush.msra.mxu0 0.0
      %1408 = vmatpush.msra.mxu0 0.0
      %1409 = vmatpush.msra.mxu0 0.0
      %1410 = vmatpush.msra.mxu0 0.0
      %1411 = vmatpush.msra.mxu0 0.0
      %1412 = vmatpush.msra.mxu0 0.0
      %1413 = vmatpush.msra.mxu0 0.0
      %1414 = vmatpush.msra.mxu0 0.0
      %1415 = vmatpush.msra.mxu0 0.0
      %1416 = vmatpush.msra.mxu0 0.0
      %1417 = vmatpush.msra.mxu0 0.0
      %1418 = vmatpush.msra.mxu0 0.0
      %1419 = vmatpush.msra.mxu0 %v1402
      %1420 = vmatmul.f32.gmra.mxu0 %v1399
      %v1421 = vpop.f32.mrf.mxu0
      %v1422 = vadd.f32 %v1396, %v1421
      %1423 = vdwg.mxu0
      %v1424 = vld [vmem:[%s1255 + $0x1] sm:$0xff]
      %v1425 = vld [vmem:[%s270] sm:$0xf]
      %v1427 = vsel %vm215, %v1424, 0
      %v1430 = vsel %vm219, %v1425, 0
      %1432 = vmatpush.msra.mxu0 0.0
      %1433 = vmatpush.msra.mxu0 0.0
      %1434 = vmatpush.msra.mxu0 0.0
      %1435 = vmatpush.msra.mxu0 0.0
      %1436 = vmatpush.msra.mxu0 0.0
      %1437 = vmatpush.msra.mxu0 0.0
      %1438 = vmatpush.msra.mxu0 0.0
      %1439 = vmatpush.msra.mxu0 0.0
      %1440 = vmatpush.msra.mxu0 0.0
      %1441 = vmatpush.msra.mxu0 0.0
      %1442 = vmatpush.msra.mxu0 0.0
      %1443 = vmatpush.msra.mxu0 0.0
      %1444 = vmatpush.msra.mxu0 0.0
      %1445 = vmatpush.msra.mxu0 0.0
      %1446 = vmatpush.msra.mxu0 0.0
      %1447 = vmatpush.msra.mxu0 %v1430
      %1448 = vmatmul.f32.gmra.mxu0 %v1427
      %v1449 = vpop.f32.mrf.mxu0
      %v1450 = vadd.f32 0.0, %v1449
      %1451 = vdwg.mxu0
      %v1452 = vadd.f32 %v1422, %v1450
      %s1453 = scalar_lea.vmem %s199, 352
      %v1454 = vld [vmem:[%s1453] sm:$0xff]
      %v1455 = vld [vmem:[%s301] sm:$0xf]
      %v1457 = vsel %vm215, %v1454, 0
      %v1460 = vsel %vm219, %v1455, 0
      %1462 = vmatpush.msra.mxu0 0.0
      %1463 = vmatpush.msra.mxu0 0.0
      %1464 = vmatpush.msra.mxu0 0.0
      %1465 = vmatpush.msra.mxu0 0.0
      %1466 = vmatpush.msra.mxu0 0.0
      %1467 = vmatpush.msra.mxu0 0.0
      %1468 = vmatpush.msra.mxu0 0.0
      %1469 = vmatpush.msra.mxu0 0.0
      %1470 = vmatpush.msra.mxu0 0.0
      %1471 = vmatpush.msra.mxu0 0.0
      %1472 = vmatpush.msra.mxu0 0.0
      %1473 = vmatpush.msra.mxu0 0.0
      %1474 = vmatpush.msra.mxu0 0.0
      %1475 = vmatpush.msra.mxu0 0.0
      %1476 = vmatpush.msra.mxu0 0.0
      %1477 = vmatpush.msra.mxu0 %v1460
      %1478 = vmatmul.f32.gmra.mxu0 %v1457
      %v1479 = vpop.f32.mrf.mxu0
      %v1480 = vadd.f32 0.0, %v1479
      %1481 = vdwg.mxu0
      %v1482 = vadd.f32 %v1452, %v1480
      %s1483 = scalar_lea.vmem %s199, 496
      %v1484 = vld [vmem:[%s1483] sm:$0xff]
      %v1485 = vld [vmem:[%s332] sm:$0xf]
      %v1487 = vsel %vm215, %v1484, 0
      %v1490 = vsel %vm219, %v1485, 0
      %1492 = vmatpush.msra.mxu0 0.0
      %1493 = vmatpush.msra.mxu0 0.0
      %1494 = vmatpush.msra.mxu0 0.0
      %1495 = vmatpush.msra.mxu0 0.0
      %1496 = vmatpush.msra.mxu0 0.0
      %1497 = vmatpush.msra.mxu0 0.0
      %1498 = vmatpush.msra.mxu0 0.0
      %1499 = vmatpush.msra.mxu0 0.0
      %1500 = vmatpush.msra.mxu0 0.0
      %1501 = vmatpush.msra.mxu0 0.0
      %1502 = vmatpush.msra.mxu0 0.0
      %1503 = vmatpush.msra.mxu0 0.0
      %1504 = vmatpush.msra.mxu0 0.0
      %1505 = vmatpush.msra.mxu0 0.0
      %1506 = vmatpush.msra.mxu0 0.0
      %1507 = vmatpush.msra.mxu0 %v1490
      %1508 = vmatmul.f32.gmra.mxu0 %v1487
      %v1509 = vpop.f32.mrf.mxu0
      %v1510 = vadd.f32 0.0, %v1509
      %1511 = vdwg.mxu0
      %v1512 = vadd.f32 %v1482, %v1510
      %v1513 = vld [vmem:[%s1453 + $0x1] sm:$0xff]
      %v1514 = vld [vmem:[%s362] sm:$0xf]
      %v1516 = vsel %vm215, %v1513, 0
      %v1519 = vsel %vm219, %v1514, 0
      %1521 = vmatpush.msra.mxu0 0.0
      %1522 = vmatpush.msra.mxu0 0.0
      %1523 = vmatpush.msra.mxu0 0.0
      %1524 = vmatpush.msra.mxu0 0.0
      %1525 = vmatpush.msra.mxu0 0.0
      %1526 = vmatpush.msra.mxu0 0.0
      %1527 = vmatpush.msra.mxu0 0.0
      %1528 = vmatpush.msra.mxu0 0.0
      %1529 = vmatpush.msra.mxu0 0.0
      %1530 = vmatpush.msra.mxu0 0.0
      %1531 = vmatpush.msra.mxu0 0.0
      %1532 = vmatpush.msra.mxu0 0.0
      %1533 = vmatpush.msra.mxu0 0.0
      %1534 = vmatpush.msra.mxu0 0.0
      %1535 = vmatpush.msra.mxu0 0.0
      %1536 = vmatpush.msra.mxu0 %v1519
      %1537 = vmatmul.f32.gmra.mxu0 %v1516
      %v1538 = vpop.f32.mrf.mxu0
      %v1539 = vadd.f32 0.0, %v1538
      %1540 = vdwg.mxu0
      %v1541 = vadd.f32 %v1512, %v1539
      %s1542 = scalar_lea.vmem %s199, 80
      %v1543 = vld [vmem:[%s1542] sm:$0xff]
      %v1544 = vld [vmem:[%s393] sm:$0xf]
      %v1546 = vsel %vm215, %v1543, 0
      %v1549 = vsel %vm219, %v1544, 0
      %1551 = vmatpush.msra.mxu0 0.0
      %1552 = vmatpush.msra.mxu0 0.0
      %1553 = vmatpush.msra.mxu0 0.0
      %1554 = vmatpush.msra.mxu0 0.0
      %1555 = vmatpush.msra.mxu0 0.0
      %1556 = vmatpush.msra.mxu0 0.0
      %1557 = vmatpush.msra.mxu0 0.0
      %1558 = vmatpush.msra.mxu0 0.0
      %1559 = vmatpush.msra.mxu0 0.0
      %1560 = vmatpush.msra.mxu0 0.0
      %1561 = vmatpush.msra.mxu0 0.0
      %1562 = vmatpush.msra.mxu0 0.0
      %1563 = vmatpush.msra.mxu0 0.0
      %1564 = vmatpush.msra.mxu0 0.0
      %1565 = vmatpush.msra.mxu0 0.0
      %1566 = vmatpush.msra.mxu0 %v1549
      %1567 = vmatmul.f32.gmra.mxu0 %v1546
      %v1568 = vpop.f32.mrf.mxu0
      %v1569 = vadd.f32 0.0, %v1568
      %1570 = vdwg.mxu0
      %v1571 = vadd.f32 %v1541, %v1569
      %s1572 = scalar_lea.vmem %s199, 224
      %v1573 = vld [vmem:[%s1572] sm:$0xff]
      %v1574 = vld [vmem:[%s424] sm:$0xf]
      %v1576 = vsel %vm215, %v1573, 0
      %v1579 = vsel %vm219, %v1574, 0
      %1581 = vmatpush.msra.mxu0 0.0
      %1582 = vmatpush.msra.mxu0 0.0
      %1583 = vmatpush.msra.mxu0 0.0
      %1584 = vmatpush.msra.mxu0 0.0
      %1585 = vmatpush.msra.mxu0 0.0
      %1586 = vmatpush.msra.mxu0 0.0
      %1587 = vmatpush.msra.mxu0 0.0
      %1588 = vmatpush.msra.mxu0 0.0
      %1589 = vmatpush.msra.mxu0 0.0
      %1590 = vmatpush.msra.mxu0 0.0
      %1591 = vmatpush.msra.mxu0 0.0
      %1592 = vmatpush.msra.mxu0 0.0
      %1593 = vmatpush.msra.mxu0 0.0
      %1594 = vmatpush.msra.mxu0 0.0
      %1595 = vmatpush.msra.mxu0 0.0
      %1596 = vmatpush.msra.mxu0 %v1579
      %1597 = vmatmul.f32.gmra.mxu0 %v1576
      %v1598 = vpop.f32.mrf.mxu0
      %v1599 = vadd.f32 0.0, %v1598
      %1600 = vdwg.mxu0
      %v1601 = vadd.f32 %v1571, %v1599
      %v1602 = vld [vmem:[%s1542 + $0x1] sm:$0xff]
      %v1603 = vld [vmem:[%s454] sm:$0xf]
      %v1605 = vsel %vm215, %v1602, 0
      %v1608 = vsel %vm219, %v1603, 0
      %1610 = vmatpush.msra.mxu0 0.0
      %1611 = vmatpush.msra.mxu0 0.0
      %1612 = vmatpush.msra.mxu0 0.0
      %1613 = vmatpush.msra.mxu0 0.0
      %1614 = vmatpush.msra.mxu0 0.0
      %1615 = vmatpush.msra.mxu0 0.0
      %1616 = vmatpush.msra.mxu0 0.0
      %1617 = vmatpush.msra.mxu0 0.0
      %1618 = vmatpush.msra.mxu0 0.0
      %1619 = vmatpush.msra.mxu0 0.0
      %1620 = vmatpush.msra.mxu0 0.0
      %1621 = vmatpush.msra.mxu0 0.0
      %1622 = vmatpush.msra.mxu0 0.0
      %1623 = vmatpush.msra.mxu0 0.0
      %1624 = vmatpush.msra.mxu0 0.0
      %1625 = vmatpush.msra.mxu0 %v1608
      %1626 = vmatmul.f32.gmra.mxu0 %v1605
      %v1627 = vpop.f32.mrf.mxu0
      %v1628 = vadd.f32 0.0, %v1627
      %1629 = vdwg.mxu0
      %v1630 = vadd.f32 %v1601, %v1628
      %v1631 = vld [vmem:[%s2] sm:$0x1]
      %v1633 = vperm.slane %v1631, 0
      %v1635 = vadd.f32 %v1630, %v1633
      %s1636 = scalar_lea.vmem %s204, 32
      %1637 = vst.msk [vmem:[%s1636] sm:$0xff] %vm488, %v1635
      %v1638 = vsel %vm488, %v1635, 0.0
      %v1639 = vrot.slane %v1638, 4
      %v1640 = vadd.f32 %v1638, %v1639
      %v1641 = vrot.slane %v1640, 2
      %v1642 = vadd.f32 %v1640, %v1641
      %v1643 = vrot.slane %v1642, 1
      %v1644 = vadd.f32 %v1642, %v1643
      %v1645 = vadd.f32 %v1358, %v1644
      %v1646 = vmul.f32 %v1635, %v1635
      %v1647 = vsel %vm488, %v1646, 0.0
      %v1648 = vrot.slane %v1647, 4
      %v1649 = vadd.f32 %v1647, %v1648
      %v1650 = vrot.slane %v1649, 2
      %v1651 = vadd.f32 %v1649, %v1650
      %v1652 = vrot.slane %v1651, 1
      %v1653 = vadd.f32 %v1651, %v1652
      %v1654 = vadd.f32 %v1367, %v1653
      %v1655 = vld [vmem:[%s1542] sm:$0xff]
      %v1656 = vld [vmem:[%s1] sm:$0xf]
      %v1657 = vld [vmem:[%s1572] sm:$0xff]
      %v1658 = vld [vmem:[%s213] sm:$0xf]
      %v1660 = vsel %vm215, %v1657, 0
      %v1663 = vsel %vm219, %v1658, 0
      %1665 = vmatpush.msra.mxu0 0.0
      %1666 = vmatpush.msra.mxu0 0.0
      %1667 = vmatpush.msra.mxu0 0.0
      %1668 = vmatpush.msra.mxu0 0.0
      %1669 = vmatpush.msra.mxu0 0.0
      %1670 = vmatpush.msra.mxu0 0.0
      %1671 = vmatpush.msra.mxu0 0.0
      %1672 = vmatpush.msra.mxu0 0.0
      %1673 = vmatpush.msra.mxu0 0.0
      %1674 = vmatpush.msra.mxu0 0.0
      %1675 = vmatpush.msra.mxu0 0.0
      %1676 = vmatpush.msra.mxu0 0.0
      %1677 = vmatpush.msra.mxu0 0.0
      %1678 = vmatpush.msra.mxu0 0.0
      %1679 = vmatpush.msra.mxu0 0.0
      %1680 = vmatpush.msra.mxu0 %v1663
      %1681 = vmatmul.f32.gmra.mxu0 %v1660
      %v1682 = vpop.f32.mrf.mxu0
      %v1683 = vadd.f32 0.0, %v1682
      %1684 = vdwg.mxu0
      %v1686 = vsel %vm215, %v1655, 0
      %v1689 = vsel %vm219, %v1656, 0
      %1691 = vmatpush.msra.mxu0 0.0
      %1692 = vmatpush.msra.mxu0 0.0
      %1693 = vmatpush.msra.mxu0 0.0
      %1694 = vmatpush.msra.mxu0 0.0
      %1695 = vmatpush.msra.mxu0 0.0
      %1696 = vmatpush.msra.mxu0 0.0
      %1697 = vmatpush.msra.mxu0 0.0
      %1698 = vmatpush.msra.mxu0 0.0
      %1699 = vmatpush.msra.mxu0 0.0
      %1700 = vmatpush.msra.mxu0 0.0
      %1701 = vmatpush.msra.mxu0 0.0
      %1702 = vmatpush.msra.mxu0 0.0
      %1703 = vmatpush.msra.mxu0 0.0
      %1704 = vmatpush.msra.mxu0 0.0
      %1705 = vmatpush.msra.mxu0 0.0
      %1706 = vmatpush.msra.mxu0 %v1689
      %1707 = vmatmul.f32.gmra.mxu0 %v1686
      %v1708 = vpop.f32.mrf.mxu0
      %v1709 = vadd.f32 %v1683, %v1708
      %1710 = vdwg.mxu0
      %v1711 = vld [vmem:[%s1542 + $0x1] sm:$0xff]
      %v1712 = vld [vmem:[%s270] sm:$0xf]
      %v1714 = vsel %vm215, %v1711, 0
      %v1717 = vsel %vm219, %v1712, 0
      %1719 = vmatpush.msra.mxu0 0.0
      %1720 = vmatpush.msra.mxu0 0.0
      %1721 = vmatpush.msra.mxu0 0.0
      %1722 = vmatpush.msra.mxu0 0.0
      %1723 = vmatpush.msra.mxu0 0.0
      %1724 = vmatpush.msra.mxu0 0.0
      %1725 = vmatpush.msra.mxu0 0.0
      %1726 = vmatpush.msra.mxu0 0.0
      %1727 = vmatpush.msra.mxu0 0.0
      %1728 = vmatpush.msra.mxu0 0.0
      %1729 = vmatpush.msra.mxu0 0.0
      %1730 = vmatpush.msra.mxu0 0.0
      %1731 = vmatpush.msra.mxu0 0.0
      %1732 = vmatpush.msra.mxu0 0.0
      %1733 = vmatpush.msra.mxu0 0.0
      %1734 = vmatpush.msra.mxu0 %v1717
      %1735 = vmatmul.f32.gmra.mxu0 %v1714
      %v1736 = vpop.f32.mrf.mxu0
      %v1737 = vadd.f32 0.0, %v1736
      %1738 = vdwg.mxu0
      %v1739 = vadd.f32 %v1709, %v1737
      %s1740 = scalar_lea.vmem %s199, 368
      %v1741 = vld [vmem:[%s1740] sm:$0xff]
      %v1742 = vld [vmem:[%s301] sm:$0xf]
      %v1744 = vsel %vm215, %v1741, 0
      %v1747 = vsel %vm219, %v1742, 0
      %1749 = vmatpush.msra.mxu0 0.0
      %1750 = vmatpush.msra.mxu0 0.0
      %1751 = vmatpush.msra.mxu0 0.0
      %1752 = vmatpush.msra.mxu0 0.0
      %1753 = vmatpush.msra.mxu0 0.0
      %1754 = vmatpush.msra.mxu0 0.0
      %1755 = vmatpush.msra.mxu0 0.0
      %1756 = vmatpush.msra.mxu0 0.0
      %1757 = vmatpush.msra.mxu0 0.0
      %1758 = vmatpush.msra.mxu0 0.0
      %1759 = vmatpush.msra.mxu0 0.0
      %1760 = vmatpush.msra.mxu0 0.0
      %1761 = vmatpush.msra.mxu0 0.0
      %1762 = vmatpush.msra.mxu0 0.0
      %1763 = vmatpush.msra.mxu0 0.0
      %1764 = vmatpush.msra.mxu0 %v1747
      %1765 = vmatmul.f32.gmra.mxu0 %v1744
      %v1766 = vpop.f32.mrf.mxu0
      %v1767 = vadd.f32 0.0, %v1766
      %1768 = vdwg.mxu0
      %v1769 = vadd.f32 %v1739, %v1767
      %s1770 = scalar_lea.vmem %s199, 512
      %v1771 = vld [vmem:[%s1770] sm:$0xff]
      %v1772 = vld [vmem:[%s332] sm:$0xf]
      %v1774 = vsel %vm215, %v1771, 0
      %v1777 = vsel %vm219, %v1772, 0
      %1779 = vmatpush.msra.mxu0 0.0
      %1780 = vmatpush.msra.mxu0 0.0
      %1781 = vmatpush.msra.mxu0 0.0
      %1782 = vmatpush.msra.mxu0 0.0
      %1783 = vmatpush.msra.mxu0 0.0
      %1784 = vmatpush.msra.mxu0 0.0
      %1785 = vmatpush.msra.mxu0 0.0
      %1786 = vmatpush.msra.mxu0 0.0
      %1787 = vmatpush.msra.mxu0 0.0
      %1788 = vmatpush.msra.mxu0 0.0
      %1789 = vmatpush.msra.mxu0 0.0
      %1790 = vmatpush.msra.mxu0 0.0
      %1791 = vmatpush.msra.mxu0 0.0
      %1792 = vmatpush.msra.mxu0 0.0
      %1793 = vmatpush.msra.mxu0 0.0
      %1794 = vmatpush.msra.mxu0 %v1777
      %1795 = vmatmul.f32.gmra.mxu0 %v1774
      %v1796 = vpop.f32.mrf.mxu0
      %v1797 = vadd.f32 0.0, %v1796
      %1798 = vdwg.mxu0
      %v1799 = vadd.f32 %v1769, %v1797
      %v1800 = vld [vmem:[%s1740 + $0x1] sm:$0xff]
      %v1801 = vld [vmem:[%s362] sm:$0xf]
      %v1803 = vsel %vm215, %v1800, 0
      %v1806 = vsel %vm219, %v1801, 0
      %1808 = vmatpush.msra.mxu0 0.0
      %1809 = vmatpush.msra.mxu0 0.0
      %1810 = vmatpush.msra.mxu0 0.0
      %1811 = vmatpush.msra.mxu0 0.0
      %1812 = vmatpush.msra.mxu0 0.0
      %1813 = vmatpush.msra.mxu0 0.0
      %1814 = vmatpush.msra.mxu0 0.0
      %1815 = vmatpush.msra.mxu0 0.0
      %1816 = vmatpush.msra.mxu0 0.0
      %1817 = vmatpush.msra.mxu0 0.0
      %1818 = vmatpush.msra.mxu0 0.0
      %1819 = vmatpush.msra.mxu0 0.0
      %1820 = vmatpush.msra.mxu0 0.0
      %1821 = vmatpush.msra.mxu0 0.0
      %1822 = vmatpush.msra.mxu0 0.0
      %1823 = vmatpush.msra.mxu0 %v1806
      %1824 = vmatmul.f32.gmra.mxu0 %v1803
      %v1825 = vpop.f32.mrf.mxu0
      %v1826 = vadd.f32 0.0, %v1825
      %1827 = vdwg.mxu0
      %v1828 = vadd.f32 %v1799, %v1826
      %s1829 = scalar_lea.vmem %s199, 96
      %v1830 = vld [vmem:[%s1829] sm:$0xff]
      %v1831 = vld [vmem:[%s393] sm:$0xf]
      %v1833 = vsel %vm215, %v1830, 0
      %v1836 = vsel %vm219, %v1831, 0
      %1838 = vmatpush.msra.mxu0 0.0
      %1839 = vmatpush.msra.mxu0 0.0
      %1840 = vmatpush.msra.mxu0 0.0
      %1841 = vmatpush.msra.mxu0 0.0
      %1842 = vmatpush.msra.mxu0 0.0
      %1843 = vmatpush.msra.mxu0 0.0
      %1844 = vmatpush.msra.mxu0 0.0
      %1845 = vmatpush.msra.mxu0 0.0
      %1846 = vmatpush.msra.mxu0 0.0
      %1847 = vmatpush.msra.mxu0 0.0
      %1848 = vmatpush.msra.mxu0 0.0
      %1849 = vmatpush.msra.mxu0 0.0
      %1850 = vmatpush.msra.mxu0 0.0
      %1851 = vmatpush.msra.mxu0 0.0
      %1852 = vmatpush.msra.mxu0 0.0
      %1853 = vmatpush.msra.mxu0 %v1836
      %1854 = vmatmul.f32.gmra.mxu0 %v1833
      %v1855 = vpop.f32.mrf.mxu0
      %v1856 = vadd.f32 0.0, %v1855
      %1857 = vdwg.mxu0
      %v1858 = vadd.f32 %v1828, %v1856
      %s1859 = scalar_lea.vmem %s199, 240
      %v1860 = vld [vmem:[%s1859] sm:$0xff]
      %v1861 = vld [vmem:[%s424] sm:$0xf]
      %v1863 = vsel %vm215, %v1860, 0
      %v1866 = vsel %vm219, %v1861, 0
      %1868 = vmatpush.msra.mxu0 0.0
      %1869 = vmatpush.msra.mxu0 0.0
      %1870 = vmatpush.msra.mxu0 0.0
      %1871 = vmatpush.msra.mxu0 0.0
      %1872 = vmatpush.msra.mxu0 0.0
      %1873 = vmatpush.msra.mxu0 0.0
      %1874 = vmatpush.msra.mxu0 0.0
      %1875 = vmatpush.msra.mxu0 0.0
      %1876 = vmatpush.msra.mxu0 0.0
      %1877 = vmatpush.msra.mxu0 0.0
      %1878 = vmatpush.msra.mxu0 0.0
      %1879 = vmatpush.msra.mxu0 0.0
      %1880 = vmatpush.msra.mxu0 0.0
      %1881 = vmatpush.msra.mxu0 0.0
      %1882 = vmatpush.msra.mxu0 0.0
      %1883 = vmatpush.msra.mxu0 %v1866
      %1884 = vmatmul.f32.gmra.mxu0 %v1863
      %v1885 = vpop.f32.mrf.mxu0
      %v1886 = vadd.f32 0.0, %v1885
      %1887 = vdwg.mxu0
      %v1888 = vadd.f32 %v1858, %v1886
      %v1889 = vld [vmem:[%s1829 + $0x1] sm:$0xff]
      %v1890 = vld [vmem:[%s454] sm:$0xf]
      %v1892 = vsel %vm215, %v1889, 0
      %v1895 = vsel %vm219, %v1890, 0
      %1897 = vmatpush.msra.mxu0 0.0
      %1898 = vmatpush.msra.mxu0 0.0
      %1899 = vmatpush.msra.mxu0 0.0
      %1900 = vmatpush.msra.mxu0 0.0
      %1901 = vmatpush.msra.mxu0 0.0
      %1902 = vmatpush.msra.mxu0 0.0
      %1903 = vmatpush.msra.mxu0 0.0
      %1904 = vmatpush.msra.mxu0 0.0
      %1905 = vmatpush.msra.mxu0 0.0
      %1906 = vmatpush.msra.mxu0 0.0
      %1907 = vmatpush.msra.mxu0 0.0
      %1908 = vmatpush.msra.mxu0 0.0
      %1909 = vmatpush.msra.mxu0 0.0
      %1910 = vmatpush.msra.mxu0 0.0
      %1911 = vmatpush.msra.mxu0 0.0
      %1912 = vmatpush.msra.mxu0 %v1895
      %1913 = vmatmul.f32.gmra.mxu0 %v1892
      %v1914 = vpop.f32.mrf.mxu0
      %v1915 = vadd.f32 0.0, %v1914
      %1916 = vdwg.mxu0
      %v1917 = vadd.f32 %v1888, %v1915
      %v1918 = vld [vmem:[%s2] sm:$0x1]
      %v1920 = vperm.slane %v1918, 0
      %v1922 = vadd.f32 %v1917, %v1920
      %s1923 = scalar_lea.vmem %s204, 40
      %1924 = vst.msk [vmem:[%s1923] sm:$0xff] %vm488, %v1922
      %v1925 = vsel %vm488, %v1922, 0.0
      %v1926 = vrot.slane %v1925, 4
      %v1927 = vadd.f32 %v1925, %v1926
      %v1928 = vrot.slane %v1927, 2
      %v1929 = vadd.f32 %v1927, %v1928
      %v1930 = vrot.slane %v1929, 1
      %v1931 = vadd.f32 %v1929, %v1930
      %v1932 = vadd.f32 %v1645, %v1931
      %v1933 = vmul.f32 %v1922, %v1922
      %v1934 = vsel %vm488, %v1933, 0.0
      %v1935 = vrot.slane %v1934, 4
      %v1936 = vadd.f32 %v1934, %v1935
      %v1937 = vrot.slane %v1936, 2
      %v1938 = vadd.f32 %v1936, %v1937
      %v1939 = vrot.slane %v1938, 1
      %v1940 = vadd.f32 %v1938, %v1939
      %v1941 = vadd.f32 %v1654, %v1940
      %v1942 = vld [vmem:[%s1829] sm:$0xff]
      %v1943 = vld [vmem:[%s1] sm:$0xf]
      %v1944 = vld [vmem:[%s1859] sm:$0xff]
      %v1945 = vld [vmem:[%s213] sm:$0xf]
      %v1947 = vsel %vm215, %v1944, 0
      %v1950 = vsel %vm219, %v1945, 0
      %1952 = vmatpush.msra.mxu0 0.0
      %1953 = vmatpush.msra.mxu0 0.0
      %1954 = vmatpush.msra.mxu0 0.0
      %1955 = vmatpush.msra.mxu0 0.0
      %1956 = vmatpush.msra.mxu0 0.0
      %1957 = vmatpush.msra.mxu0 0.0
      %1958 = vmatpush.msra.mxu0 0.0
      %1959 = vmatpush.msra.mxu0 0.0
      %1960 = vmatpush.msra.mxu0 0.0
      %1961 = vmatpush.msra.mxu0 0.0
      %1962 = vmatpush.msra.mxu0 0.0
      %1963 = vmatpush.msra.mxu0 0.0
      %1964 = vmatpush.msra.mxu0 0.0
      %1965 = vmatpush.msra.mxu0 0.0
      %1966 = vmatpush.msra.mxu0 0.0
      %1967 = vmatpush.msra.mxu0 %v1950
      %1968 = vmatmul.f32.gmra.mxu0 %v1947
      %v1969 = vpop.f32.mrf.mxu0
      %v1970 = vadd.f32 0.0, %v1969
      %1971 = vdwg.mxu0
      %v1973 = vsel %vm215, %v1942, 0
      %v1976 = vsel %vm219, %v1943, 0
      %1978 = vmatpush.msra.mxu0 0.0
      %1979 = vmatpush.msra.mxu0 0.0
      %1980 = vmatpush.msra.mxu0 0.0
      %1981 = vmatpush.msra.mxu0 0.0
      %1982 = vmatpush.msra.mxu0 0.0
      %1983 = vmatpush.msra.mxu0 0.0
      %1984 = vmatpush.msra.mxu0 0.0
      %1985 = vmatpush.msra.mxu0 0.0
      %1986 = vmatpush.msra.mxu0 0.0
      %1987 = vmatpush.msra.mxu0 0.0
      %1988 = vmatpush.msra.mxu0 0.0
      %1989 = vmatpush.msra.mxu0 0.0
      %1990 = vmatpush.msra.mxu0 0.0
      %1991 = vmatpush.msra.mxu0 0.0
      %1992 = vmatpush.msra.mxu0 0.0
      %1993 = vmatpush.msra.mxu0 %v1976
      %1994 = vmatmul.f32.gmra.mxu0 %v1973
      %v1995 = vpop.f32.mrf.mxu0
      %v1996 = vadd.f32 %v1970, %v1995
      %1997 = vdwg.mxu0
      %v1998 = vld [vmem:[%s1829 + $0x1] sm:$0xff]
      %v1999 = vld [vmem:[%s270] sm:$0xf]
      %v2001 = vsel %vm215, %v1998, 0
      %v2004 = vsel %vm219, %v1999, 0
      %2006 = vmatpush.msra.mxu0 0.0
      %2007 = vmatpush.msra.mxu0 0.0
      %2008 = vmatpush.msra.mxu0 0.0
      %2009 = vmatpush.msra.mxu0 0.0
      %2010 = vmatpush.msra.mxu0 0.0
      %2011 = vmatpush.msra.mxu0 0.0
      %2012 = vmatpush.msra.mxu0 0.0
      %2013 = vmatpush.msra.mxu0 0.0
      %2014 = vmatpush.msra.mxu0 0.0
      %2015 = vmatpush.msra.mxu0 0.0
      %2016 = vmatpush.msra.mxu0 0.0
      %2017 = vmatpush.msra.mxu0 0.0
      %2018 = vmatpush.msra.mxu0 0.0
      %2019 = vmatpush.msra.mxu0 0.0
      %2020 = vmatpush.msra.mxu0 0.0
      %2021 = vmatpush.msra.mxu0 %v2004
      %2022 = vmatmul.f32.gmra.mxu0 %v2001
      %v2023 = vpop.f32.mrf.mxu0
      %v2024 = vadd.f32 0.0, %v2023
      %2025 = vdwg.mxu0
      %v2026 = vadd.f32 %v1996, %v2024
      %s2027 = scalar_lea.vmem %s199, 384
      %v2028 = vld [vmem:[%s2027] sm:$0xff]
      %v2029 = vld [vmem:[%s301] sm:$0xf]
      %v2031 = vsel %vm215, %v2028, 0
      %v2034 = vsel %vm219, %v2029, 0
      %2036 = vmatpush.msra.mxu0 0.0
      %2037 = vmatpush.msra.mxu0 0.0
      %2038 = vmatpush.msra.mxu0 0.0
      %2039 = vmatpush.msra.mxu0 0.0
      %2040 = vmatpush.msra.mxu0 0.0
      %2041 = vmatpush.msra.mxu0 0.0
      %2042 = vmatpush.msra.mxu0 0.0
      %2043 = vmatpush.msra.mxu0 0.0
      %2044 = vmatpush.msra.mxu0 0.0
      %2045 = vmatpush.msra.mxu0 0.0
      %2046 = vmatpush.msra.mxu0 0.0
      %2047 = vmatpush.msra.mxu0 0.0
      %2048 = vmatpush.msra.mxu0 0.0
      %2049 = vmatpush.msra.mxu0 0.0
      %2050 = vmatpush.msra.mxu0 0.0
      %2051 = vmatpush.msra.mxu0 %v2034
      %2052 = vmatmul.f32.gmra.mxu0 %v2031
      %v2053 = vpop.f32.mrf.mxu0
      %v2054 = vadd.f32 0.0, %v2053
      %2055 = vdwg.mxu0
      %v2056 = vadd.f32 %v2026, %v2054
      %s2057 = scalar_lea.vmem %s199, 528
      %v2058 = vld [vmem:[%s2057] sm:$0xff]
      %v2059 = vld [vmem:[%s332] sm:$0xf]
      %v2061 = vsel %vm215, %v2058, 0
      %v2064 = vsel %vm219, %v2059, 0
      %2066 = vmatpush.msra.mxu0 0.0
      %2067 = vmatpush.msra.mxu0 0.0
      %2068 = vmatpush.msra.mxu0 0.0
      %2069 = vmatpush.msra.mxu0 0.0
      %2070 = vmatpush.msra.mxu0 0.0
      %2071 = vmatpush.msra.mxu0 0.0
      %2072 = vmatpush.msra.mxu0 0.0
      %2073 = vmatpush.msra.mxu0 0.0
      %2074 = vmatpush.msra.mxu0 0.0
      %2075 = vmatpush.msra.mxu0 0.0
      %2076 = vmatpush.msra.mxu0 0.0
      %2077 = vmatpush.msra.mxu0 0.0
      %2078 = vmatpush.msra.mxu0 0.0
      %2079 = vmatpush.msra.mxu0 0.0
      %2080 = vmatpush.msra.mxu0 0.0
      %2081 = vmatpush.msra.mxu0 %v2064
      %2082 = vmatmul.f32.gmra.mxu0 %v2061
      %v2083 = vpop.f32.mrf.mxu0
      %v2084 = vadd.f32 0.0, %v2083
      %2085 = vdwg.mxu0
      %v2086 = vadd.f32 %v2056, %v2084
      %v2087 = vld [vmem:[%s2027 + $0x1] sm:$0xff]
      %v2088 = vld [vmem:[%s362] sm:$0xf]
      %v2090 = vsel %vm215, %v2087, 0
      %v2093 = vsel %vm219, %v2088, 0
      %2095 = vmatpush.msra.mxu0 0.0
      %2096 = vmatpush.msra.mxu0 0.0
      %2097 = vmatpush.msra.mxu0 0.0
      %2098 = vmatpush.msra.mxu0 0.0
      %2099 = vmatpush.msra.mxu0 0.0
      %2100 = vmatpush.msra.mxu0 0.0
      %2101 = vmatpush.msra.mxu0 0.0
      %2102 = vmatpush.msra.mxu0 0.0
      %2103 = vmatpush.msra.mxu0 0.0
      %2104 = vmatpush.msra.mxu0 0.0
      %2105 = vmatpush.msra.mxu0 0.0
      %2106 = vmatpush.msra.mxu0 0.0
      %2107 = vmatpush.msra.mxu0 0.0
      %2108 = vmatpush.msra.mxu0 0.0
      %2109 = vmatpush.msra.mxu0 0.0
      %2110 = vmatpush.msra.mxu0 %v2093
      %2111 = vmatmul.f32.gmra.mxu0 %v2090
      %v2112 = vpop.f32.mrf.mxu0
      %v2113 = vadd.f32 0.0, %v2112
      %2114 = vdwg.mxu0
      %v2115 = vadd.f32 %v2086, %v2113
      %s2116 = scalar_lea.vmem %s199, 112
      %v2117 = vld [vmem:[%s2116] sm:$0xff]
      %v2118 = vld [vmem:[%s393] sm:$0xf]
      %v2120 = vsel %vm215, %v2117, 0
      %v2123 = vsel %vm219, %v2118, 0
      %2125 = vmatpush.msra.mxu0 0.0
      %2126 = vmatpush.msra.mxu0 0.0
      %2127 = vmatpush.msra.mxu0 0.0
      %2128 = vmatpush.msra.mxu0 0.0
      %2129 = vmatpush.msra.mxu0 0.0
      %2130 = vmatpush.msra.mxu0 0.0
      %2131 = vmatpush.msra.mxu0 0.0
      %2132 = vmatpush.msra.mxu0 0.0
      %2133 = vmatpush.msra.mxu0 0.0
      %2134 = vmatpush.msra.mxu0 0.0
      %2135 = vmatpush.msra.mxu0 0.0
      %2136 = vmatpush.msra.mxu0 0.0
      %2137 = vmatpush.msra.mxu0 0.0
      %2138 = vmatpush.msra.mxu0 0.0
      %2139 = vmatpush.msra.mxu0 0.0
      %2140 = vmatpush.msra.mxu0 %v2123
      %2141 = vmatmul.f32.gmra.mxu0 %v2120
      %v2142 = vpop.f32.mrf.mxu0
      %v2143 = vadd.f32 0.0, %v2142
      %2144 = vdwg.mxu0
      %v2145 = vadd.f32 %v2115, %v2143
      %s2146 = scalar_lea.vmem %s199, 256
      %v2147 = vld [vmem:[%s2146] sm:$0xff]
      %v2148 = vld [vmem:[%s424] sm:$0xf]
      %v2150 = vsel %vm215, %v2147, 0
      %v2153 = vsel %vm219, %v2148, 0
      %2155 = vmatpush.msra.mxu0 0.0
      %2156 = vmatpush.msra.mxu0 0.0
      %2157 = vmatpush.msra.mxu0 0.0
      %2158 = vmatpush.msra.mxu0 0.0
      %2159 = vmatpush.msra.mxu0 0.0
      %2160 = vmatpush.msra.mxu0 0.0
      %2161 = vmatpush.msra.mxu0 0.0
      %2162 = vmatpush.msra.mxu0 0.0
      %2163 = vmatpush.msra.mxu0 0.0
      %2164 = vmatpush.msra.mxu0 0.0
      %2165 = vmatpush.msra.mxu0 0.0
      %2166 = vmatpush.msra.mxu0 0.0
      %2167 = vmatpush.msra.mxu0 0.0
      %2168 = vmatpush.msra.mxu0 0.0
      %2169 = vmatpush.msra.mxu0 0.0
      %2170 = vmatpush.msra.mxu0 %v2153
      %2171 = vmatmul.f32.gmra.mxu0 %v2150
      %v2172 = vpop.f32.mrf.mxu0
      %v2173 = vadd.f32 0.0, %v2172
      %2174 = vdwg.mxu0
      %v2175 = vadd.f32 %v2145, %v2173
      %v2176 = vld [vmem:[%s2116 + $0x1] sm:$0xff]
      %v2177 = vld [vmem:[%s454] sm:$0xf]
      %v2179 = vsel %vm215, %v2176, 0
      %v2182 = vsel %vm219, %v2177, 0
      %2184 = vmatpush.msra.mxu0 0.0
      %2185 = vmatpush.msra.mxu0 0.0
      %2186 = vmatpush.msra.mxu0 0.0
      %2187 = vmatpush.msra.mxu0 0.0
      %2188 = vmatpush.msra.mxu0 0.0
      %2189 = vmatpush.msra.mxu0 0.0
      %2190 = vmatpush.msra.mxu0 0.0
      %2191 = vmatpush.msra.mxu0 0.0
      %2192 = vmatpush.msra.mxu0 0.0
      %2193 = vmatpush.msra.mxu0 0.0
      %2194 = vmatpush.msra.mxu0 0.0
      %2195 = vmatpush.msra.mxu0 0.0
      %2196 = vmatpush.msra.mxu0 0.0
      %2197 = vmatpush.msra.mxu0 0.0
      %2198 = vmatpush.msra.mxu0 0.0
      %2199 = vmatpush.msra.mxu0 %v2182
      %2200 = vmatmul.f32.gmra.mxu0 %v2179
      %v2201 = vpop.f32.mrf.mxu0
      %v2202 = vadd.f32 0.0, %v2201
      %2203 = vdwg.mxu0
      %v2204 = vadd.f32 %v2175, %v2202
      %v2205 = vld [vmem:[%s2] sm:$0x1]
      %v2207 = vperm.slane %v2205, 0
      %v2209 = vadd.f32 %v2204, %v2207
      %s2210 = scalar_lea.vmem %s204, 48
      %2211 = vst.msk [vmem:[%s2210] sm:$0xff] %vm488, %v2209
      %v2212 = vsel %vm488, %v2209, 0.0
      %v2213 = vrot.slane %v2212, 4
      %v2214 = vadd.f32 %v2212, %v2213
      %v2215 = vrot.slane %v2214, 2
      %v2216 = vadd.f32 %v2214, %v2215
      %v2217 = vrot.slane %v2216, 1
      %v2218 = vadd.f32 %v2216, %v2217
      %v2219 = vadd.f32 %v1932, %v2218
      %v2220 = vmul.f32 %v2209, %v2209
      %v2221 = vsel %vm488, %v2220, 0.0
      %v2222 = vrot.slane %v2221, 4
      %v2223 = vadd.f32 %v2221, %v2222
      %v2224 = vrot.slane %v2223, 2
      %v2225 = vadd.f32 %v2223, %v2224
      %v2226 = vrot.slane %v2225, 1
      %v2227 = vadd.f32 %v2225, %v2226
      %v2228 = vadd.f32 %v1941, %v2227
      %v2229 = vld [vmem:[%s2116] sm:$0xff]
      %v2230 = vld [vmem:[%s1] sm:$0xf]
      %v2231 = vld [vmem:[%s2146] sm:$0xff]
      %v2232 = vld [vmem:[%s213] sm:$0xf]
      %v2234 = vsel %vm215, %v2231, 0
      %v2237 = vsel %vm219, %v2232, 0
      %2239 = vmatpush.msra.mxu0 0.0
      %2240 = vmatpush.msra.mxu0 0.0
      %2241 = vmatpush.msra.mxu0 0.0
      %2242 = vmatpush.msra.mxu0 0.0
      %2243 = vmatpush.msra.mxu0 0.0
      %2244 = vmatpush.msra.mxu0 0.0
      %2245 = vmatpush.msra.mxu0 0.0
      %2246 = vmatpush.msra.mxu0 0.0
      %2247 = vmatpush.msra.mxu0 0.0
      %2248 = vmatpush.msra.mxu0 0.0
      %2249 = vmatpush.msra.mxu0 0.0
      %2250 = vmatpush.msra.mxu0 0.0
      %2251 = vmatpush.msra.mxu0 0.0
      %2252 = vmatpush.msra.mxu0 0.0
      %2253 = vmatpush.msra.mxu0 0.0
      %2254 = vmatpush.msra.mxu0 %v2237
      %2255 = vmatmul.f32.gmra.mxu0 %v2234
      %v2256 = vpop.f32.mrf.mxu0
      %v2257 = vadd.f32 0.0, %v2256
      %2258 = vdwg.mxu0
      %v2260 = vsel %vm215, %v2229, 0
      %v2263 = vsel %vm219, %v2230, 0
      %2265 = vmatpush.msra.mxu0 0.0
      %2266 = vmatpush.msra.mxu0 0.0
      %2267 = vmatpush.msra.mxu0 0.0
      %2268 = vmatpush.msra.mxu0 0.0
      %2269 = vmatpush.msra.mxu0 0.0
      %2270 = vmatpush.msra.mxu0 0.0
      %2271 = vmatpush.msra.mxu0 0.0
      %2272 = vmatpush.msra.mxu0 0.0
      %2273 = vmatpush.msra.mxu0 0.0
      %2274 = vmatpush.msra.mxu0 0.0
      %2275 = vmatpush.msra.mxu0 0.0
      %2276 = vmatpush.msra.mxu0 0.0
      %2277 = vmatpush.msra.mxu0 0.0
      %2278 = vmatpush.msra.mxu0 0.0
      %2279 = vmatpush.msra.mxu0 0.0
      %2280 = vmatpush.msra.mxu0 %v2263
      %2281 = vmatmul.f32.gmra.mxu0 %v2260
      %v2282 = vpop.f32.mrf.mxu0
      %v2283 = vadd.f32 %v2257, %v2282
      %2284 = vdwg.mxu0
      %v2285 = vld [vmem:[%s2116 + $0x1] sm:$0xff]
      %v2286 = vld [vmem:[%s270] sm:$0xf]
      %v2288 = vsel %vm215, %v2285, 0
      %v2291 = vsel %vm219, %v2286, 0
      %2293 = vmatpush.msra.mxu0 0.0
      %2294 = vmatpush.msra.mxu0 0.0
      %2295 = vmatpush.msra.mxu0 0.0
      %2296 = vmatpush.msra.mxu0 0.0
      %2297 = vmatpush.msra.mxu0 0.0
      %2298 = vmatpush.msra.mxu0 0.0
      %2299 = vmatpush.msra.mxu0 0.0
      %2300 = vmatpush.msra.mxu0 0.0
      %2301 = vmatpush.msra.mxu0 0.0
      %2302 = vmatpush.msra.mxu0 0.0
      %2303 = vmatpush.msra.mxu0 0.0
      %2304 = vmatpush.msra.mxu0 0.0
      %2305 = vmatpush.msra.mxu0 0.0
      %2306 = vmatpush.msra.mxu0 0.0
      %2307 = vmatpush.msra.mxu0 0.0
      %2308 = vmatpush.msra.mxu0 %v2291
      %2309 = vmatmul.f32.gmra.mxu0 %v2288
      %v2310 = vpop.f32.mrf.mxu0
      %v2311 = vadd.f32 0.0, %v2310
      %2312 = vdwg.mxu0
      %v2313 = vadd.f32 %v2283, %v2311
      %s2314 = scalar_lea.vmem %s199, 400
      %v2315 = vld [vmem:[%s2314] sm:$0xff]
      %v2316 = vld [vmem:[%s301] sm:$0xf]
      %v2318 = vsel %vm215, %v2315, 0
      %v2321 = vsel %vm219, %v2316, 0
      %2323 = vmatpush.msra.mxu0 0.0
      %2324 = vmatpush.msra.mxu0 0.0
      %2325 = vmatpush.msra.mxu0 0.0
      %2326 = vmatpush.msra.mxu0 0.0
      %2327 = vmatpush.msra.mxu0 0.0
      %2328 = vmatpush.msra.mxu0 0.0
      %2329 = vmatpush.msra.mxu0 0.0
      %2330 = vmatpush.msra.mxu0 0.0
      %2331 = vmatpush.msra.mxu0 0.0
      %2332 = vmatpush.msra.mxu0 0.0
      %2333 = vmatpush.msra.mxu0 0.0
      %2334 = vmatpush.msra.mxu0 0.0
      %2335 = vmatpush.msra.mxu0 0.0
      %2336 = vmatpush.msra.mxu0 0.0
      %2337 = vmatpush.msra.mxu0 0.0
      %2338 = vmatpush.msra.mxu0 %v2321
      %2339 = vmatmul.f32.gmra.mxu0 %v2318
      %v2340 = vpop.f32.mrf.mxu0
      %v2341 = vadd.f32 0.0, %v2340
      %2342 = vdwg.mxu0
      %v2343 = vadd.f32 %v2313, %v2341
      %s2344 = scalar_lea.vmem %s199, 544
      %v2345 = vld [vmem:[%s2344] sm:$0xff]
      %v2346 = vld [vmem:[%s332] sm:$0xf]
      %v2348 = vsel %vm215, %v2345, 0
      %v2351 = vsel %vm219, %v2346, 0
      %2353 = vmatpush.msra.mxu0 0.0
      %2354 = vmatpush.msra.mxu0 0.0
      %2355 = vmatpush.msra.mxu0 0.0
      %2356 = vmatpush.msra.mxu0 0.0
      %2357 = vmatpush.msra.mxu0 0.0
      %2358 = vmatpush.msra.mxu0 0.0
      %2359 = vmatpush.msra.mxu0 0.0
      %2360 = vmatpush.msra.mxu0 0.0
      %2361 = vmatpush.msra.mxu0 0.0
      %2362 = vmatpush.msra.mxu0 0.0
      %2363 = vmatpush.msra.mxu0 0.0
      %2364 = vmatpush.msra.mxu0 0.0
      %2365 = vmatpush.msra.mxu0 0.0
      %2366 = vmatpush.msra.mxu0 0.0
      %2367 = vmatpush.msra.mxu0 0.0
      %2368 = vmatpush.msra.mxu0 %v2351
      %2369 = vmatmul.f32.gmra.mxu0 %v2348
      %v2370 = vpop.f32.mrf.mxu0
      %v2371 = vadd.f32 0.0, %v2370
      %2372 = vdwg.mxu0
      %v2373 = vadd.f32 %v2343, %v2371
      %v2374 = vld [vmem:[%s2314 + $0x1] sm:$0xff]
      %v2375 = vld [vmem:[%s362] sm:$0xf]
      %v2377 = vsel %vm215, %v2374, 0
      %v2380 = vsel %vm219, %v2375, 0
      %2382 = vmatpush.msra.mxu0 0.0
      %2383 = vmatpush.msra.mxu0 0.0
      %2384 = vmatpush.msra.mxu0 0.0
      %2385 = vmatpush.msra.mxu0 0.0
      %2386 = vmatpush.msra.mxu0 0.0
      %2387 = vmatpush.msra.mxu0 0.0
      %2388 = vmatpush.msra.mxu0 0.0
      %2389 = vmatpush.msra.mxu0 0.0
      %2390 = vmatpush.msra.mxu0 0.0
      %2391 = vmatpush.msra.mxu0 0.0
      %2392 = vmatpush.msra.mxu0 0.0
      %2393 = vmatpush.msra.mxu0 0.0
      %2394 = vmatpush.msra.mxu0 0.0
      %2395 = vmatpush.msra.mxu0 0.0
      %2396 = vmatpush.msra.mxu0 0.0
      %2397 = vmatpush.msra.mxu0 %v2380
      %2398 = vmatmul.f32.gmra.mxu0 %v2377
      %v2399 = vpop.f32.mrf.mxu0
      %v2400 = vadd.f32 0.0, %v2399
      %2401 = vdwg.mxu0
      %v2402 = vadd.f32 %v2373, %v2400
      %s2403 = scalar_lea.vmem %s199, 128
      %v2404 = vld [vmem:[%s2403] sm:$0xff]
      %v2405 = vld [vmem:[%s393] sm:$0xf]
      %v2407 = vsel %vm215, %v2404, 0
      %v2410 = vsel %vm219, %v2405, 0
      %2412 = vmatpush.msra.mxu0 0.0
      %2413 = vmatpush.msra.mxu0 0.0
      %2414 = vmatpush.msra.mxu0 0.0
      %2415 = vmatpush.msra.mxu0 0.0
      %2416 = vmatpush.msra.mxu0 0.0
      %2417 = vmatpush.msra.mxu0 0.0
      %2418 = vmatpush.msra.mxu0 0.0
      %2419 = vmatpush.msra.mxu0 0.0
      %2420 = vmatpush.msra.mxu0 0.0
      %2421 = vmatpush.msra.mxu0 0.0
      %2422 = vmatpush.msra.mxu0 0.0
      %2423 = vmatpush.msra.mxu0 0.0
      %2424 = vmatpush.msra.mxu0 0.0
      %2425 = vmatpush.msra.mxu0 0.0
      %2426 = vmatpush.msra.mxu0 0.0
      %2427 = vmatpush.msra.mxu0 %v2410
      %2428 = vmatmul.f32.gmra.mxu0 %v2407
      %v2429 = vpop.f32.mrf.mxu0
      %v2430 = vadd.f32 0.0, %v2429
      %2431 = vdwg.mxu0
      %v2432 = vadd.f32 %v2402, %v2430
      %s2433 = scalar_lea.vmem %s199, 272
      %v2434 = vld [vmem:[%s2433] sm:$0xff]
      %v2435 = vld [vmem:[%s424] sm:$0xf]
      %v2437 = vsel %vm215, %v2434, 0
      %v2440 = vsel %vm219, %v2435, 0
      %2442 = vmatpush.msra.mxu0 0.0
      %2443 = vmatpush.msra.mxu0 0.0
      %2444 = vmatpush.msra.mxu0 0.0
      %2445 = vmatpush.msra.mxu0 0.0
      %2446 = vmatpush.msra.mxu0 0.0
      %2447 = vmatpush.msra.mxu0 0.0
      %2448 = vmatpush.msra.mxu0 0.0
      %2449 = vmatpush.msra.mxu0 0.0
      %2450 = vmatpush.msra.mxu0 0.0
      %2451 = vmatpush.msra.mxu0 0.0
      %2452 = vmatpush.msra.mxu0 0.0
      %2453 = vmatpush.msra.mxu0 0.0
      %2454 = vmatpush.msra.mxu0 0.0
      %2455 = vmatpush.msra.mxu0 0.0
      %2456 = vmatpush.msra.mxu0 0.0
      %2457 = vmatpush.msra.mxu0 %v2440
      %2458 = vmatmul.f32.gmra.mxu0 %v2437
      %v2459 = vpop.f32.mrf.mxu0
      %v2460 = vadd.f32 0.0, %v2459
      %2461 = vdwg.mxu0
      %v2462 = vadd.f32 %v2432, %v2460
      %v2463 = vld [vmem:[%s2403 + $0x1] sm:$0xff]
      %v2464 = vld [vmem:[%s454] sm:$0xf]
      %v2466 = vsel %vm215, %v2463, 0
      %v2469 = vsel %vm219, %v2464, 0
      %2471 = vmatpush.msra.mxu0 0.0
      %2472 = vmatpush.msra.mxu0 0.0
      %2473 = vmatpush.msra.mxu0 0.0
      %2474 = vmatpush.msra.mxu0 0.0
      %2475 = vmatpush.msra.mxu0 0.0
      %2476 = vmatpush.msra.mxu0 0.0
      %2477 = vmatpush.msra.mxu0 0.0
      %2478 = vmatpush.msra.mxu0 0.0
      %2479 = vmatpush.msra.mxu0 0.0
      %2480 = vmatpush.msra.mxu0 0.0
      %2481 = vmatpush.msra.mxu0 0.0
      %2482 = vmatpush.msra.mxu0 0.0
      %2483 = vmatpush.msra.mxu0 0.0
      %2484 = vmatpush.msra.mxu0 0.0
      %2485 = vmatpush.msra.mxu0 0.0
      %2486 = vmatpush.msra.mxu0 %v2469
      %2487 = vmatmul.f32.gmra.mxu0 %v2466
      %v2488 = vpop.f32.mrf.mxu0
      %v2489 = vadd.f32 0.0, %v2488
      %2490 = vdwg.mxu0
      %v2491 = vadd.f32 %v2462, %v2489
      %v2492 = vld [vmem:[%s2] sm:$0x1]
      %v2494 = vperm.slane %v2492, 0
      %v2496 = vadd.f32 %v2491, %v2494
      %s2497 = scalar_lea.vmem %s204, 56
      %2498 = vst.msk [vmem:[%s2497] sm:$0xff] %vm488, %v2496
      %v2499 = vsel %vm488, %v2496, 0.0
      %v2500 = vrot.slane %v2499, 4
      %v2501 = vadd.f32 %v2499, %v2500
      %v2502 = vrot.slane %v2501, 2
      %v2503 = vadd.f32 %v2501, %v2502
      %v2504 = vrot.slane %v2503, 1
      %v2505 = vadd.f32 %v2503, %v2504
      %v2506 = vadd.f32 %v2219, %v2505
      %v2507 = vmul.f32 %v2496, %v2496
      %v2508 = vsel %vm488, %v2507, 0.0
      %v2509 = vrot.slane %v2508, 4
      %v2510 = vadd.f32 %v2508, %v2509
      %v2511 = vrot.slane %v2510, 2
      %v2512 = vadd.f32 %v2510, %v2511
      %v2513 = vrot.slane %v2512, 1
      %v2514 = vadd.f32 %v2512, %v2513
      %v2515 = vadd.f32 %v2228, %v2514
      %vm2516 = vcmask 57344
      %2517 = vst.msk [vmem:[%s208] sm:$0x1] %vm2516, %v2506
      %2518 = vst.msk [vmem:[%s208 + $0x1] sm:$0x1] %vm2516, %v2515
      %p2519 = scmp.lt.s32.totalorder %s16, 1
      %s2520 = scalar_select %p2519, %s16, 1
      %s2521 = smul.addr %s2520, 8
      %s2522 = smul.addr %s2521, 8
      %s2523 = scalar_lea.vmem %s3, %s2522
      %p2524 = scmp.lt.s32.totalorder %s16, 1
      %s2525 = scalar_select %p2524, %s16, 1
      %s2526 = smul.addr %s2525, 2
      %s2527 = scalar_lea.vmem %s4, %s2526
      // Predicated region
      $region33: #{downsample_forward.3} parent=31 // pred_check
        %p2528 = pneg %p102
      $region34: #{downsample_forward.3} parent=31 // pred_check_branch
        %2530 = sbr.rel (%p2528) target = $region36
      $region35: #{downsample_forward.3} parent=31 // pred_region
        _
      $region36: #{downsample_forward.3} parent=31 // pred_fallthru
        _
      // Predicated region
      $region37: #{downsample_forward.3} parent=31 // pred_check
        %p2531 = pneg %p128
      $region38: #{downsample_forward.3} parent=31 // pred_check_branch
        %2533 = sbr.rel (%p2531) target = $region40
      $region39: #{downsample_forward.3} parent=31 // pred_region
        _
      $region40: #{downsample_forward.3} parent=31 // pred_fallthru
        _
    $region32: #{downsample_forward.3} parent=5 // pred_fallthru
      _
    %p2534 = scmp.le.s32.totalorder 2, %s11
    // Predicated region
    $region41: #{downsample_forward.3} parent=5 // pred_check
      %p2535 = pneg %p2534
    $region42: #{downsample_forward.3} parent=5 // pred_check_branch
      %2537 = sbr.rel (%p2535) target = $region44
    $region43: #{downsample_forward.3} parent=5 // pred_region
      %s2538 = ssub.s32 %s11, 2
      // Predicated region
      $region45: #{downsample_forward.3} parent=43 // pred_check
        %p2539 = pneg %p108
      $region46: #{downsample_forward.3} parent=43 // pred_check_branch
        %2541 = sbr.rel (%p2539) target = $region48
      $region47: #{downsample_forward.3} parent=43 // pred_region
        %p2542 = scmp.lt.s32.totalorder %s17, 1
        %s2543 = scalar_select %p2542, %s17, 1
        %s2544 = smul.addr %s2543, 8
        %s2545 = smul.addr %s2544, 8
        %s2546 = scalar_lea.vmem %s3, %s2545
      $region48: #{downsample_forward.3} parent=43 // pred_fallthru
        _
      // Predicated region
      $region49: #{downsample_forward.3} parent=43 // pred_check
        %p2547 = pneg %p134
      $region50: #{downsample_forward.3} parent=43 // pred_check_branch
        %2549 = sbr.rel (%p2547) target = $region52
      $region51: #{downsample_forward.3} parent=43 // pred_region
        %p2550 = scmp.lt.s32.totalorder %s17, 1
        %s2551 = scalar_select %p2550, %s17, 1
        %s2552 = smul.addr %s2551, 2
        %s2553 = scalar_lea.vmem %s4, %s2552
      $region52: #{downsample_forward.3} parent=43 // pred_fallthru
        _
    $region44: #{downsample_forward.3} parent=5 // pred_fallthru
      _
  $region6: #{downsample_forward.3} parent=0 // loop_footer
    %s15 = sadd.s32 1, %s11
  $region7: #{downsample_forward.3} parent=0 // loop_footer_branch
    %10 = sbr.rel target = $region3
  $region8: #{downsample_forward.3} parent=0 // loop_exit
    _

</llo_original>
